<compile_context>
chip_gen: v7x
topology: tpu7x:2x2x1
jax: 0.10.0
libtpu: 0.0.40
codegen_flags: <defaults>
</compile_context>

<pallas_src>
import math

import jax
import jax.numpy as jnp
from jax.experimental import pallas as pl
from jax.experimental.pallas import tpu as pltpu

_VMEM = pl.BlockSpec(memory_space=pltpu.MemorySpace.VMEM)


# ----------------------------------------------------------------------------
# In-kernel helpers (resolved statically at trace time)
# ----------------------------------------------------------------------------
def _act(y, kind):
    if kind == 'relu':
        return jnp.maximum(y, 0.0)
    if kind == 'hswish':
        return y * jnp.clip(y + 3.0, 0.0, 6.0) * (1.0 / 6.0)
    if kind == 'hsigmoid':
        return jnp.clip(y + 3.0, 0.0, 6.0) * (1.0 / 6.0)
    return y


def _dot(a, w_bf16):
    """MXU matmul: bf16 operands, f32 accumulation."""
    return jnp.dot(a.astype(jnp.bfloat16), w_bf16,
                   preferred_element_type=jnp.float32)


# ----------------------------------------------------------------------------
# Stem: im2col'd 3x3 conv + BN + h_swish (single kernel)
# ----------------------------------------------------------------------------
def _stem_kernel(x_ref, w_ref, b_ref, o_ref):
    o_ref[...] = _act(_dot(x_ref[...], w_ref[...]) + b_ref[...], 'hswish')


def run_stem(x_nhwc, P, stride=2, k=3):
    N, H, W, C = x_nhwc.shape
    p = (k - 1) // 2
    Ho = (H + 2 * p - k) // stride + 1
    Wo = (W + 2 * p - k) // stride + 1
    xp = jnp.pad(x_nhwc, ((0, 0), (p, p), (p, p), (0, 0)))
    # taps concatenated along the channel axis in (kh, kw, c) order -> no big
    # transpose of the patch tensor is ever materialized.
    cols = [xp[:, kh:kh + stride * Ho:stride, kw:kw + stride * Wo:stride, :]
            for kh in range(k) for kw in range(k)]
    pat = jnp.concatenate(cols, axis=-1).reshape(N * Ho * Wo, C * k * k)
    O = P['stem_w'].shape[1]
    out = pl.pallas_call(
        _stem_kernel,
        out_shape=jax.ShapeDtypeStruct((N * Ho * Wo, O), jnp.float32),
        in_specs=[_VMEM] * 3,
        out_specs=_VMEM,
    )(pat, P['stem_w'], P['stem_b'])
    return out.reshape(N, Ho, Wo, O)


# ----------------------------------------------------------------------------
# Fused inverted-residual block kernel
#   expand (1x1 conv+BN+act) -> depthwise conv (per-tap MAC, BN folded) ->
#   [SE] -> act -> project (1x1 conv+BN) [+ residual]
# ----------------------------------------------------------------------------
def _make_block_kernel(st):
    act = 'hswish' if st['use_hs'] else 'relu'
    has_exp = st['expand']
    use_se = st['use_se']
    act_before_se = not has_exp          # inp == hid  =>  dw->BN->act->[SE]->pw
    identity = st['identity']
    T = st['k'] * st['k']

    def kernel(*refs):
        refs = list(refs)
        out_ref = refs.pop()
        idx = 0
        taps_ref = refs[idx]; idx += 1
        if has_exp:
            mask_ref, wexp_ref, bexp_ref = refs[idx:idx + 3]; idx += 3
        wdw_ref, bdw_ref = refs[idx:idx + 2]; idx += 2
        if use_se:
            ind_ref, w1_ref, b1_ref, w2_ref, b2_ref = refs[idx:idx + 5]; idx += 5
        wpw_ref, bpw_ref = refs[idx:idx + 2]; idx += 2
        res_ref = refs[idx] if identity else None

        M = out_ref.shape[0]

        # ---- expansion 1x1 conv + BN + act, evaluated for all k*k taps at
        #      once as a single MXU matmul; padded tap positions are masked
        #      back to zero (matching zero-padding of the hidden activation).
        if has_exp:
            hid_all = _act(_dot(taps_ref[...], wexp_ref[...]) + bexp_ref[...], act)
            hid_all = hid_all * mask_ref[...]

        # ---- depthwise conv + BN (scale folded into the per-tap weights)
        acc = None
        for t in range(T):                       # static unroll over k*k taps
            if has_exp:
                h_t = hid_all[t * M:(t + 1) * M, :]
            else:
                h_t = taps_ref[t * M:(t + 1) * M, :]
            term = h_t * wdw_ref[t]
            acc = term if acc is None else acc + term
        h = acc + bdw_ref[...]

        if act_before_se:
            h = _act(h, act)

        # ---- squeeze & excite: per-image global mean, 2 FCs, channel gate.
        if use_se:
            ind = ind_ref[...]                   # (M, n_img) 0/1 image indicator
            n_img = ind.shape[1]
            hw = M // n_img
            w1 = w1_ref[...]; b1 = b1_ref[...]
            w2 = w2_ref[...]; b2 = b2_ref[...]
            gate = None
            for n in range(n_img):               # static unroll over batch
                v = jnp.sum(h[n * hw:(n + 1) * hw, :], axis=0,
                            keepdims=True) * (1.0 / hw)      # (1, hid)
                v = _act(_dot(v, w1) + b1, 'relu')
                v = _act(_dot(v, w2) + b2, 'hsigmoid')
                g = ind[:, n:n + 1] * v                      # (M, hid)
                gate = g if gate is None else gate + g
            h = h * gate

        if not act_before_se:
            h = _act(h, act)

        # ---- projection 1x1 conv + BN [+ residual]
        y = _dot(h, wpw_ref[...]) + bpw_ref[...]
        if identity:
            y = y + res_ref[...]
        out_ref[...] = y

    return kernel


def run_block(h_nhwc, prm, st):
    N, H, W, Cin = h_nhwc.shape
    k, s = st['k'], st['s']
    p = (k - 1) // 2
    Ho = (H + 2 * p - k) // s + 1
    Wo = (W + 2 * p - k) // s + 1
    M = N * Ho * Wo
    T = k * k

    def shift_stack(a):
        ap = jnp.pad(a, ((0, 0), (p, p), (p, p), (0, 0)))
        stk = jnp.stack(
            [ap[:, kh:kh + s * Ho:s, kw:kw + s * Wo:s, :]
             for kh in range(k) for kw in range(k)], axis=0)
        return stk.reshape(T * M, a.shape[-1])

    args = [shift_stack(h_nhwc)]                                 # (T*M, Cin)
    if st['expand']:
        mask = shift_stack(jnp.ones((N, H, W, 1), jnp.float32))  # (T*M, 1)
        args += [mask, prm['w_exp'], prm['b_exp']]
    args += [prm['w_dw'], prm['b_dw']]
    if st['use_se']:
        hw = Ho * Wo
        row_img = jnp.arange(M) // hw
        ind = (row_img[:, None] == jnp.arange(N)[None, :]).astype(jnp.float32)
        se = prm['se']
        args += [ind, se['w1'], se['b1'], se['w2'], se['b2']]
    args += [prm['w_pw'], prm['b_pw']]
    if st['identity']:
        args.append(h_nhwc.reshape(N * H * W, Cin))

    out = pl.pallas_call(
        _make_block_kernel(st),
        out_shape=jax.ShapeDtypeStruct((M, st['oup']), jnp.float32),
        in_specs=[_VMEM] * len(args),
        out_specs=_VMEM,
    )(*args)
    return out.reshape(N, Ho, Wo, st['oup'])


# ----------------------------------------------------------------------------
# Fused tail: head 1x1 conv+BN+h_swish -> avgpool -> h_swish -> classifier
# ----------------------------------------------------------------------------
def _tail_kernel(x_ref, wc_ref, bc_ref, w1_ref, b1_ref, w2_ref, b2_ref, o_ref):
    h = _act(_dot(x_ref[...], wc_ref[...]) + bc_ref[...], 'hswish')   # (M, head)
    n_img = o_ref.shape[0]
    hw = h.shape[0] // n_img
    w1 = w1_ref[...]; b1 = b1_ref[...]
    w2 = w2_ref[...]; b2 = b2_ref[...]
    for n in range(n_img):                       # static unroll over batch
        v = jnp.sum(h[n * hw:(n + 1) * hw, :], axis=0,
                    keepdims=True) * (1.0 / hw)                       # avgpool
        v = _act(v, 'hswish')
        v = _act(_dot(v, w1) + b1, 'hswish')                          # Linear 1
        o_ref[n:n + 1, :] = _dot(v, w2) + b2                          # Linear 2


def run_tail(h_nhwc, P):
    N, H, W, C = h_nhwc.shape
    M = N * H * W
    ncls = P['cls_b2'].shape[1]
    return pl.pallas_call(
        _tail_kernel,
        out_shape=jax.ShapeDtypeStruct((N, ncls), jnp.float32),
        in_specs=[_VMEM] * 7,
        out_specs=_VMEM,
    )(h_nhwc.reshape(M, C), P['head_w'], P['head_b'],
      P['cls_w1'], P['cls_b1'], P['cls_w2'], P['cls_b2'])


# ----------------------------------------------------------------------------
# Parameter construction (mirrors the PyTorch __init__ / _initialize_weights);
# BatchNorm scales are folded into the weights here.
# ----------------------------------------------------------------------------
def _make_divisible(v, divisor, min_value=None):
    if min_value is None:
        min_value = divisor
    new_v = max(min_value, int(v + divisor / 2) // divisor * divisor)
    if new_v < 0.9 * v:
        new_v += divisor
    return new_v


def _conv_w(key, out_c, in_c, k):
    n = k * k * out_c
    return jax.random.normal(key, (out_c, in_c, k, k), jnp.float32) * math.sqrt(2.0 / n)


def _linear_w(key, out_c, in_c):
    return jax.random.normal(key, (out_c, in_c), jnp.float32) * 0.01


def _bn_scale_bias(c, eps=1e-5):
    # freshly initialized BN (gamma=1, beta=0, mean=0, var=1), inference mode
    scale = jnp.full((c,), 1.0 / math.sqrt(1.0 + eps), jnp.float32)
    bias = jnp.zeros((c,), jnp.float32)
    return scale, bias


def build_mobilenetv3_params(key, cfgs, num_classes=16, width_mult=1.0):
    keys = iter(jax.random.split(key, 64))

    def nxt():
        return next(keys)

    P = {}
    statics = []

    # --- stem: conv3x3 s2 + BN + h_swish ---
    input_channel = _make_divisible(16 * width_mult, 8)
    w = _conv_w(nxt(), input_channel, 3, 3)
    s, b = _bn_scale_bias(input_channel)
    wmat = w.transpose(2, 3, 1, 0).reshape(9 * 3, input_channel) * s[None, :]
    P['stem_w'] = wmat.astype(jnp.bfloat16)
    P['stem_b'] = b.reshape(1, input_channel)

    # --- inverted residual blocks ---
    blocks = []
    last_exp = None
    for (k_, exp_size, c, use_se, use_hs, stride, _pool) in cfgs:
        oup = _make_divisible(c * width_mult, 8)
        hid = exp_size
        last_exp = exp_size
        st = dict(k=k_, s=stride, use_se=bool(use_se), use_hs=bool(use_hs),
                  expand=(input_channel != hid),
                  identity=(stride == 1 and input_channel == oup),
                  inp=input_channel, hid=hid, oup=oup)
        prm = {}
        if st['expand']:
            we = _conv_w(nxt(), hid, input_channel, 1).reshape(hid, input_channel).T
            se_, be_ = _bn_scale_bias(hid)
            prm['w_exp'] = (we * se_[None, :]).astype(jnp.bfloat16)
            prm['b_exp'] = be_.reshape(1, hid)
        wdw = _conv_w(nxt(), hid, 1, k_).reshape(hid, k_ * k_).T       # (T, hid)
        sdw, bdw = _bn_scale_bias(hid)
        prm['w_dw'] = (wdw * sdw[None, :]).reshape(k_ * k_, 1, hid)    # f32 (VPU)
        prm['b_dw'] = bdw.reshape(1, hid)
        if use_se:
            red = hid // 4
            w1 = _linear_w(nxt(), red, hid)
            w2 = _linear_w(nxt(), hid, red)
            prm['se'] = dict(w1=w1.T.astype(jnp.bfloat16),
                             b1=jnp.zeros((1, red), jnp.float32),
                             w2=w2.T.astype(jnp.bfloat16),
                             b2=jnp.zeros((1, hid), jnp.float32))
        wpw = _conv_w(nxt(), oup, hid, 1).reshape(oup, hid).T
        spw, bpw = _bn_scale_bias(oup)
        prm['w_pw'] = (wpw * spw[None, :]).astype(jnp.bfloat16)
        prm['b_pw'] = bpw.reshape(1, oup)
        blocks.append(prm)
        statics.append(st)
        input_channel = oup
    P['blocks'] = blocks

    # --- head 1x1 conv + BN + h_swish ---
    head_ch = _make_divisible(last_exp * width_mult, 8)
    wc = _conv_w(nxt(), head_ch, input_channel, 1).reshape(head_ch, input_channel).T
    sc, bc = _bn_scale_bias(head_ch)
    P['head_w'] = (wc * sc[None, :]).astype(jnp.bfloat16)
    P['head_b'] = bc.reshape(1, head_ch)

    # --- classifier ---
    out_ch = _make_divisible(1280 * width_mult, 8) if width_mult > 1.0 else 1280
    w1 = _linear_w(nxt(), out_ch, head_ch)
    w2 = _linear_w(nxt(), num_classes, out_ch)
    P['cls_w1'] = w1.T.astype(jnp.bfloat16)
    P['cls_b1'] = jnp.zeros((1, out_ch), jnp.float32)
    P['cls_w2'] = w2.T.astype(jnp.bfloat16)
    P['cls_b2'] = jnp.zeros((1, num_classes), jnp.float32)
    return P, statics


# ----------------------------------------------------------------------------
# Forward (matches MobileNetV3.forward, mode='large')
# ----------------------------------------------------------------------------
def mobilenetv3_forward(x_nchw, P, statics):
    x = jnp.transpose(x_nchw, (0, 2, 3, 1))          # NCHW -> NHWC (once)
    h = run_stem(x, P)                               # fused stem kernel
    for prm, st in zip(P['blocks'], statics):
        h = run_block(h, prm, st)                    # one kernel per block
    return run_tail(h, P)                            # fused head/pool/classifier


# ----------------------------------------------------------------------------
if __name__ == "__main__":
    # cfg rows: (kernel, exp_size, out_c, use_se, use_hs, stride, se_pool)
    # se_pool equals the spatial size at that block (so SE avg-pool -> 1x1).
    cfgs = [
        (3, 16, 16, 0, 0, 2, 8),
        (3, 32, 24, 0, 0, 2, 4),
        (5, 48, 24, 1, 1, 1, 4),
        (3, 64, 40, 1, 1, 2, 2),
        (5, 96, 48, 1, 1, 2, 1),
    ]
    input_size = 32
    num_classes = 16
    key = jax.random.PRNGKey(0)
    pkey, xkey = jax.random.split(key)

    params, statics = build_mobilenetv3_params(pkey, cfgs, num_classes=num_classes)
    x = jax.random.normal(xkey, (2, 3, input_size, input_size), jnp.float32)  # NCHW

    fwd = jax.jit(lambda inp: mobilenetv3_forward(inp, params, statics))
    out = jax.block_until_ready(fwd(x))

    assert out.shape == (2, num_classes), out.shape
    assert bool(jnp.all(jnp.isfinite(out)))
    print("KERNEL_OK")
</pallas_src>

<mosaic_0001>
module attributes {stable_mosaic.version = 11 : i64} {
  func.func @_stem_kernel(%arg0: memref<512x27xf32, #tpu.memory_space<vmem>>, %arg1: memref<27x16xbf16, #tpu.memory_space<vmem>>, %arg2: memref<1x16xf32, #tpu.memory_space<vmem>>, %arg3: memref<512x16xf32, #tpu.memory_space<vmem>>) attributes {dimension_semantics = [], scalar_prefetch = 0 : i64, scratch_operands = 0 : i64, tpu.core_type = #tpu.core_type<tc>} {
    %c0 = arith.constant 0 : index
    %c0_0 = arith.constant 0 : index
    %0 = vector.load %arg0[%c0, %c0_0] : memref<512x27xf32, #tpu.memory_space<vmem>>, vector<512x27xf32>
    %c0_1 = arith.constant 0 : index
    %c0_2 = arith.constant 0 : index
    %1 = vector.load %arg1[%c0_1, %c0_2] : memref<27x16xbf16, #tpu.memory_space<vmem>>, vector<27x16xbf16>
    %2 = arith.truncf %0 : vector<512x27xf32> to vector<512x27xbf16>
    %cst = arith.constant dense<0.000000e+00> : vector<512x16xf32>
    %3 = tpu.matmul %2, %1, %cst {dimension_numbers = #tpu.dot_dimension_numbers<[1], [0], [0], [1], [0, 0, 1, 1], [], []>} : vector<512x27xbf16>, vector<27x16xbf16>, vector<512x16xf32> -> vector<512x16xf32>
    %c0_3 = arith.constant 0 : index
    %c0_4 = arith.constant 0 : index
    %4 = vector.load %arg2[%c0_3, %c0_4] : memref<1x16xf32, #tpu.memory_space<vmem>>, vector<1x16xf32>
    %5 = vector.broadcast %4 : vector<1x16xf32> to vector<512x16xf32>
    %6 = arith.addf %3, %5 : vector<512x16xf32>
    %cst_5 = arith.constant 3.000000e+00 : f32
    %7 = vector.broadcast %cst_5 : f32 to vector<512x16xf32>
    %8 = arith.addf %6, %7 : vector<512x16xf32>
    %cst_6 = arith.constant 0.000000e+00 : f32
    %cst_7 = arith.constant 6.000000e+00 : f32
    %9 = vector.broadcast %cst_6 : f32 to vector<512x16xf32>
    %10 = arith.maximumf %9, %8 : vector<512x16xf32>
    %11 = vector.broadcast %cst_7 : f32 to vector<512x16xf32>
    %12 = arith.minimumf %11, %10 : vector<512x16xf32>
    %13 = arith.mulf %6, %12 : vector<512x16xf32>
    %cst_8 = arith.constant 0.166666672 : f32
    %14 = vector.broadcast %cst_8 : f32 to vector<512x16xf32>
    %15 = arith.mulf %13, %14 : vector<512x16xf32>
    %c0_9 = arith.constant 0 : index
    %c0_10 = arith.constant 0 : index
    %16 = vector.load %arg3[%c0_9, %c0_10] : memref<512x16xf32, #tpu.memory_space<vmem>>, vector<512x16xf32>
    tpu.vector_store %arg3[%c0_9, %c0_10], %15 {strides = array<i32>} : memref<512x16xf32, #tpu.memory_space<vmem>>, vector<512x16xf32>,
    return
  }
}

module attributes {stable_mosaic.version = 11 : i64} {
  func.func @kernel(%arg0: memref<1152x16xf32, #tpu.memory_space<vmem>>, %arg1: memref<9x1x16xf32, #tpu.memory_space<vmem>>, %arg2: memref<1x16xf32, #tpu.memory_space<vmem>>, %arg3: memref<16x16xbf16, #tpu.memory_space<vmem>>, %arg4: memref<1x16xf32, #tpu.memory_space<vmem>>, %arg5: memref<128x16xf32, #tpu.memory_space<vmem>>) attributes {dimension_semantics = [], scalar_prefetch = 0 : i64, scratch_operands = 0 : i64, tpu.core_type = #tpu.core_type<tc>} {
    %c0 = arith.constant 0 : index
    %c0_0 = arith.constant 0 : index
    %0 = vector.load %arg0[%c0, %c0_0] : memref<1152x16xf32, #tpu.memory_space<vmem>>, vector<128x16xf32>
    %c0_1 = arith.constant 0 : index
    %c0_2 = arith.constant 0 : index
    %c0_3 = arith.constant 0 : index
    %1 = vector.load %arg1[%c0_1, %c0_2, %c0_3] : memref<9x1x16xf32, #tpu.memory_space<vmem>>, vector<1x1x16xf32>
    %2 = vector.shape_cast %1 : vector<1x1x16xf32> to vector<1x16xf32>
    %3 = vector.broadcast %2 : vector<1x16xf32> to vector<128x16xf32>
    %4 = arith.mulf %0, %3 : vector<128x16xf32>
    %c128 = arith.constant 128 : index
    %c0_4 = arith.constant 0 : index
    %5 = vector.load %arg0[%c128, %c0_4] : memref<1152x16xf32, #tpu.memory_space<vmem>>, vector<128x16xf32>
    %c1 = arith.constant 1 : index
    %c0_5 = arith.constant 0 : index
    %c0_6 = arith.constant 0 : index
    %6 = vector.load %arg1[%c1, %c0_5, %c0_6] : memref<9x1x16xf32, #tpu.memory_space<vmem>>, vector<1x1x16xf32>
    %7 = vector.shape_cast %6 : vector<1x1x16xf32> to vector<1x16xf32>
    %8 = vector.broadcast %7 : vector<1x16xf32> to vector<128x16xf32>
    %9 = arith.mulf %5, %8 : vector<128x16xf32>
    %10 = arith.addf %4, %9 : vector<128x16xf32>
    %c256 = arith.constant 256 : index
    %c0_7 = arith.constant 0 : index
    %11 = vector.load %arg0[%c256, %c0_7] : memref<1152x16xf32, #tpu.memory_space<vmem>>, vector<128x16xf32>
    %c2 = arith.constant 2 : index
    %c0_8 = arith.constant 0 : index
    %c0_9 = arith.constant 0 : index
    %12 = vector.load %arg1[%c2, %c0_8, %c0_9] : memref<9x1x16xf32, #tpu.memory_space<vmem>>, vector<1x1x16xf32>
    %13 = vector.shape_cast %12 : vector<1x1x16xf32> to vector<1x16xf32>
    %14 = vector.broadcast %13 : vector<1x16xf32> to vector<128x16xf32>
    %15 = arith.mulf %11, %14 : vector<128x16xf32>
    %16 = arith.addf %10, %15 : vector<128x16xf32>
    %c384 = arith.constant 384 : index
    %c0_10 = arith.constant 0 : index
    %17 = vector.load %arg0[%c384, %c0_10] : memref<1152x16xf32, #tpu.memory_space<vmem>>, vector<128x16xf32>
    %c3 = arith.constant 3 : index
    %c0_11 = arith.constant 0 : index
    %c0_12 = arith.constant 0 : index
    %18 = vector.load %arg1[%c3, %c0_11, %c0_12] : memref<9x1x16xf32, #tpu.memory_space<vmem>>, vector<1x1x16xf32>
    %19 = vector.shape_cast %18 : vector<1x1x16xf32> to vector<1x16xf32>
    %20 = vector.broadcast %19 : vector<1x16xf32> to vector<128x16xf32>
    %21 = arith.mulf %17, %20 : vector<128x16xf32>
    %22 = arith.addf %16, %21 : vector<128x16xf32>
    %c512 = arith.constant 512 : index
    %c0_13 = arith.constant 0 : index
    %23 = vector.load %arg0[%c512, %c0_13] : memref<1152x16xf32, #tpu.memory_space<vmem>>, vector<128x16xf32>
    %c4 = arith.constant 4 : index
    %c0_14 = arith.constant 0 : index
    %c0_15 = arith.constant 0 : index
    %24 = vector.load %arg1[%c4, %c0_14, %c0_15] : memref<9x1x16xf32, #tpu.memory_space<vmem>>, vector<1x1x16xf32>
    %25 = vector.shape_cast %24 : vector<1x1x16xf32> to vector<1x16xf32>
    %26 = vector.broadcast %25 : vector<1x16xf32> to vector<128x16xf32>
    %27 = arith.mulf %23, %26 : vector<128x16xf32>
    %28 = arith.addf %22, %27 : vector<128x16xf32>
    %c640 = arith.constant 640 : index
    %c0_16 = arith.constant 0 : index
    %29 = vector.load %arg0[%c640, %c0_16] : memref<1152x16xf32, #tpu.memory_space<vmem>>, vector<128x16xf32>
    %c5 = arith.constant 5 : index
    %c0_17 = arith.constant 0 : index
    %c0_18 = arith.constant 0 : index
    %30 = vector.load %arg1[%c5, %c0_17, %c0_18] : memref<9x1x16xf32, #tpu.memory_space<vmem>>, vector<1x1x16xf32>
    %31 = vector.shape_cast %30 : vector<1x1x16xf32> to vector<1x16xf32>
    %32 = vector.broadcast %31 : vector<1x16xf32> to vector<128x16xf32>
    %33 = arith.mulf %29, %32 : vector<128x16xf32>
    %34 = arith.addf %28, %33 : vector<128x16xf32>
    %c768 = arith.constant 768 : index
    %c0_19 = arith.constant 0 : index
    %35 = vector.load %arg0[%c768, %c0_19] : memref<1152x16xf32, #tpu.memory_space<vmem>>, vector<128x16xf32>
    %c6 = arith.constant 6 : index
    %c0_20 = arith.constant 0 : index
    %c0_21 = arith.constant 0 : index
    %36 = vector.load %arg1[%c6, %c0_20, %c0_21] : memref<9x1x16xf32, #tpu.memory_space<vmem>>, vector<1x1x16xf32>
    %37 = vector.shape_cast %36 : vector<1x1x16xf32> to vector<1x16xf32>
    %38 = vector.broadcast %37 : vector<1x16xf32> to vector<128x16xf32>
    %39 = arith.mulf %35, %38 : vector<128x16xf32>
    %40 = arith.addf %34, %39 : vector<128x16xf32>
    %c896 = arith.constant 896 : index
    %c0_22 = arith.constant 0 : index
    %41 = vector.load %arg0[%c896, %c0_22] : memref<1152x16xf32, #tpu.memory_space<vmem>>, vector<128x16xf32>
    %c7 = arith.constant 7 : index
    %c0_23 = arith.constant 0 : index
    %c0_24 = arith.constant 0 : index
    %42 = vector.load %arg1[%c7, %c0_23, %c0_24] : memref<9x1x16xf32, #tpu.memory_space<vmem>>, vector<1x1x16xf32>
    %43 = vector.shape_cast %42 : vector<1x1x16xf32> to vector<1x16xf32>
    %44 = vector.broadcast %43 : vector<1x16xf32> to vector<128x16xf32>
    %45 = arith.mulf %41, %44 : vector<128x16xf32>
    %46 = arith.addf %40, %45 : vector<128x16xf32>
    %c1024 = arith.constant 1024 : index
    %c0_25 = arith.constant 0 : index
    %47 = vector.load %arg0[%c1024, %c0_25] : memref<1152x16xf32, #tpu.memory_space<vmem>>, vector<128x16xf32>
    %c8 = arith.constant 8 : index
    %c0_26 = arith.constant 0 : index
    %c0_27 = arith.constant 0 : index
    %48 = vector.load %arg1[%c8, %c0_26, %c0_27] : memref<9x1x16xf32, #tpu.memory_space<vmem>>, vector<1x1x16xf32>
    %49 = vector.shape_cast %48 : vector<1x1x16xf32> to vector<1x16xf32>
    %50 = vector.broadcast %49 : vector<1x16xf32> to vector<128x16xf32>
    %51 = arith.mulf %47, %50 : vector<128x16xf32>
    %52 = arith.addf %46, %51 : vector<128x16xf32>
    %c0_28 = arith.constant 0 : index
    %c0_29 = arith.constant 0 : index
    %53 = vector.load %arg2[%c0_28, %c0_29] : memref<1x16xf32, #tpu.memory_space<vmem>>, vector<1x16xf32>
    %54 = vector.broadcast %53 : vector<1x16xf32> to vector<128x16xf32>
    %55 = arith.addf %52, %54 : vector<128x16xf32>
    %cst = arith.constant 0.000000e+00 : f32
    %56 = vector.broadcast %cst : f32 to vector<128x16xf32>
    %57 = arith.maximumf %55, %56 : vector<128x16xf32>
    %c0_30 = arith.constant 0 : index
    %c0_31 = arith.constant 0 : index
    %58 = vector.load %arg3[%c0_30, %c0_31] : memref<16x16xbf16, #tpu.memory_space<vmem>>, vector<16x16xbf16>
    %59 = arith.truncf %57 : vector<128x16xf32> to vector<128x16xbf16>
    %cst_32 = arith.constant dense<0.000000e+00> : vector<128x16xf32>
    %60 = tpu.matmul %59, %58, %cst_32 {dimension_numbers = #tpu.dot_dimension_numbers<[1], [0], [0], [1], [0, 0, 1, 1], [], []>} : vector<128x16xbf16>, vector<16x16xbf16>, vector<128x16xf32> -> vector<128x16xf32>
    %c0_33 = arith.constant 0 : index
    %c0_34 = arith.constant 0 : index
    %61 = vector.load %arg4[%c0_33, %c0_34] : memref<1x16xf32, #tpu.memory_space<vmem>>, vector<1x16xf32>
    %62 = vector.broadcast %61 : vector<1x16xf32> to vector<128x16xf32>
    %63 = arith.addf %60, %62 : vector<128x16xf32>
    %c0_35 = arith.constant 0 : index
    %c0_36 = arith.constant 0 : index
    %64 = vector.load %arg5[%c0_35, %c0_36] : memref<128x16xf32, #tpu.memory_space<vmem>>, vector<128x16xf32>
    tpu.vector_store %arg5[%c0_35, %c0_36], %63 {strides = array<i32>} : memref<128x16xf32, #tpu.memory_space<vmem>>, vector<128x16xf32>,
    return
  }
}

module attributes {stable_mosaic.version = 11 : i64} {
  func.func @kernel(%arg0: memref<288x16xf32, #tpu.memory_space<vmem>>, %arg1: memref<288x1xf32, #tpu.memory_space<vmem>>, %arg2: memref<16x32xbf16, #tpu.memory_space<vmem>>, %arg3: memref<1x32xf32, #tpu.memory_space<vmem>>, %arg4: memref<9x1x32xf32, #tpu.memory_space<vmem>>, %arg5: memref<1x32xf32, #tpu.memory_space<vmem>>, %arg6: memref<32x24xbf16, #tpu.memory_space<vmem>>, %arg7: memref<1x24xf32, #tpu.memory_space<vmem>>, %arg8: memref<32x24xf32, #tpu.memory_space<vmem>>) attributes {dimension_semantics = [], scalar_prefetch = 0 : i64, scratch_operands = 0 : i64, tpu.core_type = #tpu.core_type<tc>} {
    %c0 = arith.constant 0 : index
    %c0_0 = arith.constant 0 : index
    %0 = vector.load %arg0[%c0, %c0_0] : memref<288x16xf32, #tpu.memory_space<vmem>>, vector<288x16xf32>
    %c0_1 = arith.constant 0 : index
    %c0_2 = arith.constant 0 : index
    %1 = vector.load %arg2[%c0_1, %c0_2] : memref<16x32xbf16, #tpu.memory_space<vmem>>, vector<16x32xbf16>
    %2 = arith.truncf %0 : vector<288x16xf32> to vector<288x16xbf16>
    %cst = arith.constant dense<0.000000e+00> : vector<288x32xf32>
    %3 = tpu.matmul %2, %1, %cst {dimension_numbers = #tpu.dot_dimension_numbers<[1], [0], [0], [1], [0, 0, 1, 1], [], []>} : vector<288x16xbf16>, vector<16x32xbf16>, vector<288x32xf32> -> vector<288x32xf32>
    %c0_3 = arith.constant 0 : index
    %c0_4 = arith.constant 0 : index
    %4 = vector.load %arg3[%c0_3, %c0_4] : memref<1x32xf32, #tpu.memory_space<vmem>>, vector<1x32xf32>
    %5 = vector.broadcast %4 : vector<1x32xf32> to vector<288x32xf32>
    %6 = arith.addf %3, %5 : vector<288x32xf32>
    %cst_5 = arith.constant 0.000000e+00 : f32
    %7 = vector.broadcast %cst_5 : f32 to vector<288x32xf32>
    %8 = arith.maximumf %6, %7 : vector<288x32xf32>
    %c0_6 = arith.constant 0 : index
    %c0_7 = arith.constant 0 : index
    %9 = vector.load %arg1[%c0_6, %c0_7] : memref<288x1xf32, #tpu.memory_space<vmem>>, vector<288x1xf32>
    %10 = vector.broadcast %9 : vector<288x1xf32> to vector<288x32xf32>
    %11 = arith.mulf %8, %10 : vector<288x32xf32>
    %12 = vector.extract_strided_slice %11 {offsets = [0, 0], sizes = [32, 32], strides = [1, 1]} : vector<288x32xf32> to vector<32x32xf32>
    %c0_8 = arith.constant 0 : index
    %c0_9 = arith.constant 0 : index
    %c0_10 = arith.constant 0 : index
    %13 = vector.load %arg4[%c0_8, %c0_9, %c0_10] : memref<9x1x32xf32, #tpu.memory_space<vmem>>, vector<1x1x32xf32>
    %14 = vector.shape_cast %13 : vector<1x1x32xf32> to vector<1x32xf32>
    %15 = vector.broadcast %14 : vector<1x32xf32> to vector<32x32xf32>
    %16 = arith.mulf %12, %15 : vector<32x32xf32>
    %17 = vector.extract_strided_slice %11 {offsets = [32, 0], sizes = [32, 32], strides = [1, 1]} : vector<288x32xf32> to vector<32x32xf32>
    %c1 = arith.constant 1 : index
    %c0_11 = arith.constant 0 : index
    %c0_12 = arith.constant 0 : index
    %18 = vector.load %arg4[%c1, %c0_11, %c0_12] : memref<9x1x32xf32, #tpu.memory_space<vmem>>, vector<1x1x32xf32>
    %19 = vector.shape_cast %18 : vector<1x1x32xf32> to vector<1x32xf32>
    %20 = vector.broadcast %19 : vector<1x32xf32> to vector<32x32xf32>
    %21 = arith.mulf %17, %20 : vector<32x32xf32>
    %22 = arith.addf %16, %21 : vector<32x32xf32>
    %23 = vector.extract_strided_slice %11 {offsets = [64, 0], sizes = [32, 32], strides = [1, 1]} : vector<288x32xf32> to vector<32x32xf32>
    %c2 = arith.constant 2 : index
    %c0_13 = arith.constant 0 : index
    %c0_14 = arith.constant 0 : index
    %24 = vector.load %arg4[%c2, %c0_13, %c0_14] : memref<9x1x32xf32, #tpu.memory_space<vmem>>, vector<1x1x32xf32>
    %25 = vector.shape_cast %24 : vector<1x1x32xf32> to vector<1x32xf32>
    %26 = vector.broadcast %25 : vector<1x32xf32> to vector<32x32xf32>
    %27 = arith.mulf %23, %26 : vector<32x32xf32>
    %28 = arith.addf %22, %27 : vector<32x32xf32>
    %29 = vector.extract_strided_slice %11 {offsets = [96, 0], sizes = [32, 32], strides = [1, 1]} : vector<288x32xf32> to vector<32x32xf32>
    %c3 = arith.constant 3 : index
    %c0_15 = arith.constant 0 : index
    %c0_16 = arith.constant 0 : index
    %30 = vector.load %arg4[%c3, %c0_15, %c0_16] : memref<9x1x32xf32, #tpu.memory_space<vmem>>, vector<1x1x32xf32>
    %31 = vector.shape_cast %30 : vector<1x1x32xf32> to vector<1x32xf32>
    %32 = vector.broadcast %31 : vector<1x32xf32> to vector<32x32xf32>
    %33 = arith.mulf %29, %32 : vector<32x32xf32>
    %34 = arith.addf %28, %33 : vector<32x32xf32>
    %35 = vector.extract_strided_slice %11 {offsets = [128, 0], sizes = [32, 32], strides = [1, 1]} : vector<288x32xf32> to vector<32x32xf32>
    %c4 = arith.constant 4 : index
    %c0_17 = arith.constant 0 : index
    %c0_18 = arith.constant 0 : index
    %36 = vector.load %arg4[%c4, %c0_17, %c0_18] : memref<9x1x32xf32, #tpu.memory_space<vmem>>, vector<1x1x32xf32>
    %37 = vector.shape_cast %36 : vector<1x1x32xf32> to vector<1x32xf32>
    %38 = vector.broadcast %37 : vector<1x32xf32> to vector<32x32xf32>
    %39 = arith.mulf %35, %38 : vector<32x32xf32>
    %40 = arith.addf %34, %39 : vector<32x32xf32>
    %41 = vector.extract_strided_slice %11 {offsets = [160, 0], sizes = [32, 32], strides = [1, 1]} : vector<288x32xf32> to vector<32x32xf32>
    %c5 = arith.constant 5 : index
    %c0_19 = arith.constant 0 : index
    %c0_20 = arith.constant 0 : index
    %42 = vector.load %arg4[%c5, %c0_19, %c0_20] : memref<9x1x32xf32, #tpu.memory_space<vmem>>, vector<1x1x32xf32>
    %43 = vector.shape_cast %42 : vector<1x1x32xf32> to vector<1x32xf32>
    %44 = vector.broadcast %43 : vector<1x32xf32> to vector<32x32xf32>
    %45 = arith.mulf %41, %44 : vector<32x32xf32>
    %46 = arith.addf %40, %45 : vector<32x32xf32>
    %47 = vector.extract_strided_slice %11 {offsets = [192, 0], sizes = [32, 32], strides = [1, 1]} : vector<288x32xf32> to vector<32x32xf32>
    %c6 = arith.constant 6 : index
    %c0_21 = arith.constant 0 : index
    %c0_22 = arith.constant 0 : index
    %48 = vector.load %arg4[%c6, %c0_21, %c0_22] : memref<9x1x32xf32, #tpu.memory_space<vmem>>, vector<1x1x32xf32>
    %49 = vector.shape_cast %48 : vector<1x1x32xf32> to vector<1x32xf32>
    %50 = vector.broadcast %49 : vector<1x32xf32> to vector<32x32xf32>
    %51 = arith.mulf %47, %50 : vector<32x32xf32>
    %52 = arith.addf %46, %51 : vector<32x32xf32>
    %53 = vector.extract_strided_slice %11 {offsets = [224, 0], sizes = [32, 32], strides = [1, 1]} : vector<288x32xf32> to vector<32x32xf32>
    %c7 = arith.constant 7 : index
    %c0_23 = arith.constant 0 : index
    %c0_24 = arith.constant 0 : index
    %54 = vector.load %arg4[%c7, %c0_23, %c0_24] : memref<9x1x32xf32, #tpu.memory_space<vmem>>, vector<1x1x32xf32>
    %55 = vector.shape_cast %54 : vector<1x1x32xf32> to vector<1x32xf32>
    %56 = vector.broadcast %55 : vector<1x32xf32> to vector<32x32xf32>
    %57 = arith.mulf %53, %56 : vector<32x32xf32>
    %58 = arith.addf %52, %57 : vector<32x32xf32>
    %59 = vector.extract_strided_slice %11 {offsets = [256, 0], sizes = [32, 32], strides = [1, 1]} : vector<288x32xf32> to vector<32x32xf32>
    %c8 = arith.constant 8 : index
    %c0_25 = arith.constant 0 : index
    %c0_26 = arith.constant 0 : index
    %60 = vector.load %arg4[%c8, %c0_25, %c0_26] : memref<9x1x32xf32, #tpu.memory_space<vmem>>, vector<1x1x32xf32>
    %61 = vector.shape_cast %60 : vector<1x1x32xf32> to vector<1x32xf32>
    %62 = vector.broadcast %61 : vector<1x32xf32> to vector<32x32xf32>
    %63 = arith.mulf %59, %62 : vector<32x32xf32>
    %64 = arith.addf %58, %63 : vector<32x32xf32>
    %c0_27 = arith.constant 0 : index
    %c0_28 = arith.constant 0 : index
    %65 = vector.load %arg5[%c0_27, %c0_28] : memref<1x32xf32, #tpu.memory_space<vmem>>, vector<1x32xf32>
    %66 = vector.broadcast %65 : vector<1x32xf32> to vector<32x32xf32>
    %67 = arith.addf %64, %66 : vector<32x32xf32>
    %cst_29 = arith.constant 0.000000e+00 : f32
    %68 = vector.broadcast %cst_29 : f32 to vector<32x32xf32>
    %69 = arith.maximumf %67, %68 : vector<32x32xf32>
    %c0_30 = arith.constant 0 : index
    %c0_31 = arith.constant 0 : index
    %70 = vector.load %arg6[%c0_30, %c0_31] : memref<32x24xbf16, #tpu.memory_space<vmem>>, vector<32x24xbf16>
    %71 = arith.truncf %69 : vector<32x32xf32> to vector<32x32xbf16>
    %cst_32 = arith.constant dense<0.000000e+00> : vector<32x24xf32>
    %72 = tpu.matmul %71, %70, %cst_32 {dimension_numbers = #tpu.dot_dimension_numbers<[1], [0], [0], [1], [0, 0, 1, 1], [], []>} : vector<32x32xbf16>, vector<32x24xbf16>, vector<32x24xf32> -> vector<32x24xf32>
    %c0_33 = arith.constant 0 : index
    %c0_34 = arith.constant 0 : index
    %73 = vector.load %arg7[%c0_33, %c0_34] : memref<1x24xf32, #tpu.memory_space<vmem>>, vector<1x24xf32>
    %74 = vector.broadcast %73 : vector<1x24xf32> to vector<32x24xf32>
    %75 = arith.addf %72, %74 : vector<32x24xf32>
    %c0_35 = arith.constant 0 : index
    %c0_36 = arith.constant 0 : index
    %76 = vector.load %arg8[%c0_35, %c0_36] : memref<32x24xf32, #tpu.memory_space<vmem>>, vector<32x24xf32>
    tpu.vector_store %arg8[%c0_35, %c0_36], %75 {strides = array<i32>} : memref<32x24xf32, #tpu.memory_space<vmem>>, vector<32x24xf32>,
    return
  }
}

module attributes {stable_mosaic.version = 11 : i64} {
  func.func @kernel(%arg0: memref<800x24xf32, #tpu.memory_space<vmem>>, %arg1: memref<800x1xf32, #tpu.memory_space<vmem>>, %arg2: memref<24x48xbf16, #tpu.memory_space<vmem>>, %arg3: memref<1x48xf32, #tpu.memory_space<vmem>>, %arg4: memref<25x1x48xf32, #tpu.memory_space<vmem>>, %arg5: memref<1x48xf32, #tpu.memory_space<vmem>>, %arg6: memref<32x2xf32, #tpu.memory_space<vmem>>, %arg7: memref<48x12xbf16, #tpu.memory_space<vmem>>, %arg8: memref<1x12xf32, #tpu.memory_space<vmem>>, %arg9: memref<12x48xbf16, #tpu.memory_space<vmem>>, %arg10: memref<1x48xf32, #tpu.memory_space<vmem>>, %arg11: memref<48x24xbf16, #tpu.memory_space<vmem>>, %arg12: memref<1x24xf32, #tpu.memory_space<vmem>>, %arg13: memref<32x24xf32, #tpu.memory_space<vmem>>, %arg14: memref<32x24xf32, #tpu.memory_space<vmem>>) attributes {dimension_semantics = [], scalar_prefetch = 0 : i64, scratch_operands = 0 : i64, tpu.core_type = #tpu.core_type<tc>} {
    %c0 = arith.constant 0 : index
    %c0_0 = arith.constant 0 : index
    %0 = vector.load %arg0[%c0, %c0_0] : memref<800x24xf32, #tpu.memory_space<vmem>>, vector<800x24xf32>
    %c0_1 = arith.constant 0 : index
    %c0_2 = arith.constant 0 : index
    %1 = vector.load %arg2[%c0_1, %c0_2] : memref<24x48xbf16, #tpu.memory_space<vmem>>, vector<24x48xbf16>
    %2 = arith.truncf %0 : vector<800x24xf32> to vector<800x24xbf16>
    %cst = arith.constant dense<0.000000e+00> : vector<800x48xf32>
    %3 = tpu.matmul %2, %1, %cst {dimension_numbers = #tpu.dot_dimension_numbers<[1], [0], [0], [1], [0, 0, 1, 1], [], []>} : vector<800x24xbf16>, vector<24x48xbf16>, vector<800x48xf32> -> vector<800x48xf32>
    %c0_3 = arith.constant 0 : index
    %c0_4 = arith.constant 0 : index
    %4 = vector.load %arg3[%c0_3, %c0_4] : memref<1x48xf32, #tpu.memory_space<vmem>>, vector<1x48xf32>
    %5 = vector.broadcast %4 : vector<1x48xf32> to vector<800x48xf32>
    %6 = arith.addf %3, %5 : vector<800x48xf32>
    %cst_5 = arith.constant 3.000000e+00 : f32
    %7 = vector.broadcast %cst_5 : f32 to vector<800x48xf32>
    %8 = arith.addf %6, %7 : vector<800x48xf32>
    %cst_6 = arith.constant 0.000000e+00 : f32
    %cst_7 = arith.constant 6.000000e+00 : f32
    %9 = vector.broadcast %cst_6 : f32 to vector<800x48xf32>
    %10 = arith.maximumf %9, %8 : vector<800x48xf32>
    %11 = vector.broadcast %cst_7 : f32 to vector<800x48xf32>
    %12 = arith.minimumf %11, %10 : vector<800x48xf32>
    %13 = arith.mulf %6, %12 : vector<800x48xf32>
    %cst_8 = arith.constant 0.166666672 : f32
    %14 = vector.broadcast %cst_8 : f32 to vector<800x48xf32>
    %15 = arith.mulf %13, %14 : vector<800x48xf32>
    %c0_9 = arith.constant 0 : index
    %c0_10 = arith.constant 0 : index
    %16 = vector.load %arg1[%c0_9, %c0_10] : memref<800x1xf32, #tpu.memory_space<vmem>>, vector<800x1xf32>
    %17 = vector.broadcast %16 : vector<800x1xf32> to vector<800x48xf32>
    %18 = arith.mulf %15, %17 : vector<800x48xf32>
    %19 = vector.extract_strided_slice %18 {offsets = [0, 0], sizes = [32, 48], strides = [1, 1]} : vector<800x48xf32> to vector<32x48xf32>
    %c0_11 = arith.constant 0 : index
    %c0_12 = arith.constant 0 : index
    %c0_13 = arith.constant 0 : index
    %20 = vector.load %arg4[%c0_11, %c0_12, %c0_13] : memref<25x1x48xf32, #tpu.memory_space<vmem>>, vector<1x1x48xf32>
    %21 = vector.shape_cast %20 : vector<1x1x48xf32> to vector<1x48xf32>
    %22 = vector.broadcast %21 : vector<1x48xf32> to vector<32x48xf32>
    %23 = arith.mulf %19, %22 : vector<32x48xf32>
    %24 = vector.extract_strided_slice %18 {offsets = [32, 0], sizes = [32, 48], strides = [1, 1]} : vector<800x48xf32> to vector<32x48xf32>
    %c1 = arith.constant 1 : index
    %c0_14 = arith.constant 0 : index
    %c0_15 = arith.constant 0 : index
    %25 = vector.load %arg4[%c1, %c0_14, %c0_15] : memref<25x1x48xf32, #tpu.memory_space<vmem>>, vector<1x1x48xf32>
    %26 = vector.shape_cast %25 : vector<1x1x48xf32> to vector<1x48xf32>
    %27 = vector.broadcast %26 : vector<1x48xf32> to vector<32x48xf32>
    %28 = arith.mulf %24, %27 : vector<32x48xf32>
    %29 = arith.addf %23, %28 : vector<32x48xf32>
    %30 = vector.extract_strided_slice %18 {offsets = [64, 0], sizes = [32, 48], strides = [1, 1]} : vector<800x48xf32> to vector<32x48xf32>
    %c2 = arith.constant 2 : index
    %c0_16 = arith.constant 0 : index
    %c0_17 = arith.constant 0 : index
    %31 = vector.load %arg4[%c2, %c0_16, %c0_17] : memref<25x1x48xf32, #tpu.memory_space<vmem>>, vector<1x1x48xf32>
    %32 = vector.shape_cast %31 : vector<1x1x48xf32> to vector<1x48xf32>
    %33 = vector.broadcast %32 : vector<1x48xf32> to vector<32x48xf32>
    %34 = arith.mulf %30, %33 : vector<32x48xf32>
    %35 = arith.addf %29, %34 : vector<32x48xf32>
    %36 = vector.extract_strided_slice %18 {offsets = [96, 0], sizes = [32, 48], strides = [1, 1]} : vector<800x48xf32> to vector<32x48xf32>
    %c3 = arith.constant 3 : index
    %c0_18 = arith.constant 0 : index
    %c0_19 = arith.constant 0 : index
    %37 = vector.load %arg4[%c3, %c0_18, %c0_19] : memref<25x1x48xf32, #tpu.memory_space<vmem>>, vector<1x1x48xf32>
    %38 = vector.shape_cast %37 : vector<1x1x48xf32> to vector<1x48xf32>
    %39 = vector.broadcast %38 : vector<1x48xf32> to vector<32x48xf32>
    %40 = arith.mulf %36, %39 : vector<32x48xf32>
    %41 = arith.addf %35, %40 : vector<32x48xf32>
    %42 = vector.extract_strided_slice %18 {offsets = [128, 0], sizes = [32, 48], strides = [1, 1]} : vector<800x48xf32> to vector<32x48xf32>
    %c4 = arith.constant 4 : index
    %c0_20 = arith.constant 0 : index
    %c0_21 = arith.constant 0 : index
    %43 = vector.load %arg4[%c4, %c0_20, %c0_21] : memref<25x1x48xf32, #tpu.memory_space<vmem>>, vector<1x1x48xf32>
    %44 = vector.shape_cast %43 : vector<1x1x48xf32> to vector<1x48xf32>
    %45 = vector.broadcast %44 : vector<1x48xf32> to vector<32x48xf32>
    %46 = arith.mulf %42, %45 : vector<32x48xf32>
    %47 = arith.addf %41, %46 : vector<32x48xf32>
    %48 = vector.extract_strided_slice %18 {offsets = [160, 0], sizes = [32, 48], strides = [1, 1]} : vector<800x48xf32> to vector<32x48xf32>
    %c5 = arith.constant 5 : index
    %c0_22 = arith.constant 0 : index
    %c0_23 = arith.constant 0 : index
    %49 = vector.load %arg4[%c5, %c0_22, %c0_23] : memref<25x1x48xf32, #tpu.memory_space<vmem>>, vector<1x1x48xf32>
    %50 = vector.shape_cast %49 : vector<1x1x48xf32> to vector<1x48xf32>
    %51 = vector.broadcast %50 : vector<1x48xf32> to vector<32x48xf32>
    %52 = arith.mulf %48, %51 : vector<32x48xf32>
    %53 = arith.addf %47, %52 : vector<32x48xf32>
    %54 = vector.extract_strided_slice %18 {offsets = [192, 0], sizes = [32, 48], strides = [1, 1]} : vector<800x48xf32> to vector<32x48xf32>
    %c6 = arith.constant 6 : index
    %c0_24 = arith.constant 0 : index
    %c0_25 = arith.constant 0 : index
    %55 = vector.load %arg4[%c6, %c0_24, %c0_25] : memref<25x1x48xf32, #tpu.memory_space<vmem>>, vector<1x1x48xf32>
    %56 = vector.shape_cast %55 : vector<1x1x48xf32> to vector<1x48xf32>
    %57 = vector.broadcast %56 : vector<1x48xf32> to vector<32x48xf32>
    %58 = arith.mulf %54, %57 : vector<32x48xf32>
    %59 = arith.addf %53, %58 : vector<32x48xf32>
    %60 = vector.extract_strided_slice %18 {offsets = [224, 0], sizes = [32, 48], strides = [1, 1]} : vector<800x48xf32> to vector<32x48xf32>
    %c7 = arith.constant 7 : index
    %c0_26 = arith.constant 0 : index
    %c0_27 = arith.constant 0 : index
    %61 = vector.load %arg4[%c7, %c0_26, %c0_27] : memref<25x1x48xf32, #tpu.memory_space<vmem>>, vector<1x1x48xf32>
    %62 = vector.shape_cast %61 : vector<1x1x48xf32> to vector<1x48xf32>
    %63 = vector.broadcast %62 : vector<1x48xf32> to vector<32x48xf32>
    %64 = arith.mulf %60, %63 : vector<32x48xf32>
    %65 = arith.addf %59, %64 : vector<32x48xf32>
    %66 = vector.extract_strided_slice %18 {offsets = [256, 0], sizes = [32, 48], strides = [1, 1]} : vector<800x48xf32> to vector<32x48xf32>
    %c8 = arith.constant 8 : index
    %c0_28 = arith.constant 0 : index
    %c0_29 = arith.constant 0 : index
    %67 = vector.load %arg4[%c8, %c0_28, %c0_29] : memref<25x1x48xf32, #tpu.memory_space<vmem>>, vector<1x1x48xf32>
    %68 = vector.shape_cast %67 : vector<1x1x48xf32> to vector<1x48xf32>
    %69 = vector.broadcast %68 : vector<1x48xf32> to vector<32x48xf32>
    %70 = arith.mulf %66, %69 : vector<32x48xf32>
    %71 = arith.addf %65, %70 : vector<32x48xf32>
    %72 = vector.extract_strided_slice %18 {offsets = [288, 0], sizes = [32, 48], strides = [1, 1]} : vector<800x48xf32> to vector<32x48xf32>
    %c9 = arith.constant 9 : index
    %c0_30 = arith.constant 0 : index
    %c0_31 = arith.constant 0 : index
    %73 = vector.load %arg4[%c9, %c0_30, %c0_31] : memref<25x1x48xf32, #tpu.memory_space<vmem>>, vector<1x1x48xf32>
    %74 = vector.shape_cast %73 : vector<1x1x48xf32> to vector<1x48xf32>
    %75 = vector.broadcast %74 : vector<1x48xf32> to vector<32x48xf32>
    %76 = arith.mulf %72, %75 : vector<32x48xf32>
    %77 = arith.addf %71, %76 : vector<32x48xf32>
    %78 = vector.extract_strided_slice %18 {offsets = [320, 0], sizes = [32, 48], strides = [1, 1]} : vector<800x48xf32> to vector<32x48xf32>
    %c10 = arith.constant 10 : index
    %c0_32 = arith.constant 0 : index
    %c0_33 = arith.constant 0 : index
    %79 = vector.load %arg4[%c10, %c0_32, %c0_33] : memref<25x1x48xf32, #tpu.memory_space<vmem>>, vector<1x1x48xf32>
    %80 = vector.shape_cast %79 : vector<1x1x48xf32> to vector<1x48xf32>
    %81 = vector.broadcast %80 : vector<1x48xf32> to vector<32x48xf32>
    %82 = arith.mulf %78, %81 : vector<32x48xf32>
    %83 = arith.addf %77, %82 : vector<32x48xf32>
    %84 = vector.extract_strided_slice %18 {offsets = [352, 0], sizes = [32, 48], strides = [1, 1]} : vector<800x48xf32> to vector<32x48xf32>
    %c11 = arith.constant 11 : index
    %c0_34 = arith.constant 0 : index
    %c0_35 = arith.constant 0 : index
    %85 = vector.load %arg4[%c11, %c0_34, %c0_35] : memref<25x1x48xf32, #tpu.memory_space<vmem>>, vector<1x1x48xf32>
    %86 = vector.shape_cast %85 : vector<1x1x48xf32> to vector<1x48xf32>
    %87 = vector.broadcast %86 : vector<1x48xf32> to vector<32x48xf32>
    %88 = arith.mulf %84, %87 : vector<32x48xf32>
    %89 = arith.addf %83, %88 : vector<32x48xf32>
    %90 = vector.extract_strided_slice %18 {offsets = [384, 0], sizes = [32, 48], strides = [1, 1]} : vector<800x48xf32> to vector<32x48xf32>
    %c12 = arith.constant 12 : index
    %c0_36 = arith.constant 0 : index
    %c0_37 = arith.constant 0 : index
    %91 = vector.load %arg4[%c12, %c0_36, %c0_37] : memref<25x1x48xf32, #tpu.memory_space<vmem>>, vector<1x1x48xf32>
    %92 = vector.shape_cast %91 : vector<1x1x48xf32> to vector<1x48xf32>
    %93 = vector.broadcast %92 : vector<1x48xf32> to vector<32x48xf32>
    %94 = arith.mulf %90, %93 : vector<32x48xf32>
    %95 = arith.addf %89, %94 : vector<32x48xf32>
    %96 = vector.extract_strided_slice %18 {offsets = [416, 0], sizes = [32, 48], strides = [1, 1]} : vector<800x48xf32> to vector<32x48xf32>
    %c13 = arith.constant 13 : index
    %c0_38 = arith.constant 0 : index
    %c0_39 = arith.constant 0 : index
    %97 = vector.load %arg4[%c13, %c0_38, %c0_39] : memref<25x1x48xf32, #tpu.memory_space<vmem>>, vector<1x1x48xf32>
    %98 = vector.shape_cast %97 : vector<1x1x48xf32> to vector<1x48xf32>
    %99 = vector.broadcast %98 : vector<1x48xf32> to vector<32x48xf32>
    %100 = arith.mulf %96, %99 : vector<32x48xf32>
    %101 = arith.addf %95, %100 : vector<32x48xf32>
    %102 = vector.extract_strided_slice %18 {offsets = [448, 0], sizes = [32, 48], strides = [1, 1]} : vector<800x48xf32> to vector<32x48xf32>
    %c14 = arith.constant 14 : index
    %c0_40 = arith.constant 0 : index
    %c0_41 = arith.constant 0 : index
    %103 = vector.load %arg4[%c14, %c0_40, %c0_41] : memref<25x1x48xf32, #tpu.memory_space<vmem>>, vector<1x1x48xf32>
    %104 = vector.shape_cast %103 : vector<1x1x48xf32> to vector<1x48xf32>
    %105 = vector.broadcast %104 : vector<1x48xf32> to vector<32x48xf32>
    %106 = arith.mulf %102, %105 : vector<32x48xf32>
    %107 = arith.addf %101, %106 : vector<32x48xf32>
    %108 = vector.extract_strided_slice %18 {offsets = [480, 0], sizes = [32, 48], strides = [1, 1]} : vector<800x48xf32> to vector<32x48xf32>
    %c15 = arith.constant 15 : index
    %c0_42 = arith.constant 0 : index
    %c0_43 = arith.constant 0 : index
    %109 = vector.load %arg4[%c15, %c0_42, %c0_43] : memref<25x1x48xf32, #tpu.memory_space<vmem>>, vector<1x1x48xf32>
    %110 = vector.shape_cast %109 : vector<1x1x48xf32> to vector<1x48xf32>
    %111 = vector.broadcast %110 : vector<1x48xf32> to vector<32x48xf32>
    %112 = arith.mulf %108, %111 : vector<32x48xf32>
    %113 = arith.addf %107, %112 : vector<32x48xf32>
    %114 = vector.extract_strided_slice %18 {offsets = [512, 0], sizes = [32, 48], strides = [1, 1]} : vector<800x48xf32> to vector<32x48xf32>
    %c16 = arith.constant 16 : index
    %c0_44 = arith.constant 0 : index
    %c0_45 = arith.constant 0 : index
    %115 = vector.load %arg4[%c16, %c0_44, %c0_45] : memref<25x1x48xf32, #tpu.memory_space<vmem>>, vector<1x1x48xf32>
    %116 = vector.shape_cast %115 : vector<1x1x48xf32> to vector<1x48xf32>
    %117 = vector.broadcast %116 : vector<1x48xf32> to vector<32x48xf32>
    %118 = arith.mulf %114, %117 : vector<32x48xf32>
    %119 = arith.addf %113, %118 : vector<32x48xf32>
    %120 = vector.extract_strided_slice %18 {offsets = [544, 0], sizes = [32, 48], strides = [1, 1]} : vector<800x48xf32> to vector<32x48xf32>
    %c17 = arith.constant 17 : index
    %c0_46 = arith.constant 0 : index
    %c0_47 = arith.constant 0 : index
    %121 = vector.load %arg4[%c17, %c0_46, %c0_47] : memref<25x1x48xf32, #tpu.memory_space<vmem>>, vector<1x1x48xf32>
    %122 = vector.shape_cast %121 : vector<1x1x48xf32> to vector<1x48xf32>
    %123 = vector.broadcast %122 : vector<1x48xf32> to vector<32x48xf32>
    %124 = arith.mulf %120, %123 : vector<32x48xf32>
    %125 = arith.addf %119, %124 : vector<32x48xf32>
    %126 = vector.extract_strided_slice %18 {offsets = [576, 0], sizes = [32, 48], strides = [1, 1]} : vector<800x48xf32> to vector<32x48xf32>
    %c18 = arith.constant 18 : index
    %c0_48 = arith.constant 0 : index
    %c0_49 = arith.constant 0 : index
    %127 = vector.load %arg4[%c18, %c0_48, %c0_49] : memref<25x1x48xf32, #tpu.memory_space<vmem>>, vector<1x1x48xf32>
    %128 = vector.shape_cast %127 : vector<1x1x48xf32> to vector<1x48xf32>
    %129 = vector.broadcast %128 : vector<1x48xf32> to vector<32x48xf32>
    %130 = arith.mulf %126, %129 : vector<32x48xf32>
    %131 = arith.addf %125, %130 : vector<32x48xf32>
    %132 = vector.extract_strided_slice %18 {offsets = [608, 0], sizes = [32, 48], strides = [1, 1]} : vector<800x48xf32> to vector<32x48xf32>
    %c19 = arith.constant 19 : index
    %c0_50 = arith.constant 0 : index
    %c0_51 = arith.constant 0 : index
    %133 = vector.load %arg4[%c19, %c0_50, %c0_51] : memref<25x1x48xf32, #tpu.memory_space<vmem>>, vector<1x1x48xf32>
    %134 = vector.shape_cast %133 : vector<1x1x48xf32> to vector<1x48xf32>
    %135 = vector.broadcast %134 : vector<1x48xf32> to vector<32x48xf32>
    %136 = arith.mulf %132, %135 : vector<32x48xf32>
    %137 = arith.addf %131, %136 : vector<32x48xf32>
    %138 = vector.extract_strided_slice %18 {offsets = [640, 0], sizes = [32, 48], strides = [1, 1]} : vector<800x48xf32> to vector<32x48xf32>
    %c20 = arith.constant 20 : index
    %c0_52 = arith.constant 0 : index
    %c0_53 = arith.constant 0 : index
    %139 = vector.load %arg4[%c20, %c0_52, %c0_53] : memref<25x1x48xf32, #tpu.memory_space<vmem>>, vector<1x1x48xf32>
    %140 = vector.shape_cast %139 : vector<1x1x48xf32> to vector<1x48xf32>
    %141 = vector.broadcast %140 : vector<1x48xf32> to vector<32x48xf32>
    %142 = arith.mulf %138, %141 : vector<32x48xf32>
    %143 = arith.addf %137, %142 : vector<32x48xf32>
    %144 = vector.extract_strided_slice %18 {offsets = [672, 0], sizes = [32, 48], strides = [1, 1]} : vector<800x48xf32> to vector<32x48xf32>
    %c21 = arith.constant 21 : index
    %c0_54 = arith.constant 0 : index
    %c0_55 = arith.constant 0 : index
    %145 = vector.load %arg4[%c21, %c0_54, %c0_55] : memref<25x1x48xf32, #tpu.memory_space<vmem>>, vector<1x1x48xf32>
    %146 = vector.shape_cast %145 : vector<1x1x48xf32> to vector<1x48xf32>
    %147 = vector.broadcast %146 : vector<1x48xf32> to vector<32x48xf32>
    %148 = arith.mulf %144, %147 : vector<32x48xf32>
    %149 = arith.addf %143, %148 : vector<32x48xf32>
    %150 = vector.extract_strided_slice %18 {offsets = [704, 0], sizes = [32, 48], strides = [1, 1]} : vector<800x48xf32> to vector<32x48xf32>
    %c22 = arith.constant 22 : index
    %c0_56 = arith.constant 0 : index
    %c0_57 = arith.constant 0 : index
    %151 = vector.load %arg4[%c22, %c0_56, %c0_57] : memref<25x1x48xf32, #tpu.memory_space<vmem>>, vector<1x1x48xf32>
    %152 = vector.shape_cast %151 : vector<1x1x48xf32> to vector<1x48xf32>
    %153 = vector.broadcast %152 : vector<1x48xf32> to vector<32x48xf32>
    %154 = arith.mulf %150, %153 : vector<32x48xf32>
    %155 = arith.addf %149, %154 : vector<32x48xf32>
    %156 = vector.extract_strided_slice %18 {offsets = [736, 0], sizes = [32, 48], strides = [1, 1]} : vector<800x48xf32> to vector<32x48xf32>
    %c23 = arith.constant 23 : index
    %c0_58 = arith.constant 0 : index
    %c0_59 = arith.constant 0 : index
    %157 = vector.load %arg4[%c23, %c0_58, %c0_59] : memref<25x1x48xf32, #tpu.memory_space<vmem>>, vector<1x1x48xf32>
    %158 = vector.shape_cast %157 : vector<1x1x48xf32> to vector<1x48xf32>
    %159 = vector.broadcast %158 : vector<1x48xf32> to vector<32x48xf32>
    %160 = arith.mulf %156, %159 : vector<32x48xf32>
    %161 = arith.addf %155, %160 : vector<32x48xf32>
    %162 = vector.extract_strided_slice %18 {offsets = [768, 0], sizes = [32, 48], strides = [1, 1]} : vector<800x48xf32> to vector<32x48xf32>
    %c24 = arith.constant 24 : index
    %c0_60 = arith.constant 0 : index
    %c0_61 = arith.constant 0 : index
    %163 = vector.load %arg4[%c24, %c0_60, %c0_61] : memref<25x1x48xf32, #tpu.memory_space<vmem>>, vector<1x1x48xf32>
    %164 = vector.shape_cast %163 : vector<1x1x48xf32> to vector<1x48xf32>
    %165 = vector.broadcast %164 : vector<1x48xf32> to vector<32x48xf32>
    %166 = arith.mulf %162, %165 : vector<32x48xf32>
    %167 = arith.addf %161, %166 : vector<32x48xf32>
    %c0_62 = arith.constant 0 : index
    %c0_63 = arith.constant 0 : index
    %168 = vector.load %arg5[%c0_62, %c0_63] : memref<1x48xf32, #tpu.memory_space<vmem>>, vector<1x48xf32>
    %169 = vector.broadcast %168 : vector<1x48xf32> to vector<32x48xf32>
    %170 = arith.addf %167, %169 : vector<32x48xf32>
    %c0_64 = arith.constant 0 : index
    %c0_65 = arith.constant 0 : index
    %171 = vector.load %arg6[%c0_64, %c0_65] : memref<32x2xf32, #tpu.memory_space<vmem>>, vector<32x2xf32>
    %c0_66 = arith.constant 0 : index
    %c0_67 = arith.constant 0 : index
    %172 = vector.load %arg7[%c0_66, %c0_67] : memref<48x12xbf16, #tpu.memory_space<vmem>>, vector<48x12xbf16>
    %c0_68 = arith.constant 0 : index
    %c0_69 = arith.constant 0 : index
    %173 = vector.load %arg8[%c0_68, %c0_69] : memref<1x12xf32, #tpu.memory_space<vmem>>, vector<1x12xf32>
    %c0_70 = arith.constant 0 : index
    %c0_71 = arith.constant 0 : index
    %174 = vector.load %arg9[%c0_70, %c0_71] : memref<12x48xbf16, #tpu.memory_space<vmem>>, vector<12x48xbf16>
    %c0_72 = arith.constant 0 : index
    %c0_73 = arith.constant 0 : index
    %175 = vector.load %arg10[%c0_72, %c0_73] : memref<1x48xf32, #tpu.memory_space<vmem>>, vector<1x48xf32>
    %176 = vector.extract_strided_slice %170 {offsets = [0, 0], sizes = [16, 48], strides = [1, 1]} : vector<32x48xf32> to vector<16x48xf32>
    %cst_74 = arith.constant dense<0.000000e+00> : vector<48xf32>
    %177 = vector.multi_reduction <add>, %176, %cst_74 [0] : vector<16x48xf32> to vector<48xf32>
    %178 = vector.shape_cast %177 : vector<48xf32> to vector<1x48xf32>
    %cst_75 = arith.constant 6.250000e-02 : f32
    %179 = vector.broadcast %cst_75 : f32 to vector<1x48xf32>
    %180 = arith.mulf %178, %179 : vector<1x48xf32>
    %181 = arith.truncf %180 : vector<1x48xf32> to vector<1x48xbf16>
    %cst_76 = arith.constant dense<0.000000e+00> : vector<1x12xf32>
    %182 = tpu.matmul %181, %172, %cst_76 {dimension_numbers = #tpu.dot_dimension_numbers<[1], [0], [0], [1], [0, 0, 1, 1], [], []>} : vector<1x48xbf16>, vector<48x12xbf16>, vector<1x12xf32> -> vector<1x12xf32>
    %183 = arith.addf %182, %173 : vector<1x12xf32>
    %cst_77 = arith.constant 0.000000e+00 : f32
    %184 = vector.broadcast %cst_77 : f32 to vector<1x12xf32>
    %185 = arith.maximumf %183, %184 : vector<1x12xf32>
    %186 = arith.truncf %185 : vector<1x12xf32> to vector<1x12xbf16>
    %cst_78 = arith.constant dense<0.000000e+00> : vector<1x48xf32>
    %187 = tpu.matmul %186, %174, %cst_78 {dimension_numbers = #tpu.dot_dimension_numbers<[1], [0], [0], [1], [0, 0, 1, 1], [], []>} : vector<1x12xbf16>, vector<12x48xbf16>, vector<1x48xf32> -> vector<1x48xf32>
    %188 = arith.addf %187, %175 : vector<1x48xf32>
    %cst_79 = arith.constant 3.000000e+00 : f32
    %189 = vector.broadcast %cst_79 : f32 to vector<1x48xf32>
    %190 = arith.addf %188, %189 : vector<1x48xf32>
    %cst_80 = arith.constant 0.000000e+00 : f32
    %cst_81 = arith.constant 6.000000e+00 : f32
    %191 = vector.broadcast %cst_80 : f32 to vector<1x48xf32>
    %192 = arith.maximumf %191, %190 : vector<1x48xf32>
    %193 = vector.broadcast %cst_81 : f32 to vector<1x48xf32>
    %194 = arith.minimumf %193, %192 : vector<1x48xf32>
    %cst_82 = arith.constant 0.166666672 : f32
    %195 = vector.broadcast %cst_82 : f32 to vector<1x48xf32>
    %196 = arith.mulf %194, %195 : vector<1x48xf32>
    %197 = vector.extract_strided_slice %171 {offsets = [0, 0], sizes = [32, 1], strides = [1, 1]} : vector<32x2xf32> to vector<32x1xf32>
    %198 = vector.broadcast %197 : vector<32x1xf32> to vector<32x48xf32>
    %199 = vector.broadcast %196 : vector<1x48xf32> to vector<32x48xf32>
    %200 = arith.mulf %198, %199 : vector<32x48xf32>
    %201 = vector.extract_strided_slice %170 {offsets = [16, 0], sizes = [16, 48], strides = [1, 1]} : vector<32x48xf32> to vector<16x48xf32>
    %cst_83 = arith.constant dense<0.000000e+00> : vector<48xf32>
    %202 = vector.multi_reduction <add>, %201, %cst_83 [0] : vector<16x48xf32> to vector<48xf32>
    %203 = vector.shape_cast %202 : vector<48xf32> to vector<1x48xf32>
    %cst_84 = arith.constant 6.250000e-02 : f32
    %204 = vector.broadcast %cst_84 : f32 to vector<1x48xf32>
    %205 = arith.mulf %203, %204 : vector<1x48xf32>
    %206 = arith.truncf %205 : vector<1x48xf32> to vector<1x48xbf16>
    %cst_85 = arith.constant dense<0.000000e+00> : vector<1x12xf32>
    %207 = tpu.matmul %206, %172, %cst_85 {dimension_numbers = #tpu.dot_dimension_numbers<[1], [0], [0], [1], [0, 0, 1, 1], [], []>} : vector<1x48xbf16>, vector<48x12xbf16>, vector<1x12xf32> -> vector<1x12xf32>
    %208 = arith.addf %207, %173 : vector<1x12xf32>
    %cst_86 = arith.constant 0.000000e+00 : f32
    %209 = vector.broadcast %cst_86 : f32 to vector<1x12xf32>
    %210 = arith.maximumf %208, %209 : vector<1x12xf32>
    %211 = arith.truncf %210 : vector<1x12xf32> to vector<1x12xbf16>
    %cst_87 = arith.constant dense<0.000000e+00> : vector<1x48xf32>
    %212 = tpu.matmul %211, %174, %cst_87 {dimension_numbers = #tpu.dot_dimension_numbers<[1], [0], [0], [1], [0, 0, 1, 1], [], []>} : vector<1x12xbf16>, vector<12x48xbf16>, vector<1x48xf32> -> vector<1x48xf32>
    %213 = arith.addf %212, %175 : vector<1x48xf32>
    %cst_88 = arith.constant 3.000000e+00 : f32
    %214 = vector.broadcast %cst_88 : f32 to vector<1x48xf32>
    %215 = arith.addf %213, %214 : vector<1x48xf32>
    %cst_89 = arith.constant 0.000000e+00 : f32
    %cst_90 = arith.constant 6.000000e+00 : f32
    %216 = vector.broadcast %cst_89 : f32 to vector<1x48xf32>
    %217 = arith.maximumf %216, %215 : vector<1x48xf32>
    %218 = vector.broadcast %cst_90 : f32 to vector<1x48xf32>
    %219 = arith.minimumf %218, %217 : vector<1x48xf32>
    %cst_91 = arith.constant 0.166666672 : f32
    %220 = vector.broadcast %cst_91 : f32 to vector<1x48xf32>
    %221 = arith.mulf %219, %220 : vector<1x48xf32>
    %222 = vector.extract_strided_slice %171 {offsets = [0, 1], sizes = [32, 1], strides = [1, 1]} : vector<32x2xf32> to vector<32x1xf32>
    %223 = vector.broadcast %222 : vector<32x1xf32> to vector<32x48xf32>
    %224 = vector.broadcast %221 : vector<1x48xf32> to vector<32x48xf32>
    %225 = arith.mulf %223, %224 : vector<32x48xf32>
    %226 = arith.addf %200, %225 : vector<32x48xf32>
    %227 = arith.mulf %170, %226 : vector<32x48xf32>
    %cst_92 = arith.constant 3.000000e+00 : f32
    %228 = vector.broadcast %cst_92 : f32 to vector<32x48xf32>
    %229 = arith.addf %227, %228 : vector<32x48xf32>
    %cst_93 = arith.constant 0.000000e+00 : f32
    %cst_94 = arith.constant 6.000000e+00 : f32
    %230 = vector.broadcast %cst_93 : f32 to vector<32x48xf32>
    %231 = arith.maximumf %230, %229 : vector<32x48xf32>
    %232 = vector.broadcast %cst_94 : f32 to vector<32x48xf32>
    %233 = arith.minimumf %232, %231 : vector<32x48xf32>
    %234 = arith.mulf %227, %233 : vector<32x48xf32>
    %cst_95 = arith.constant 0.166666672 : f32
    %235 = vector.broadcast %cst_95 : f32 to vector<32x48xf32>
    %236 = arith.mulf %234, %235 : vector<32x48xf32>
    %c0_96 = arith.constant 0 : index
    %c0_97 = arith.constant 0 : index
    %237 = vector.load %arg11[%c0_96, %c0_97] : memref<48x24xbf16, #tpu.memory_space<vmem>>, vector<48x24xbf16>
    %238 = arith.truncf %236 : vector<32x48xf32> to vector<32x48xbf16>
    %cst_98 = arith.constant dense<0.000000e+00> : vector<32x24xf32>
    %239 = tpu.matmul %238, %237, %cst_98 {dimension_numbers = #tpu.dot_dimension_numbers<[1], [0], [0], [1], [0, 0, 1, 1], [], []>} : vector<32x48xbf16>, vector<48x24xbf16>, vector<32x24xf32> -> vector<32x24xf32>
    %c0_99 = arith.constant 0 : index
    %c0_100 = arith.constant 0 : index
    %240 = vector.load %arg12[%c0_99, %c0_100] : memref<1x24xf32, #tpu.memory_space<vmem>>, vector<1x24xf32>
    %241 = vector.broadcast %240 : vector<1x24xf32> to vector<32x24xf32>
    %242 = arith.addf %239, %241 : vector<32x24xf32>
    %c0_101 = arith.constant 0 : index
    %c0_102 = arith.constant 0 : index
    %243 = vector.load %arg13[%c0_101, %c0_102] : memref<32x24xf32, #tpu.memory_space<vmem>>, vector<32x24xf32>
    %244 = arith.addf %242, %243 : vector<32x24xf32>
    %c0_103 = arith.constant 0 : index
    %c0_104 = arith.constant 0 : index
    %245 = vector.load %arg14[%c0_103, %c0_104] : memref<32x24xf32, #tpu.memory_space<vmem>>, vector<32x24xf32>
    tpu.vector_store %arg14[%c0_103, %c0_104], %244 {strides = array<i32>} : memref<32x24xf32, #tpu.memory_space<vmem>>, vector<32x24xf32>,
    return
  }
}

module attributes {stable_mosaic.version = 11 : i64} {
  func.func @kernel(%arg0: memref<72x24xf32, #tpu.memory_space<vmem>>, %arg1: memref<72x1xf32, #tpu.memory_space<vmem>>, %arg2: memref<24x64xbf16, #tpu.memory_space<vmem>>, %arg3: memref<1x64xf32, #tpu.memory_space<vmem>>, %arg4: memref<9x1x64xf32, #tpu.memory_space<vmem>>, %arg5: memref<1x64xf32, #tpu.memory_space<vmem>>, %arg6: memref<8x2xf32, #tpu.memory_space<vmem>>, %arg7: memref<64x16xbf16, #tpu.memory_space<vmem>>, %arg8: memref<1x16xf32, #tpu.memory_space<vmem>>, %arg9: memref<16x64xbf16, #tpu.memory_space<vmem>>, %arg10: memref<1x64xf32, #tpu.memory_space<vmem>>, %arg11: memref<64x40xbf16, #tpu.memory_space<vmem>>, %arg12: memref<1x40xf32, #tpu.memory_space<vmem>>, %arg13: memref<8x40xf32, #tpu.memory_space<vmem>>) attributes {dimension_semantics = [], scalar_prefetch = 0 : i64, scratch_operands = 0 : i64, tpu.core_type = #tpu.core_type<tc>} {
    %c0 = arith.constant 0 : index
    %c0_0 = arith.constant 0 : index
    %0 = vector.load %arg0[%c0, %c0_0] : memref<72x24xf32, #tpu.memory_space<vmem>>, vector<72x24xf32>
    %c0_1 = arith.constant 0 : index
    %c0_2 = arith.constant 0 : index
    %1 = vector.load %arg2[%c0_1, %c0_2] : memref<24x64xbf16, #tpu.memory_space<vmem>>, vector<24x64xbf16>
    %2 = arith.truncf %0 : vector<72x24xf32> to vector<72x24xbf16>
    %cst = arith.constant dense<0.000000e+00> : vector<72x64xf32>
    %3 = tpu.matmul %2, %1, %cst {dimension_numbers = #tpu.dot_dimension_numbers<[1], [0], [0], [1], [0, 0, 1, 1], [], []>} : vector<72x24xbf16>, vector<24x64xbf16>, vector<72x64xf32> -> vector<72x64xf32>
    %c0_3 = arith.constant 0 : index
    %c0_4 = arith.constant 0 : index
    %4 = vector.load %arg3[%c0_3, %c0_4] : memref<1x64xf32, #tpu.memory_space<vmem>>, vector<1x64xf32>
    %5 = vector.broadcast %4 : vector<1x64xf32> to vector<72x64xf32>
    %6 = arith.addf %3, %5 : vector<72x64xf32>
    %cst_5 = arith.constant 3.000000e+00 : f32
    %7 = vector.broadcast %cst_5 : f32 to vector<72x64xf32>
    %8 = arith.addf %6, %7 : vector<72x64xf32>
    %cst_6 = arith.constant 0.000000e+00 : f32
    %cst_7 = arith.constant 6.000000e+00 : f32
    %9 = vector.broadcast %cst_6 : f32 to vector<72x64xf32>
    %10 = arith.maximumf %9, %8 : vector<72x64xf32>
    %11 = vector.broadcast %cst_7 : f32 to vector<72x64xf32>
    %12 = arith.minimumf %11, %10 : vector<72x64xf32>
    %13 = arith.mulf %6, %12 : vector<72x64xf32>
    %cst_8 = arith.constant 0.166666672 : f32
    %14 = vector.broadcast %cst_8 : f32 to vector<72x64xf32>
    %15 = arith.mulf %13, %14 : vector<72x64xf32>
    %c0_9 = arith.constant 0 : index
    %c0_10 = arith.constant 0 : index
    %16 = vector.load %arg1[%c0_9, %c0_10] : memref<72x1xf32, #tpu.memory_space<vmem>>, vector<72x1xf32>
    %17 = vector.broadcast %16 : vector<72x1xf32> to vector<72x64xf32>
    %18 = arith.mulf %15, %17 : vector<72x64xf32>
    %19 = vector.extract_strided_slice %18 {offsets = [0, 0], sizes = [8, 64], strides = [1, 1]} : vector<72x64xf32> to vector<8x64xf32>
    %c0_11 = arith.constant 0 : index
    %c0_12 = arith.constant 0 : index
    %c0_13 = arith.constant 0 : index
    %20 = vector.load %arg4[%c0_11, %c0_12, %c0_13] : memref<9x1x64xf32, #tpu.memory_space<vmem>>, vector<1x1x64xf32>
    %21 = vector.shape_cast %20 : vector<1x1x64xf32> to vector<1x64xf32>
    %22 = vector.broadcast %21 : vector<1x64xf32> to vector<8x64xf32>
    %23 = arith.mulf %19, %22 : vector<8x64xf32>
    %24 = vector.extract_strided_slice %18 {offsets = [8, 0], sizes = [8, 64], strides = [1, 1]} : vector<72x64xf32> to vector<8x64xf32>
    %c1 = arith.constant 1 : index
    %c0_14 = arith.constant 0 : index
    %c0_15 = arith.constant 0 : index
    %25 = vector.load %arg4[%c1, %c0_14, %c0_15] : memref<9x1x64xf32, #tpu.memory_space<vmem>>, vector<1x1x64xf32>
    %26 = vector.shape_cast %25 : vector<1x1x64xf32> to vector<1x64xf32>
    %27 = vector.broadcast %26 : vector<1x64xf32> to vector<8x64xf32>
    %28 = arith.mulf %24, %27 : vector<8x64xf32>
    %29 = arith.addf %23, %28 : vector<8x64xf32>
    %30 = vector.extract_strided_slice %18 {offsets = [16, 0], sizes = [8, 64], strides = [1, 1]} : vector<72x64xf32> to vector<8x64xf32>
    %c2 = arith.constant 2 : index
    %c0_16 = arith.constant 0 : index
    %c0_17 = arith.constant 0 : index
    %31 = vector.load %arg4[%c2, %c0_16, %c0_17] : memref<9x1x64xf32, #tpu.memory_space<vmem>>, vector<1x1x64xf32>
    %32 = vector.shape_cast %31 : vector<1x1x64xf32> to vector<1x64xf32>
    %33 = vector.broadcast %32 : vector<1x64xf32> to vector<8x64xf32>
    %34 = arith.mulf %30, %33 : vector<8x64xf32>
    %35 = arith.addf %29, %34 : vector<8x64xf32>
    %36 = vector.extract_strided_slice %18 {offsets = [24, 0], sizes = [8, 64], strides = [1, 1]} : vector<72x64xf32> to vector<8x64xf32>
    %c3 = arith.constant 3 : index
    %c0_18 = arith.constant 0 : index
    %c0_19 = arith.constant 0 : index
    %37 = vector.load %arg4[%c3, %c0_18, %c0_19] : memref<9x1x64xf32, #tpu.memory_space<vmem>>, vector<1x1x64xf32>
    %38 = vector.shape_cast %37 : vector<1x1x64xf32> to vector<1x64xf32>
    %39 = vector.broadcast %38 : vector<1x64xf32> to vector<8x64xf32>
    %40 = arith.mulf %36, %39 : vector<8x64xf32>
    %41 = arith.addf %35, %40 : vector<8x64xf32>
    %42 = vector.extract_strided_slice %18 {offsets = [32, 0], sizes = [8, 64], strides = [1, 1]} : vector<72x64xf32> to vector<8x64xf32>
    %c4 = arith.constant 4 : index
    %c0_20 = arith.constant 0 : index
    %c0_21 = arith.constant 0 : index
    %43 = vector.load %arg4[%c4, %c0_20, %c0_21] : memref<9x1x64xf32, #tpu.memory_space<vmem>>, vector<1x1x64xf32>
    %44 = vector.shape_cast %43 : vector<1x1x64xf32> to vector<1x64xf32>
    %45 = vector.broadcast %44 : vector<1x64xf32> to vector<8x64xf32>
    %46 = arith.mulf %42, %45 : vector<8x64xf32>
    %47 = arith.addf %41, %46 : vector<8x64xf32>
    %48 = vector.extract_strided_slice %18 {offsets = [40, 0], sizes = [8, 64], strides = [1, 1]} : vector<72x64xf32> to vector<8x64xf32>
    %c5 = arith.constant 5 : index
    %c0_22 = arith.constant 0 : index
    %c0_23 = arith.constant 0 : index
    %49 = vector.load %arg4[%c5, %c0_22, %c0_23] : memref<9x1x64xf32, #tpu.memory_space<vmem>>, vector<1x1x64xf32>
    %50 = vector.shape_cast %49 : vector<1x1x64xf32> to vector<1x64xf32>
    %51 = vector.broadcast %50 : vector<1x64xf32> to vector<8x64xf32>
    %52 = arith.mulf %48, %51 : vector<8x64xf32>
    %53 = arith.addf %47, %52 : vector<8x64xf32>
    %54 = vector.extract_strided_slice %18 {offsets = [48, 0], sizes = [8, 64], strides = [1, 1]} : vector<72x64xf32> to vector<8x64xf32>
    %c6 = arith.constant 6 : index
    %c0_24 = arith.constant 0 : index
    %c0_25 = arith.constant 0 : index
    %55 = vector.load %arg4[%c6, %c0_24, %c0_25] : memref<9x1x64xf32, #tpu.memory_space<vmem>>, vector<1x1x64xf32>
    %56 = vector.shape_cast %55 : vector<1x1x64xf32> to vector<1x64xf32>
    %57 = vector.broadcast %56 : vector<1x64xf32> to vector<8x64xf32>
    %58 = arith.mulf %54, %57 : vector<8x64xf32>
    %59 = arith.addf %53, %58 : vector<8x64xf32>
    %60 = vector.extract_strided_slice %18 {offsets = [56, 0], sizes = [8, 64], strides = [1, 1]} : vector<72x64xf32> to vector<8x64xf32>
    %c7 = arith.constant 7 : index
    %c0_26 = arith.constant 0 : index
    %c0_27 = arith.constant 0 : index
    %61 = vector.load %arg4[%c7, %c0_26, %c0_27] : memref<9x1x64xf32, #tpu.memory_space<vmem>>, vector<1x1x64xf32>
    %62 = vector.shape_cast %61 : vector<1x1x64xf32> to vector<1x64xf32>
    %63 = vector.broadcast %62 : vector<1x64xf32> to vector<8x64xf32>
    %64 = arith.mulf %60, %63 : vector<8x64xf32>
    %65 = arith.addf %59, %64 : vector<8x64xf32>
    %66 = vector.extract_strided_slice %18 {offsets = [64, 0], sizes = [8, 64], strides = [1, 1]} : vector<72x64xf32> to vector<8x64xf32>
    %c8 = arith.constant 8 : index
    %c0_28 = arith.constant 0 : index
    %c0_29 = arith.constant 0 : index
    %67 = vector.load %arg4[%c8, %c0_28, %c0_29] : memref<9x1x64xf32, #tpu.memory_space<vmem>>, vector<1x1x64xf32>
    %68 = vector.shape_cast %67 : vector<1x1x64xf32> to vector<1x64xf32>
    %69 = vector.broadcast %68 : vector<1x64xf32> to vector<8x64xf32>
    %70 = arith.mulf %66, %69 : vector<8x64xf32>
    %71 = arith.addf %65, %70 : vector<8x64xf32>
    %c0_30 = arith.constant 0 : index
    %c0_31 = arith.constant 0 : index
    %72 = vector.load %arg5[%c0_30, %c0_31] : memref<1x64xf32, #tpu.memory_space<vmem>>, vector<1x64xf32>
    %73 = vector.broadcast %72 : vector<1x64xf32> to vector<8x64xf32>
    %74 = arith.addf %71, %73 : vector<8x64xf32>
    %c0_32 = arith.constant 0 : index
    %c0_33 = arith.constant 0 : index
    %75 = vector.load %arg6[%c0_32, %c0_33] : memref<8x2xf32, #tpu.memory_space<vmem>>, vector<8x2xf32>
    %c0_34 = arith.constant 0 : index
    %c0_35 = arith.constant 0 : index
    %76 = vector.load %arg7[%c0_34, %c0_35] : memref<64x16xbf16, #tpu.memory_space<vmem>>, vector<64x16xbf16>
    %c0_36 = arith.constant 0 : index
    %c0_37 = arith.constant 0 : index
    %77 = vector.load %arg8[%c0_36, %c0_37] : memref<1x16xf32, #tpu.memory_space<vmem>>, vector<1x16xf32>
    %c0_38 = arith.constant 0 : index
    %c0_39 = arith.constant 0 : index
    %78 = vector.load %arg9[%c0_38, %c0_39] : memref<16x64xbf16, #tpu.memory_space<vmem>>, vector<16x64xbf16>
    %c0_40 = arith.constant 0 : index
    %c0_41 = arith.constant 0 : index
    %79 = vector.load %arg10[%c0_40, %c0_41] : memref<1x64xf32, #tpu.memory_space<vmem>>, vector<1x64xf32>
    %80 = vector.extract_strided_slice %74 {offsets = [0, 0], sizes = [4, 64], strides = [1, 1]} : vector<8x64xf32> to vector<4x64xf32>
    %cst_42 = arith.constant dense<0.000000e+00> : vector<64xf32>
    %81 = vector.multi_reduction <add>, %80, %cst_42 [0] : vector<4x64xf32> to vector<64xf32>
    %82 = vector.shape_cast %81 : vector<64xf32> to vector<1x64xf32>
    %cst_43 = arith.constant 2.500000e-01 : f32
    %83 = vector.broadcast %cst_43 : f32 to vector<1x64xf32>
    %84 = arith.mulf %82, %83 : vector<1x64xf32>
    %85 = arith.truncf %84 : vector<1x64xf32> to vector<1x64xbf16>
    %cst_44 = arith.constant dense<0.000000e+00> : vector<1x16xf32>
    %86 = tpu.matmul %85, %76, %cst_44 {dimension_numbers = #tpu.dot_dimension_numbers<[1], [0], [0], [1], [0, 0, 1, 1], [], []>} : vector<1x64xbf16>, vector<64x16xbf16>, vector<1x16xf32> -> vector<1x16xf32>
    %87 = arith.addf %86, %77 : vector<1x16xf32>
    %cst_45 = arith.constant 0.000000e+00 : f32
    %88 = vector.broadcast %cst_45 : f32 to vector<1x16xf32>
    %89 = arith.maximumf %87, %88 : vector<1x16xf32>
    %90 = arith.truncf %89 : vector<1x16xf32> to vector<1x16xbf16>
    %cst_46 = arith.constant dense<0.000000e+00> : vector<1x64xf32>
    %91 = tpu.matmul %90, %78, %cst_46 {dimension_numbers = #tpu.dot_dimension_numbers<[1], [0], [0], [1], [0, 0, 1, 1], [], []>} : vector<1x16xbf16>, vector<16x64xbf16>, vector<1x64xf32> -> vector<1x64xf32>
    %92 = arith.addf %91, %79 : vector<1x64xf32>
    %cst_47 = arith.constant 3.000000e+00 : f32
    %93 = vector.broadcast %cst_47 : f32 to vector<1x64xf32>
    %94 = arith.addf %92, %93 : vector<1x64xf32>
    %cst_48 = arith.constant 0.000000e+00 : f32
    %cst_49 = arith.constant 6.000000e+00 : f32
    %95 = vector.broadcast %cst_48 : f32 to vector<1x64xf32>
    %96 = arith.maximumf %95, %94 : vector<1x64xf32>
    %97 = vector.broadcast %cst_49 : f32 to vector<1x64xf32>
    %98 = arith.minimumf %97, %96 : vector<1x64xf32>
    %cst_50 = arith.constant 0.166666672 : f32
    %99 = vector.broadcast %cst_50 : f32 to vector<1x64xf32>
    %100 = arith.mulf %98, %99 : vector<1x64xf32>
    %101 = vector.extract_strided_slice %75 {offsets = [0, 0], sizes = [8, 1], strides = [1, 1]} : vector<8x2xf32> to vector<8x1xf32>
    %102 = vector.broadcast %101 : vector<8x1xf32> to vector<8x64xf32>
    %103 = vector.broadcast %100 : vector<1x64xf32> to vector<8x64xf32>
    %104 = arith.mulf %102, %103 : vector<8x64xf32>
    %105 = vector.extract_strided_slice %74 {offsets = [4, 0], sizes = [4, 64], strides = [1, 1]} : vector<8x64xf32> to vector<4x64xf32>
    %cst_51 = arith.constant dense<0.000000e+00> : vector<64xf32>
    %106 = vector.multi_reduction <add>, %105, %cst_51 [0] : vector<4x64xf32> to vector<64xf32>
    %107 = vector.shape_cast %106 : vector<64xf32> to vector<1x64xf32>
    %cst_52 = arith.constant 2.500000e-01 : f32
    %108 = vector.broadcast %cst_52 : f32 to vector<1x64xf32>
    %109 = arith.mulf %107, %108 : vector<1x64xf32>
    %110 = arith.truncf %109 : vector<1x64xf32> to vector<1x64xbf16>
    %cst_53 = arith.constant dense<0.000000e+00> : vector<1x16xf32>
    %111 = tpu.matmul %110, %76, %cst_53 {dimension_numbers = #tpu.dot_dimension_numbers<[1], [0], [0], [1], [0, 0, 1, 1], [], []>} : vector<1x64xbf16>, vector<64x16xbf16>, vector<1x16xf32> -> vector<1x16xf32>
    %112 = arith.addf %111, %77 : vector<1x16xf32>
    %cst_54 = arith.constant 0.000000e+00 : f32
    %113 = vector.broadcast %cst_54 : f32 to vector<1x16xf32>
    %114 = arith.maximumf %112, %113 : vector<1x16xf32>
    %115 = arith.truncf %114 : vector<1x16xf32> to vector<1x16xbf16>
    %cst_55 = arith.constant dense<0.000000e+00> : vector<1x64xf32>
    %116 = tpu.matmul %115, %78, %cst_55 {dimension_numbers = #tpu.dot_dimension_numbers<[1], [0], [0], [1], [0, 0, 1, 1], [], []>} : vector<1x16xbf16>, vector<16x64xbf16>, vector<1x64xf32> -> vector<1x64xf32>
    %117 = arith.addf %116, %79 : vector<1x64xf32>
    %cst_56 = arith.constant 3.000000e+00 : f32
    %118 = vector.broadcast %cst_56 : f32 to vector<1x64xf32>
    %119 = arith.addf %117, %118 : vector<1x64xf32>
    %cst_57 = arith.constant 0.000000e+00 : f32
    %cst_58 = arith.constant 6.000000e+00 : f32
    %120 = vector.broadcast %cst_57 : f32 to vector<1x64xf32>
    %121 = arith.maximumf %120, %119 : vector<1x64xf32>
    %122 = vector.broadcast %cst_58 : f32 to vector<1x64xf32>
    %123 = arith.minimumf %122, %121 : vector<1x64xf32>
    %cst_59 = arith.constant 0.166666672 : f32
    %124 = vector.broadcast %cst_59 : f32 to vector<1x64xf32>
    %125 = arith.mulf %123, %124 : vector<1x64xf32>
    %126 = vector.extract_strided_slice %75 {offsets = [0, 1], sizes = [8, 1], strides = [1, 1]} : vector<8x2xf32> to vector<8x1xf32>
    %127 = vector.broadcast %126 : vector<8x1xf32> to vector<8x64xf32>
    %128 = vector.broadcast %125 : vector<1x64xf32> to vector<8x64xf32>
    %129 = arith.mulf %127, %128 : vector<8x64xf32>
    %130 = arith.addf %104, %129 : vector<8x64xf32>
    %131 = arith.mulf %74, %130 : vector<8x64xf32>
    %cst_60 = arith.constant 3.000000e+00 : f32
    %132 = vector.broadcast %cst_60 : f32 to vector<8x64xf32>
    %133 = arith.addf %131, %132 : vector<8x64xf32>
    %cst_61 = arith.constant 0.000000e+00 : f32
    %cst_62 = arith.constant 6.000000e+00 : f32
    %134 = vector.broadcast %cst_61 : f32 to vector<8x64xf32>
    %135 = arith.maximumf %134, %133 : vector<8x64xf32>
    %136 = vector.broadcast %cst_62 : f32 to vector<8x64xf32>
    %137 = arith.minimumf %136, %135 : vector<8x64xf32>
    %138 = arith.mulf %131, %137 : vector<8x64xf32>
    %cst_63 = arith.constant 0.166666672 : f32
    %139 = vector.broadcast %cst_63 : f32 to vector<8x64xf32>
    %140 = arith.mulf %138, %139 : vector<8x64xf32>
    %c0_64 = arith.constant 0 : index
    %c0_65 = arith.constant 0 : index
    %141 = vector.load %arg11[%c0_64, %c0_65] : memref<64x40xbf16, #tpu.memory_space<vmem>>, vector<64x40xbf16>
    %142 = arith.truncf %140 : vector<8x64xf32> to vector<8x64xbf16>
    %cst_66 = arith.constant dense<0.000000e+00> : vector<8x40xf32>
    %143 = tpu.matmul %142, %141, %cst_66 {dimension_numbers = #tpu.dot_dimension_numbers<[1], [0], [0], [1], [0, 0, 1, 1], [], []>} : vector<8x64xbf16>, vector<64x40xbf16>, vector<8x40xf32> -> vector<8x40xf32>
    %c0_67 = arith.constant 0 : index
    %c0_68 = arith.constant 0 : index
    %144 = vector.load %arg12[%c0_67, %c0_68] : memref<1x40xf32, #tpu.memory_space<vmem>>, vector<1x40xf32>
    %145 = vector.broadcast %144 : vector<1x40xf32> to vector<8x40xf32>
    %146 = arith.addf %143, %145 : vector<8x40xf32>
    %c0_69 = arith.constant 0 : index
    %c0_70 = arith.constant 0 : index
    %147 = vector.load %arg13[%c0_69, %c0_70] : memref<8x40xf32, #tpu.memory_space<vmem>>, vector<8x40xf32>
    tpu.vector_store %arg13[%c0_69, %c0_70], %146 {strides = array<i32>} : memref<8x40xf32, #tpu.memory_space<vmem>>, vector<8x40xf32>,
    return
  }
}

module attributes {stable_mosaic.version = 11 : i64} {
  func.func @kernel(%arg0: memref<50x40xf32, #tpu.memory_space<vmem>>, %arg1: memref<50x1xf32, #tpu.memory_space<vmem>>, %arg2: memref<40x96xbf16, #tpu.memory_space<vmem>>, %arg3: memref<1x96xf32, #tpu.memory_space<vmem>>, %arg4: memref<25x1x96xf32, #tpu.memory_space<vmem>>, %arg5: memref<1x96xf32, #tpu.memory_space<vmem>>, %arg6: memref<2x2xf32, #tpu.memory_space<vmem>>, %arg7: memref<96x24xbf16, #tpu.memory_space<vmem>>, %arg8: memref<1x24xf32, #tpu.memory_space<vmem>>, %arg9: memref<24x96xbf16, #tpu.memory_space<vmem>>, %arg10: memref<1x96xf32, #tpu.memory_space<vmem>>, %arg11: memref<96x48xbf16, #tpu.memory_space<vmem>>, %arg12: memref<1x48xf32, #tpu.memory_space<vmem>>, %arg13: memref<2x48xf32, #tpu.memory_space<vmem>>) attributes {dimension_semantics = [], scalar_prefetch = 0 : i64, scratch_operands = 0 : i64, tpu.core_type = #tpu.core_type<tc>} {
    %c0 = arith.constant 0 : index
    %c0_0 = arith.constant 0 : index
    %0 = vector.load %arg0[%c0, %c0_0] : memref<50x40xf32, #tpu.memory_space<vmem>>, vector<50x40xf32>
    %c0_1 = arith.constant 0 : index
    %c0_2 = arith.constant 0 : index
    %1 = vector.load %arg2[%c0_1, %c0_2] : memref<40x96xbf16, #tpu.memory_space<vmem>>, vector<40x96xbf16>
    %2 = arith.truncf %0 : vector<50x40xf32> to vector<50x40xbf16>
    %cst = arith.constant dense<0.000000e+00> : vector<50x96xf32>
    %3 = tpu.matmul %2, %1, %cst {dimension_numbers = #tpu.dot_dimension_numbers<[1], [0], [0], [1], [0, 0, 1, 1], [], []>} : vector<50x40xbf16>, vector<40x96xbf16>, vector<50x96xf32> -> vector<50x96xf32>
    %c0_3 = arith.constant 0 : index
    %c0_4 = arith.constant 0 : index
    %4 = vector.load %arg3[%c0_3, %c0_4] : memref<1x96xf32, #tpu.memory_space<vmem>>, vector<1x96xf32>
    %5 = vector.broadcast %4 : vector<1x96xf32> to vector<50x96xf32>
    %6 = arith.addf %3, %5 : vector<50x96xf32>
    %cst_5 = arith.constant 3.000000e+00 : f32
    %7 = vector.broadcast %cst_5 : f32 to vector<50x96xf32>
    %8 = arith.addf %6, %7 : vector<50x96xf32>
    %cst_6 = arith.constant 0.000000e+00 : f32
    %cst_7 = arith.constant 6.000000e+00 : f32
    %9 = vector.broadcast %cst_6 : f32 to vector<50x96xf32>
    %10 = arith.maximumf %9, %8 : vector<50x96xf32>
    %11 = vector.broadcast %cst_7 : f32 to vector<50x96xf32>
    %12 = arith.minimumf %11, %10 : vector<50x96xf32>
    %13 = arith.mulf %6, %12 : vector<50x96xf32>
    %cst_8 = arith.constant 0.166666672 : f32
    %14 = vector.broadcast %cst_8 : f32 to vector<50x96xf32>
    %15 = arith.mulf %13, %14 : vector<50x96xf32>
    %c0_9 = arith.constant 0 : index
    %c0_10 = arith.constant 0 : index
    %16 = vector.load %arg1[%c0_9, %c0_10] : memref<50x1xf32, #tpu.memory_space<vmem>>, vector<50x1xf32>
    %17 = vector.broadcast %16 : vector<50x1xf32> to vector<50x96xf32>
    %18 = arith.mulf %15, %17 : vector<50x96xf32>
    %19 = vector.extract_strided_slice %18 {offsets = [0, 0], sizes = [2, 96], strides = [1, 1]} : vector<50x96xf32> to vector<2x96xf32>
    %c0_11 = arith.constant 0 : index
    %c0_12 = arith.constant 0 : index
    %c0_13 = arith.constant 0 : index
    %20 = vector.load %arg4[%c0_11, %c0_12, %c0_13] : memref<25x1x96xf32, #tpu.memory_space<vmem>>, vector<1x1x96xf32>
    %21 = vector.shape_cast %20 : vector<1x1x96xf32> to vector<1x96xf32>
    %22 = vector.broadcast %21 : vector<1x96xf32> to vector<2x96xf32>
    %23 = arith.mulf %19, %22 : vector<2x96xf32>
    %24 = vector.extract_strided_slice %18 {offsets = [2, 0], sizes = [2, 96], strides = [1, 1]} : vector<50x96xf32> to vector<2x96xf32>
    %c1 = arith.constant 1 : index
    %c0_14 = arith.constant 0 : index
    %c0_15 = arith.constant 0 : index
    %25 = vector.load %arg4[%c1, %c0_14, %c0_15] : memref<25x1x96xf32, #tpu.memory_space<vmem>>, vector<1x1x96xf32>
    %26 = vector.shape_cast %25 : vector<1x1x96xf32> to vector<1x96xf32>
    %27 = vector.broadcast %26 : vector<1x96xf32> to vector<2x96xf32>
    %28 = arith.mulf %24, %27 : vector<2x96xf32>
    %29 = arith.addf %23, %28 : vector<2x96xf32>
    %30 = vector.extract_strided_slice %18 {offsets = [4, 0], sizes = [2, 96], strides = [1, 1]} : vector<50x96xf32> to vector<2x96xf32>
    %c2 = arith.constant 2 : index
    %c0_16 = arith.constant 0 : index
    %c0_17 = arith.constant 0 : index
    %31 = vector.load %arg4[%c2, %c0_16, %c0_17] : memref<25x1x96xf32, #tpu.memory_space<vmem>>, vector<1x1x96xf32>
    %32 = vector.shape_cast %31 : vector<1x1x96xf32> to vector<1x96xf32>
    %33 = vector.broadcast %32 : vector<1x96xf32> to vector<2x96xf32>
    %34 = arith.mulf %30, %33 : vector<2x96xf32>
    %35 = arith.addf %29, %34 : vector<2x96xf32>
    %36 = vector.extract_strided_slice %18 {offsets = [6, 0], sizes = [2, 96], strides = [1, 1]} : vector<50x96xf32> to vector<2x96xf32>
    %c3 = arith.constant 3 : index
    %c0_18 = arith.constant 0 : index
    %c0_19 = arith.constant 0 : index
    %37 = vector.load %arg4[%c3, %c0_18, %c0_19] : memref<25x1x96xf32, #tpu.memory_space<vmem>>, vector<1x1x96xf32>
    %38 = vector.shape_cast %37 : vector<1x1x96xf32> to vector<1x96xf32>
    %39 = vector.broadcast %38 : vector<1x96xf32> to vector<2x96xf32>
    %40 = arith.mulf %36, %39 : vector<2x96xf32>
    %41 = arith.addf %35, %40 : vector<2x96xf32>
    %42 = vector.extract_strided_slice %18 {offsets = [8, 0], sizes = [2, 96], strides = [1, 1]} : vector<50x96xf32> to vector<2x96xf32>
    %c4 = arith.constant 4 : index
    %c0_20 = arith.constant 0 : index
    %c0_21 = arith.constant 0 : index
    %43 = vector.load %arg4[%c4, %c0_20, %c0_21] : memref<25x1x96xf32, #tpu.memory_space<vmem>>, vector<1x1x96xf32>
    %44 = vector.shape_cast %43 : vector<1x1x96xf32> to vector<1x96xf32>
    %45 = vector.broadcast %44 : vector<1x96xf32> to vector<2x96xf32>
    %46 = arith.mulf %42, %45 : vector<2x96xf32>
    %47 = arith.addf %41, %46 : vector<2x96xf32>
    %48 = vector.extract_strided_slice %18 {offsets = [10, 0], sizes = [2, 96], strides = [1, 1]} : vector<50x96xf32> to vector<2x96xf32>
    %c5 = arith.constant 5 : index
    %c0_22 = arith.constant 0 : index
    %c0_23 = arith.constant 0 : index
    %49 = vector.load %arg4[%c5, %c0_22, %c0_23] : memref<25x1x96xf32, #tpu.memory_space<vmem>>, vector<1x1x96xf32>
    %50 = vector.shape_cast %49 : vector<1x1x96xf32> to vector<1x96xf32>
    %51 = vector.broadcast %50 : vector<1x96xf32> to vector<2x96xf32>
    %52 = arith.mulf %48, %51 : vector<2x96xf32>
    %53 = arith.addf %47, %52 : vector<2x96xf32>
    %54 = vector.extract_strided_slice %18 {offsets = [12, 0], sizes = [2, 96], strides = [1, 1]} : vector<50x96xf32> to vector<2x96xf32>
    %c6 = arith.constant 6 : index
    %c0_24 = arith.constant 0 : index
    %c0_25 = arith.constant 0 : index
    %55 = vector.load %arg4[%c6, %c0_24, %c0_25] : memref<25x1x96xf32, #tpu.memory_space<vmem>>, vector<1x1x96xf32>
    %56 = vector.shape_cast %55 : vector<1x1x96xf32> to vector<1x96xf32>
    %57 = vector.broadcast %56 : vector<1x96xf32> to vector<2x96xf32>
    %58 = arith.mulf %54, %57 : vector<2x96xf32>
    %59 = arith.addf %53, %58 : vector<2x96xf32>
    %60 = vector.extract_strided_slice %18 {offsets = [14, 0], sizes = [2, 96], strides = [1, 1]} : vector<50x96xf32> to vector<2x96xf32>
    %c7 = arith.constant 7 : index
    %c0_26 = arith.constant 0 : index
    %c0_27 = arith.constant 0 : index
    %61 = vector.load %arg4[%c7, %c0_26, %c0_27] : memref<25x1x96xf32, #tpu.memory_space<vmem>>, vector<1x1x96xf32>
    %62 = vector.shape_cast %61 : vector<1x1x96xf32> to vector<1x96xf32>
    %63 = vector.broadcast %62 : vector<1x96xf32> to vector<2x96xf32>
    %64 = arith.mulf %60, %63 : vector<2x96xf32>
    %65 = arith.addf %59, %64 : vector<2x96xf32>
    %66 = vector.extract_strided_slice %18 {offsets = [16, 0], sizes = [2, 96], strides = [1, 1]} : vector<50x96xf32> to vector<2x96xf32>
    %c8 = arith.constant 8 : index
    %c0_28 = arith.constant 0 : index
    %c0_29 = arith.constant 0 : index
    %67 = vector.load %arg4[%c8, %c0_28, %c0_29] : memref<25x1x96xf32, #tpu.memory_space<vmem>>, vector<1x1x96xf32>
    %68 = vector.shape_cast %67 : vector<1x1x96xf32> to vector<1x96xf32>
    %69 = vector.broadcast %68 : vector<1x96xf32> to vector<2x96xf32>
    %70 = arith.mulf %66, %69 : vector<2x96xf32>
    %71 = arith.addf %65, %70 : vector<2x96xf32>
    %72 = vector.extract_strided_slice %18 {offsets = [18, 0], sizes = [2, 96], strides = [1, 1]} : vector<50x96xf32> to vector<2x96xf32>
    %c9 = arith.constant 9 : index
    %c0_30 = arith.constant 0 : index
    %c0_31 = arith.constant 0 : index
    %73 = vector.load %arg4[%c9, %c0_30, %c0_31] : memref<25x1x96xf32, #tpu.memory_space<vmem>>, vector<1x1x96xf32>
    %74 = vector.shape_cast %73 : vector<1x1x96xf32> to vector<1x96xf32>
    %75 = vector.broadcast %74 : vector<1x96xf32> to vector<2x96xf32>
    %76 = arith.mulf %72, %75 : vector<2x96xf32>
    %77 = arith.addf %71, %76 : vector<2x96xf32>
    %78 = vector.extract_strided_slice %18 {offsets = [20, 0], sizes = [2, 96], strides = [1, 1]} : vector<50x96xf32> to vector<2x96xf32>
    %c10 = arith.constant 10 : index
    %c0_32 = arith.constant 0 : index
    %c0_33 = arith.constant 0 : index
    %79 = vector.load %arg4[%c10, %c0_32, %c0_33] : memref<25x1x96xf32, #tpu.memory_space<vmem>>, vector<1x1x96xf32>
    %80 = vector.shape_cast %79 : vector<1x1x96xf32> to vector<1x96xf32>
    %81 = vector.broadcast %80 : vector<1x96xf32> to vector<2x96xf32>
    %82 = arith.mulf %78, %81 : vector<2x96xf32>
    %83 = arith.addf %77, %82 : vector<2x96xf32>
    %84 = vector.extract_strided_slice %18 {offsets = [22, 0], sizes = [2, 96], strides = [1, 1]} : vector<50x96xf32> to vector<2x96xf32>
    %c11 = arith.constant 11 : index
    %c0_34 = arith.constant 0 : index
    %c0_35 = arith.constant 0 : index
    %85 = vector.load %arg4[%c11, %c0_34, %c0_35] : memref<25x1x96xf32, #tpu.memory_space<vmem>>, vector<1x1x96xf32>
    %86 = vector.shape_cast %85 : vector<1x1x96xf32> to vector<1x96xf32>
    %87 = vector.broadcast %86 : vector<1x96xf32> to vector<2x96xf32>
    %88 = arith.mulf %84, %87 : vector<2x96xf32>
    %89 = arith.addf %83, %88 : vector<2x96xf32>
    %90 = vector.extract_strided_slice %18 {offsets = [24, 0], sizes = [2, 96], strides = [1, 1]} : vector<50x96xf32> to vector<2x96xf32>
    %c12 = arith.constant 12 : index
    %c0_36 = arith.constant 0 : index
    %c0_37 = arith.constant 0 : index
    %91 = vector.load %arg4[%c12, %c0_36, %c0_37] : memref<25x1x96xf32, #tpu.memory_space<vmem>>, vector<1x1x96xf32>
    %92 = vector.shape_cast %91 : vector<1x1x96xf32> to vector<1x96xf32>
    %93 = vector.broadcast %92 : vector<1x96xf32> to vector<2x96xf32>
    %94 = arith.mulf %90, %93 : vector<2x96xf32>
    %95 = arith.addf %89, %94 : vector<2x96xf32>
    %96 = vector.extract_strided_slice %18 {offsets = [26, 0], sizes = [2, 96], strides = [1, 1]} : vector<50x96xf32> to vector<2x96xf32>
    %c13 = arith.constant 13 : index
    %c0_38 = arith.constant 0 : index
    %c0_39 = arith.constant 0 : index
    %97 = vector.load %arg4[%c13, %c0_38, %c0_39] : memref<25x1x96xf32, #tpu.memory_space<vmem>>, vector<1x1x96xf32>
    %98 = vector.shape_cast %97 : vector<1x1x96xf32> to vector<1x96xf32>
    %99 = vector.broadcast %98 : vector<1x96xf32> to vector<2x96xf32>
    %100 = arith.mulf %96, %99 : vector<2x96xf32>
    %101 = arith.addf %95, %100 : vector<2x96xf32>
    %102 = vector.extract_strided_slice %18 {offsets = [28, 0], sizes = [2, 96], strides = [1, 1]} : vector<50x96xf32> to vector<2x96xf32>
    %c14 = arith.constant 14 : index
    %c0_40 = arith.constant 0 : index
    %c0_41 = arith.constant 0 : index
    %103 = vector.load %arg4[%c14, %c0_40, %c0_41] : memref<25x1x96xf32, #tpu.memory_space<vmem>>, vector<1x1x96xf32>
    %104 = vector.shape_cast %103 : vector<1x1x96xf32> to vector<1x96xf32>
    %105 = vector.broadcast %104 : vector<1x96xf32> to vector<2x96xf32>
    %106 = arith.mulf %102, %105 : vector<2x96xf32>
    %107 = arith.addf %101, %106 : vector<2x96xf32>
    %108 = vector.extract_strided_slice %18 {offsets = [30, 0], sizes = [2, 96], strides = [1, 1]} : vector<50x96xf32> to vector<2x96xf32>
    %c15 = arith.constant 15 : index
    %c0_42 = arith.constant 0 : index
    %c0_43 = arith.constant 0 : index
    %109 = vector.load %arg4[%c15, %c0_42, %c0_43] : memref<25x1x96xf32, #tpu.memory_space<vmem>>, vector<1x1x96xf32>
    %110 = vector.shape_cast %109 : vector<1x1x96xf32> to vector<1x96xf32>
    %111 = vector.broadcast %110 : vector<1x96xf32> to vector<2x96xf32>
    %112 = arith.mulf %108, %111 : vector<2x96xf32>
    %113 = arith.addf %107, %112 : vector<2x96xf32>
    %114 = vector.extract_strided_slice %18 {offsets = [32, 0], sizes = [2, 96], strides = [1, 1]} : vector<50x96xf32> to vector<2x96xf32>
    %c16 = arith.constant 16 : index
    %c0_44 = arith.constant 0 : index
    %c0_45 = arith.constant 0 : index
    %115 = vector.load %arg4[%c16, %c0_44, %c0_45] : memref<25x1x96xf32, #tpu.memory_space<vmem>>, vector<1x1x96xf32>
    %116 = vector.shape_cast %115 : vector<1x1x96xf32> to vector<1x96xf32>
    %117 = vector.broadcast %116 : vector<1x96xf32> to vector<2x96xf32>
    %118 = arith.mulf %114, %117 : vector<2x96xf32>
    %119 = arith.addf %113, %118 : vector<2x96xf32>
    %120 = vector.extract_strided_slice %18 {offsets = [34, 0], sizes = [2, 96], strides = [1, 1]} : vector<50x96xf32> to vector<2x96xf32>
    %c17 = arith.constant 17 : index
    %c0_46 = arith.constant 0 : index
    %c0_47 = arith.constant 0 : index
    %121 = vector.load %arg4[%c17, %c0_46, %c0_47] : memref<25x1x96xf32, #tpu.memory_space<vmem>>, vector<1x1x96xf32>
    %122 = vector.shape_cast %121 : vector<1x1x96xf32> to vector<1x96xf32>
    %123 = vector.broadcast %122 : vector<1x96xf32> to vector<2x96xf32>
    %124 = arith.mulf %120, %123 : vector<2x96xf32>
    %125 = arith.addf %119, %124 : vector<2x96xf32>
    %126 = vector.extract_strided_slice %18 {offsets = [36, 0], sizes = [2, 96], strides = [1, 1]} : vector<50x96xf32> to vector<2x96xf32>
    %c18 = arith.constant 18 : index
    %c0_48 = arith.constant 0 : index
    %c0_49 = arith.constant 0 : index
    %127 = vector.load %arg4[%c18, %c0_48, %c0_49] : memref<25x1x96xf32, #tpu.memory_space<vmem>>, vector<1x1x96xf32>
    %128 = vector.shape_cast %127 : vector<1x1x96xf32> to vector<1x96xf32>
    %129 = vector.broadcast %128 : vector<1x96xf32> to vector<2x96xf32>
    %130 = arith.mulf %126, %129 : vector<2x96xf32>
    %131 = arith.addf %125, %130 : vector<2x96xf32>
    %132 = vector.extract_strided_slice %18 {offsets = [38, 0], sizes = [2, 96], strides = [1, 1]} : vector<50x96xf32> to vector<2x96xf32>
    %c19 = arith.constant 19 : index
    %c0_50 = arith.constant 0 : index
    %c0_51 = arith.constant 0 : index
    %133 = vector.load %arg4[%c19, %c0_50, %c0_51] : memref<25x1x96xf32, #tpu.memory_space<vmem>>, vector<1x1x96xf32>
    %134 = vector.shape_cast %133 : vector<1x1x96xf32> to vector<1x96xf32>
    %135 = vector.broadcast %134 : vector<1x96xf32> to vector<2x96xf32>
    %136 = arith.mulf %132, %135 : vector<2x96xf32>
    %137 = arith.addf %131, %136 : vector<2x96xf32>
    %138 = vector.extract_strided_slice %18 {offsets = [40, 0], sizes = [2, 96], strides = [1, 1]} : vector<50x96xf32> to vector<2x96xf32>
    %c20 = arith.constant 20 : index
    %c0_52 = arith.constant 0 : index
    %c0_53 = arith.constant 0 : index
    %139 = vector.load %arg4[%c20, %c0_52, %c0_53] : memref<25x1x96xf32, #tpu.memory_space<vmem>>, vector<1x1x96xf32>
    %140 = vector.shape_cast %139 : vector<1x1x96xf32> to vector<1x96xf32>
    %141 = vector.broadcast %140 : vector<1x96xf32> to vector<2x96xf32>
    %142 = arith.mulf %138, %141 : vector<2x96xf32>
    %143 = arith.addf %137, %142 : vector<2x96xf32>
    %144 = vector.extract_strided_slice %18 {offsets = [42, 0], sizes = [2, 96], strides = [1, 1]} : vector<50x96xf32> to vector<2x96xf32>
    %c21 = arith.constant 21 : index
    %c0_54 = arith.constant 0 : index
    %c0_55 = arith.constant 0 : index
    %145 = vector.load %arg4[%c21, %c0_54, %c0_55] : memref<25x1x96xf32, #tpu.memory_space<vmem>>, vector<1x1x96xf32>
    %146 = vector.shape_cast %145 : vector<1x1x96xf32> to vector<1x96xf32>
    %147 = vector.broadcast %146 : vector<1x96xf32> to vector<2x96xf32>
    %148 = arith.mulf %144, %147 : vector<2x96xf32>
    %149 = arith.addf %143, %148 : vector<2x96xf32>
    %150 = vector.extract_strided_slice %18 {offsets = [44, 0], sizes = [2, 96], strides = [1, 1]} : vector<50x96xf32> to vector<2x96xf32>
    %c22 = arith.constant 22 : index
    %c0_56 = arith.constant 0 : index
    %c0_57 = arith.constant 0 : index
    %151 = vector.load %arg4[%c22, %c0_56, %c0_57] : memref<25x1x96xf32, #tpu.memory_space<vmem>>, vector<1x1x96xf32>
    %152 = vector.shape_cast %151 : vector<1x1x96xf32> to vector<1x96xf32>
    %153 = vector.broadcast %152 : vector<1x96xf32> to vector<2x96xf32>
    %154 = arith.mulf %150, %153 : vector<2x96xf32>
    %155 = arith.addf %149, %154 : vector<2x96xf32>
    %156 = vector.extract_strided_slice %18 {offsets = [46, 0], sizes = [2, 96], strides = [1, 1]} : vector<50x96xf32> to vector<2x96xf32>
    %c23 = arith.constant 23 : index
    %c0_58 = arith.constant 0 : index
    %c0_59 = arith.constant 0 : index
    %157 = vector.load %arg4[%c23, %c0_58, %c0_59] : memref<25x1x96xf32, #tpu.memory_space<vmem>>, vector<1x1x96xf32>
    %158 = vector.shape_cast %157 : vector<1x1x96xf32> to vector<1x96xf32>
    %159 = vector.broadcast %158 : vector<1x96xf32> to vector<2x96xf32>
    %160 = arith.mulf %156, %159 : vector<2x96xf32>
    %161 = arith.addf %155, %160 : vector<2x96xf32>
    %162 = vector.extract_strided_slice %18 {offsets = [48, 0], sizes = [2, 96], strides = [1, 1]} : vector<50x96xf32> to vector<2x96xf32>
    %c24 = arith.constant 24 : index
    %c0_60 = arith.constant 0 : index
    %c0_61 = arith.constant 0 : index
    %163 = vector.load %arg4[%c24, %c0_60, %c0_61] : memref<25x1x96xf32, #tpu.memory_space<vmem>>, vector<1x1x96xf32>
    %164 = vector.shape_cast %163 : vector<1x1x96xf32> to vector<1x96xf32>
    %165 = vector.broadcast %164 : vector<1x96xf32> to vector<2x96xf32>
    %166 = arith.mulf %162, %165 : vector<2x96xf32>
    %167 = arith.addf %161, %166 : vector<2x96xf32>
    %c0_62 = arith.constant 0 : index
    %c0_63 = arith.constant 0 : index
    %168 = vector.load %arg5[%c0_62, %c0_63] : memref<1x96xf32, #tpu.memory_space<vmem>>, vector<1x96xf32>
    %169 = vector.broadcast %168 : vector<1x96xf32> to vector<2x96xf32>
    %170 = arith.addf %167, %169 : vector<2x96xf32>
    %c0_64 = arith.constant 0 : index
    %c0_65 = arith.constant 0 : index
    %171 = vector.load %arg6[%c0_64, %c0_65] : memref<2x2xf32, #tpu.memory_space<vmem>>, vector<2x2xf32>
    %c0_66 = arith.constant 0 : index
    %c0_67 = arith.constant 0 : index
    %172 = vector.load %arg7[%c0_66, %c0_67] : memref<96x24xbf16, #tpu.memory_space<vmem>>, vector<96x24xbf16>
    %c0_68 = arith.constant 0 : index
    %c0_69 = arith.constant 0 : index
    %173 = vector.load %arg8[%c0_68, %c0_69] : memref<1x24xf32, #tpu.memory_space<vmem>>, vector<1x24xf32>
    %c0_70 = arith.constant 0 : index
    %c0_71 = arith.constant 0 : index
    %174 = vector.load %arg9[%c0_70, %c0_71] : memref<24x96xbf16, #tpu.memory_space<vmem>>, vector<24x96xbf16>
    %c0_72 = arith.constant 0 : index
    %c0_73 = arith.constant 0 : index
    %175 = vector.load %arg10[%c0_72, %c0_73] : memref<1x96xf32, #tpu.memory_space<vmem>>, vector<1x96xf32>
    %176 = vector.extract_strided_slice %170 {offsets = [0, 0], sizes = [1, 96], strides = [1, 1]} : vector<2x96xf32> to vector<1x96xf32>
    %cst_74 = arith.constant dense<0.000000e+00> : vector<96xf32>
    %177 = vector.multi_reduction <add>, %176, %cst_74 [0] : vector<1x96xf32> to vector<96xf32>
    %178 = vector.shape_cast %177 : vector<96xf32> to vector<1x96xf32>
    %cst_75 = arith.constant 1.000000e+00 : f32
    %179 = vector.broadcast %cst_75 : f32 to vector<1x96xf32>
    %180 = arith.mulf %178, %179 : vector<1x96xf32>
    %181 = arith.truncf %180 : vector<1x96xf32> to vector<1x96xbf16>
    %cst_76 = arith.constant dense<0.000000e+00> : vector<1x24xf32>
    %182 = tpu.matmul %181, %172, %cst_76 {dimension_numbers = #tpu.dot_dimension_numbers<[1], [0], [0], [1], [0, 0, 1, 1], [], []>} : vector<1x96xbf16>, vector<96x24xbf16>, vector<1x24xf32> -> vector<1x24xf32>
    %183 = arith.addf %182, %173 : vector<1x24xf32>
    %cst_77 = arith.constant 0.000000e+00 : f32
    %184 = vector.broadcast %cst_77 : f32 to vector<1x24xf32>
    %185 = arith.maximumf %183, %184 : vector<1x24xf32>
    %186 = arith.truncf %185 : vector<1x24xf32> to vector<1x24xbf16>
    %cst_78 = arith.constant dense<0.000000e+00> : vector<1x96xf32>
    %187 = tpu.matmul %186, %174, %cst_78 {dimension_numbers = #tpu.dot_dimension_numbers<[1], [0], [0], [1], [0, 0, 1, 1], [], []>} : vector<1x24xbf16>, vector<24x96xbf16>, vector<1x96xf32> -> vector<1x96xf32>
    %188 = arith.addf %187, %175 : vector<1x96xf32>
    %cst_79 = arith.constant 3.000000e+00 : f32
    %189 = vector.broadcast %cst_79 : f32 to vector<1x96xf32>
    %190 = arith.addf %188, %189 : vector<1x96xf32>
    %cst_80 = arith.constant 0.000000e+00 : f32
    %cst_81 = arith.constant 6.000000e+00 : f32
    %191 = vector.broadcast %cst_80 : f32 to vector<1x96xf32>
    %192 = arith.maximumf %191, %190 : vector<1x96xf32>
    %193 = vector.broadcast %cst_81 : f32 to vector<1x96xf32>
    %194 = arith.minimumf %193, %192 : vector<1x96xf32>
    %cst_82 = arith.constant 0.166666672 : f32
    %195 = vector.broadcast %cst_82 : f32 to vector<1x96xf32>
    %196 = arith.mulf %194, %195 : vector<1x96xf32>
    %197 = vector.extract_strided_slice %171 {offsets = [0, 0], sizes = [2, 1], strides = [1, 1]} : vector<2x2xf32> to vector<2x1xf32>
    %198 = vector.broadcast %197 : vector<2x1xf32> to vector<2x96xf32>
    %199 = vector.broadcast %196 : vector<1x96xf32> to vector<2x96xf32>
    %200 = arith.mulf %198, %199 : vector<2x96xf32>
    %201 = vector.extract_strided_slice %170 {offsets = [1, 0], sizes = [1, 96], strides = [1, 1]} : vector<2x96xf32> to vector<1x96xf32>
    %cst_83 = arith.constant dense<0.000000e+00> : vector<96xf32>
    %202 = vector.multi_reduction <add>, %201, %cst_83 [0] : vector<1x96xf32> to vector<96xf32>
    %203 = vector.shape_cast %202 : vector<96xf32> to vector<1x96xf32>
    %cst_84 = arith.constant 1.000000e+00 : f32
    %204 = vector.broadcast %cst_84 : f32 to vector<1x96xf32>
    %205 = arith.mulf %203, %204 : vector<1x96xf32>
    %206 = arith.truncf %205 : vector<1x96xf32> to vector<1x96xbf16>
    %cst_85 = arith.constant dense<0.000000e+00> : vector<1x24xf32>
    %207 = tpu.matmul %206, %172, %cst_85 {dimension_numbers = #tpu.dot_dimension_numbers<[1], [0], [0], [1], [0, 0, 1, 1], [], []>} : vector<1x96xbf16>, vector<96x24xbf16>, vector<1x24xf32> -> vector<1x24xf32>
    %208 = arith.addf %207, %173 : vector<1x24xf32>
    %cst_86 = arith.constant 0.000000e+00 : f32
    %209 = vector.broadcast %cst_86 : f32 to vector<1x24xf32>
    %210 = arith.maximumf %208, %209 : vector<1x24xf32>
    %211 = arith.truncf %210 : vector<1x24xf32> to vector<1x24xbf16>
    %cst_87 = arith.constant dense<0.000000e+00> : vector<1x96xf32>
    %212 = tpu.matmul %211, %174, %cst_87 {dimension_numbers = #tpu.dot_dimension_numbers<[1], [0], [0], [1], [0, 0, 1, 1], [], []>} : vector<1x24xbf16>, vector<24x96xbf16>, vector<1x96xf32> -> vector<1x96xf32>
    %213 = arith.addf %212, %175 : vector<1x96xf32>
    %cst_88 = arith.constant 3.000000e+00 : f32
    %214 = vector.broadcast %cst_88 : f32 to vector<1x96xf32>
    %215 = arith.addf %213, %214 : vector<1x96xf32>
    %cst_89 = arith.constant 0.000000e+00 : f32
    %cst_90 = arith.constant 6.000000e+00 : f32
    %216 = vector.broadcast %cst_89 : f32 to vector<1x96xf32>
    %217 = arith.maximumf %216, %215 : vector<1x96xf32>
    %218 = vector.broadcast %cst_90 : f32 to vector<1x96xf32>
    %219 = arith.minimumf %218, %217 : vector<1x96xf32>
    %cst_91 = arith.constant 0.166666672 : f32
    %220 = vector.broadcast %cst_91 : f32 to vector<1x96xf32>
    %221 = arith.mulf %219, %220 : vector<1x96xf32>
    %222 = vector.extract_strided_slice %171 {offsets = [0, 1], sizes = [2, 1], strides = [1, 1]} : vector<2x2xf32> to vector<2x1xf32>
    %223 = vector.broadcast %222 : vector<2x1xf32> to vector<2x96xf32>
    %224 = vector.broadcast %221 : vector<1x96xf32> to vector<2x96xf32>
    %225 = arith.mulf %223, %224 : vector<2x96xf32>
    %226 = arith.addf %200, %225 : vector<2x96xf32>
    %227 = arith.mulf %170, %226 : vector<2x96xf32>
    %cst_92 = arith.constant 3.000000e+00 : f32
    %228 = vector.broadcast %cst_92 : f32 to vector<2x96xf32>
    %229 = arith.addf %227, %228 : vector<2x96xf32>
    %cst_93 = arith.constant 0.000000e+00 : f32
    %cst_94 = arith.constant 6.000000e+00 : f32
    %230 = vector.broadcast %cst_93 : f32 to vector<2x96xf32>
    %231 = arith.maximumf %230, %229 : vector<2x96xf32>
    %232 = vector.broadcast %cst_94 : f32 to vector<2x96xf32>
    %233 = arith.minimumf %232, %231 : vector<2x96xf32>
    %234 = arith.mulf %227, %233 : vector<2x96xf32>
    %cst_95 = arith.constant 0.166666672 : f32
    %235 = vector.broadcast %cst_95 : f32 to vector<2x96xf32>
    %236 = arith.mulf %234, %235 : vector<2x96xf32>
    %c0_96 = arith.constant 0 : index
    %c0_97 = arith.constant 0 : index
    %237 = vector.load %arg11[%c0_96, %c0_97] : memref<96x48xbf16, #tpu.memory_space<vmem>>, vector<96x48xbf16>
    %238 = arith.truncf %236 : vector<2x96xf32> to vector<2x96xbf16>
    %cst_98 = arith.constant dense<0.000000e+00> : vector<2x48xf32>
    %239 = tpu.matmul %238, %237, %cst_98 {dimension_numbers = #tpu.dot_dimension_numbers<[1], [0], [0], [1], [0, 0, 1, 1], [], []>} : vector<2x96xbf16>, vector<96x48xbf16>, vector<2x48xf32> -> vector<2x48xf32>
    %c0_99 = arith.constant 0 : index
    %c0_100 = arith.constant 0 : index
    %240 = vector.load %arg12[%c0_99, %c0_100] : memref<1x48xf32, #tpu.memory_space<vmem>>, vector<1x48xf32>
    %241 = vector.broadcast %240 : vector<1x48xf32> to vector<2x48xf32>
    %242 = arith.addf %239, %241 : vector<2x48xf32>
    %c0_101 = arith.constant 0 : index
    %c0_102 = arith.constant 0 : index
    %243 = vector.load %arg13[%c0_101, %c0_102] : memref<2x48xf32, #tpu.memory_space<vmem>>, vector<2x48xf32>
    tpu.vector_store %arg13[%c0_101, %c0_102], %242 {strides = array<i32>} : memref<2x48xf32, #tpu.memory_space<vmem>>, vector<2x48xf32>,
    return
  }
}

module attributes {stable_mosaic.version = 11 : i64} {
  func.func @_tail_kernel(%arg0: memref<2x48xf32, #tpu.memory_space<vmem>>, %arg1: memref<48x96xbf16, #tpu.memory_space<vmem>>, %arg2: memref<1x96xf32, #tpu.memory_space<vmem>>, %arg3: memref<96x1280xbf16, #tpu.memory_space<vmem>>, %arg4: memref<1x1280xf32, #tpu.memory_space<vmem>>, %arg5: memref<1280x16xbf16, #tpu.memory_space<vmem>>, %arg6: memref<1x16xf32, #tpu.memory_space<vmem>>, %arg7: memref<2x16xf32, #tpu.memory_space<vmem>>) attributes {dimension_semantics = [], scalar_prefetch = 0 : i64, scratch_operands = 0 : i64, tpu.core_type = #tpu.core_type<tc>} {
    %c0 = arith.constant 0 : index
    %c0_0 = arith.constant 0 : index
    %0 = vector.load %arg0[%c0, %c0_0] : memref<2x48xf32, #tpu.memory_space<vmem>>, vector<2x48xf32>
    %c0_1 = arith.constant 0 : index
    %c0_2 = arith.constant 0 : index
    %1 = vector.load %arg1[%c0_1, %c0_2] : memref<48x96xbf16, #tpu.memory_space<vmem>>, vector<48x96xbf16>
    %2 = arith.truncf %0 : vector<2x48xf32> to vector<2x48xbf16>
    %cst = arith.constant dense<0.000000e+00> : vector<2x96xf32>
    %3 = tpu.matmul %2, %1, %cst {dimension_numbers = #tpu.dot_dimension_numbers<[1], [0], [0], [1], [0, 0, 1, 1], [], []>} : vector<2x48xbf16>, vector<48x96xbf16>, vector<2x96xf32> -> vector<2x96xf32>
    %c0_3 = arith.constant 0 : index
    %c0_4 = arith.constant 0 : index
    %4 = vector.load %arg2[%c0_3, %c0_4] : memref<1x96xf32, #tpu.memory_space<vmem>>, vector<1x96xf32>
    %5 = vector.broadcast %4 : vector<1x96xf32> to vector<2x96xf32>
    %6 = arith.addf %3, %5 : vector<2x96xf32>
    %cst_5 = arith.constant 3.000000e+00 : f32
    %7 = vector.broadcast %cst_5 : f32 to vector<2x96xf32>
    %8 = arith.addf %6, %7 : vector<2x96xf32>
    %cst_6 = arith.constant 0.000000e+00 : f32
    %cst_7 = arith.constant 6.000000e+00 : f32
    %9 = vector.broadcast %cst_6 : f32 to vector<2x96xf32>
    %10 = arith.maximumf %9, %8 : vector<2x96xf32>
    %11 = vector.broadcast %cst_7 : f32 to vector<2x96xf32>
    %12 = arith.minimumf %11, %10 : vector<2x96xf32>
    %13 = arith.mulf %6, %12 : vector<2x96xf32>
    %cst_8 = arith.constant 0.166666672 : f32
    %14 = vector.broadcast %cst_8 : f32 to vector<2x96xf32>
    %15 = arith.mulf %13, %14 : vector<2x96xf32>
    %c0_9 = arith.constant 0 : index
    %c0_10 = arith.constant 0 : index
    %16 = vector.load %arg3[%c0_9, %c0_10] : memref<96x1280xbf16, #tpu.memory_space<vmem>>, vector<96x1280xbf16>
    %c0_11 = arith.constant 0 : index
    %c0_12 = arith.constant 0 : index
    %17 = vector.load %arg4[%c0_11, %c0_12] : memref<1x1280xf32, #tpu.memory_space<vmem>>, vector<1x1280xf32>
    %c0_13 = arith.constant 0 : index
    %c0_14 = arith.constant 0 : index
    %18 = vector.load %arg5[%c0_13, %c0_14] : memref<1280x16xbf16, #tpu.memory_space<vmem>>, vector<1280x16xbf16>
    %c0_15 = arith.constant 0 : index
    %c0_16 = arith.constant 0 : index
    %19 = vector.load %arg6[%c0_15, %c0_16] : memref<1x16xf32, #tpu.memory_space<vmem>>, vector<1x16xf32>
    %20 = vector.extract_strided_slice %15 {offsets = [0, 0], sizes = [1, 96], strides = [1, 1]} : vector<2x96xf32> to vector<1x96xf32>
    %cst_17 = arith.constant dense<0.000000e+00> : vector<96xf32>
    %21 = vector.multi_reduction <add>, %20, %cst_17 [0] : vector<1x96xf32> to vector<96xf32>
    %22 = vector.shape_cast %21 : vector<96xf32> to vector<1x96xf32>
    %cst_18 = arith.constant 1.000000e+00 : f32
    %23 = vector.broadcast %cst_18 : f32 to vector<1x96xf32>
    %24 = arith.mulf %22, %23 : vector<1x96xf32>
    %cst_19 = arith.constant 3.000000e+00 : f32
    %25 = vector.broadcast %cst_19 : f32 to vector<1x96xf32>
    %26 = arith.addf %24, %25 : vector<1x96xf32>
    %cst_20 = arith.constant 0.000000e+00 : f32
    %cst_21 = arith.constant 6.000000e+00 : f32
    %27 = vector.broadcast %cst_20 : f32 to vector<1x96xf32>
    %28 = arith.maximumf %27, %26 : vector<1x96xf32>
    %29 = vector.broadcast %cst_21 : f32 to vector<1x96xf32>
    %30 = arith.minimumf %29, %28 : vector<1x96xf32>
    %31 = arith.mulf %24, %30 : vector<1x96xf32>
    %cst_22 = arith.constant 0.166666672 : f32
    %32 = vector.broadcast %cst_22 : f32 to vector<1x96xf32>
    %33 = arith.mulf %31, %32 : vector<1x96xf32>
    %34 = arith.truncf %33 : vector<1x96xf32> to vector<1x96xbf16>
    %cst_23 = arith.constant dense<0.000000e+00> : vector<1x1280xf32>
    %35 = tpu.matmul %34, %16, %cst_23 {dimension_numbers = #tpu.dot_dimension_numbers<[1], [0], [0], [1], [0, 0, 1, 1], [], []>} : vector<1x96xbf16>, vector<96x1280xbf16>, vector<1x1280xf32> -> vector<1x1280xf32>
    %36 = arith.addf %35, %17 : vector<1x1280xf32>
    %cst_24 = arith.constant 3.000000e+00 : f32
    %37 = vector.broadcast %cst_24 : f32 to vector<1x1280xf32>
    %38 = arith.addf %36, %37 : vector<1x1280xf32>
    %cst_25 = arith.constant 0.000000e+00 : f32
    %cst_26 = arith.constant 6.000000e+00 : f32
    %39 = vector.broadcast %cst_25 : f32 to vector<1x1280xf32>
    %40 = arith.maximumf %39, %38 : vector<1x1280xf32>
    %41 = vector.broadcast %cst_26 : f32 to vector<1x1280xf32>
    %42 = arith.minimumf %41, %40 : vector<1x1280xf32>
    %43 = arith.mulf %36, %42 : vector<1x1280xf32>
    %cst_27 = arith.constant 0.166666672 : f32
    %44 = vector.broadcast %cst_27 : f32 to vector<1x1280xf32>
    %45 = arith.mulf %43, %44 : vector<1x1280xf32>
    %46 = arith.truncf %45 : vector<1x1280xf32> to vector<1x1280xbf16>
    %cst_28 = arith.constant dense<0.000000e+00> : vector<1x16xf32>
    %47 = tpu.matmul %46, %18, %cst_28 {dimension_numbers = #tpu.dot_dimension_numbers<[1], [0], [0], [1], [0, 0, 1, 1], [], []>} : vector<1x1280xbf16>, vector<1280x16xbf16>, vector<1x16xf32> -> vector<1x16xf32>
    %48 = arith.addf %47, %19 : vector<1x16xf32>
    %c0_29 = arith.constant 0 : index
    %c0_30 = arith.constant 0 : index
    %49 = vector.load %arg7[%c0_29, %c0_30] : memref<2x16xf32, #tpu.memory_space<vmem>>, vector<1x16xf32>
    tpu.vector_store %arg7[%c0_29, %c0_30], %48 {strides = array<i32>} : memref<2x16xf32, #tpu.memory_space<vmem>>, vector<1x16xf32>,
    %50 = vector.extract_strided_slice %15 {offsets = [1, 0], sizes = [1, 96], strides = [1, 1]} : vector<2x96xf32> to vector<1x96xf32>
    %cst_31 = arith.constant dense<0.000000e+00> : vector<96xf32>
    %51 = vector.multi_reduction <add>, %50, %cst_31 [0] : vector<1x96xf32> to vector<96xf32>
    %52 = vector.shape_cast %51 : vector<96xf32> to vector<1x96xf32>
    %cst_32 = arith.constant 1.000000e+00 : f32
    %53 = vector.broadcast %cst_32 : f32 to vector<1x96xf32>
    %54 = arith.mulf %52, %53 : vector<1x96xf32>
    %cst_33 = arith.constant 3.000000e+00 : f32
    %55 = vector.broadcast %cst_33 : f32 to vector<1x96xf32>
    %56 = arith.addf %54, %55 : vector<1x96xf32>
    %cst_34 = arith.constant 0.000000e+00 : f32
    %cst_35 = arith.constant 6.000000e+00 : f32
    %57 = vector.broadcast %cst_34 : f32 to vector<1x96xf32>
    %58 = arith.maximumf %57, %56 : vector<1x96xf32>
    %59 = vector.broadcast %cst_35 : f32 to vector<1x96xf32>
    %60 = arith.minimumf %59, %58 : vector<1x96xf32>
    %61 = arith.mulf %54, %60 : vector<1x96xf32>
    %cst_36 = arith.constant 0.166666672 : f32
    %62 = vector.broadcast %cst_36 : f32 to vector<1x96xf32>
    %63 = arith.mulf %61, %62 : vector<1x96xf32>
    %64 = arith.truncf %63 : vector<1x96xf32> to vector<1x96xbf16>
    %cst_37 = arith.constant dense<0.000000e+00> : vector<1x1280xf32>
    %65 = tpu.matmul %64, %16, %cst_37 {dimension_numbers = #tpu.dot_dimension_numbers<[1], [0], [0], [1], [0, 0, 1, 1], [], []>} : vector<1x96xbf16>, vector<96x1280xbf16>, vector<1x1280xf32> -> vector<1x1280xf32>
    %66 = arith.addf %65, %17 : vector<1x1280xf32>
    %cst_38 = arith.constant 3.000000e+00 : f32
    %67 = vector.broadcast %cst_38 : f32 to vector<1x1280xf32>
    %68 = arith.addf %66, %67 : vector<1x1280xf32>
    %cst_39 = arith.constant 0.000000e+00 : f32
    %cst_40 = arith.constant 6.000000e+00 : f32
    %69 = vector.broadcast %cst_39 : f32 to vector<1x1280xf32>
    %70 = arith.maximumf %69, %68 : vector<1x1280xf32>
    %71 = vector.broadcast %cst_40 : f32 to vector<1x1280xf32>
    %72 = arith.minimumf %71, %70 : vector<1x1280xf32>
    %73 = arith.mulf %66, %72 : vector<1x1280xf32>
    %cst_41 = arith.constant 0.166666672 : f32
    %74 = vector.broadcast %cst_41 : f32 to vector<1x1280xf32>
    %75 = arith.mulf %73, %74 : vector<1x1280xf32>
    %76 = arith.truncf %75 : vector<1x1280xf32> to vector<1x1280xbf16>
    %cst_42 = arith.constant dense<0.000000e+00> : vector<1x16xf32>
    %77 = tpu.matmul %76, %18, %cst_42 {dimension_numbers = #tpu.dot_dimension_numbers<[1], [0], [0], [1], [0, 0, 1, 1], [], []>} : vector<1x1280xbf16>, vector<1280x16xbf16>, vector<1x16xf32> -> vector<1x16xf32>
    %78 = arith.addf %77, %19 : vector<1x16xf32>
    %c1 = arith.constant 1 : index
    %c0_43 = arith.constant 0 : index
    %79 = vector.load %arg7[%c1, %c0_43] : memref<2x16xf32, #tpu.memory_space<vmem>>, vector<1x16xf32>
    tpu.vector_store %arg7[%c1, %c0_43], %78 {strides = array<i32>} : memref<2x16xf32, #tpu.memory_space<vmem>>, vector<1x16xf32>,
    return
  }
}

</mosaic_0001>

<llo_original>
// kernel: _lambda_.7
$region0: #{_lambda_.7}
  #allocation0 [shape = 'u32[]', space=smem, size = 0x4, offset = 0x4, fixed_abs, tag = 'smem constant byte address 0x4 - core index']
  #allocation1 [shape = 'u32[144,128]{1,0:T(1,128)}', space=vmem, size = 0x12000, scoped, tag = 'internal scratch']
  %s0 = inlined_call_operand.vmem [shape: f32[512,27], index: 0, kind: input, shape index: {}]
  %s1 = inlined_call_operand.vmem [shape: bf16[27,16], index: 1, kind: input, shape index: {}]
  %s2 = inlined_call_operand.vmem [shape: f32[1,16], index: 2, kind: input, shape index: {}]
  %s3 = inlined_call_operand.vmem [shape: f32[512,16], index: 3, kind: output, shape index: {}]
  %s4 = sld [smem:[#allocation0]]
  $region22: #{_lambda_.7} parent=0
    _
  %s6 = ssub.s32 1, %s4
  %s7 = scalar_select 0, %s6, %s4
  // Predicated region
  $region2: #{_lambda_.7} parent=0 // pred_check
    _
  $region3: #{_lambda_.7} parent=0 // pred_check_branch
    %9 = sbr.rel (0) target = $region5
  $region4: #{_lambda_.7} parent=0 // pred_region
    _
  $region5: #{_lambda_.7} parent=0 // pred_fallthru
    _
  // Predicated region
  $region6: #{_lambda_.7} parent=0 // pred_check
    _
  $region7: #{_lambda_.7} parent=0 // pred_check_branch
    %11 = sbr.rel (0) target = $region9
  $region8: #{_lambda_.7} parent=0 // pred_region
    _
  $region9: #{_lambda_.7} parent=0 // pred_fallthru
    _
  // Predicated region
  $region10: #{_lambda_.7} parent=0 // pred_check
    _
  $region11: #{_lambda_.7} parent=0 // pred_check_branch
    %13 = sbr.rel (0) target = $region13
  $region12: #{_lambda_.7} parent=0 // pred_region
    _
  $region13: #{_lambda_.7} parent=0 // pred_fallthru
    _
  %v15 = vld [vmem:[%s0] sm:$0xff]
  %v16 = vld [vmem:[%s0 + $0x8] sm:$0xff]
  %v17 = vld [vmem:[%s0 + $0x10] sm:$0xff]
  %v18 = vld [vmem:[%s0 + $0x18] sm:$0xff]
  %v19 = vld [vmem:[%s0 + $0x20] sm:$0xff]
  %v20 = vld [vmem:[%s0 + $0x28] sm:$0xff]
  %v21 = vld [vmem:[%s0 + $0x30] sm:$0xff]
  %v22 = vld [vmem:[%s0 + $0x38] sm:$0xff]
  %v23 = vld [vmem:[%s0 + $0x40] sm:$0xff]
  %v24 = vld [vmem:[%s0 + $0x48] sm:$0xff]
  %v25 = vld [vmem:[%s0 + $0x50] sm:$0xff]
  %v26 = vld [vmem:[%s0 + $0x58] sm:$0xff]
  %v27 = vld [vmem:[%s0 + $0x60] sm:$0xff]
  %v28 = vld [vmem:[%s0 + $0x68] sm:$0xff]
  %v29 = vld [vmem:[%s0 + $0x70] sm:$0xff]
  %v30 = vld [vmem:[%s0 + $0x78] sm:$0xff]
  %v31 = vld [vmem:[%s0 + $0x80] sm:$0xff]
  %v32 = vld [vmem:[%s0 + $0x88] sm:$0xff]
  %v33 = vld [vmem:[%s0 + $0x90] sm:$0xff]
  %v34 = vld [vmem:[%s0 + $0x98] sm:$0xff]
  %v35 = vld [vmem:[%s0 + $0xa0] sm:$0xff]
  %v36 = vld [vmem:[%s0 + $0xa8] sm:$0xff]
  %v37 = vld [vmem:[%s0 + $0xb0] sm:$0xff]
  %v38 = vld [vmem:[%s0 + $0xb8] sm:$0xff]
  %v39 = vld [vmem:[%s0 + $0xc0] sm:$0xff]
  %v40 = vld [vmem:[%s0 + $0xc8] sm:$0xff]
  %v41 = vld [vmem:[%s0 + $0xd0] sm:$0xff]
  %v42 = vld [vmem:[%s0 + $0xd8] sm:$0xff]
  %v43 = vld [vmem:[%s0 + $0xe0] sm:$0xff]
  %v44 = vld [vmem:[%s0 + $0xe8] sm:$0xff]
  %v45 = vld [vmem:[%s0 + $0xf0] sm:$0xff]
  %v46 = vld [vmem:[%s0 + $0xf8] sm:$0xff]
  %v47 = vld [vmem:[%s0 + $0x100] sm:$0xff]
  %v48 = vld [vmem:[%s0 + $0x108] sm:$0xff]
  %v49 = vld [vmem:[%s0 + $0x110] sm:$0xff]
  %v50 = vld [vmem:[%s0 + $0x118] sm:$0xff]
  %v51 = vld [vmem:[%s0 + $0x120] sm:$0xff]
  %v52 = vld [vmem:[%s0 + $0x128] sm:$0xff]
  %v53 = vld [vmem:[%s0 + $0x130] sm:$0xff]
  %v54 = vld [vmem:[%s0 + $0x138] sm:$0xff]
  %v55 = vld [vmem:[%s0 + $0x140] sm:$0xff]
  %v56 = vld [vmem:[%s0 + $0x148] sm:$0xff]
  %v57 = vld [vmem:[%s0 + $0x150] sm:$0xff]
  %v58 = vld [vmem:[%s0 + $0x158] sm:$0xff]
  %v59 = vld [vmem:[%s0 + $0x160] sm:$0xff]
  %v60 = vld [vmem:[%s0 + $0x168] sm:$0xff]
  %v61 = vld [vmem:[%s0 + $0x170] sm:$0xff]
  %v62 = vld [vmem:[%s0 + $0x178] sm:$0xff]
  %v63 = vld [vmem:[%s0 + $0x180] sm:$0xff]
  %v64 = vld [vmem:[%s0 + $0x188] sm:$0xff]
  %v65 = vld [vmem:[%s0 + $0x190] sm:$0xff]
  %v66 = vld [vmem:[%s0 + $0x198] sm:$0xff]
  %v67 = vld [vmem:[%s0 + $0x1a0] sm:$0xff]
  %v68 = vld [vmem:[%s0 + $0x1a8] sm:$0xff]
  %v69 = vld [vmem:[%s0 + $0x1b0] sm:$0xff]
  %v70 = vld [vmem:[%s0 + $0x1b8] sm:$0xff]
  %v71 = vld [vmem:[%s0 + $0x1c0] sm:$0xff]
  %v72 = vld [vmem:[%s0 + $0x1c8] sm:$0xff]
  %v73 = vld [vmem:[%s0 + $0x1d0] sm:$0xff]
  %v74 = vld [vmem:[%s0 + $0x1d8] sm:$0xff]
  %v75 = vld [vmem:[%s0 + $0x1e0] sm:$0xff]
  %v76 = vld [vmem:[%s0 + $0x1e8] sm:$0xff]
  %v77 = vld [vmem:[%s0 + $0x1f0] sm:$0xff]
  %v78 = vld [vmem:[%s0 + $0x1f8] sm:$0xff]
  %v79 = vld [vmem:[%s1] sm:$0xf]
  %v80 = vld [vmem:[%s1 + $0x4] sm:$0xf]
  %v81 = vld [vmem:[%s1 + $0x8] sm:$0xf]
  %v82 = vld [vmem:[%s1 + $0xc] sm:$0x3]
  %v83 = vpack.c.bf16 %v16, %v15
  %v84 = vpack.c.bf16 %v18, %v17
  %v85 = vpack.c.bf16 %v20, %v19
  %v86 = vpack.c.bf16 %v22, %v21
  %v87 = vpack.c.bf16 %v24, %v23
  %v88 = vpack.c.bf16 %v26, %v25
  %v89 = vpack.c.bf16 %v28, %v27
  %v90 = vpack.c.bf16 %v30, %v29
  %v91 = vpack.c.bf16 %v32, %v31
  %v92 = vpack.c.bf16 %v34, %v33
  %v93 = vpack.c.bf16 %v36, %v35
  %v94 = vpack.c.bf16 %v38, %v37
  %v95 = vpack.c.bf16 %v40, %v39
  %v96 = vpack.c.bf16 %v42, %v41
  %v97 = vpack.c.bf16 %v44, %v43
  %v98 = vpack.c.bf16 %v46, %v45
  %v99 = vpack.c.bf16 %v48, %v47
  %v100 = vpack.c.bf16 %v50, %v49
  %v101 = vpack.c.bf16 %v52, %v51
  %v102 = vpack.c.bf16 %v54, %v53
  %v103 = vpack.c.bf16 %v56, %v55
  %v104 = vpack.c.bf16 %v58, %v57
  %v105 = vpack.c.bf16 %v60, %v59
  %v106 = vpack.c.bf16 %v62, %v61
  %v107 = vpack.c.bf16 %v64, %v63
  %v108 = vpack.c.bf16 %v66, %v65
  %v109 = vpack.c.bf16 %v68, %v67
  %v110 = vpack.c.bf16 %v70, %v69
  %v111 = vpack.c.bf16 %v72, %v71
  %v112 = vpack.c.bf16 %v74, %v73
  %v113 = vpack.c.bf16 %v76, %v75
  %v114 = vpack.c.bf16 %v78, %v77
  %v115 = vld [vmem:[%s2] sm:$0x1]
  %v117 = vlaneseq
  %v118 = vshrl.u32 %v117, 7
  %v119 = vsub.s32 0, %v118
  %v120 = vrot.slane %v115, %v119
  %v126 = vunpack.c.l.b16 %v79
  %v127 = vunpack.c.l.b16 %v80
  %v128 = vunpack.c.l.b16 %v81
  %v129 = vunpack.c.l.b16 %v82
  %v130 = vpack.c.b16 %v127, %v126
  %v131 = vpack.c.b16 %v129, %v128
  %vm133 = vcmask 220160
  %v135 = vsel %vm133, %v83, 0
  %v138 = vsel %vm133, %v84, 0
  %v141 = vsel %vm133, %v85, 0
  %v144 = vsel %vm133, %v86, 0
  %v147 = vsel %vm133, %v87, 0
  %v150 = vsel %vm133, %v88, 0
  %v153 = vsel %vm133, %v89, 0
  %v156 = vsel %vm133, %v90, 0
  %v159 = vsel %vm133, %v91, 0
  %v162 = vsel %vm133, %v92, 0
  %v165 = vsel %vm133, %v93, 0
  %v168 = vsel %vm133, %v94, 0
  %v171 = vsel %vm133, %v95, 0
  %v174 = vsel %vm133, %v96, 0
  %v177 = vsel %vm133, %v97, 0
  %v180 = vsel %vm133, %v98, 0
  %v183 = vsel %vm133, %v99, 0
  %v186 = vsel %vm133, %v100, 0
  %v189 = vsel %vm133, %v101, 0
  %v192 = vsel %vm133, %v102, 0
  %v195 = vsel %vm133, %v103, 0
  %v198 = vsel %vm133, %v104, 0
  %v201 = vsel %vm133, %v105, 0
  %v204 = vsel %vm133, %v106, 0
  %v207 = vsel %vm133, %v107, 0
  %v210 = vsel %vm133, %v108, 0
  %v213 = vsel %vm133, %v109, 0
  %v216 = vsel %vm133, %v110, 0
  %v219 = vsel %vm133, %v111, 0
  %v222 = vsel %vm133, %v112, 0
  %v225 = vsel %vm133, %v113, 0
  %v228 = vsel %vm133, %v114, 0
  %vm230 = vcmask 1044480
  %vm231 = vcmask 1045504
  %v232 = vsel %vm230, 4294967295, 65535
  %v233 = vsel %vm231, %v232, 0
  %v235 = vand.u32 %v131, %v233
  %237 = vmatprep.subr.bf16.mxu0 0
  %238 = vmatpush1.bf16.msra.mxu0 %v130
  %239 = vmatprep.subr.bf16.mxu0 0
  %240 = vmatpush1.bf16.msra.mxu0 %v235
  %241 = vmatprep.subr.bf16.mxu0 0
  %242 = vmatpush1.bf16.msra.mxu0 0
  %243 = vmatprep.subr.bf16.mxu0 0
  %244 = vmatpush1.bf16.msra.mxu0 0
  %245 = vmatprep.subr.bf16.mxu0 0
  %246 = vmatpush1.bf16.msra.mxu0 0
  %247 = vmatprep.subr.bf16.mxu0 0
  %248 = vmatpush1.bf16.msra.mxu0 0
  %249 = vmatprep.subr.bf16.mxu0 0
  %250 = vmatpush1.bf16.msra.mxu0 0
  %251 = vmatprep.subr.bf16.mxu0 0
  %252 = vmatpush1.bf16.msra.mxu0 0
  %253 = vmatprep.subr.bf16.mxu0 0
  %254 = vmatpush1.bf16.msra.mxu0 0
  %255 = vmatprep.subr.bf16.mxu0 0
  %256 = vmatpush1.bf16.msra.mxu0 0
  %257 = vmatprep.subr.bf16.mxu0 0
  %258 = vmatpush1.bf16.msra.mxu0 0
  %259 = vmatprep.subr.bf16.mxu0 0
  %260 = vmatpush1.bf16.msra.mxu0 0
  %261 = vmatprep.subr.bf16.mxu0 0
  %262 = vmatpush1.bf16.msra.mxu0 0
  %263 = vmatprep.subr.bf16.mxu0 0
  %264 = vmatpush1.bf16.msra.mxu0 0
  %265 = vmatprep.subr.bf16.mxu0 0
  %266 = vmatpush1.bf16.msra.mxu0 0
  %267 = vmatprep.subr.bf16.mxu0 0
  %268 = vmatpush1.bf16.msra.mxu0 0
  %269 = vmatprep.mubr.bf16.mxu0 0
  %270 = vmatmul.mubr.bf16.gmra.mrb[0].mxu0 %v135
  %v271 = vpop.f32.mrb[0].mxu0
  %v272 = vadd.f32 %v120, %v271
  %v273 = vpop.f32.mrb[0].mxu0
  %v274 = vpop.f32.mrb[0].mxu0
  %v275 = vadd.f32 %v120, %v274
  %v276 = vpop.f32.mrb[0].mxu0
  %277 = vmatprep.mubr.bf16.mxu0 0
  %278 = vmatmul.mubr.bf16.gmra.mrb[0].mxu0 %v138
  %v279 = vpop.f32.mrb[0].mxu0
  %v280 = vadd.f32 %v120, %v279
  %v281 = vpop.f32.mrb[0].mxu0
  %v282 = vpop.f32.mrb[0].mxu0
  %v283 = vadd.f32 %v120, %v282
  %v284 = vpop.f32.mrb[0].mxu0
  %285 = vmatprep.mubr.bf16.mxu0 0
  %286 = vmatmul.mubr.bf16.gmra.mrb[0].mxu0 %v141
  %v287 = vpop.f32.mrb[0].mxu0
  %v288 = vadd.f32 %v120, %v287
  %v289 = vpop.f32.mrb[0].mxu0
  %v290 = vpop.f32.mrb[0].mxu0
  %v291 = vadd.f32 %v120, %v290
  %v292 = vpop.f32.mrb[0].mxu0
  %293 = vmatprep.mubr.bf16.mxu0 0
  %294 = vmatmul.mubr.bf16.gmra.mrb[0].mxu0 %v144
  %v295 = vpop.f32.mrb[0].mxu0
  %v296 = vadd.f32 %v120, %v295
  %v297 = vpop.f32.mrb[0].mxu0
  %v298 = vpop.f32.mrb[0].mxu0
  %v299 = vadd.f32 %v120, %v298
  %v300 = vpop.f32.mrb[0].mxu0
  %301 = vmatprep.mubr.bf16.mxu0 0
  %302 = vmatmul.mubr.bf16.gmra.mrb[0].mxu0 %v147
  %v303 = vpop.f32.mrb[0].mxu0
  %v304 = vadd.f32 %v120, %v303
  %v305 = vpop.f32.mrb[0].mxu0
  %v306 = vpop.f32.mrb[0].mxu0
  %v307 = vadd.f32 %v120, %v306
  %v308 = vpop.f32.mrb[0].mxu0
  %309 = vmatprep.mubr.bf16.mxu0 0
  %310 = vmatmul.mubr.bf16.gmra.mrb[0].mxu0 %v150
  %v311 = vpop.f32.mrb[0].mxu0
  %v312 = vadd.f32 %v120, %v311
  %v313 = vpop.f32.mrb[0].mxu0
  %v314 = vpop.f32.mrb[0].mxu0
  %v315 = vadd.f32 %v120, %v314
  %v316 = vpop.f32.mrb[0].mxu0
  %317 = vmatprep.mubr.bf16.mxu0 0
  %318 = vmatmul.mubr.bf16.gmra.mrb[0].mxu0 %v153
  %v319 = vpop.f32.mrb[0].mxu0
  %v320 = vadd.f32 %v120, %v319
  %v321 = vpop.f32.mrb[0].mxu0
  %v322 = vpop.f32.mrb[0].mxu0
  %v323 = vadd.f32 %v120, %v322
  %v324 = vpop.f32.mrb[0].mxu0
  %325 = vmatprep.mubr.bf16.mxu0 0
  %326 = vmatmul.mubr.bf16.gmra.mrb[0].mxu0 %v156
  %v327 = vpop.f32.mrb[0].mxu0
  %v328 = vadd.f32 %v120, %v327
  %v329 = vpop.f32.mrb[0].mxu0
  %v330 = vpop.f32.mrb[0].mxu0
  %v331 = vadd.f32 %v120, %v330
  %v332 = vpop.f32.mrb[0].mxu0
  %333 = vmatprep.mubr.bf16.mxu0 0
  %334 = vmatmul.mubr.bf16.gmra.mrb[0].mxu0 %v159
  %v335 = vpop.f32.mrb[0].mxu0
  %v336 = vadd.f32 %v120, %v335
  %v337 = vpop.f32.mrb[0].mxu0
  %v338 = vpop.f32.mrb[0].mxu0
  %v339 = vadd.f32 %v120, %v338
  %v340 = vpop.f32.mrb[0].mxu0
  %341 = vmatprep.mubr.bf16.mxu0 0
  %342 = vmatmul.mubr.bf16.gmra.mrb[0].mxu0 %v162
  %v343 = vpop.f32.mrb[0].mxu0
  %v344 = vadd.f32 %v120, %v343
  %v345 = vpop.f32.mrb[0].mxu0
  %v346 = vpop.f32.mrb[0].mxu0
  %v347 = vadd.f32 %v120, %v346
  %v348 = vpop.f32.mrb[0].mxu0
  %349 = vmatprep.mubr.bf16.mxu0 0
  %350 = vmatmul.mubr.bf16.gmra.mrb[0].mxu0 %v165
  %v351 = vpop.f32.mrb[0].mxu0
  %v352 = vadd.f32 %v120, %v351
  %v353 = vpop.f32.mrb[0].mxu0
  %v354 = vpop.f32.mrb[0].mxu0
  %v355 = vadd.f32 %v120, %v354
  %v356 = vpop.f32.mrb[0].mxu0
  %357 = vmatprep.mubr.bf16.mxu0 0
  %358 = vmatmul.mubr.bf16.gmra.mrb[0].mxu0 %v168
  %v359 = vpop.f32.mrb[0].mxu0
  %v360 = vadd.f32 %v120, %v359
  %v361 = vpop.f32.mrb[0].mxu0
  %v362 = vpop.f32.mrb[0].mxu0
  %v363 = vadd.f32 %v120, %v362
  %v364 = vpop.f32.mrb[0].mxu0
  %365 = vmatprep.mubr.bf16.mxu0 0
  %366 = vmatmul.mubr.bf16.gmra.mrb[0].mxu0 %v171
  %v367 = vpop.f32.mrb[0].mxu0
  %v368 = vadd.f32 %v120, %v367
  %v369 = vpop.f32.mrb[0].mxu0
  %v370 = vpop.f32.mrb[0].mxu0
  %v371 = vadd.f32 %v120, %v370
  %v372 = vpop.f32.mrb[0].mxu0
  %373 = vmatprep.mubr.bf16.mxu0 0
  %374 = vmatmul.mubr.bf16.gmra.mrb[0].mxu0 %v174
  %v375 = vpop.f32.mrb[0].mxu0
  %v376 = vadd.f32 %v120, %v375
  %v377 = vpop.f32.mrb[0].mxu0
  %v378 = vpop.f32.mrb[0].mxu0
  %v379 = vadd.f32 %v120, %v378
  %v380 = vpop.f32.mrb[0].mxu0
  %381 = vmatprep.mubr.bf16.mxu0 0
  %382 = vmatmul.mubr.bf16.gmra.mrb[0].mxu0 %v177
  %v383 = vpop.f32.mrb[0].mxu0
  %v384 = vadd.f32 %v120, %v383
  %v385 = vpop.f32.mrb[0].mxu0
  %v386 = vpop.f32.mrb[0].mxu0
  %v387 = vadd.f32 %v120, %v386
  %v388 = vpop.f32.mrb[0].mxu0
  %389 = vmatprep.mubr.bf16.mxu0 0
  %390 = vmatmul.mubr.bf16.gmra.mrb[0].mxu0 %v180
  %v391 = vpop.f32.mrb[0].mxu0
  %v392 = vadd.f32 %v120, %v391
  %v393 = vpop.f32.mrb[0].mxu0
  %v394 = vpop.f32.mrb[0].mxu0
  %v395 = vadd.f32 %v120, %v394
  %v396 = vpop.f32.mrb[0].mxu0
  %397 = vmatprep.mubr.bf16.mxu0 0
  %398 = vmatmul.mubr.bf16.gmra.mrb[0].mxu0 %v183
  %v399 = vpop.f32.mrb[0].mxu0
  %v400 = vadd.f32 %v120, %v399
  %v401 = vpop.f32.mrb[0].mxu0
  %v402 = vpop.f32.mrb[0].mxu0
  %v403 = vadd.f32 %v120, %v402
  %v404 = vpop.f32.mrb[0].mxu0
  %405 = vmatprep.mubr.bf16.mxu0 0
  %406 = vmatmul.mubr.bf16.gmra.mrb[0].mxu0 %v186
  %v407 = vpop.f32.mrb[0].mxu0
  %v408 = vadd.f32 %v120, %v407
  %v409 = vpop.f32.mrb[0].mxu0
  %v410 = vpop.f32.mrb[0].mxu0
  %v411 = vadd.f32 %v120, %v410
  %v412 = vpop.f32.mrb[0].mxu0
  %413 = vmatprep.mubr.bf16.mxu0 0
  %414 = vmatmul.mubr.bf16.gmra.mrb[0].mxu0 %v189
  %v415 = vpop.f32.mrb[0].mxu0
  %v416 = vadd.f32 %v120, %v415
  %v417 = vpop.f32.mrb[0].mxu0
  %v418 = vpop.f32.mrb[0].mxu0
  %v419 = vadd.f32 %v120, %v418
  %v420 = vpop.f32.mrb[0].mxu0
  %421 = vmatprep.mubr.bf16.mxu0 0
  %422 = vmatmul.mubr.bf16.gmra.mrb[0].mxu0 %v192
  %v423 = vpop.f32.mrb[0].mxu0
  %v424 = vadd.f32 %v120, %v423
  %v425 = vpop.f32.mrb[0].mxu0
  %v426 = vpop.f32.mrb[0].mxu0
  %v427 = vadd.f32 %v120, %v426
  %v428 = vpop.f32.mrb[0].mxu0
  %429 = vmatprep.mubr.bf16.mxu0 0
  %430 = vmatmul.mubr.bf16.gmra.mrb[0].mxu0 %v195
  %v431 = vpop.f32.mrb[0].mxu0
  %v432 = vadd.f32 %v120, %v431
  %v433 = vpop.f32.mrb[0].mxu0
  %v434 = vpop.f32.mrb[0].mxu0
  %v435 = vadd.f32 %v120, %v434
  %v436 = vpop.f32.mrb[0].mxu0
  %437 = vmatprep.mubr.bf16.mxu0 0
  %438 = vmatmul.mubr.bf16.gmra.mrb[0].mxu0 %v198
  %v439 = vpop.f32.mrb[0].mxu0
  %v440 = vadd.f32 %v120, %v439
  %v441 = vpop.f32.mrb[0].mxu0
  %v442 = vpop.f32.mrb[0].mxu0
  %v443 = vadd.f32 %v120, %v442
  %v444 = vpop.f32.mrb[0].mxu0
  %445 = vmatprep.mubr.bf16.mxu0 0
  %446 = vmatmul.mubr.bf16.gmra.mrb[0].mxu0 %v201
  %v447 = vpop.f32.mrb[0].mxu0
  %v448 = vadd.f32 %v120, %v447
  %v449 = vpop.f32.mrb[0].mxu0
  %v450 = vpop.f32.mrb[0].mxu0
  %v451 = vadd.f32 %v120, %v450
  %v452 = vpop.f32.mrb[0].mxu0
  %453 = vmatprep.mubr.bf16.mxu0 0
  %454 = vmatmul.mubr.bf16.gmra.mrb[0].mxu0 %v204
  %v455 = vpop.f32.mrb[0].mxu0
  %v456 = vadd.f32 %v120, %v455
  %v457 = vpop.f32.mrb[0].mxu0
  %v458 = vpop.f32.mrb[0].mxu0
  %v459 = vadd.f32 %v120, %v458
  %v460 = vpop.f32.mrb[0].mxu0
  %461 = vmatprep.mubr.bf16.mxu0 0
  %462 = vmatmul.mubr.bf16.gmra.mrb[0].mxu0 %v207
  %v463 = vpop.f32.mrb[0].mxu0
  %v464 = vadd.f32 %v120, %v463
  %v465 = vpop.f32.mrb[0].mxu0
  %v466 = vpop.f32.mrb[0].mxu0
  %v467 = vadd.f32 %v120, %v466
  %v468 = vpop.f32.mrb[0].mxu0
  %469 = vmatprep.mubr.bf16.mxu0 0
  %470 = vmatmul.mubr.bf16.gmra.mrb[0].mxu0 %v210
  %v471 = vpop.f32.mrb[0].mxu0
  %v472 = vadd.f32 %v120, %v471
  %v473 = vpop.f32.mrb[0].mxu0
  %v474 = vpop.f32.mrb[0].mxu0
  %v475 = vadd.f32 %v120, %v474
  %v476 = vpop.f32.mrb[0].mxu0
  %477 = vmatprep.mubr.bf16.mxu0 0
  %478 = vmatmul.mubr.bf16.gmra.mrb[0].mxu0 %v213
  %v479 = vpop.f32.mrb[0].mxu0
  %v480 = vadd.f32 %v120, %v479
  %v481 = vpop.f32.mrb[0].mxu0
  %v482 = vpop.f32.mrb[0].mxu0
  %v483 = vadd.f32 %v120, %v482
  %v484 = vpop.f32.mrb[0].mxu0
  %485 = vmatprep.mubr.bf16.mxu0 0
  %486 = vmatmul.mubr.bf16.gmra.mrb[0].mxu0 %v216
  %v487 = vpop.f32.mrb[0].mxu0
  %v488 = vadd.f32 %v120, %v487
  %v489 = vpop.f32.mrb[0].mxu0
  %v490 = vpop.f32.mrb[0].mxu0
  %v491 = vadd.f32 %v120, %v490
  %v492 = vpop.f32.mrb[0].mxu0
  %493 = vmatprep.mubr.bf16.mxu0 0
  %494 = vmatmul.mubr.bf16.gmra.mrb[0].mxu0 %v219
  %v495 = vpop.f32.mrb[0].mxu0
  %v496 = vadd.f32 %v120, %v495
  %v497 = vpop.f32.mrb[0].mxu0
  %v498 = vpop.f32.mrb[0].mxu0
  %v499 = vadd.f32 %v120, %v498
  %v500 = vpop.f32.mrb[0].mxu0
  %501 = vmatprep.mubr.bf16.mxu0 0
  %502 = vmatmul.mubr.bf16.gmra.mrb[0].mxu0 %v222
  %v503 = vpop.f32.mrb[0].mxu0
  %v504 = vadd.f32 %v120, %v503
  %v505 = vpop.f32.mrb[0].mxu0
  %v506 = vpop.f32.mrb[0].mxu0
  %v507 = vadd.f32 %v120, %v506
  %v508 = vpop.f32.mrb[0].mxu0
  %509 = vmatprep.mubr.bf16.mxu0 0
  %510 = vmatmul.mubr.bf16.gmra.mrb[0].mxu0 %v225
  %v511 = vpop.f32.mrb[0].mxu0
  %v512 = vadd.f32 %v120, %v511
  %v513 = vpop.f32.mrb[0].mxu0
  %v514 = vpop.f32.mrb[0].mxu0
  %v515 = vadd.f32 %v120, %v514
  %v516 = vpop.f32.mrb[0].mxu0
  %517 = vmatprep.mubr.bf16.mxu0 0
  %518 = vmatmul.mubr.bf16.gmra.mrb[0].mxu0 %v228
  %v519 = vpop.f32.mrb[0].mxu0
  %v520 = vadd.f32 %v120, %v519
  %v521 = vpop.f32.mrb[0].mxu0
  %v522 = vpop.f32.mrb[0].mxu0
  %v523 = vadd.f32 %v120, %v522
  %v524 = vpop.f32.mrb[0].mxu0
  %525 = vdwg.mxu0
  %v526 = vadd.f32 %v272, 3.0
  %v527 = vadd.f32 %v275, 3.0
  %v528 = vadd.f32 %v280, 3.0
  %v529 = vadd.f32 %v283, 3.0
  %v530 = vadd.f32 %v288, 3.0
  %v531 = vadd.f32 %v291, 3.0
  %v532 = vadd.f32 %v296, 3.0
  %v533 = vadd.f32 %v299, 3.0
  %v534 = vadd.f32 %v304, 3.0
  %v535 = vadd.f32 %v307, 3.0
  %v536 = vadd.f32 %v312, 3.0
  %v537 = vadd.f32 %v315, 3.0
  %v538 = vadd.f32 %v320, 3.0
  %v539 = vadd.f32 %v323, 3.0
  %v540 = vadd.f32 %v328, 3.0
  %v541 = vadd.f32 %v331, 3.0
  %v542 = vadd.f32 %v336, 3.0
  %v543 = vadd.f32 %v339, 3.0
  %v544 = vadd.f32 %v344, 3.0
  %v545 = vadd.f32 %v347, 3.0
  %v546 = vadd.f32 %v352, 3.0
  %v547 = vadd.f32 %v355, 3.0
  %v548 = vadd.f32 %v360, 3.0
  %v549 = vadd.f32 %v363, 3.0
  %v550 = vadd.f32 %v368, 3.0
  %v551 = vadd.f32 %v371, 3.0
  %v552 = vadd.f32 %v376, 3.0
  %v553 = vadd.f32 %v379, 3.0
  %v554 = vadd.f32 %v384, 3.0
  %v555 = vadd.f32 %v387, 3.0
  %v556 = vadd.f32 %v392, 3.0
  %v557 = vadd.f32 %v395, 3.0
  %v558 = vadd.f32 %v400, 3.0
  %v559 = vadd.f32 %v403, 3.0
  %v560 = vadd.f32 %v408, 3.0
  %v561 = vadd.f32 %v411, 3.0
  %v562 = vadd.f32 %v416, 3.0
  %v563 = vadd.f32 %v419, 3.0
  %v564 = vadd.f32 %v424, 3.0
  %v565 = vadd.f32 %v427, 3.0
  %v566 = vadd.f32 %v432, 3.0
  %v567 = vadd.f32 %v435, 3.0
  %v568 = vadd.f32 %v440, 3.0
  %v569 = vadd.f32 %v443, 3.0
  %v570 = vadd.f32 %v448, 3.0
  %v571 = vadd.f32 %v451, 3.0
  %v572 = vadd.f32 %v456, 3.0
  %v573 = vadd.f32 %v459, 3.0
  %v574 = vadd.f32 %v464, 3.0
  %v575 = vadd.f32 %v467, 3.0
  %v576 = vadd.f32 %v472, 3.0
  %v577 = vadd.f32 %v475, 3.0
  %v578 = vadd.f32 %v480, 3.0
  %v579 = vadd.f32 %v483, 3.0
  %v580 = vadd.f32 %v488, 3.0
  %v581 = vadd.f32 %v491, 3.0
  %v582 = vadd.f32 %v496, 3.0
  %v583 = vadd.f32 %v499, 3.0
  %v584 = vadd.f32 %v504, 3.0
  %v585 = vadd.f32 %v507, 3.0
  %v586 = vadd.f32 %v512, 3.0
  %v587 = vadd.f32 %v515, 3.0
  %v588 = vadd.f32 %v520, 3.0
  %v589 = vadd.f32 %v523, 3.0
  %v590 = vmax.f32 %v526, 0.0
  %v591 = vmax.f32 %v527, 0.0
  %v592 = vmax.f32 %v528, 0.0
  %v593 = vmax.f32 %v529, 0.0
  %v594 = vmax.f32 %v530, 0.0
  %v595 = vmax.f32 %v531, 0.0
  %v596 = vmax.f32 %v532, 0.0
  %v597 = vmax.f32 %v533, 0.0
  %v598 = vmax.f32 %v534, 0.0
  %v599 = vmax.f32 %v535, 0.0
  %v600 = vmax.f32 %v536, 0.0
  %v601 = vmax.f32 %v537, 0.0
  %v602 = vmax.f32 %v538, 0.0
  %v603 = vmax.f32 %v539, 0.0
  %v604 = vmax.f32 %v540, 0.0
  %v605 = vmax.f32 %v541, 0.0
  %v606 = vmax.f32 %v542, 0.0
  %v607 = vmax.f32 %v543, 0.0
  %v608 = vmax.f32 %v544, 0.0
  %v609 = vmax.f32 %v545, 0.0
  %v610 = vmax.f32 %v546, 0.0
  %v611 = vmax.f32 %v547, 0.0
  %v612 = vmax.f32 %v548, 0.0
  %v613 = vmax.f32 %v549, 0.0
  %v614 = vmax.f32 %v550, 0.0
  %v615 = vmax.f32 %v551, 0.0
  %v616 = vmax.f32 %v552, 0.0
  %v617 = vmax.f32 %v553, 0.0
  %v618 = vmax.f32 %v554, 0.0
  %v619 = vmax.f32 %v555, 0.0
  %v620 = vmax.f32 %v556, 0.0
  %v621 = vmax.f32 %v557, 0.0
  %v622 = vmax.f32 %v558, 0.0
  %v623 = vmax.f32 %v559, 0.0
  %v624 = vmax.f32 %v560, 0.0
  %v625 = vmax.f32 %v561, 0.0
  %v626 = vmax.f32 %v562, 0.0
  %v627 = vmax.f32 %v563, 0.0
  %v628 = vmax.f32 %v564, 0.0
  %v629 = vmax.f32 %v565, 0.0
  %v630 = vmax.f32 %v566, 0.0
  %v631 = vmax.f32 %v567, 0.0
  %v632 = vmax.f32 %v568, 0.0
  %v633 = vmax.f32 %v569, 0.0
  %v634 = vmax.f32 %v570, 0.0
  %v635 = vmax.f32 %v571, 0.0
  %v636 = vmax.f32 %v572, 0.0
  %v637 = vmax.f32 %v573, 0.0
  %v638 = vmax.f32 %v574, 0.0
  %v639 = vmax.f32 %v575, 0.0
  %v640 = vmax.f32 %v576, 0.0
  %v641 = vmax.f32 %v577, 0.0
  %v642 = vmax.f32 %v578, 0.0
  %v643 = vmax.f32 %v579, 0.0
  %v644 = vmax.f32 %v580, 0.0
  %v645 = vmax.f32 %v581, 0.0
  %v646 = vmax.f32 %v582, 0.0
  %v647 = vmax.f32 %v583, 0.0
  %v648 = vmax.f32 %v584, 0.0
  %v649 = vmax.f32 %v585, 0.0
  %v650 = vmax.f32 %v586, 0.0
  %v651 = vmax.f32 %v587, 0.0
  %v652 = vmax.f32 %v588, 0.0
  %v653 = vmax.f32 %v589, 0.0
  %v654 = vmin.f32 %v590, 6.0
  %v655 = vmin.f32 %v591, 6.0
  %v656 = vmin.f32 %v592, 6.0
  %v657 = vmin.f32 %v593, 6.0
  %v658 = vmin.f32 %v594, 6.0
  %v659 = vmin.f32 %v595, 6.0
  %v660 = vmin.f32 %v596, 6.0
  %v661 = vmin.f32 %v597, 6.0
  %v662 = vmin.f32 %v598, 6.0
  %v663 = vmin.f32 %v599, 6.0
  %v664 = vmin.f32 %v600, 6.0
  %v665 = vmin.f32 %v601, 6.0
  %v666 = vmin.f32 %v602, 6.0
  %v667 = vmin.f32 %v603, 6.0
  %v668 = vmin.f32 %v604, 6.0
  %v669 = vmin.f32 %v605, 6.0
  %v670 = vmin.f32 %v606, 6.0
  %v671 = vmin.f32 %v607, 6.0
  %v672 = vmin.f32 %v608, 6.0
  %v673 = vmin.f32 %v609, 6.0
  %v674 = vmin.f32 %v610, 6.0
  %v675 = vmin.f32 %v611, 6.0
  %v676 = vmin.f32 %v612, 6.0
  %v677 = vmin.f32 %v613, 6.0
  %v678 = vmin.f32 %v614, 6.0
  %v679 = vmin.f32 %v615, 6.0
  %v680 = vmin.f32 %v616, 6.0
  %v681 = vmin.f32 %v617, 6.0
  %v682 = vmin.f32 %v618, 6.0
  %v683 = vmin.f32 %v619, 6.0
  %v684 = vmin.f32 %v620, 6.0
  %v685 = vmin.f32 %v621, 6.0
  %v686 = vmin.f32 %v622, 6.0
  %v687 = vmin.f32 %v623, 6.0
  %v688 = vmin.f32 %v624, 6.0
  %v689 = vmin.f32 %v625, 6.0
  %v690 = vmin.f32 %v626, 6.0
  %v691 = vmin.f32 %v627, 6.0
  %v692 = vmin.f32 %v628, 6.0
  %v693 = vmin.f32 %v629, 6.0
  %v694 = vmin.f32 %v630, 6.0
  %v695 = vmin.f32 %v631, 6.0
  %v696 = vmin.f32 %v632, 6.0
  %v697 = vmin.f32 %v633, 6.0
  %v698 = vmin.f32 %v634, 6.0
  %v699 = vmin.f32 %v635, 6.0
  %v700 = vmin.f32 %v636, 6.0
  %v701 = vmin.f32 %v637, 6.0
  %v702 = vmin.f32 %v638, 6.0
  %v703 = vmin.f32 %v639, 6.0
  %v704 = vmin.f32 %v640, 6.0
  %v705 = vmin.f32 %v641, 6.0
  %v706 = vmin.f32 %v642, 6.0
  %v707 = vmin.f32 %v643, 6.0
  %v708 = vmin.f32 %v644, 6.0
  %v709 = vmin.f32 %v645, 6.0
  %v710 = vmin.f32 %v646, 6.0
  %v711 = vmin.f32 %v647, 6.0
  %v712 = vmin.f32 %v648, 6.0
  %v713 = vmin.f32 %v649, 6.0
  %v714 = vmin.f32 %v650, 6.0
  %v715 = vmin.f32 %v651, 6.0
  %v716 = vmin.f32 %v652, 6.0
  %v717 = vmin.f32 %v653, 6.0
  %v718 = vmul.f32 %v272, %v654
  %v719 = vmul.f32 %v275, %v655
  %v720 = vmul.f32 %v280, %v656
  %v721 = vmul.f32 %v283, %v657
  %v722 = vmul.f32 %v288, %v658
  %v723 = vmul.f32 %v291, %v659
  %v724 = vmul.f32 %v296, %v660
  %v725 = vmul.f32 %v299, %v661
  %v726 = vmul.f32 %v304, %v662
  %v727 = vmul.f32 %v307, %v663
  %v728 = vmul.f32 %v312, %v664
  %v729 = vmul.f32 %v315, %v665
  %v730 = vmul.f32 %v320, %v666
  %v731 = vmul.f32 %v323, %v667
  %v732 = vmul.f32 %v328, %v668
  %v733 = vmul.f32 %v331, %v669
  %v734 = vmul.f32 %v336, %v670
  %v735 = vmul.f32 %v339, %v671
  %v736 = vmul.f32 %v344, %v672
  %v737 = vmul.f32 %v347, %v673
  %v738 = vmul.f32 %v352, %v674
  %v739 = vmul.f32 %v355, %v675
  %v740 = vmul.f32 %v360, %v676
  %v741 = vmul.f32 %v363, %v677
  %v742 = vmul.f32 %v368, %v678
  %v743 = vmul.f32 %v371, %v679
  %v744 = vmul.f32 %v376, %v680
  %v745 = vmul.f32 %v379, %v681
  %v746 = vmul.f32 %v384, %v682
  %v747 = vmul.f32 %v387, %v683
  %v748 = vmul.f32 %v392, %v684
  %v749 = vmul.f32 %v395, %v685
  %v750 = vmul.f32 %v400, %v686
  %v751 = vmul.f32 %v403, %v687
  %v752 = vmul.f32 %v408, %v688
  %v753 = vmul.f32 %v411, %v689
  %v754 = vmul.f32 %v416, %v690
  %v755 = vmul.f32 %v419, %v691
  %v756 = vmul.f32 %v424, %v692
  %v757 = vmul.f32 %v427, %v693
  %v758 = vmul.f32 %v432, %v694
  %v759 = vmul.f32 %v435, %v695
  %v760 = vmul.f32 %v440, %v696
  %v761 = vmul.f32 %v443, %v697
  %v762 = vmul.f32 %v448, %v698
  %v763 = vmul.f32 %v451, %v699
  %v764 = vmul.f32 %v456, %v700
  %v765 = vmul.f32 %v459, %v701
  %v766 = vmul.f32 %v464, %v702
  %v767 = vmul.f32 %v467, %v703
  %v768 = vmul.f32 %v472, %v704
  %v769 = vmul.f32 %v475, %v705
  %v770 = vmul.f32 %v480, %v706
  %v771 = vmul.f32 %v483, %v707
  %v772 = vmul.f32 %v488, %v708
  %v773 = vmul.f32 %v491, %v709
  %v774 = vmul.f32 %v496, %v710
  %v775 = vmul.f32 %v499, %v711
  %v776 = vmul.f32 %v504, %v712
  %v777 = vmul.f32 %v507, %v713
  %v778 = vmul.f32 %v512, %v714
  %v779 = vmul.f32 %v515, %v715
  %v780 = vmul.f32 %v520, %v716
  %v781 = vmul.f32 %v523, %v717
  %v782 = vmul.f32 %v718, 0.16666667
  %v783 = vmul.f32 %v719, 0.16666667
  %v784 = vmul.f32 %v720, 0.16666667
  %v785 = vmul.f32 %v721, 0.16666667
  %v786 = vmul.f32 %v722, 0.16666667
  %v787 = vmul.f32 %v723, 0.16666667
  %v788 = vmul.f32 %v724, 0.16666667
  %v789 = vmul.f32 %v725, 0.16666667
  %v790 = vmul.f32 %v726, 0.16666667
  %v791 = vmul.f32 %v727, 0.16666667
  %v792 = vmul.f32 %v728, 0.16666667
  %v793 = vmul.f32 %v729, 0.16666667
  %v794 = vmul.f32 %v730, 0.16666667
  %v795 = vmul.f32 %v731, 0.16666667
  %v796 = vmul.f32 %v732, 0.16666667
  %v797 = vmul.f32 %v733, 0.16666667
  %v798 = vmul.f32 %v734, 0.16666667
  %v799 = vmul.f32 %v735, 0.16666667
  %v800 = vmul.f32 %v736, 0.16666667
  %v801 = vmul.f32 %v737, 0.16666667
  %v802 = vmul.f32 %v738, 0.16666667
  %v803 = vmul.f32 %v739, 0.16666667
  %v804 = vmul.f32 %v740, 0.16666667
  %v805 = vmul.f32 %v741, 0.16666667
  %v806 = vmul.f32 %v742, 0.16666667
  %v807 = vmul.f32 %v743, 0.16666667
  %v808 = vmul.f32 %v744, 0.16666667
  %v809 = vmul.f32 %v745, 0.16666667
  %v810 = vmul.f32 %v746, 0.16666667
  %v811 = vmul.f32 %v747, 0.16666667
  %v812 = vmul.f32 %v748, 0.16666667
  %v813 = vmul.f32 %v749, 0.16666667
  %v814 = vmul.f32 %v750, 0.16666667
  %v815 = vmul.f32 %v751, 0.16666667
  %v816 = vmul.f32 %v752, 0.16666667
  %v817 = vmul.f32 %v753, 0.16666667
  %v818 = vmul.f32 %v754, 0.16666667
  %v819 = vmul.f32 %v755, 0.16666667
  %v820 = vmul.f32 %v756, 0.16666667
  %v821 = vmul.f32 %v757, 0.16666667
  %v822 = vmul.f32 %v758, 0.16666667
  %v823 = vmul.f32 %v759, 0.16666667
  %v824 = vmul.f32 %v760, 0.16666667
  %v825 = vmul.f32 %v761, 0.16666667
  %v826 = vmul.f32 %v762, 0.16666667
  %v827 = vmul.f32 %v763, 0.16666667
  %v828 = vmul.f32 %v764, 0.16666667
  %v829 = vmul.f32 %v765, 0.16666667
  %v830 = vmul.f32 %v766, 0.16666667
  %v831 = vmul.f32 %v767, 0.16666667
  %v832 = vmul.f32 %v768, 0.16666667
  %v833 = vmul.f32 %v769, 0.16666667
  %v834 = vmul.f32 %v770, 0.16666667
  %v835 = vmul.f32 %v771, 0.16666667
  %v836 = vmul.f32 %v772, 0.16666667
  %v837 = vmul.f32 %v773, 0.16666667
  %v838 = vmul.f32 %v774, 0.16666667
  %v839 = vmul.f32 %v775, 0.16666667
  %v840 = vmul.f32 %v776, 0.16666667
  %v841 = vmul.f32 %v777, 0.16666667
  %v842 = vmul.f32 %v778, 0.16666667
  %v843 = vmul.f32 %v779, 0.16666667
  %v844 = vmul.f32 %v780, 0.16666667
  %v845 = vmul.f32 %v781, 0.16666667
  %vm846 = vcmask 130048
  %847 = vst.msk [vmem:[%s3] sm:$0xff] %vm846, %v782
  %848 = vst.msk [vmem:[%s3 + $0x8] sm:$0xff] %vm846, %v783
  %849 = vst.msk [vmem:[%s3 + $0x10] sm:$0xff] %vm846, %v784
  %850 = vst.msk [vmem:[%s3 + $0x18] sm:$0xff] %vm846, %v785
  %851 = vst.msk [vmem:[%s3 + $0x20] sm:$0xff] %vm846, %v786
  %852 = vst.msk [vmem:[%s3 + $0x28] sm:$0xff] %vm846, %v787
  %853 = vst.msk [vmem:[%s3 + $0x30] sm:$0xff] %vm846, %v788
  %854 = vst.msk [vmem:[%s3 + $0x38] sm:$0xff] %vm846, %v789
  %855 = vst.msk [vmem:[%s3 + $0x40] sm:$0xff] %vm846, %v790
  %856 = vst.msk [vmem:[%s3 + $0x48] sm:$0xff] %vm846, %v791
  %857 = vst.msk [vmem:[%s3 + $0x50] sm:$0xff] %vm846, %v792
  %858 = vst.msk [vmem:[%s3 + $0x58] sm:$0xff] %vm846, %v793
  %859 = vst.msk [vmem:[%s3 + $0x60] sm:$0xff] %vm846, %v794
  %860 = vst.msk [vmem:[%s3 + $0x68] sm:$0xff] %vm846, %v795
  %861 = vst.msk [vmem:[%s3 + $0x70] sm:$0xff] %vm846, %v796
  %862 = vst.msk [vmem:[%s3 + $0x78] sm:$0xff] %vm846, %v797
  %863 = vst.msk [vmem:[%s3 + $0x80] sm:$0xff] %vm846, %v798
  %864 = vst.msk [vmem:[%s3 + $0x88] sm:$0xff] %vm846, %v799
  %865 = vst.msk [vmem:[%s3 + $0x90] sm:$0xff] %vm846, %v800
  %866 = vst.msk [vmem:[%s3 + $0x98] sm:$0xff] %vm846, %v801
  %867 = vst.msk [vmem:[%s3 + $0xa0] sm:$0xff] %vm846, %v802
  %868 = vst.msk [vmem:[%s3 + $0xa8] sm:$0xff] %vm846, %v803
  %869 = vst.msk [vmem:[%s3 + $0xb0] sm:$0xff] %vm846, %v804
  %870 = vst.msk [vmem:[%s3 + $0xb8] sm:$0xff] %vm846, %v805
  %871 = vst.msk [vmem:[%s3 + $0xc0] sm:$0xff] %vm846, %v806
  %872 = vst.msk [vmem:[%s3 + $0xc8] sm:$0xff] %vm846, %v807
  %873 = vst.msk [vmem:[%s3 + $0xd0] sm:$0xff] %vm846, %v808
  %874 = vst.msk [vmem:[%s3 + $0xd8] sm:$0xff] %vm846, %v809
  %875 = vst.msk [vmem:[%s3 + $0xe0] sm:$0xff] %vm846, %v810
  %876 = vst.msk [vmem:[%s3 + $0xe8] sm:$0xff] %vm846, %v811
  %877 = vst.msk [vmem:[%s3 + $0xf0] sm:$0xff] %vm846, %v812
  %878 = vst.msk [vmem:[%s3 + $0xf8] sm:$0xff] %vm846, %v813
  %879 = vst.msk [vmem:[%s3 + $0x100] sm:$0xff] %vm846, %v814
  %880 = vst.msk [vmem:[%s3 + $0x108] sm:$0xff] %vm846, %v815
  %881 = vst.msk [vmem:[%s3 + $0x110] sm:$0xff] %vm846, %v816
  %882 = vst.msk [vmem:[%s3 + $0x118] sm:$0xff] %vm846, %v817
  %883 = vst.msk [vmem:[%s3 + $0x120] sm:$0xff] %vm846, %v818
  %884 = vst.msk [vmem:[%s3 + $0x128] sm:$0xff] %vm846, %v819
  %885 = vst.msk [vmem:[%s3 + $0x130] sm:$0xff] %vm846, %v820
  %886 = vst.msk [vmem:[%s3 + $0x138] sm:$0xff] %vm846, %v821
  %887 = vst.msk [vmem:[%s3 + $0x140] sm:$0xff] %vm846, %v822
  %888 = vst.msk [vmem:[%s3 + $0x148] sm:$0xff] %vm846, %v823
  %889 = vst.msk [vmem:[%s3 + $0x150] sm:$0xff] %vm846, %v824
  %890 = vst.msk [vmem:[%s3 + $0x158] sm:$0xff] %vm846, %v825
  %891 = vst.msk [vmem:[%s3 + $0x160] sm:$0xff] %vm846, %v826
  %892 = vst.msk [vmem:[%s3 + $0x168] sm:$0xff] %vm846, %v827
  %893 = vst.msk [vmem:[%s3 + $0x170] sm:$0xff] %vm846, %v828
  %894 = vst.msk [vmem:[%s3 + $0x178] sm:$0xff] %vm846, %v829
  %895 = vst.msk [vmem:[%s3 + $0x180] sm:$0xff] %vm846, %v830
  %896 = vst.msk [vmem:[%s3 + $0x188] sm:$0xff] %vm846, %v831
  %897 = vst.msk [vmem:[%s3 + $0x190] sm:$0xff] %vm846, %v832
  %898 = vst.msk [vmem:[%s3 + $0x198] sm:$0xff] %vm846, %v833
  %899 = vst.msk [vmem:[%s3 + $0x1a0] sm:$0xff] %vm846, %v834
  %900 = vst.msk [vmem:[%s3 + $0x1a8] sm:$0xff] %vm846, %v835
  %901 = vst.msk [vmem:[%s3 + $0x1b0] sm:$0xff] %vm846, %v836
  %902 = vst.msk [vmem:[%s3 + $0x1b8] sm:$0xff] %vm846, %v837
  %903 = vst.msk [vmem:[%s3 + $0x1c0] sm:$0xff] %vm846, %v838
  %904 = vst.msk [vmem:[%s3 + $0x1c8] sm:$0xff] %vm846, %v839
  %905 = vst.msk [vmem:[%s3 + $0x1d0] sm:$0xff] %vm846, %v840
  %906 = vst.msk [vmem:[%s3 + $0x1d8] sm:$0xff] %vm846, %v841
  %907 = vst.msk [vmem:[%s3 + $0x1e0] sm:$0xff] %vm846, %v842
  %908 = vst.msk [vmem:[%s3 + $0x1e8] sm:$0xff] %vm846, %v843
  %909 = vst.msk [vmem:[%s3 + $0x1f0] sm:$0xff] %vm846, %v844
  %910 = vst.msk [vmem:[%s3 + $0x1f8] sm:$0xff] %vm846, %v845
  // Predicated region
  $region14: #{_lambda_.7} parent=0 // pred_check
    _
  $region15: #{_lambda_.7} parent=0 // pred_check_branch
    %912 = sbr.rel (0) target = $region17
  $region16: #{_lambda_.7} parent=0 // pred_region
    _
  $region17: #{_lambda_.7} parent=0 // pred_fallthru
    _
  // Predicated region
  $region18: #{_lambda_.7} parent=0 // pred_check
    _
  $region19: #{_lambda_.7} parent=0 // pred_check_branch
    %914 = sbr.rel (0) target = $region21
  $region20: #{_lambda_.7} parent=0 // pred_region
    _
  $region21: #{_lambda_.7} parent=0 // pred_fallthru
    _

// kernel: _lambda_.8
$region0: #{_lambda_.8}
  #allocation0 [shape = 'u32[]', space=smem, size = 0x4, offset = 0x4, fixed_abs, tag = 'smem constant byte address 0x4 - core index']
  #allocation1 [shape = 'u32[144,128]{1,0:T(1,128)}', space=vmem, size = 0x12000, scoped, tag = 'internal scratch']
  %s0 = inlined_call_operand.vmem [shape: f32[1152,16], index: 0, kind: input, shape index: {}]
  %s1 = inlined_call_operand.vmem [shape: f32[9,1,16], index: 1, kind: input, shape index: {}]
  %s2 = inlined_call_operand.vmem [shape: f32[1,16], index: 2, kind: input, shape index: {}, may-alias: {2,4}]
  %s3 = inlined_call_operand.vmem [shape: bf16[16,16], index: 3, kind: input, shape index: {}]
  %s4 = inlined_call_operand.vmem [shape: f32[1,16], index: 4, kind: input, shape index: {}, may-alias: {2,4}]
  %s5 = inlined_call_operand.vmem [shape: f32[128,16], index: 5, kind: output, shape index: {}]
  %s6 = sld [smem:[#allocation0]]
  $region30: #{_lambda_.8} parent=0
    _
  %s8 = ssub.s32 1, %s6
  %s9 = scalar_select 0, %s8, %s6
  // Predicated region
  $region2: #{_lambda_.8} parent=0 // pred_check
    _
  $region3: #{_lambda_.8} parent=0 // pred_check_branch
    %11 = sbr.rel (0) target = $region5
  $region4: #{_lambda_.8} parent=0 // pred_region
    _
  $region5: #{_lambda_.8} parent=0 // pred_fallthru
    _
  // Predicated region
  $region6: #{_lambda_.8} parent=0 // pred_check
    _
  $region7: #{_lambda_.8} parent=0 // pred_check_branch
    %13 = sbr.rel (0) target = $region9
  $region8: #{_lambda_.8} parent=0 // pred_region
    _
  $region9: #{_lambda_.8} parent=0 // pred_fallthru
    _
  // Predicated region
  $region10: #{_lambda_.8} parent=0 // pred_check
    _
  $region11: #{_lambda_.8} parent=0 // pred_check_branch
    %15 = sbr.rel (0) target = $region13
  $region12: #{_lambda_.8} parent=0 // pred_region
    _
  $region13: #{_lambda_.8} parent=0 // pred_fallthru
    _
  // Predicated region
  $region14: #{_lambda_.8} parent=0 // pred_check
    _
  $region15: #{_lambda_.8} parent=0 // pred_check_branch
    %17 = sbr.rel (0) target = $region17
  $region16: #{_lambda_.8} parent=0 // pred_region
    _
  $region17: #{_lambda_.8} parent=0 // pred_fallthru
    _
  // Predicated region
  $region18: #{_lambda_.8} parent=0 // pred_check
    _
  $region19: #{_lambda_.8} parent=0 // pred_check_branch
    %19 = sbr.rel (0) target = $region21
  $region20: #{_lambda_.8} parent=0 // pred_region
    _
  $region21: #{_lambda_.8} parent=0 // pred_fallthru
    _
  %v21 = vld [vmem:[%s0] sm:$0xff]
  %v22 = vld [vmem:[%s0 + $0x8] sm:$0xff]
  %v23 = vld [vmem:[%s0 + $0x10] sm:$0xff]
  %v24 = vld [vmem:[%s0 + $0x18] sm:$0xff]
  %v25 = vld [vmem:[%s0 + $0x20] sm:$0xff]
  %v26 = vld [vmem:[%s0 + $0x28] sm:$0xff]
  %v27 = vld [vmem:[%s0 + $0x30] sm:$0xff]
  %v28 = vld [vmem:[%s0 + $0x38] sm:$0xff]
  %v29 = vld [vmem:[%s0 + $0x40] sm:$0xff]
  %v30 = vld [vmem:[%s0 + $0x48] sm:$0xff]
  %v31 = vld [vmem:[%s0 + $0x50] sm:$0xff]
  %v32 = vld [vmem:[%s0 + $0x58] sm:$0xff]
  %v33 = vld [vmem:[%s0 + $0x60] sm:$0xff]
  %v34 = vld [vmem:[%s0 + $0x68] sm:$0xff]
  %v35 = vld [vmem:[%s0 + $0x70] sm:$0xff]
  %v36 = vld [vmem:[%s0 + $0x78] sm:$0xff]
  %v37 = vld [vmem:[%s1] sm:$0x1]
  %v39 = vlaneseq
  %v40 = vshrl.u32 %v39, 7
  %v41 = vsub.s32 0, %v40
  %v42 = vrot.slane %v37, %v41
  %v44 = vmul.f32 %v21, %v42
  %v45 = vmul.f32 %v22, %v42
  %v46 = vmul.f32 %v23, %v42
  %v47 = vmul.f32 %v24, %v42
  %v48 = vmul.f32 %v25, %v42
  %v49 = vmul.f32 %v26, %v42
  %v50 = vmul.f32 %v27, %v42
  %v51 = vmul.f32 %v28, %v42
  %v52 = vmul.f32 %v29, %v42
  %v53 = vmul.f32 %v30, %v42
  %v54 = vmul.f32 %v31, %v42
  %v55 = vmul.f32 %v32, %v42
  %v56 = vmul.f32 %v33, %v42
  %v57 = vmul.f32 %v34, %v42
  %v58 = vmul.f32 %v35, %v42
  %v59 = vmul.f32 %v36, %v42
  %v60 = vld [vmem:[%s0 + $0x80] sm:$0xff]
  %v61 = vld [vmem:[%s0 + $0x88] sm:$0xff]
  %v62 = vld [vmem:[%s0 + $0x90] sm:$0xff]
  %v63 = vld [vmem:[%s0 + $0x98] sm:$0xff]
  %v64 = vld [vmem:[%s0 + $0xa0] sm:$0xff]
  %v65 = vld [vmem:[%s0 + $0xa8] sm:$0xff]
  %v66 = vld [vmem:[%s0 + $0xb0] sm:$0xff]
  %v67 = vld [vmem:[%s0 + $0xb8] sm:$0xff]
  %v68 = vld [vmem:[%s0 + $0xc0] sm:$0xff]
  %v69 = vld [vmem:[%s0 + $0xc8] sm:$0xff]
  %v70 = vld [vmem:[%s0 + $0xd0] sm:$0xff]
  %v71 = vld [vmem:[%s0 + $0xd8] sm:$0xff]
  %v72 = vld [vmem:[%s0 + $0xe0] sm:$0xff]
  %v73 = vld [vmem:[%s0 + $0xe8] sm:$0xff]
  %v74 = vld [vmem:[%s0 + $0xf0] sm:$0xff]
  %v75 = vld [vmem:[%s0 + $0xf8] sm:$0xff]
  %s76 = scalar_lea.vmem %s1, 1
  %v77 = vld [vmem:[%s76] sm:$0x1]
  %v79 = vlaneseq
  %v80 = vshrl.u32 %v79, 7
  %v81 = vsub.s32 0, %v80
  %v82 = vrot.slane %v77, %v81
  %v84 = vmul.f32 %v60, %v82
  %v85 = vmul.f32 %v61, %v82
  %v86 = vmul.f32 %v62, %v82
  %v87 = vmul.f32 %v63, %v82
  %v88 = vmul.f32 %v64, %v82
  %v89 = vmul.f32 %v65, %v82
  %v90 = vmul.f32 %v66, %v82
  %v91 = vmul.f32 %v67, %v82
  %v92 = vmul.f32 %v68, %v82
  %v93 = vmul.f32 %v69, %v82
  %v94 = vmul.f32 %v70, %v82
  %v95 = vmul.f32 %v71, %v82
  %v96 = vmul.f32 %v72, %v82
  %v97 = vmul.f32 %v73, %v82
  %v98 = vmul.f32 %v74, %v82
  %v99 = vmul.f32 %v75, %v82
  %v100 = vadd.f32 %v44, %v84
  %v101 = vadd.f32 %v45, %v85
  %v102 = vadd.f32 %v46, %v86
  %v103 = vadd.f32 %v47, %v87
  %v104 = vadd.f32 %v48, %v88
  %v105 = vadd.f32 %v49, %v89
  %v106 = vadd.f32 %v50, %v90
  %v107 = vadd.f32 %v51, %v91
  %v108 = vadd.f32 %v52, %v92
  %v109 = vadd.f32 %v53, %v93
  %v110 = vadd.f32 %v54, %v94
  %v111 = vadd.f32 %v55, %v95
  %v112 = vadd.f32 %v56, %v96
  %v113 = vadd.f32 %v57, %v97
  %v114 = vadd.f32 %v58, %v98
  %v115 = vadd.f32 %v59, %v99
  %v116 = vld [vmem:[%s0 + $0x100] sm:$0xff]
  %v117 = vld [vmem:[%s0 + $0x108] sm:$0xff]
  %v118 = vld [vmem:[%s0 + $0x110] sm:$0xff]
  %v119 = vld [vmem:[%s0 + $0x118] sm:$0xff]
  %v120 = vld [vmem:[%s0 + $0x120] sm:$0xff]
  %v121 = vld [vmem:[%s0 + $0x128] sm:$0xff]
  %v122 = vld [vmem:[%s0 + $0x130] sm:$0xff]
  %v123 = vld [vmem:[%s0 + $0x138] sm:$0xff]
  %v124 = vld [vmem:[%s0 + $0x140] sm:$0xff]
  %v125 = vld [vmem:[%s0 + $0x148] sm:$0xff]
  %v126 = vld [vmem:[%s0 + $0x150] sm:$0xff]
  %v127 = vld [vmem:[%s0 + $0x158] sm:$0xff]
  %v128 = vld [vmem:[%s0 + $0x160] sm:$0xff]
  %v129 = vld [vmem:[%s0 + $0x168] sm:$0xff]
  %v130 = vld [vmem:[%s0 + $0x170] sm:$0xff]
  %v131 = vld [vmem:[%s0 + $0x178] sm:$0xff]
  %s132 = scalar_lea.vmem %s1, 2
  %v133 = vld [vmem:[%s132] sm:$0x1]
  %v135 = vlaneseq
  %v136 = vshrl.u32 %v135, 7
  %v137 = vsub.s32 0, %v136
  %v138 = vrot.slane %v133, %v137
  %v140 = vmul.f32 %v116, %v138
  %v141 = vmul.f32 %v117, %v138
  %v142 = vmul.f32 %v118, %v138
  %v143 = vmul.f32 %v119, %v138
  %v144 = vmul.f32 %v120, %v138
  %v145 = vmul.f32 %v121, %v138
  %v146 = vmul.f32 %v122, %v138
  %v147 = vmul.f32 %v123, %v138
  %v148 = vmul.f32 %v124, %v138
  %v149 = vmul.f32 %v125, %v138
  %v150 = vmul.f32 %v126, %v138
  %v151 = vmul.f32 %v127, %v138
  %v152 = vmul.f32 %v128, %v138
  %v153 = vmul.f32 %v129, %v138
  %v154 = vmul.f32 %v130, %v138
  %v155 = vmul.f32 %v131, %v138
  %v156 = vadd.f32 %v100, %v140
  %v157 = vadd.f32 %v101, %v141
  %v158 = vadd.f32 %v102, %v142
  %v159 = vadd.f32 %v103, %v143
  %v160 = vadd.f32 %v104, %v144
  %v161 = vadd.f32 %v105, %v145
  %v162 = vadd.f32 %v106, %v146
  %v163 = vadd.f32 %v107, %v147
  %v164 = vadd.f32 %v108, %v148
  %v165 = vadd.f32 %v109, %v149
  %v166 = vadd.f32 %v110, %v150
  %v167 = vadd.f32 %v111, %v151
  %v168 = vadd.f32 %v112, %v152
  %v169 = vadd.f32 %v113, %v153
  %v170 = vadd.f32 %v114, %v154
  %v171 = vadd.f32 %v115, %v155
  %v172 = vld [vmem:[%s0 + $0x180] sm:$0xff]
  %v173 = vld [vmem:[%s0 + $0x188] sm:$0xff]
  %v174 = vld [vmem:[%s0 + $0x190] sm:$0xff]
  %v175 = vld [vmem:[%s0 + $0x198] sm:$0xff]
  %v176 = vld [vmem:[%s0 + $0x1a0] sm:$0xff]
  %v177 = vld [vmem:[%s0 + $0x1a8] sm:$0xff]
  %v178 = vld [vmem:[%s0 + $0x1b0] sm:$0xff]
  %v179 = vld [vmem:[%s0 + $0x1b8] sm:$0xff]
  %v180 = vld [vmem:[%s0 + $0x1c0] sm:$0xff]
  %v181 = vld [vmem:[%s0 + $0x1c8] sm:$0xff]
  %v182 = vld [vmem:[%s0 + $0x1d0] sm:$0xff]
  %v183 = vld [vmem:[%s0 + $0x1d8] sm:$0xff]
  %v184 = vld [vmem:[%s0 + $0x1e0] sm:$0xff]
  %v185 = vld [vmem:[%s0 + $0x1e8] sm:$0xff]
  %v186 = vld [vmem:[%s0 + $0x1f0] sm:$0xff]
  %v187 = vld [vmem:[%s0 + $0x1f8] sm:$0xff]
  %s188 = scalar_lea.vmem %s1, 3
  %v189 = vld [vmem:[%s188] sm:$0x1]
  %v191 = vlaneseq
  %v192 = vshrl.u32 %v191, 7
  %v193 = vsub.s32 0, %v192
  %v194 = vrot.slane %v189, %v193
  %v196 = vmul.f32 %v172, %v194
  %v197 = vmul.f32 %v173, %v194
  %v198 = vmul.f32 %v174, %v194
  %v199 = vmul.f32 %v175, %v194
  %v200 = vmul.f32 %v176, %v194
  %v201 = vmul.f32 %v177, %v194
  %v202 = vmul.f32 %v178, %v194
  %v203 = vmul.f32 %v179, %v194
  %v204 = vmul.f32 %v180, %v194
  %v205 = vmul.f32 %v181, %v194
  %v206 = vmul.f32 %v182, %v194
  %v207 = vmul.f32 %v183, %v194
  %v208 = vmul.f32 %v184, %v194
  %v209 = vmul.f32 %v185, %v194
  %v210 = vmul.f32 %v186, %v194
  %v211 = vmul.f32 %v187, %v194
  %v212 = vadd.f32 %v156, %v196
  %v213 = vadd.f32 %v157, %v197
  %v214 = vadd.f32 %v158, %v198
  %v215 = vadd.f32 %v159, %v199
  %v216 = vadd.f32 %v160, %v200
  %v217 = vadd.f32 %v161, %v201
  %v218 = vadd.f32 %v162, %v202
  %v219 = vadd.f32 %v163, %v203
  %v220 = vadd.f32 %v164, %v204
  %v221 = vadd.f32 %v165, %v205
  %v222 = vadd.f32 %v166, %v206
  %v223 = vadd.f32 %v167, %v207
  %v224 = vadd.f32 %v168, %v208
  %v225 = vadd.f32 %v169, %v209
  %v226 = vadd.f32 %v170, %v210
  %v227 = vadd.f32 %v171, %v211
  %v228 = vld [vmem:[%s0 + $0x200] sm:$0xff]
  %v229 = vld [vmem:[%s0 + $0x208] sm:$0xff]
  %v230 = vld [vmem:[%s0 + $0x210] sm:$0xff]
  %v231 = vld [vmem:[%s0 + $0x218] sm:$0xff]
  %v232 = vld [vmem:[%s0 + $0x220] sm:$0xff]
  %v233 = vld [vmem:[%s0 + $0x228] sm:$0xff]
  %v234 = vld [vmem:[%s0 + $0x230] sm:$0xff]
  %v235 = vld [vmem:[%s0 + $0x238] sm:$0xff]
  %v236 = vld [vmem:[%s0 + $0x240] sm:$0xff]
  %v237 = vld [vmem:[%s0 + $0x248] sm:$0xff]
  %v238 = vld [vmem:[%s0 + $0x250] sm:$0xff]
  %v239 = vld [vmem:[%s0 + $0x258] sm:$0xff]
  %v240 = vld [vmem:[%s0 + $0x260] sm:$0xff]
  %v241 = vld [vmem:[%s0 + $0x268] sm:$0xff]
  %v242 = vld [vmem:[%s0 + $0x270] sm:$0xff]
  %v243 = vld [vmem:[%s0 + $0x278] sm:$0xff]
  %s244 = scalar_lea.vmem %s1, 4
  %v245 = vld [vmem:[%s244] sm:$0x1]
  %v247 = vlaneseq
  %v248 = vshrl.u32 %v247, 7
  %v249 = vsub.s32 0, %v248
  %v250 = vrot.slane %v245, %v249
  %v252 = vmul.f32 %v228, %v250
  %v253 = vmul.f32 %v229, %v250
  %v254 = vmul.f32 %v230, %v250
  %v255 = vmul.f32 %v231, %v250
  %v256 = vmul.f32 %v232, %v250
  %v257 = vmul.f32 %v233, %v250
  %v258 = vmul.f32 %v234, %v250
  %v259 = vmul.f32 %v235, %v250
  %v260 = vmul.f32 %v236, %v250
  %v261 = vmul.f32 %v237, %v250
  %v262 = vmul.f32 %v238, %v250
  %v263 = vmul.f32 %v239, %v250
  %v264 = vmul.f32 %v240, %v250
  %v265 = vmul.f32 %v241, %v250
  %v266 = vmul.f32 %v242, %v250
  %v267 = vmul.f32 %v243, %v250
  %v268 = vadd.f32 %v212, %v252
  %v269 = vadd.f32 %v213, %v253
  %v270 = vadd.f32 %v214, %v254
  %v271 = vadd.f32 %v215, %v255
  %v272 = vadd.f32 %v216, %v256
  %v273 = vadd.f32 %v217, %v257
  %v274 = vadd.f32 %v218, %v258
  %v275 = vadd.f32 %v219, %v259
  %v276 = vadd.f32 %v220, %v260
  %v277 = vadd.f32 %v221, %v261
  %v278 = vadd.f32 %v222, %v262
  %v279 = vadd.f32 %v223, %v263
  %v280 = vadd.f32 %v224, %v264
  %v281 = vadd.f32 %v225, %v265
  %v282 = vadd.f32 %v226, %v266
  %v283 = vadd.f32 %v227, %v267
  %v284 = vld [vmem:[%s0 + $0x280] sm:$0xff]
  %v285 = vld [vmem:[%s0 + $0x288] sm:$0xff]
  %v286 = vld [vmem:[%s0 + $0x290] sm:$0xff]
  %v287 = vld [vmem:[%s0 + $0x298] sm:$0xff]
  %v288 = vld [vmem:[%s0 + $0x2a0] sm:$0xff]
  %v289 = vld [vmem:[%s0 + $0x2a8] sm:$0xff]
  %v290 = vld [vmem:[%s0 + $0x2b0] sm:$0xff]
  %v291 = vld [vmem:[%s0 + $0x2b8] sm:$0xff]
  %v292 = vld [vmem:[%s0 + $0x2c0] sm:$0xff]
  %v293 = vld [vmem:[%s0 + $0x2c8] sm:$0xff]
  %v294 = vld [vmem:[%s0 + $0x2d0] sm:$0xff]
  %v295 = vld [vmem:[%s0 + $0x2d8] sm:$0xff]
  %v296 = vld [vmem:[%s0 + $0x2e0] sm:$0xff]
  %v297 = vld [vmem:[%s0 + $0x2e8] sm:$0xff]
  %v298 = vld [vmem:[%s0 + $0x2f0] sm:$0xff]
  %v299 = vld [vmem:[%s0 + $0x2f8] sm:$0xff]
  %s300 = scalar_lea.vmem %s1, 5
  %v301 = vld [vmem:[%s300] sm:$0x1]
  %v303 = vlaneseq
  %v304 = vshrl.u32 %v303, 7
  %v305 = vsub.s32 0, %v304
  %v306 = vrot.slane %v301, %v305
  %v308 = vmul.f32 %v284, %v306
  %v309 = vmul.f32 %v285, %v306
  %v310 = vmul.f32 %v286, %v306
  %v311 = vmul.f32 %v287, %v306
  %v312 = vmul.f32 %v288, %v306
  %v313 = vmul.f32 %v289, %v306
  %v314 = vmul.f32 %v290, %v306
  %v315 = vmul.f32 %v291, %v306
  %v316 = vmul.f32 %v292, %v306
  %v317 = vmul.f32 %v293, %v306
  %v318 = vmul.f32 %v294, %v306
  %v319 = vmul.f32 %v295, %v306
  %v320 = vmul.f32 %v296, %v306
  %v321 = vmul.f32 %v297, %v306
  %v322 = vmul.f32 %v298, %v306
  %v323 = vmul.f32 %v299, %v306
  %v324 = vadd.f32 %v268, %v308
  %v325 = vadd.f32 %v269, %v309
  %v326 = vadd.f32 %v270, %v310
  %v327 = vadd.f32 %v271, %v311
  %v328 = vadd.f32 %v272, %v312
  %v329 = vadd.f32 %v273, %v313
  %v330 = vadd.f32 %v274, %v314
  %v331 = vadd.f32 %v275, %v315
  %v332 = vadd.f32 %v276, %v316
  %v333 = vadd.f32 %v277, %v317
  %v334 = vadd.f32 %v278, %v318
  %v335 = vadd.f32 %v279, %v319
  %v336 = vadd.f32 %v280, %v320
  %v337 = vadd.f32 %v281, %v321
  %v338 = vadd.f32 %v282, %v322
  %v339 = vadd.f32 %v283, %v323
  %v340 = vld [vmem:[%s0 + $0x300] sm:$0xff]
  %v341 = vld [vmem:[%s0 + $0x308] sm:$0xff]
  %v342 = vld [vmem:[%s0 + $0x310] sm:$0xff]
  %v343 = vld [vmem:[%s0 + $0x318] sm:$0xff]
  %v344 = vld [vmem:[%s0 + $0x320] sm:$0xff]
  %v345 = vld [vmem:[%s0 + $0x328] sm:$0xff]
  %v346 = vld [vmem:[%s0 + $0x330] sm:$0xff]
  %v347 = vld [vmem:[%s0 + $0x338] sm:$0xff]
  %v348 = vld [vmem:[%s0 + $0x340] sm:$0xff]
  %v349 = vld [vmem:[%s0 + $0x348] sm:$0xff]
  %v350 = vld [vmem:[%s0 + $0x350] sm:$0xff]
  %v351 = vld [vmem:[%s0 + $0x358] sm:$0xff]
  %v352 = vld [vmem:[%s0 + $0x360] sm:$0xff]
  %v353 = vld [vmem:[%s0 + $0x368] sm:$0xff]
  %v354 = vld [vmem:[%s0 + $0x370] sm:$0xff]
  %v355 = vld [vmem:[%s0 + $0x378] sm:$0xff]
  %s356 = scalar_lea.vmem %s1, 6
  %v357 = vld [vmem:[%s356] sm:$0x1]
  %v359 = vlaneseq
  %v360 = vshrl.u32 %v359, 7
  %v361 = vsub.s32 0, %v360
  %v362 = vrot.slane %v357, %v361
  %v364 = vmul.f32 %v340, %v362
  %v365 = vmul.f32 %v341, %v362
  %v366 = vmul.f32 %v342, %v362
  %v367 = vmul.f32 %v343, %v362
  %v368 = vmul.f32 %v344, %v362
  %v369 = vmul.f32 %v345, %v362
  %v370 = vmul.f32 %v346, %v362
  %v371 = vmul.f32 %v347, %v362
  %v372 = vmul.f32 %v348, %v362
  %v373 = vmul.f32 %v349, %v362
  %v374 = vmul.f32 %v350, %v362
  %v375 = vmul.f32 %v351, %v362
  %v376 = vmul.f32 %v352, %v362
  %v377 = vmul.f32 %v353, %v362
  %v378 = vmul.f32 %v354, %v362
  %v379 = vmul.f32 %v355, %v362
  %v380 = vadd.f32 %v324, %v364
  %v381 = vadd.f32 %v325, %v365
  %v382 = vadd.f32 %v326, %v366
  %v383 = vadd.f32 %v327, %v367
  %v384 = vadd.f32 %v328, %v368
  %v385 = vadd.f32 %v329, %v369
  %v386 = vadd.f32 %v330, %v370
  %v387 = vadd.f32 %v331, %v371
  %v388 = vadd.f32 %v332, %v372
  %v389 = vadd.f32 %v333, %v373
  %v390 = vadd.f32 %v334, %v374
  %v391 = vadd.f32 %v335, %v375
  %v392 = vadd.f32 %v336, %v376
  %v393 = vadd.f32 %v337, %v377
  %v394 = vadd.f32 %v338, %v378
  %v395 = vadd.f32 %v339, %v379
  %v396 = vld [vmem:[%s0 + $0x380] sm:$0xff]
  %v397 = vld [vmem:[%s0 + $0x388] sm:$0xff]
  %v398 = vld [vmem:[%s0 + $0x390] sm:$0xff]
  %v399 = vld [vmem:[%s0 + $0x398] sm:$0xff]
  %v400 = vld [vmem:[%s0 + $0x3a0] sm:$0xff]
  %v401 = vld [vmem:[%s0 + $0x3a8] sm:$0xff]
  %v402 = vld [vmem:[%s0 + $0x3b0] sm:$0xff]
  %v403 = vld [vmem:[%s0 + $0x3b8] sm:$0xff]
  %v404 = vld [vmem:[%s0 + $0x3c0] sm:$0xff]
  %v405 = vld [vmem:[%s0 + $0x3c8] sm:$0xff]
  %v406 = vld [vmem:[%s0 + $0x3d0] sm:$0xff]
  %v407 = vld [vmem:[%s0 + $0x3d8] sm:$0xff]
  %v408 = vld [vmem:[%s0 + $0x3e0] sm:$0xff]
  %v409 = vld [vmem:[%s0 + $0x3e8] sm:$0xff]
  %v410 = vld [vmem:[%s0 + $0x3f0] sm:$0xff]
  %v411 = vld [vmem:[%s0 + $0x3f8] sm:$0xff]
  %s412 = scalar_lea.vmem %s1, 7
  %v413 = vld [vmem:[%s412] sm:$0x1]
  %v415 = vlaneseq
  %v416 = vshrl.u32 %v415, 7
  %v417 = vsub.s32 0, %v416
  %v418 = vrot.slane %v413, %v417
  %v420 = vmul.f32 %v396, %v418
  %v421 = vmul.f32 %v397, %v418
  %v422 = vmul.f32 %v398, %v418
  %v423 = vmul.f32 %v399, %v418
  %v424 = vmul.f32 %v400, %v418
  %v425 = vmul.f32 %v401, %v418
  %v426 = vmul.f32 %v402, %v418
  %v427 = vmul.f32 %v403, %v418
  %v428 = vmul.f32 %v404, %v418
  %v429 = vmul.f32 %v405, %v418
  %v430 = vmul.f32 %v406, %v418
  %v431 = vmul.f32 %v407, %v418
  %v432 = vmul.f32 %v408, %v418
  %v433 = vmul.f32 %v409, %v418
  %v434 = vmul.f32 %v410, %v418
  %v435 = vmul.f32 %v411, %v418
  %v436 = vadd.f32 %v380, %v420
  %v437 = vadd.f32 %v381, %v421
  %v438 = vadd.f32 %v382, %v422
  %v439 = vadd.f32 %v383, %v423
  %v440 = vadd.f32 %v384, %v424
  %v441 = vadd.f32 %v385, %v425
  %v442 = vadd.f32 %v386, %v426
  %v443 = vadd.f32 %v387, %v427
  %v444 = vadd.f32 %v388, %v428
  %v445 = vadd.f32 %v389, %v429
  %v446 = vadd.f32 %v390, %v430
  %v447 = vadd.f32 %v391, %v431
  %v448 = vadd.f32 %v392, %v432
  %v449 = vadd.f32 %v393, %v433
  %v450 = vadd.f32 %v394, %v434
  %v451 = vadd.f32 %v395, %v435
  %v452 = vld [vmem:[%s0 + $0x400] sm:$0xff]
  %v453 = vld [vmem:[%s0 + $0x408] sm:$0xff]
  %v454 = vld [vmem:[%s0 + $0x410] sm:$0xff]
  %v455 = vld [vmem:[%s0 + $0x418] sm:$0xff]
  %v456 = vld [vmem:[%s0 + $0x420] sm:$0xff]
  %v457 = vld [vmem:[%s0 + $0x428] sm:$0xff]
  %v458 = vld [vmem:[%s0 + $0x430] sm:$0xff]
  %v459 = vld [vmem:[%s0 + $0x438] sm:$0xff]
  %v460 = vld [vmem:[%s0 + $0x440] sm:$0xff]
  %v461 = vld [vmem:[%s0 + $0x448] sm:$0xff]
  %v462 = vld [vmem:[%s0 + $0x450] sm:$0xff]
  %v463 = vld [vmem:[%s0 + $0x458] sm:$0xff]
  %v464 = vld [vmem:[%s0 + $0x460] sm:$0xff]
  %v465 = vld [vmem:[%s0 + $0x468] sm:$0xff]
  %v466 = vld [vmem:[%s0 + $0x470] sm:$0xff]
  %v467 = vld [vmem:[%s0 + $0x478] sm:$0xff]
  %s468 = scalar_lea.vmem %s1, 8
  %v469 = vld [vmem:[%s468] sm:$0x1]
  %v471 = vlaneseq
  %v472 = vshrl.u32 %v471, 7
  %v473 = vsub.s32 0, %v472
  %v474 = vrot.slane %v469, %v473
  %v476 = vmul.f32 %v452, %v474
  %v477 = vmul.f32 %v453, %v474
  %v478 = vmul.f32 %v454, %v474
  %v479 = vmul.f32 %v455, %v474
  %v480 = vmul.f32 %v456, %v474
  %v481 = vmul.f32 %v457, %v474
  %v482 = vmul.f32 %v458, %v474
  %v483 = vmul.f32 %v459, %v474
  %v484 = vmul.f32 %v460, %v474
  %v485 = vmul.f32 %v461, %v474
  %v486 = vmul.f32 %v462, %v474
  %v487 = vmul.f32 %v463, %v474
  %v488 = vmul.f32 %v464, %v474
  %v489 = vmul.f32 %v465, %v474
  %v490 = vmul.f32 %v466, %v474
  %v491 = vmul.f32 %v467, %v474
  %v492 = vadd.f32 %v436, %v476
  %v493 = vadd.f32 %v437, %v477
  %v494 = vadd.f32 %v438, %v478
  %v495 = vadd.f32 %v439, %v479
  %v496 = vadd.f32 %v440, %v480
  %v497 = vadd.f32 %v441, %v481
  %v498 = vadd.f32 %v442, %v482
  %v499 = vadd.f32 %v443, %v483
  %v500 = vadd.f32 %v444, %v484
  %v501 = vadd.f32 %v445, %v485
  %v502 = vadd.f32 %v446, %v486
  %v503 = vadd.f32 %v447, %v487
  %v504 = vadd.f32 %v448, %v488
  %v505 = vadd.f32 %v449, %v489
  %v506 = vadd.f32 %v450, %v490
  %v507 = vadd.f32 %v451, %v491
  %v508 = vld [vmem:[%s2] sm:$0x1]
  %v510 = vlaneseq
  %v511 = vshrl.u32 %v510, 7
  %v512 = vsub.s32 0, %v511
  %v513 = vrot.slane %v508, %v512
  %v515 = vadd.f32 %v492, %v513
  %v516 = vadd.f32 %v493, %v513
  %v517 = vadd.f32 %v494, %v513
  %v518 = vadd.f32 %v495, %v513
  %v519 = vadd.f32 %v496, %v513
  %v520 = vadd.f32 %v497, %v513
  %v521 = vadd.f32 %v498, %v513
  %v522 = vadd.f32 %v499, %v513
  %v523 = vadd.f32 %v500, %v513
  %v524 = vadd.f32 %v501, %v513
  %v525 = vadd.f32 %v502, %v513
  %v526 = vadd.f32 %v503, %v513
  %v527 = vadd.f32 %v504, %v513
  %v528 = vadd.f32 %v505, %v513
  %v529 = vadd.f32 %v506, %v513
  %v530 = vadd.f32 %v507, %v513
  %v531 = vmax.f32 %v515, 0.0
  %v532 = vmax.f32 %v516, 0.0
  %v533 = vmax.f32 %v517, 0.0
  %v534 = vmax.f32 %v518, 0.0
  %v535 = vmax.f32 %v519, 0.0
  %v536 = vmax.f32 %v520, 0.0
  %v537 = vmax.f32 %v521, 0.0
  %v538 = vmax.f32 %v522, 0.0
  %v539 = vmax.f32 %v523, 0.0
  %v540 = vmax.f32 %v524, 0.0
  %v541 = vmax.f32 %v525, 0.0
  %v542 = vmax.f32 %v526, 0.0
  %v543 = vmax.f32 %v527, 0.0
  %v544 = vmax.f32 %v528, 0.0
  %v545 = vmax.f32 %v529, 0.0
  %v546 = vmax.f32 %v530, 0.0
  %v547 = vld [vmem:[%s3] sm:$0xf]
  %v548 = vld [vmem:[%s3 + $0x4] sm:$0xf]
  %v549 = vpack.c.bf16 %v532, %v531
  %v550 = vpack.c.bf16 %v534, %v533
  %v551 = vpack.c.bf16 %v536, %v535
  %v552 = vpack.c.bf16 %v538, %v537
  %v553 = vpack.c.bf16 %v540, %v539
  %v554 = vpack.c.bf16 %v542, %v541
  %v555 = vpack.c.bf16 %v544, %v543
  %v556 = vpack.c.bf16 %v546, %v545
  %v557 = vld [vmem:[%s4] sm:$0x1]
  %v559 = vlaneseq
  %v560 = vshrl.u32 %v559, 7
  %v561 = vsub.s32 0, %v560
  %v562 = vrot.slane %v557, %v561
  %v566 = vunpack.c.l.b16 %v547
  %v567 = vunpack.c.l.b16 %v548
  %v568 = vpack.c.b16 %v567, %v566
  %vm570 = vcmask 130048
  %v572 = vsel %vm570, %v549, 0
  %v575 = vsel %vm570, %v550, 0
  %v578 = vsel %vm570, %v551, 0
  %v581 = vsel %vm570, %v552, 0
  %v584 = vsel %vm570, %v553, 0
  %v587 = vsel %vm570, %v554, 0
  %v590 = vsel %vm570, %v555, 0
  %v593 = vsel %vm570, %v556, 0
  %595 = vmatprep.subr.bf16.mxu0 0
  %596 = vmatpush1.bf16.msra.mxu0 %v568
  %597 = vmatprep.subr.bf16.mxu0 0
  %598 = vmatpush1.bf16.msra.mxu0 0
  %599 = vmatprep.subr.bf16.mxu0 0
  %600 = vmatpush1.bf16.msra.mxu0 0
  %601 = vmatprep.subr.bf16.mxu0 0
  %602 = vmatpush1.bf16.msra.mxu0 0
  %603 = vmatprep.subr.bf16.mxu0 0
  %604 = vmatpush1.bf16.msra.mxu0 0
  %605 = vmatprep.subr.bf16.mxu0 0
  %606 = vmatpush1.bf16.msra.mxu0 0
  %607 = vmatprep.subr.bf16.mxu0 0
  %608 = vmatpush1.bf16.msra.mxu0 0
  %609 = vmatprep.subr.bf16.mxu0 0
  %610 = vmatpush1.bf16.msra.mxu0 0
  %611 = vmatprep.subr.bf16.mxu0 0
  %612 = vmatpush1.bf16.msra.mxu0 0
  %613 = vmatprep.subr.bf16.mxu0 0
  %614 = vmatpush1.bf16.msra.mxu0 0
  %615 = vmatprep.subr.bf16.mxu0 0
  %616 = vmatpush1.bf16.msra.mxu0 0
  %617 = vmatprep.subr.bf16.mxu0 0
  %618 = vmatpush1.bf16.msra.mxu0 0
  %619 = vmatprep.subr.bf16.mxu0 0
  %620 = vmatpush1.bf16.msra.mxu0 0
  %621 = vmatprep.subr.bf16.mxu0 0
  %622 = vmatpush1.bf16.msra.mxu0 0
  %623 = vmatprep.subr.bf16.mxu0 0
  %624 = vmatpush1.bf16.msra.mxu0 0
  %625 = vmatprep.subr.bf16.mxu0 0
  %626 = vmatpush1.bf16.msra.mxu0 0
  %627 = vmatprep.mubr.bf16.mxu0 0
  %628 = vmatmul.mubr.bf16.gmra.mrb[0].mxu0 %v572
  %v629 = vpop.f32.mrb[0].mxu0
  %v630 = vadd.f32 %v562, %v629
  %v631 = vpop.f32.mrb[0].mxu0
  %v632 = vpop.f32.mrb[0].mxu0
  %v633 = vadd.f32 %v562, %v632
  %v634 = vpop.f32.mrb[0].mxu0
  %635 = vmatprep.mubr.bf16.mxu0 0
  %636 = vmatmul.mubr.bf16.gmra.mrb[0].mxu0 %v575
  %v637 = vpop.f32.mrb[0].mxu0
  %v638 = vadd.f32 %v562, %v637
  %v639 = vpop.f32.mrb[0].mxu0
  %v640 = vpop.f32.mrb[0].mxu0
  %v641 = vadd.f32 %v562, %v640
  %v642 = vpop.f32.mrb[0].mxu0
  %643 = vmatprep.mubr.bf16.mxu0 0
  %644 = vmatmul.mubr.bf16.gmra.mrb[0].mxu0 %v578
  %v645 = vpop.f32.mrb[0].mxu0
  %v646 = vadd.f32 %v562, %v645
  %v647 = vpop.f32.mrb[0].mxu0
  %v648 = vpop.f32.mrb[0].mxu0
  %v649 = vadd.f32 %v562, %v648
  %v650 = vpop.f32.mrb[0].mxu0
  %651 = vmatprep.mubr.bf16.mxu0 0
  %652 = vmatmul.mubr.bf16.gmra.mrb[0].mxu0 %v581
  %v653 = vpop.f32.mrb[0].mxu0
  %v654 = vadd.f32 %v562, %v653
  %v655 = vpop.f32.mrb[0].mxu0
  %v656 = vpop.f32.mrb[0].mxu0
  %v657 = vadd.f32 %v562, %v656
  %v658 = vpop.f32.mrb[0].mxu0
  %659 = vmatprep.mubr.bf16.mxu0 0
  %660 = vmatmul.mubr.bf16.gmra.mrb[0].mxu0 %v584
  %v661 = vpop.f32.mrb[0].mxu0
  %v662 = vadd.f32 %v562, %v661
  %v663 = vpop.f32.mrb[0].mxu0
  %v664 = vpop.f32.mrb[0].mxu0
  %v665 = vadd.f32 %v562, %v664
  %v666 = vpop.f32.mrb[0].mxu0
  %667 = vmatprep.mubr.bf16.mxu0 0
  %668 = vmatmul.mubr.bf16.gmra.mrb[0].mxu0 %v587
  %v669 = vpop.f32.mrb[0].mxu0
  %v670 = vadd.f32 %v562, %v669
  %v671 = vpop.f32.mrb[0].mxu0
  %v672 = vpop.f32.mrb[0].mxu0
  %v673 = vadd.f32 %v562, %v672
  %v674 = vpop.f32.mrb[0].mxu0
  %675 = vmatprep.mubr.bf16.mxu0 0
  %676 = vmatmul.mubr.bf16.gmra.mrb[0].mxu0 %v590
  %v677 = vpop.f32.mrb[0].mxu0
  %v678 = vadd.f32 %v562, %v677
  %v679 = vpop.f32.mrb[0].mxu0
  %v680 = vpop.f32.mrb[0].mxu0
  %v681 = vadd.f32 %v562, %v680
  %v682 = vpop.f32.mrb[0].mxu0
  %683 = vmatprep.mubr.bf16.mxu0 0
  %684 = vmatmul.mubr.bf16.gmra.mrb[0].mxu0 %v593
  %v685 = vpop.f32.mrb[0].mxu0
  %v686 = vadd.f32 %v562, %v685
  %v687 = vpop.f32.mrb[0].mxu0
  %v688 = vpop.f32.mrb[0].mxu0
  %v689 = vadd.f32 %v562, %v688
  %v690 = vpop.f32.mrb[0].mxu0
  %691 = vdwg.mxu0
  %692 = vst.msk [vmem:[%s5] sm:$0xff] %vm570, %v630
  %693 = vst.msk [vmem:[%s5 + $0x8] sm:$0xff] %vm570, %v633
  %694 = vst.msk [vmem:[%s5 + $0x10] sm:$0xff] %vm570, %v638
  %695 = vst.msk [vmem:[%s5 + $0x18] sm:$0xff] %vm570, %v641
  %696 = vst.msk [vmem:[%s5 + $0x20] sm:$0xff] %vm570, %v646
  %697 = vst.msk [vmem:[%s5 + $0x28] sm:$0xff] %vm570, %v649
  %698 = vst.msk [vmem:[%s5 + $0x30] sm:$0xff] %vm570, %v654
  %699 = vst.msk [vmem:[%s5 + $0x38] sm:$0xff] %vm570, %v657
  %700 = vst.msk [vmem:[%s5 + $0x40] sm:$0xff] %vm570, %v662
  %701 = vst.msk [vmem:[%s5 + $0x48] sm:$0xff] %vm570, %v665
  %702 = vst.msk [vmem:[%s5 + $0x50] sm:$0xff] %vm570, %v670
  %703 = vst.msk [vmem:[%s5 + $0x58] sm:$0xff] %vm570, %v673
  %704 = vst.msk [vmem:[%s5 + $0x60] sm:$0xff] %vm570, %v678
  %705 = vst.msk [vmem:[%s5 + $0x68] sm:$0xff] %vm570, %v681
  %706 = vst.msk [vmem:[%s5 + $0x70] sm:$0xff] %vm570, %v686
  %707 = vst.msk [vmem:[%s5 + $0x78] sm:$0xff] %vm570, %v689
  // Predicated region
  $region22: #{_lambda_.8} parent=0 // pred_check
    _
  $region23: #{_lambda_.8} parent=0 // pred_check_branch
    %709 = sbr.rel (0) target = $region25
  $region24: #{_lambda_.8} parent=0 // pred_region
    _
  $region25: #{_lambda_.8} parent=0 // pred_fallthru
    _
  // Predicated region
  $region26: #{_lambda_.8} parent=0 // pred_check
    _
  $region27: #{_lambda_.8} parent=0 // pred_check_branch
    %711 = sbr.rel (0) target = $region29
  $region28: #{_lambda_.8} parent=0 // pred_region
    _
  $region29: #{_lambda_.8} parent=0 // pred_fallthru
    _

// kernel: _lambda_.9
$region0: #{_lambda_.9}
  #allocation0 [shape = 'u32[]', space=smem, size = 0x4, offset = 0x4, fixed_abs, tag = 'smem constant byte address 0x4 - core index']
  #allocation1 [shape = 'u32[144,128]{1,0:T(1,128)}', space=vmem, size = 0x12000, scoped, tag = 'internal scratch']
  %s0 = inlined_call_operand.vmem [shape: f32[288,16], index: 0, kind: input, shape index: {}]
  %s1 = inlined_call_operand.vmem [shape: f32[288,1], index: 1, kind: input, shape index: {}]
  %s2 = inlined_call_operand.vmem [shape: bf16[16,32], index: 2, kind: input, shape index: {}]
  %s3 = inlined_call_operand.vmem [shape: f32[1,32], index: 3, kind: input, shape index: {}, may-alias: {3,5}]
  %s4 = inlined_call_operand.vmem [shape: f32[9,1,32], index: 4, kind: input, shape index: {}]
  %s5 = inlined_call_operand.vmem [shape: f32[1,32], index: 5, kind: input, shape index: {}, may-alias: {3,5}]
  %s6 = inlined_call_operand.vmem [shape: bf16[32,24], index: 6, kind: input, shape index: {}]
  %s7 = inlined_call_operand.vmem [shape: f32[1,24], index: 7, kind: input, shape index: {}]
  %s8 = inlined_call_operand.vmem [shape: f32[32,24], index: 8, kind: output, shape index: {}]
  %s9 = sld [smem:[#allocation0]]
  $region42: #{_lambda_.9} parent=0
    _
  %s11 = ssub.s32 1, %s9
  %s12 = scalar_select 0, %s11, %s9
  // Predicated region
  $region2: #{_lambda_.9} parent=0 // pred_check
    _
  $region3: #{_lambda_.9} parent=0 // pred_check_branch
    %14 = sbr.rel (0) target = $region5
  $region4: #{_lambda_.9} parent=0 // pred_region
    _
  $region5: #{_lambda_.9} parent=0 // pred_fallthru
    _
  // Predicated region
  $region6: #{_lambda_.9} parent=0 // pred_check
    _
  $region7: #{_lambda_.9} parent=0 // pred_check_branch
    %16 = sbr.rel (0) target = $region9
  $region8: #{_lambda_.9} parent=0 // pred_region
    _
  $region9: #{_lambda_.9} parent=0 // pred_fallthru
    _
  // Predicated region
  $region10: #{_lambda_.9} parent=0 // pred_check
    _
  $region11: #{_lambda_.9} parent=0 // pred_check_branch
    %18 = sbr.rel (0) target = $region13
  $region12: #{_lambda_.9} parent=0 // pred_region
    _
  $region13: #{_lambda_.9} parent=0 // pred_fallthru
    _
  // Predicated region
  $region14: #{_lambda_.9} parent=0 // pred_check
    _
  $region15: #{_lambda_.9} parent=0 // pred_check_branch
    %20 = sbr.rel (0) target = $region17
  $region16: #{_lambda_.9} parent=0 // pred_region
    _
  $region17: #{_lambda_.9} parent=0 // pred_fallthru
    _
  // Predicated region
  $region18: #{_lambda_.9} parent=0 // pred_check
    _
  $region19: #{_lambda_.9} parent=0 // pred_check_branch
    %22 = sbr.rel (0) target = $region21
  $region20: #{_lambda_.9} parent=0 // pred_region
    _
  $region21: #{_lambda_.9} parent=0 // pred_fallthru
    _
  // Predicated region
  $region22: #{_lambda_.9} parent=0 // pred_check
    _
  $region23: #{_lambda_.9} parent=0 // pred_check_branch
    %24 = sbr.rel (0) target = $region25
  $region24: #{_lambda_.9} parent=0 // pred_region
    _
  $region25: #{_lambda_.9} parent=0 // pred_fallthru
    _
  // Predicated region
  $region26: #{_lambda_.9} parent=0 // pred_check
    _
  $region27: #{_lambda_.9} parent=0 // pred_check_branch
    %26 = sbr.rel (0) target = $region29
  $region28: #{_lambda_.9} parent=0 // pred_region
    _
  $region29: #{_lambda_.9} parent=0 // pred_fallthru
    _
  // Predicated region
  $region30: #{_lambda_.9} parent=0 // pred_check
    _
  $region31: #{_lambda_.9} parent=0 // pred_check_branch
    %28 = sbr.rel (0) target = $region33
  $region32: #{_lambda_.9} parent=0 // pred_region
    _
  $region33: #{_lambda_.9} parent=0 // pred_fallthru
    _
  %v30 = vld [vmem:[%s0] sm:$0xff]
  %v31 = vld [vmem:[%s0 + $0x8] sm:$0xff]
  %v32 = vld [vmem:[%s0 + $0x10] sm:$0xff]
  %v33 = vld [vmem:[%s0 + $0x18] sm:$0xff]
  %v34 = vld [vmem:[%s0 + $0x20] sm:$0xff]
  %v35 = vld [vmem:[%s0 + $0x28] sm:$0xff]
  %v36 = vld [vmem:[%s0 + $0x30] sm:$0xff]
  %v37 = vld [vmem:[%s0 + $0x38] sm:$0xff]
  %v38 = vld [vmem:[%s0 + $0x40] sm:$0xff]
  %v39 = vld [vmem:[%s0 + $0x48] sm:$0xff]
  %v40 = vld [vmem:[%s0 + $0x50] sm:$0xff]
  %v41 = vld [vmem:[%s0 + $0x58] sm:$0xff]
  %v42 = vld [vmem:[%s0 + $0x60] sm:$0xff]
  %v43 = vld [vmem:[%s0 + $0x68] sm:$0xff]
  %v44 = vld [vmem:[%s0 + $0x70] sm:$0xff]
  %v45 = vld [vmem:[%s0 + $0x78] sm:$0xff]
  %v46 = vld [vmem:[%s0 + $0x80] sm:$0xff]
  %v47 = vld [vmem:[%s0 + $0x88] sm:$0xff]
  %v48 = vld [vmem:[%s0 + $0x90] sm:$0xff]
  %v49 = vld [vmem:[%s0 + $0x98] sm:$0xff]
  %v50 = vld [vmem:[%s0 + $0xa0] sm:$0xff]
  %v51 = vld [vmem:[%s0 + $0xa8] sm:$0xff]
  %v52 = vld [vmem:[%s0 + $0xb0] sm:$0xff]
  %v53 = vld [vmem:[%s0 + $0xb8] sm:$0xff]
  %v54 = vld [vmem:[%s0 + $0xc0] sm:$0xff]
  %v55 = vld [vmem:[%s0 + $0xc8] sm:$0xff]
  %v56 = vld [vmem:[%s0 + $0xd0] sm:$0xff]
  %v57 = vld [vmem:[%s0 + $0xd8] sm:$0xff]
  %v58 = vld [vmem:[%s0 + $0xe0] sm:$0xff]
  %v59 = vld [vmem:[%s0 + $0xe8] sm:$0xff]
  %v60 = vld [vmem:[%s0 + $0xf0] sm:$0xff]
  %v61 = vld [vmem:[%s0 + $0xf8] sm:$0xff]
  %v62 = vld [vmem:[%s0 + $0x100] sm:$0xff]
  %v63 = vld [vmem:[%s0 + $0x108] sm:$0xff]
  %v64 = vld [vmem:[%s0 + $0x110] sm:$0xff]
  %v65 = vld [vmem:[%s0 + $0x118] sm:$0xff]
  %v66 = vld [vmem:[%s2] sm:$0xf]
  %v67 = vld [vmem:[%s2 + $0x4] sm:$0xf]
  %v68 = vpack.c.bf16 %v31, %v30
  %v69 = vpack.c.bf16 %v33, %v32
  %v70 = vpack.c.bf16 %v35, %v34
  %v71 = vpack.c.bf16 %v37, %v36
  %v72 = vpack.c.bf16 %v39, %v38
  %v73 = vpack.c.bf16 %v41, %v40
  %v74 = vpack.c.bf16 %v43, %v42
  %v75 = vpack.c.bf16 %v45, %v44
  %v76 = vpack.c.bf16 %v47, %v46
  %v77 = vpack.c.bf16 %v49, %v48
  %v78 = vpack.c.bf16 %v51, %v50
  %v79 = vpack.c.bf16 %v53, %v52
  %v80 = vpack.c.bf16 %v55, %v54
  %v81 = vpack.c.bf16 %v57, %v56
  %v82 = vpack.c.bf16 %v59, %v58
  %v83 = vpack.c.bf16 %v61, %v60
  %v84 = vpack.c.bf16 %v63, %v62
  %v85 = vpack.c.bf16 %v65, %v64
  %v86 = vld [vmem:[%s3] sm:$0x1]
  %v88 = vlaneseq
  %v89 = vshrl.u32 %v88, 7
  %v90 = vsub.s32 0, %v89
  %v91 = vrot.slane %v86, %v90
  %v95 = vunpack.c.l.b16 %v66
  %v96 = vunpack.c.l.b16 %v67
  %v97 = vpack.c.b16 %v96, %v95
  %vm99 = vcmask 130048
  %v101 = vsel %vm99, %v68, 0
  %v104 = vsel %vm99, %v69, 0
  %v107 = vsel %vm99, %v70, 0
  %v110 = vsel %vm99, %v71, 0
  %v113 = vsel %vm99, %v72, 0
  %v116 = vsel %vm99, %v73, 0
  %v119 = vsel %vm99, %v74, 0
  %v122 = vsel %vm99, %v75, 0
  %v125 = vsel %vm99, %v76, 0
  %v128 = vsel %vm99, %v77, 0
  %v131 = vsel %vm99, %v78, 0
  %v134 = vsel %vm99, %v79, 0
  %v137 = vsel %vm99, %v80, 0
  %v140 = vsel %vm99, %v81, 0
  %v143 = vsel %vm99, %v82, 0
  %v146 = vsel %vm99, %v83, 0
  %v149 = vsel %vm99, %v84, 0
  %v152 = vsel %vm99, %v85, 0
  %154 = vmatprep.subr.bf16.mxu0 0
  %155 = vmatpush1.bf16.msra.mxu0 %v97
  %156 = vmatprep.subr.bf16.mxu0 0
  %157 = vmatpush1.bf16.msra.mxu0 0
  %158 = vmatprep.subr.bf16.mxu0 0
  %159 = vmatpush1.bf16.msra.mxu0 0
  %160 = vmatprep.subr.bf16.mxu0 0
  %161 = vmatpush1.bf16.msra.mxu0 0
  %162 = vmatprep.subr.bf16.mxu0 0
  %163 = vmatpush1.bf16.msra.mxu0 0
  %164 = vmatprep.subr.bf16.mxu0 0
  %165 = vmatpush1.bf16.msra.mxu0 0
  %166 = vmatprep.subr.bf16.mxu0 0
  %167 = vmatpush1.bf16.msra.mxu0 0
  %168 = vmatprep.subr.bf16.mxu0 0
  %169 = vmatpush1.bf16.msra.mxu0 0
  %170 = vmatprep.subr.bf16.mxu0 0
  %171 = vmatpush1.bf16.msra.mxu0 0
  %172 = vmatprep.subr.bf16.mxu0 0
  %173 = vmatpush1.bf16.msra.mxu0 0
  %174 = vmatprep.subr.bf16.mxu0 0
  %175 = vmatpush1.bf16.msra.mxu0 0
  %176 = vmatprep.subr.bf16.mxu0 0
  %177 = vmatpush1.bf16.msra.mxu0 0
  %178 = vmatprep.subr.bf16.mxu0 0
  %179 = vmatpush1.bf16.msra.mxu0 0
  %180 = vmatprep.subr.bf16.mxu0 0
  %181 = vmatpush1.bf16.msra.mxu0 0
  %182 = vmatprep.subr.bf16.mxu0 0
  %183 = vmatpush1.bf16.msra.mxu0 0
  %184 = vmatprep.subr.bf16.mxu0 0
  %185 = vmatpush1.bf16.msra.mxu0 0
  %186 = vmatprep.mubr.bf16.mxu0 0
  %187 = vmatmul.mubr.bf16.gmra.mrb[0].mxu0 %v101
  %v188 = vpop.f32.mrb[0].mxu0
  %v189 = vadd.f32 %v91, %v188
  %v190 = vpop.f32.mrb[0].mxu0
  %v191 = vpop.f32.mrb[0].mxu0
  %v192 = vadd.f32 %v91, %v191
  %v193 = vpop.f32.mrb[0].mxu0
  %194 = vmatprep.mubr.bf16.mxu0 0
  %195 = vmatmul.mubr.bf16.gmra.mrb[0].mxu0 %v104
  %v196 = vpop.f32.mrb[0].mxu0
  %v197 = vadd.f32 %v91, %v196
  %v198 = vpop.f32.mrb[0].mxu0
  %v199 = vpop.f32.mrb[0].mxu0
  %v200 = vadd.f32 %v91, %v199
  %v201 = vpop.f32.mrb[0].mxu0
  %202 = vmatprep.mubr.bf16.mxu0 0
  %203 = vmatmul.mubr.bf16.gmra.mrb[0].mxu0 %v107
  %v204 = vpop.f32.mrb[0].mxu0
  %v205 = vadd.f32 %v91, %v204
  %v206 = vpop.f32.mrb[0].mxu0
  %v207 = vpop.f32.mrb[0].mxu0
  %v208 = vadd.f32 %v91, %v207
  %v209 = vpop.f32.mrb[0].mxu0
  %210 = vmatprep.mubr.bf16.mxu0 0
  %211 = vmatmul.mubr.bf16.gmra.mrb[0].mxu0 %v110
  %v212 = vpop.f32.mrb[0].mxu0
  %v213 = vadd.f32 %v91, %v212
  %v214 = vpop.f32.mrb[0].mxu0
  %v215 = vpop.f32.mrb[0].mxu0
  %v216 = vadd.f32 %v91, %v215
  %v217 = vpop.f32.mrb[0].mxu0
  %218 = vmatprep.mubr.bf16.mxu0 0
  %219 = vmatmul.mubr.bf16.gmra.mrb[0].mxu0 %v113
  %v220 = vpop.f32.mrb[0].mxu0
  %v221 = vadd.f32 %v91, %v220
  %v222 = vpop.f32.mrb[0].mxu0
  %v223 = vpop.f32.mrb[0].mxu0
  %v224 = vadd.f32 %v91, %v223
  %v225 = vpop.f32.mrb[0].mxu0
  %226 = vmatprep.mubr.bf16.mxu0 0
  %227 = vmatmul.mubr.bf16.gmra.mrb[0].mxu0 %v116
  %v228 = vpop.f32.mrb[0].mxu0
  %v229 = vadd.f32 %v91, %v228
  %v230 = vpop.f32.mrb[0].mxu0
  %v231 = vpop.f32.mrb[0].mxu0
  %v232 = vadd.f32 %v91, %v231
  %v233 = vpop.f32.mrb[0].mxu0
  %234 = vmatprep.mubr.bf16.mxu0 0
  %235 = vmatmul.mubr.bf16.gmra.mrb[0].mxu0 %v119
  %v236 = vpop.f32.mrb[0].mxu0
  %v237 = vadd.f32 %v91, %v236
  %v238 = vpop.f32.mrb[0].mxu0
  %v239 = vpop.f32.mrb[0].mxu0
  %v240 = vadd.f32 %v91, %v239
  %v241 = vpop.f32.mrb[0].mxu0
  %242 = vmatprep.mubr.bf16.mxu0 0
  %243 = vmatmul.mubr.bf16.gmra.mrb[0].mxu0 %v122
  %v244 = vpop.f32.mrb[0].mxu0
  %v245 = vadd.f32 %v91, %v244
  %v246 = vpop.f32.mrb[0].mxu0
  %v247 = vpop.f32.mrb[0].mxu0
  %v248 = vadd.f32 %v91, %v247
  %v249 = vpop.f32.mrb[0].mxu0
  %250 = vmatprep.mubr.bf16.mxu0 0
  %251 = vmatmul.mubr.bf16.gmra.mrb[0].mxu0 %v125
  %v252 = vpop.f32.mrb[0].mxu0
  %v253 = vadd.f32 %v91, %v252
  %v254 = vpop.f32.mrb[0].mxu0
  %v255 = vpop.f32.mrb[0].mxu0
  %v256 = vadd.f32 %v91, %v255
  %v257 = vpop.f32.mrb[0].mxu0
  %258 = vmatprep.mubr.bf16.mxu0 0
  %259 = vmatmul.mubr.bf16.gmra.mrb[0].mxu0 %v128
  %v260 = vpop.f32.mrb[0].mxu0
  %v261 = vadd.f32 %v91, %v260
  %v262 = vpop.f32.mrb[0].mxu0
  %v263 = vpop.f32.mrb[0].mxu0
  %v264 = vadd.f32 %v91, %v263
  %v265 = vpop.f32.mrb[0].mxu0
  %266 = vmatprep.mubr.bf16.mxu0 0
  %267 = vmatmul.mubr.bf16.gmra.mrb[0].mxu0 %v131
  %v268 = vpop.f32.mrb[0].mxu0
  %v269 = vadd.f32 %v91, %v268
  %v270 = vpop.f32.mrb[0].mxu0
  %v271 = vpop.f32.mrb[0].mxu0
  %v272 = vadd.f32 %v91, %v271
  %v273 = vpop.f32.mrb[0].mxu0
  %274 = vmatprep.mubr.bf16.mxu0 0
  %275 = vmatmul.mubr.bf16.gmra.mrb[0].mxu0 %v134
  %v276 = vpop.f32.mrb[0].mxu0
  %v277 = vadd.f32 %v91, %v276
  %v278 = vpop.f32.mrb[0].mxu0
  %v279 = vpop.f32.mrb[0].mxu0
  %v280 = vadd.f32 %v91, %v279
  %v281 = vpop.f32.mrb[0].mxu0
  %282 = vmatprep.mubr.bf16.mxu0 0
  %283 = vmatmul.mubr.bf16.gmra.mrb[0].mxu0 %v137
  %v284 = vpop.f32.mrb[0].mxu0
  %v285 = vadd.f32 %v91, %v284
  %v286 = vpop.f32.mrb[0].mxu0
  %v287 = vpop.f32.mrb[0].mxu0
  %v288 = vadd.f32 %v91, %v287
  %v289 = vpop.f32.mrb[0].mxu0
  %290 = vmatprep.mubr.bf16.mxu0 0
  %291 = vmatmul.mubr.bf16.gmra.mrb[0].mxu0 %v140
  %v292 = vpop.f32.mrb[0].mxu0
  %v293 = vadd.f32 %v91, %v292
  %v294 = vpop.f32.mrb[0].mxu0
  %v295 = vpop.f32.mrb[0].mxu0
  %v296 = vadd.f32 %v91, %v295
  %v297 = vpop.f32.mrb[0].mxu0
  %298 = vmatprep.mubr.bf16.mxu0 0
  %299 = vmatmul.mubr.bf16.gmra.mrb[0].mxu0 %v143
  %v300 = vpop.f32.mrb[0].mxu0
  %v301 = vadd.f32 %v91, %v300
  %v302 = vpop.f32.mrb[0].mxu0
  %v303 = vpop.f32.mrb[0].mxu0
  %v304 = vadd.f32 %v91, %v303
  %v305 = vpop.f32.mrb[0].mxu0
  %306 = vmatprep.mubr.bf16.mxu0 0
  %307 = vmatmul.mubr.bf16.gmra.mrb[0].mxu0 %v146
  %v308 = vpop.f32.mrb[0].mxu0
  %v309 = vadd.f32 %v91, %v308
  %v310 = vpop.f32.mrb[0].mxu0
  %v311 = vpop.f32.mrb[0].mxu0
  %v312 = vadd.f32 %v91, %v311
  %v313 = vpop.f32.mrb[0].mxu0
  %314 = vmatprep.mubr.bf16.mxu0 0
  %315 = vmatmul.mubr.bf16.gmra.mrb[0].mxu0 %v149
  %v316 = vpop.f32.mrb[0].mxu0
  %v317 = vadd.f32 %v91, %v316
  %v318 = vpop.f32.mrb[0].mxu0
  %v319 = vpop.f32.mrb[0].mxu0
  %v320 = vadd.f32 %v91, %v319
  %v321 = vpop.f32.mrb[0].mxu0
  %322 = vmatprep.mubr.bf16.mxu0 0
  %323 = vmatmul.mubr.bf16.gmra.mrb[0].mxu0 %v152
  %v324 = vpop.f32.mrb[0].mxu0
  %v325 = vadd.f32 %v91, %v324
  %v326 = vpop.f32.mrb[0].mxu0
  %v327 = vpop.f32.mrb[0].mxu0
  %v328 = vadd.f32 %v91, %v327
  %v329 = vpop.f32.mrb[0].mxu0
  %330 = vdwg.mxu0
  %v331 = vmax.f32 %v189, 0.0
  %v332 = vmax.f32 %v192, 0.0
  %v333 = vmax.f32 %v197, 0.0
  %v334 = vmax.f32 %v200, 0.0
  %v335 = vmax.f32 %v205, 0.0
  %v336 = vmax.f32 %v208, 0.0
  %v337 = vmax.f32 %v213, 0.0
  %v338 = vmax.f32 %v216, 0.0
  %v339 = vmax.f32 %v221, 0.0
  %v340 = vmax.f32 %v224, 0.0
  %v341 = vmax.f32 %v229, 0.0
  %v342 = vmax.f32 %v232, 0.0
  %v343 = vmax.f32 %v237, 0.0
  %v344 = vmax.f32 %v240, 0.0
  %v345 = vmax.f32 %v245, 0.0
  %v346 = vmax.f32 %v248, 0.0
  %v347 = vmax.f32 %v253, 0.0
  %v348 = vmax.f32 %v256, 0.0
  %v349 = vmax.f32 %v261, 0.0
  %v350 = vmax.f32 %v264, 0.0
  %v351 = vmax.f32 %v269, 0.0
  %v352 = vmax.f32 %v272, 0.0
  %v353 = vmax.f32 %v277, 0.0
  %v354 = vmax.f32 %v280, 0.0
  %v355 = vmax.f32 %v285, 0.0
  %v356 = vmax.f32 %v288, 0.0
  %v357 = vmax.f32 %v293, 0.0
  %v358 = vmax.f32 %v296, 0.0
  %v359 = vmax.f32 %v301, 0.0
  %v360 = vmax.f32 %v304, 0.0
  %v361 = vmax.f32 %v309, 0.0
  %v362 = vmax.f32 %v312, 0.0
  %v363 = vmax.f32 %v317, 0.0
  %v364 = vmax.f32 %v320, 0.0
  %v365 = vmax.f32 %v325, 0.0
  %v366 = vmax.f32 %v328, 0.0
  %v367 = vld [vmem:[%s1] sm:$0xff]
  %v368 = vld [vmem:[%s1 + $0x8] sm:$0xff]
  %v369 = vld [vmem:[%s1 + $0x10] sm:$0xff]
  %v370 = vld [vmem:[%s1 + $0x18] sm:$0xff]
  %v371 = vld [vmem:[%s1 + $0x20] sm:$0xff]
  %v372 = vld [vmem:[%s1 + $0x28] sm:$0xff]
  %v373 = vld [vmem:[%s1 + $0x30] sm:$0xff]
  %v374 = vld [vmem:[%s1 + $0x38] sm:$0xff]
  %v375 = vld [vmem:[%s1 + $0x40] sm:$0xff]
  %v376 = vld [vmem:[%s1 + $0x48] sm:$0xff]
  %v377 = vld [vmem:[%s1 + $0x50] sm:$0xff]
  %v378 = vld [vmem:[%s1 + $0x58] sm:$0xff]
  %v379 = vld [vmem:[%s1 + $0x60] sm:$0xff]
  %v380 = vld [vmem:[%s1 + $0x68] sm:$0xff]
  %v381 = vld [vmem:[%s1 + $0x70] sm:$0xff]
  %v382 = vld [vmem:[%s1 + $0x78] sm:$0xff]
  %v383 = vld [vmem:[%s1 + $0x80] sm:$0xff]
  %v384 = vld [vmem:[%s1 + $0x88] sm:$0xff]
  %v385 = vld [vmem:[%s1 + $0x90] sm:$0xff]
  %v386 = vld [vmem:[%s1 + $0x98] sm:$0xff]
  %v387 = vld [vmem:[%s1 + $0xa0] sm:$0xff]
  %v388 = vld [vmem:[%s1 + $0xa8] sm:$0xff]
  %v389 = vld [vmem:[%s1 + $0xb0] sm:$0xff]
  %v390 = vld [vmem:[%s1 + $0xb8] sm:$0xff]
  %v391 = vld [vmem:[%s1 + $0xc0] sm:$0xff]
  %v392 = vld [vmem:[%s1 + $0xc8] sm:$0xff]
  %v393 = vld [vmem:[%s1 + $0xd0] sm:$0xff]
  %v394 = vld [vmem:[%s1 + $0xd8] sm:$0xff]
  %v395 = vld [vmem:[%s1 + $0xe0] sm:$0xff]
  %v396 = vld [vmem:[%s1 + $0xe8] sm:$0xff]
  %v397 = vld [vmem:[%s1 + $0xf0] sm:$0xff]
  %v398 = vld [vmem:[%s1 + $0xf8] sm:$0xff]
  %v399 = vld [vmem:[%s1 + $0x100] sm:$0xff]
  %v400 = vld [vmem:[%s1 + $0x108] sm:$0xff]
  %v401 = vld [vmem:[%s1 + $0x110] sm:$0xff]
  %v402 = vld [vmem:[%s1 + $0x118] sm:$0xff]
  %404 = vset.pattern.permute.xlu0 0
  %405 = vperm.xlu0 %404, %v367
  %v406 = vpop.permute.xlu0 %405
  %409 = vset.pattern.permute.xlu0 0
  %410 = vperm.xlu0 %409, %v368
  %v411 = vpop.permute.xlu0 %410
  %414 = vset.pattern.permute.xlu0 0
  %415 = vperm.xlu0 %414, %v369
  %v416 = vpop.permute.xlu0 %415
  %419 = vset.pattern.permute.xlu0 0
  %420 = vperm.xlu0 %419, %v370
  %v421 = vpop.permute.xlu0 %420
  %424 = vset.pattern.permute.xlu0 0
  %425 = vperm.xlu0 %424, %v371
  %v426 = vpop.permute.xlu0 %425
  %429 = vset.pattern.permute.xlu0 0
  %430 = vperm.xlu0 %429, %v372
  %v431 = vpop.permute.xlu0 %430
  %434 = vset.pattern.permute.xlu0 0
  %435 = vperm.xlu0 %434, %v373
  %v436 = vpop.permute.xlu0 %435
  %439 = vset.pattern.permute.xlu0 0
  %440 = vperm.xlu0 %439, %v374
  %v441 = vpop.permute.xlu0 %440
  %444 = vset.pattern.permute.xlu0 0
  %445 = vperm.xlu0 %444, %v375
  %v446 = vpop.permute.xlu0 %445
  %449 = vset.pattern.permute.xlu0 0
  %450 = vperm.xlu0 %449, %v376
  %v451 = vpop.permute.xlu0 %450
  %454 = vset.pattern.permute.xlu0 0
  %455 = vperm.xlu0 %454, %v377
  %v456 = vpop.permute.xlu0 %455
  %459 = vset.pattern.permute.xlu0 0
  %460 = vperm.xlu0 %459, %v378
  %v461 = vpop.permute.xlu0 %460
  %464 = vset.pattern.permute.xlu0 0
  %465 = vperm.xlu0 %464, %v379
  %v466 = vpop.permute.xlu0 %465
  %469 = vset.pattern.permute.xlu0 0
  %470 = vperm.xlu0 %469, %v380
  %v471 = vpop.permute.xlu0 %470
  %474 = vset.pattern.permute.xlu0 0
  %475 = vperm.xlu0 %474, %v381
  %v476 = vpop.permute.xlu0 %475
  %479 = vset.pattern.permute.xlu0 0
  %480 = vperm.xlu0 %479, %v382
  %v481 = vpop.permute.xlu0 %480
  %484 = vset.pattern.permute.xlu0 0
  %485 = vperm.xlu0 %484, %v383
  %v486 = vpop.permute.xlu0 %485
  %489 = vset.pattern.permute.xlu0 0
  %490 = vperm.xlu0 %489, %v384
  %v491 = vpop.permute.xlu0 %490
  %494 = vset.pattern.permute.xlu0 0
  %495 = vperm.xlu0 %494, %v385
  %v496 = vpop.permute.xlu0 %495
  %499 = vset.pattern.permute.xlu0 0
  %500 = vperm.xlu0 %499, %v386
  %v501 = vpop.permute.xlu0 %500
  %504 = vset.pattern.permute.xlu0 0
  %505 = vperm.xlu0 %504, %v387
  %v506 = vpop.permute.xlu0 %505
  %509 = vset.pattern.permute.xlu0 0
  %510 = vperm.xlu0 %509, %v388
  %v511 = vpop.permute.xlu0 %510
  %514 = vset.pattern.permute.xlu0 0
  %515 = vperm.xlu0 %514, %v389
  %v516 = vpop.permute.xlu0 %515
  %519 = vset.pattern.permute.xlu0 0
  %520 = vperm.xlu0 %519, %v390
  %v521 = vpop.permute.xlu0 %520
  %524 = vset.pattern.permute.xlu0 0
  %525 = vperm.xlu0 %524, %v391
  %v526 = vpop.permute.xlu0 %525
  %529 = vset.pattern.permute.xlu0 0
  %530 = vperm.xlu0 %529, %v392
  %v531 = vpop.permute.xlu0 %530
  %534 = vset.pattern.permute.xlu0 0
  %535 = vperm.xlu0 %534, %v393
  %v536 = vpop.permute.xlu0 %535
  %539 = vset.pattern.permute.xlu0 0
  %540 = vperm.xlu0 %539, %v394
  %v541 = vpop.permute.xlu0 %540
  %544 = vset.pattern.permute.xlu0 0
  %545 = vperm.xlu0 %544, %v395
  %v546 = vpop.permute.xlu0 %545
  %549 = vset.pattern.permute.xlu0 0
  %550 = vperm.xlu0 %549, %v396
  %v551 = vpop.permute.xlu0 %550
  %554 = vset.pattern.permute.xlu0 0
  %555 = vperm.xlu0 %554, %v397
  %v556 = vpop.permute.xlu0 %555
  %559 = vset.pattern.permute.xlu0 0
  %560 = vperm.xlu0 %559, %v398
  %v561 = vpop.permute.xlu0 %560
  %564 = vset.pattern.permute.xlu0 0
  %565 = vperm.xlu0 %564, %v399
  %v566 = vpop.permute.xlu0 %565
  %569 = vset.pattern.permute.xlu0 0
  %570 = vperm.xlu0 %569, %v400
  %v571 = vpop.permute.xlu0 %570
  %574 = vset.pattern.permute.xlu0 0
  %575 = vperm.xlu0 %574, %v401
  %v576 = vpop.permute.xlu0 %575
  %579 = vset.pattern.permute.xlu0 0
  %580 = vperm.xlu0 %579, %v402
  %v581 = vpop.permute.xlu0 %580
  %v583 = vmul.f32 %v331, %v406
  %v584 = vmul.f32 %v332, %v411
  %v585 = vmul.f32 %v333, %v416
  %v586 = vmul.f32 %v334, %v421
  %v587 = vmul.f32 %v335, %v426
  %v588 = vmul.f32 %v336, %v431
  %v589 = vmul.f32 %v337, %v436
  %v590 = vmul.f32 %v338, %v441
  %v591 = vmul.f32 %v339, %v446
  %v592 = vmul.f32 %v340, %v451
  %v593 = vmul.f32 %v341, %v456
  %v594 = vmul.f32 %v342, %v461
  %v595 = vmul.f32 %v343, %v466
  %v596 = vmul.f32 %v344, %v471
  %v597 = vmul.f32 %v345, %v476
  %v598 = vmul.f32 %v346, %v481
  %v599 = vmul.f32 %v347, %v486
  %v600 = vmul.f32 %v348, %v491
  %v601 = vmul.f32 %v349, %v496
  %v602 = vmul.f32 %v350, %v501
  %v603 = vmul.f32 %v351, %v506
  %v604 = vmul.f32 %v352, %v511
  %v605 = vmul.f32 %v353, %v516
  %v606 = vmul.f32 %v354, %v521
  %v607 = vmul.f32 %v355, %v526
  %v608 = vmul.f32 %v356, %v531
  %v609 = vmul.f32 %v357, %v536
  %v610 = vmul.f32 %v358, %v541
  %v611 = vmul.f32 %v359, %v546
  %v612 = vmul.f32 %v360, %v551
  %v613 = vmul.f32 %v361, %v556
  %v614 = vmul.f32 %v362, %v561
  %v615 = vmul.f32 %v363, %v566
  %v616 = vmul.f32 %v364, %v571
  %v617 = vmul.f32 %v365, %v576
  %v618 = vmul.f32 %v366, %v581
  %v619 = vld [vmem:[%s4] sm:$0x1]
  %v621 = vlaneseq
  %v622 = vshrl.u32 %v621, 7
  %v623 = vsub.s32 0, %v622
  %v624 = vrot.slane %v619, %v623
  %v626 = vmul.f32 %v583, %v624
  %v627 = vmul.f32 %v584, %v624
  %v628 = vmul.f32 %v585, %v624
  %v629 = vmul.f32 %v586, %v624
  %s630 = scalar_lea.vmem %s4, 1
  %v631 = vld [vmem:[%s630] sm:$0x1]
  %v633 = vlaneseq
  %v634 = vshrl.u32 %v633, 7
  %v635 = vsub.s32 0, %v634
  %v636 = vrot.slane %v631, %v635
  %v638 = vmul.f32 %v587, %v636
  %v639 = vmul.f32 %v588, %v636
  %v640 = vmul.f32 %v589, %v636
  %v641 = vmul.f32 %v590, %v636
  %v642 = vadd.f32 %v626, %v638
  %v643 = vadd.f32 %v627, %v639
  %v644 = vadd.f32 %v628, %v640
  %v645 = vadd.f32 %v629, %v641
  %s646 = scalar_lea.vmem %s4, 2
  %v647 = vld [vmem:[%s646] sm:$0x1]
  %v649 = vlaneseq
  %v650 = vshrl.u32 %v649, 7
  %v651 = vsub.s32 0, %v650
  %v652 = vrot.slane %v647, %v651
  %v654 = vmul.f32 %v591, %v652
  %v655 = vmul.f32 %v592, %v652
  %v656 = vmul.f32 %v593, %v652
  %v657 = vmul.f32 %v594, %v652
  %v658 = vadd.f32 %v642, %v654
  %v659 = vadd.f32 %v643, %v655
  %v660 = vadd.f32 %v644, %v656
  %v661 = vadd.f32 %v645, %v657
  %s662 = scalar_lea.vmem %s4, 3
  %v663 = vld [vmem:[%s662] sm:$0x1]
  %v665 = vlaneseq
  %v666 = vshrl.u32 %v665, 7
  %v667 = vsub.s32 0, %v666
  %v668 = vrot.slane %v663, %v667
  %v670 = vmul.f32 %v595, %v668
  %v671 = vmul.f32 %v596, %v668
  %v672 = vmul.f32 %v597, %v668
  %v673 = vmul.f32 %v598, %v668
  %v674 = vadd.f32 %v658, %v670
  %v675 = vadd.f32 %v659, %v671
  %v676 = vadd.f32 %v660, %v672
  %v677 = vadd.f32 %v661, %v673
  %s678 = scalar_lea.vmem %s4, 4
  %v679 = vld [vmem:[%s678] sm:$0x1]
  %v681 = vlaneseq
  %v682 = vshrl.u32 %v681, 7
  %v683 = vsub.s32 0, %v682
  %v684 = vrot.slane %v679, %v683
  %v686 = vmul.f32 %v599, %v684
  %v687 = vmul.f32 %v600, %v684
  %v688 = vmul.f32 %v601, %v684
  %v689 = vmul.f32 %v602, %v684
  %v690 = vadd.f32 %v674, %v686
  %v691 = vadd.f32 %v675, %v687
  %v692 = vadd.f32 %v676, %v688
  %v693 = vadd.f32 %v677, %v689
  %s694 = scalar_lea.vmem %s4, 5
  %v695 = vld [vmem:[%s694] sm:$0x1]
  %v697 = vlaneseq
  %v698 = vshrl.u32 %v697, 7
  %v699 = vsub.s32 0, %v698
  %v700 = vrot.slane %v695, %v699
  %v702 = vmul.f32 %v603, %v700
  %v703 = vmul.f32 %v604, %v700
  %v704 = vmul.f32 %v605, %v700
  %v705 = vmul.f32 %v606, %v700
  %v706 = vadd.f32 %v690, %v702
  %v707 = vadd.f32 %v691, %v703
  %v708 = vadd.f32 %v692, %v704
  %v709 = vadd.f32 %v693, %v705
  %s710 = scalar_lea.vmem %s4, 6
  %v711 = vld [vmem:[%s710] sm:$0x1]
  %v713 = vlaneseq
  %v714 = vshrl.u32 %v713, 7
  %v715 = vsub.s32 0, %v714
  %v716 = vrot.slane %v711, %v715
  %v718 = vmul.f32 %v607, %v716
  %v719 = vmul.f32 %v608, %v716
  %v720 = vmul.f32 %v609, %v716
  %v721 = vmul.f32 %v610, %v716
  %v722 = vadd.f32 %v706, %v718
  %v723 = vadd.f32 %v707, %v719
  %v724 = vadd.f32 %v708, %v720
  %v725 = vadd.f32 %v709, %v721
  %s726 = scalar_lea.vmem %s4, 7
  %v727 = vld [vmem:[%s726] sm:$0x1]
  %v729 = vlaneseq
  %v730 = vshrl.u32 %v729, 7
  %v731 = vsub.s32 0, %v730
  %v732 = vrot.slane %v727, %v731
  %v734 = vmul.f32 %v611, %v732
  %v735 = vmul.f32 %v612, %v732
  %v736 = vmul.f32 %v613, %v732
  %v737 = vmul.f32 %v614, %v732
  %v738 = vadd.f32 %v722, %v734
  %v739 = vadd.f32 %v723, %v735
  %v740 = vadd.f32 %v724, %v736
  %v741 = vadd.f32 %v725, %v737
  %s742 = scalar_lea.vmem %s4, 8
  %v743 = vld [vmem:[%s742] sm:$0x1]
  %v745 = vlaneseq
  %v746 = vshrl.u32 %v745, 7
  %v747 = vsub.s32 0, %v746
  %v748 = vrot.slane %v743, %v747
  %v750 = vmul.f32 %v615, %v748
  %v751 = vmul.f32 %v616, %v748
  %v752 = vmul.f32 %v617, %v748
  %v753 = vmul.f32 %v618, %v748
  %v754 = vadd.f32 %v738, %v750
  %v755 = vadd.f32 %v739, %v751
  %v756 = vadd.f32 %v740, %v752
  %v757 = vadd.f32 %v741, %v753
  %v758 = vld [vmem:[%s5] sm:$0x1]
  %v760 = vlaneseq
  %v761 = vshrl.u32 %v760, 7
  %v762 = vsub.s32 0, %v761
  %v763 = vrot.slane %v758, %v762
  %v765 = vadd.f32 %v754, %v763
  %v766 = vadd.f32 %v755, %v763
  %v767 = vadd.f32 %v756, %v763
  %v768 = vadd.f32 %v757, %v763
  %v769 = vmax.f32 %v765, 0.0
  %v770 = vmax.f32 %v766, 0.0
  %v771 = vmax.f32 %v767, 0.0
  %v772 = vmax.f32 %v768, 0.0
  %v773 = vld [vmem:[%s6] sm:$0xf]
  %v774 = vld [vmem:[%s6 + $0x4] sm:$0xf]
  %v775 = vld [vmem:[%s6 + $0x8] sm:$0xf]
  %v776 = vld [vmem:[%s6 + $0xc] sm:$0xf]
  %v777 = vpack.c.bf16 %v770, %v769
  %v778 = vpack.c.bf16 %v772, %v771
  %v779 = vld [vmem:[%s7] sm:$0x1]
  %v781 = vlaneseq
  %v782 = vshrl.u32 %v781, 7
  %v783 = vsub.s32 0, %v782
  %v784 = vrot.slane %v779, %v783
  %v790 = vunpack.c.l.b16 %v773
  %v791 = vunpack.c.l.b16 %v774
  %v792 = vunpack.c.l.b16 %v775
  %v793 = vunpack.c.l.b16 %v776
  %v794 = vpack.c.b16 %v791, %v790
  %v795 = vpack.c.b16 %v793, %v792
  %vm798 = vcmask 261120
  %v800 = vsel %vm798, %v777, 0
  %v803 = vsel %vm798, %v778, 0
  %805 = vmatprep.subr.bf16.mxu0 0
  %806 = vmatpush1.bf16.msra.mxu0 %v794
  %807 = vmatprep.subr.bf16.mxu0 0
  %808 = vmatpush1.bf16.msra.mxu0 %v795
  %809 = vmatprep.subr.bf16.mxu0 0
  %810 = vmatpush1.bf16.msra.mxu0 0
  %811 = vmatprep.subr.bf16.mxu0 0
  %812 = vmatpush1.bf16.msra.mxu0 0
  %813 = vmatprep.subr.bf16.mxu0 0
  %814 = vmatpush1.bf16.msra.mxu0 0
  %815 = vmatprep.subr.bf16.mxu0 0
  %816 = vmatpush1.bf16.msra.mxu0 0
  %817 = vmatprep.subr.bf16.mxu0 0
  %818 = vmatpush1.bf16.msra.mxu0 0
  %819 = vmatprep.subr.bf16.mxu0 0
  %820 = vmatpush1.bf16.msra.mxu0 0
  %821 = vmatprep.subr.bf16.mxu0 0
  %822 = vmatpush1.bf16.msra.mxu0 0
  %823 = vmatprep.subr.bf16.mxu0 0
  %824 = vmatpush1.bf16.msra.mxu0 0
  %825 = vmatprep.subr.bf16.mxu0 0
  %826 = vmatpush1.bf16.msra.mxu0 0
  %827 = vmatprep.subr.bf16.mxu0 0
  %828 = vmatpush1.bf16.msra.mxu0 0
  %829 = vmatprep.subr.bf16.mxu0 0
  %830 = vmatpush1.bf16.msra.mxu0 0
  %831 = vmatprep.subr.bf16.mxu0 0
  %832 = vmatpush1.bf16.msra.mxu0 0
  %833 = vmatprep.subr.bf16.mxu0 0
  %834 = vmatpush1.bf16.msra.mxu0 0
  %835 = vmatprep.subr.bf16.mxu0 0
  %836 = vmatpush1.bf16.msra.mxu0 0
  %837 = vmatprep.mubr.bf16.mxu0 0
  %838 = vmatmul.mubr.bf16.gmra.mrb[0].mxu0 %v800
  %v839 = vpop.f32.mrb[0].mxu0
  %v840 = vadd.f32 %v784, %v839
  %v841 = vpop.f32.mrb[0].mxu0
  %v842 = vpop.f32.mrb[0].mxu0
  %v843 = vadd.f32 %v784, %v842
  %v844 = vpop.f32.mrb[0].mxu0
  %845 = vmatprep.mubr.bf16.mxu0 0
  %846 = vmatmul.mubr.bf16.gmra.mrb[0].mxu0 %v803
  %v847 = vpop.f32.mrb[0].mxu0
  %v848 = vadd.f32 %v784, %v847
  %v849 = vpop.f32.mrb[0].mxu0
  %v850 = vpop.f32.mrb[0].mxu0
  %v851 = vadd.f32 %v784, %v850
  %v852 = vpop.f32.mrb[0].mxu0
  %853 = vdwg.mxu0
  %vm854 = vcmask 195584
  %855 = vst.msk [vmem:[%s8] sm:$0xff] %vm854, %v840
  %856 = vst.msk [vmem:[%s8 + $0x8] sm:$0xff] %vm854, %v843
  %857 = vst.msk [vmem:[%s8 + $0x10] sm:$0xff] %vm854, %v848
  %858 = vst.msk [vmem:[%s8 + $0x18] sm:$0xff] %vm854, %v851
  // Predicated region
  $region34: #{_lambda_.9} parent=0 // pred_check
    _
  $region35: #{_lambda_.9} parent=0 // pred_check_branch
    %860 = sbr.rel (0) target = $region37
  $region36: #{_lambda_.9} parent=0 // pred_region
    _
  $region37: #{_lambda_.9} parent=0 // pred_fallthru
    _
  // Predicated region
  $region38: #{_lambda_.9} parent=0 // pred_check
    _
  $region39: #{_lambda_.9} parent=0 // pred_check_branch
    %862 = sbr.rel (0) target = $region41
  $region40: #{_lambda_.9} parent=0 // pred_region
    _
  $region41: #{_lambda_.9} parent=0 // pred_fallthru
    _

// kernel: _lambda_.10
$region0: #{_lambda_.10}
  #allocation0 [shape = 'u32[]', space=smem, size = 0x4, offset = 0x4, fixed_abs, tag = 'smem constant byte address 0x4 - core index']
  #allocation1 [shape = 'u32[144,128]{1,0:T(1,128)}', space=vmem, size = 0x12000, scoped, tag = 'internal scratch']
  %s0 = inlined_call_operand.vmem [shape: f32[800,24], index: 0, kind: input, shape index: {}]
  %s1 = inlined_call_operand.vmem [shape: f32[800,1], index: 1, kind: input, shape index: {}]
  %s2 = inlined_call_operand.vmem [shape: bf16[24,48], index: 2, kind: input, shape index: {}]
  %s3 = inlined_call_operand.vmem [shape: f32[1,48], index: 3, kind: input, shape index: {}, may-alias: {3,5,10}]
  %s4 = inlined_call_operand.vmem [shape: f32[25,1,48], index: 4, kind: input, shape index: {}]
  %s5 = inlined_call_operand.vmem [shape: f32[1,48], index: 5, kind: input, shape index: {}, may-alias: {3,5,10}]
  %s6 = inlined_call_operand.vmem [shape: f32[32,2], index: 6, kind: input, shape index: {}]
  %s7 = inlined_call_operand.vmem [shape: bf16[48,12], index: 7, kind: input, shape index: {}]
  %s8 = inlined_call_operand.vmem [shape: f32[1,12], index: 8, kind: input, shape index: {}]
  %s9 = inlined_call_operand.vmem [shape: bf16[12,48], index: 9, kind: input, shape index: {}]
  %s10 = inlined_call_operand.vmem [shape: f32[1,48], index: 10, kind: input, shape index: {}, may-alias: {3,5,10}]
  %s11 = inlined_call_operand.vmem [shape: bf16[48,24], index: 11, kind: input, shape index: {}]
  %s12 = inlined_call_operand.vmem [shape: f32[1,24], index: 12, kind: input, shape index: {}]
  %s13 = inlined_call_operand.vmem [shape: f32[32,24], index: 13, kind: input, shape index: {}]
  %s14 = inlined_call_operand.vmem [shape: f32[32,24], index: 14, kind: output, shape index: {}]
  %s15 = sld [smem:[#allocation0]]
  $region66: #{_lambda_.10} parent=0
    _
  %s17 = ssub.s32 1, %s15
  %s18 = scalar_select 0, %s17, %s15
  // Predicated region
  $region2: #{_lambda_.10} parent=0 // pred_check
    _
  $region3: #{_lambda_.10} parent=0 // pred_check_branch
    %20 = sbr.rel (0) target = $region5
  $region4: #{_lambda_.10} parent=0 // pred_region
    _
  $region5: #{_lambda_.10} parent=0 // pred_fallthru
    _
  // Predicated region
  $region6: #{_lambda_.10} parent=0 // pred_check
    _
  $region7: #{_lambda_.10} parent=0 // pred_check_branch
    %22 = sbr.rel (0) target = $region9
  $region8: #{_lambda_.10} parent=0 // pred_region
    _
  $region9: #{_lambda_.10} parent=0 // pred_fallthru
    _
  // Predicated region
  $region10: #{_lambda_.10} parent=0 // pred_check
    _
  $region11: #{_lambda_.10} parent=0 // pred_check_branch
    %24 = sbr.rel (0) target = $region13
  $region12: #{_lambda_.10} parent=0 // pred_region
    _
  $region13: #{_lambda_.10} parent=0 // pred_fallthru
    _
  // Predicated region
  $region14: #{_lambda_.10} parent=0 // pred_check
    _
  $region15: #{_lambda_.10} parent=0 // pred_check_branch
    %26 = sbr.rel (0) target = $region17
  $region16: #{_lambda_.10} parent=0 // pred_region
    _
  $region17: #{_lambda_.10} parent=0 // pred_fallthru
    _
  // Predicated region
  $region18: #{_lambda_.10} parent=0 // pred_check
    _
  $region19: #{_lambda_.10} parent=0 // pred_check_branch
    %28 = sbr.rel (0) target = $region21
  $region20: #{_lambda_.10} parent=0 // pred_region
    _
  $region21: #{_lambda_.10} parent=0 // pred_fallthru
    _
  // Predicated region
  $region22: #{_lambda_.10} parent=0 // pred_check
    _
  $region23: #{_lambda_.10} parent=0 // pred_check_branch
    %30 = sbr.rel (0) target = $region25
  $region24: #{_lambda_.10} parent=0 // pred_region
    _
  $region25: #{_lambda_.10} parent=0 // pred_fallthru
    _
  // Predicated region
  $region26: #{_lambda_.10} parent=0 // pred_check
    _
  $region27: #{_lambda_.10} parent=0 // pred_check_branch
    %32 = sbr.rel (0) target = $region29
  $region28: #{_lambda_.10} parent=0 // pred_region
    _
  $region29: #{_lambda_.10} parent=0 // pred_fallthru
    _
  // Predicated region
  $region30: #{_lambda_.10} parent=0 // pred_check
    _
  $region31: #{_lambda_.10} parent=0 // pred_check_branch
    %34 = sbr.rel (0) target = $region33
  $region32: #{_lambda_.10} parent=0 // pred_region
    _
  $region33: #{_lambda_.10} parent=0 // pred_fallthru
    _
  // Predicated region
  $region34: #{_lambda_.10} parent=0 // pred_check
    _
  $region35: #{_lambda_.10} parent=0 // pred_check_branch
    %36 = sbr.rel (0) target = $region37
  $region36: #{_lambda_.10} parent=0 // pred_region
    _
  $region37: #{_lambda_.10} parent=0 // pred_fallthru
    _
  // Predicated region
  $region38: #{_lambda_.10} parent=0 // pred_check
    _
  $region39: #{_lambda_.10} parent=0 // pred_check_branch
    %38 = sbr.rel (0) target = $region41
  $region40: #{_lambda_.10} parent=0 // pred_region
    _
  $region41: #{_lambda_.10} parent=0 // pred_fallthru
    _
  // Predicated region
  $region42: #{_lambda_.10} parent=0 // pred_check
    _
  $region43: #{_lambda_.10} parent=0 // pred_check_branch
    %40 = sbr.rel (0) target = $region45
  $region44: #{_lambda_.10} parent=0 // pred_region
    _
  $region45: #{_lambda_.10} parent=0 // pred_fallthru
    _
  // Predicated region
  $region46: #{_lambda_.10} parent=0 // pred_check
    _
  $region47: #{_lambda_.10} parent=0 // pred_check_branch
    %42 = sbr.rel (0) target = $region49
  $region48: #{_lambda_.10} parent=0 // pred_region
    _
  $region49: #{_lambda_.10} parent=0 // pred_fallthru
    _
  // Predicated region
  $region50: #{_lambda_.10} parent=0 // pred_check
    _
  $region51: #{_lambda_.10} parent=0 // pred_check_branch
    %44 = sbr.rel (0) target = $region53
  $region52: #{_lambda_.10} parent=0 // pred_region
    _
  $region53: #{_lambda_.10} parent=0 // pred_fallthru
    _
  // Predicated region
  $region54: #{_lambda_.10} parent=0 // pred_check
    _
  $region55: #{_lambda_.10} parent=0 // pred_check_branch
    %46 = sbr.rel (0) target = $region57
  $region56: #{_lambda_.10} parent=0 // pred_region
    _
  $region57: #{_lambda_.10} parent=0 // pred_fallthru
    _
  %v48 = vld [vmem:[%s0] sm:$0xff]
  %v49 = vld [vmem:[%s0 + $0x8] sm:$0xff]
  %v50 = vld [vmem:[%s0 + $0x10] sm:$0xff]
  %v51 = vld [vmem:[%s0 + $0x18] sm:$0xff]
  %v52 = vld [vmem:[%s0 + $0x20] sm:$0xff]
  %v53 = vld [vmem:[%s0 + $0x28] sm:$0xff]
  %v54 = vld [vmem:[%s0 + $0x30] sm:$0xff]
  %v55 = vld [vmem:[%s0 + $0x38] sm:$0xff]
  %v56 = vld [vmem:[%s0 + $0x40] sm:$0xff]
  %v57 = vld [vmem:[%s0 + $0x48] sm:$0xff]
  %v58 = vld [vmem:[%s0 + $0x50] sm:$0xff]
  %v59 = vld [vmem:[%s0 + $0x58] sm:$0xff]
  %v60 = vld [vmem:[%s0 + $0x60] sm:$0xff]
  %v61 = vld [vmem:[%s0 + $0x68] sm:$0xff]
  %v62 = vld [vmem:[%s0 + $0x70] sm:$0xff]
  %v63 = vld [vmem:[%s0 + $0x78] sm:$0xff]
  %v64 = vld [vmem:[%s0 + $0x80] sm:$0xff]
  %v65 = vld [vmem:[%s0 + $0x88] sm:$0xff]
  %v66 = vld [vmem:[%s0 + $0x90] sm:$0xff]
  %v67 = vld [vmem:[%s0 + $0x98] sm:$0xff]
  %v68 = vld [vmem:[%s0 + $0xa0] sm:$0xff]
  %v69 = vld [vmem:[%s0 + $0xa8] sm:$0xff]
  %v70 = vld [vmem:[%s0 + $0xb0] sm:$0xff]
  %v71 = vld [vmem:[%s0 + $0xb8] sm:$0xff]
  %v72 = vld [vmem:[%s0 + $0xc0] sm:$0xff]
  %v73 = vld [vmem:[%s0 + $0xc8] sm:$0xff]
  %v74 = vld [vmem:[%s0 + $0xd0] sm:$0xff]
  %v75 = vld [vmem:[%s0 + $0xd8] sm:$0xff]
  %v76 = vld [vmem:[%s0 + $0xe0] sm:$0xff]
  %v77 = vld [vmem:[%s0 + $0xe8] sm:$0xff]
  %v78 = vld [vmem:[%s0 + $0xf0] sm:$0xff]
  %v79 = vld [vmem:[%s0 + $0xf8] sm:$0xff]
  %v80 = vld [vmem:[%s0 + $0x100] sm:$0xff]
  %v81 = vld [vmem:[%s0 + $0x108] sm:$0xff]
  %v82 = vld [vmem:[%s0 + $0x110] sm:$0xff]
  %v83 = vld [vmem:[%s0 + $0x118] sm:$0xff]
  %v84 = vld [vmem:[%s0 + $0x120] sm:$0xff]
  %v85 = vld [vmem:[%s0 + $0x128] sm:$0xff]
  %v86 = vld [vmem:[%s0 + $0x130] sm:$0xff]
  %v87 = vld [vmem:[%s0 + $0x138] sm:$0xff]
  %v88 = vld [vmem:[%s0 + $0x140] sm:$0xff]
  %v89 = vld [vmem:[%s0 + $0x148] sm:$0xff]
  %v90 = vld [vmem:[%s0 + $0x150] sm:$0xff]
  %v91 = vld [vmem:[%s0 + $0x158] sm:$0xff]
  %v92 = vld [vmem:[%s0 + $0x160] sm:$0xff]
  %v93 = vld [vmem:[%s0 + $0x168] sm:$0xff]
  %v94 = vld [vmem:[%s0 + $0x170] sm:$0xff]
  %v95 = vld [vmem:[%s0 + $0x178] sm:$0xff]
  %v96 = vld [vmem:[%s0 + $0x180] sm:$0xff]
  %v97 = vld [vmem:[%s0 + $0x188] sm:$0xff]
  %v98 = vld [vmem:[%s0 + $0x190] sm:$0xff]
  %v99 = vld [vmem:[%s0 + $0x198] sm:$0xff]
  %v100 = vld [vmem:[%s0 + $0x1a0] sm:$0xff]
  %v101 = vld [vmem:[%s0 + $0x1a8] sm:$0xff]
  %v102 = vld [vmem:[%s0 + $0x1b0] sm:$0xff]
  %v103 = vld [vmem:[%s0 + $0x1b8] sm:$0xff]
  %v104 = vld [vmem:[%s0 + $0x1c0] sm:$0xff]
  %v105 = vld [vmem:[%s0 + $0x1c8] sm:$0xff]
  %v106 = vld [vmem:[%s0 + $0x1d0] sm:$0xff]
  %v107 = vld [vmem:[%s0 + $0x1d8] sm:$0xff]
  %v108 = vld [vmem:[%s0 + $0x1e0] sm:$0xff]
  %v109 = vld [vmem:[%s0 + $0x1e8] sm:$0xff]
  %v110 = vld [vmem:[%s0 + $0x1f0] sm:$0xff]
  %v111 = vld [vmem:[%s0 + $0x1f8] sm:$0xff]
  %v112 = vld [vmem:[%s0 + $0x200] sm:$0xff]
  %v113 = vld [vmem:[%s0 + $0x208] sm:$0xff]
  %v114 = vld [vmem:[%s0 + $0x210] sm:$0xff]
  %v115 = vld [vmem:[%s0 + $0x218] sm:$0xff]
  %v116 = vld [vmem:[%s0 + $0x220] sm:$0xff]
  %v117 = vld [vmem:[%s0 + $0x228] sm:$0xff]
  %v118 = vld [vmem:[%s0 + $0x230] sm:$0xff]
  %v119 = vld [vmem:[%s0 + $0x238] sm:$0xff]
  %v120 = vld [vmem:[%s0 + $0x240] sm:$0xff]
  %v121 = vld [vmem:[%s0 + $0x248] sm:$0xff]
  %v122 = vld [vmem:[%s0 + $0x250] sm:$0xff]
  %v123 = vld [vmem:[%s0 + $0x258] sm:$0xff]
  %v124 = vld [vmem:[%s0 + $0x260] sm:$0xff]
  %v125 = vld [vmem:[%s0 + $0x268] sm:$0xff]
  %v126 = vld [vmem:[%s0 + $0x270] sm:$0xff]
  %v127 = vld [vmem:[%s0 + $0x278] sm:$0xff]
  %v128 = vld [vmem:[%s0 + $0x280] sm:$0xff]
  %v129 = vld [vmem:[%s0 + $0x288] sm:$0xff]
  %v130 = vld [vmem:[%s0 + $0x290] sm:$0xff]
  %v131 = vld [vmem:[%s0 + $0x298] sm:$0xff]
  %v132 = vld [vmem:[%s0 + $0x2a0] sm:$0xff]
  %v133 = vld [vmem:[%s0 + $0x2a8] sm:$0xff]
  %v134 = vld [vmem:[%s0 + $0x2b0] sm:$0xff]
  %v135 = vld [vmem:[%s0 + $0x2b8] sm:$0xff]
  %v136 = vld [vmem:[%s0 + $0x2c0] sm:$0xff]
  %v137 = vld [vmem:[%s0 + $0x2c8] sm:$0xff]
  %v138 = vld [vmem:[%s0 + $0x2d0] sm:$0xff]
  %v139 = vld [vmem:[%s0 + $0x2d8] sm:$0xff]
  %v140 = vld [vmem:[%s0 + $0x2e0] sm:$0xff]
  %v141 = vld [vmem:[%s0 + $0x2e8] sm:$0xff]
  %v142 = vld [vmem:[%s0 + $0x2f0] sm:$0xff]
  %v143 = vld [vmem:[%s0 + $0x2f8] sm:$0xff]
  %v144 = vld [vmem:[%s0 + $0x300] sm:$0xff]
  %v145 = vld [vmem:[%s0 + $0x308] sm:$0xff]
  %v146 = vld [vmem:[%s0 + $0x310] sm:$0xff]
  %v147 = vld [vmem:[%s0 + $0x318] sm:$0xff]
  %v148 = vld [vmem:[%s2] sm:$0xf]
  %v149 = vld [vmem:[%s2 + $0x4] sm:$0xf]
  %v150 = vld [vmem:[%s2 + $0x8] sm:$0xf]
  %v151 = vpack.c.bf16 %v49, %v48
  %v152 = vpack.c.bf16 %v51, %v50
  %v153 = vpack.c.bf16 %v53, %v52
  %v154 = vpack.c.bf16 %v55, %v54
  %v155 = vpack.c.bf16 %v57, %v56
  %v156 = vpack.c.bf16 %v59, %v58
  %v157 = vpack.c.bf16 %v61, %v60
  %v158 = vpack.c.bf16 %v63, %v62
  %v159 = vpack.c.bf16 %v65, %v64
  %v160 = vpack.c.bf16 %v67, %v66
  %v161 = vpack.c.bf16 %v69, %v68
  %v162 = vpack.c.bf16 %v71, %v70
  %v163 = vpack.c.bf16 %v73, %v72
  %v164 = vpack.c.bf16 %v75, %v74
  %v165 = vpack.c.bf16 %v77, %v76
  %v166 = vpack.c.bf16 %v79, %v78
  %v167 = vpack.c.bf16 %v81, %v80
  %v168 = vpack.c.bf16 %v83, %v82
  %v169 = vpack.c.bf16 %v85, %v84
  %v170 = vpack.c.bf16 %v87, %v86
  %v171 = vpack.c.bf16 %v89, %v88
  %v172 = vpack.c.bf16 %v91, %v90
  %v173 = vpack.c.bf16 %v93, %v92
  %v174 = vpack.c.bf16 %v95, %v94
  %v175 = vpack.c.bf16 %v97, %v96
  %v176 = vpack.c.bf16 %v99, %v98
  %v177 = vpack.c.bf16 %v101, %v100
  %v178 = vpack.c.bf16 %v103, %v102
  %v179 = vpack.c.bf16 %v105, %v104
  %v180 = vpack.c.bf16 %v107, %v106
  %v181 = vpack.c.bf16 %v109, %v108
  %v182 = vpack.c.bf16 %v111, %v110
  %v183 = vpack.c.bf16 %v113, %v112
  %v184 = vpack.c.bf16 %v115, %v114
  %v185 = vpack.c.bf16 %v117, %v116
  %v186 = vpack.c.bf16 %v119, %v118
  %v187 = vpack.c.bf16 %v121, %v120
  %v188 = vpack.c.bf16 %v123, %v122
  %v189 = vpack.c.bf16 %v125, %v124
  %v190 = vpack.c.bf16 %v127, %v126
  %v191 = vpack.c.bf16 %v129, %v128
  %v192 = vpack.c.bf16 %v131, %v130
  %v193 = vpack.c.bf16 %v133, %v132
  %v194 = vpack.c.bf16 %v135, %v134
  %v195 = vpack.c.bf16 %v137, %v136
  %v196 = vpack.c.bf16 %v139, %v138
  %v197 = vpack.c.bf16 %v141, %v140
  %v198 = vpack.c.bf16 %v143, %v142
  %v199 = vpack.c.bf16 %v145, %v144
  %v200 = vpack.c.bf16 %v147, %v146
  %v201 = vld [vmem:[%s3] sm:$0x1]
  %v203 = vlaneseq
  %v204 = vshrl.u32 %v203, 7
  %v205 = vsub.s32 0, %v204
  %v206 = vrot.slane %v201, %v205
  %v211 = vunpack.c.l.b16 %v148
  %v212 = vunpack.c.l.b16 %v149
  %v213 = vunpack.c.l.b16 %v150
  %v214 = vpack.c.b16 %v212, %v211
  %v215 = vpack.c.b16 %v213, %v213
  %vm217 = vcmask 195584
  %v219 = vsel %vm217, %v151, 0
  %v222 = vsel %vm217, %v152, 0
  %v225 = vsel %vm217, %v153, 0
  %v228 = vsel %vm217, %v154, 0
  %v231 = vsel %vm217, %v155, 0
  %v234 = vsel %vm217, %v156, 0
  %v237 = vsel %vm217, %v157, 0
  %v240 = vsel %vm217, %v158, 0
  %v243 = vsel %vm217, %v159, 0
  %v246 = vsel %vm217, %v160, 0
  %v249 = vsel %vm217, %v161, 0
  %v252 = vsel %vm217, %v162, 0
  %v255 = vsel %vm217, %v163, 0
  %v258 = vsel %vm217, %v164, 0
  %v261 = vsel %vm217, %v165, 0
  %v264 = vsel %vm217, %v166, 0
  %v267 = vsel %vm217, %v167, 0
  %v270 = vsel %vm217, %v168, 0
  %v273 = vsel %vm217, %v169, 0
  %v276 = vsel %vm217, %v170, 0
  %v279 = vsel %vm217, %v171, 0
  %v282 = vsel %vm217, %v172, 0
  %v285 = vsel %vm217, %v173, 0
  %v288 = vsel %vm217, %v174, 0
  %v291 = vsel %vm217, %v175, 0
  %v294 = vsel %vm217, %v176, 0
  %v297 = vsel %vm217, %v177, 0
  %v300 = vsel %vm217, %v178, 0
  %v303 = vsel %vm217, %v179, 0
  %v306 = vsel %vm217, %v180, 0
  %v309 = vsel %vm217, %v181, 0
  %v312 = vsel %vm217, %v182, 0
  %v315 = vsel %vm217, %v183, 0
  %v318 = vsel %vm217, %v184, 0
  %v321 = vsel %vm217, %v185, 0
  %v324 = vsel %vm217, %v186, 0
  %v327 = vsel %vm217, %v187, 0
  %v330 = vsel %vm217, %v188, 0
  %v333 = vsel %vm217, %v189, 0
  %v336 = vsel %vm217, %v190, 0
  %v339 = vsel %vm217, %v191, 0
  %v342 = vsel %vm217, %v192, 0
  %v345 = vsel %vm217, %v193, 0
  %v348 = vsel %vm217, %v194, 0
  %v351 = vsel %vm217, %v195, 0
  %v354 = vsel %vm217, %v196, 0
  %v357 = vsel %vm217, %v197, 0
  %v360 = vsel %vm217, %v198, 0
  %v363 = vsel %vm217, %v199, 0
  %v366 = vsel %vm217, %v200, 0
  %vm368 = vcmask 1043456
  %v370 = vsel %vm368, %v215, 0
  %372 = vmatprep.subr.bf16.mxu0 0
  %373 = vmatpush1.bf16.msra.mxu0 %v214
  %374 = vmatprep.subr.bf16.mxu0 0
  %375 = vmatpush1.bf16.msra.mxu0 %v370
  %376 = vmatprep.subr.bf16.mxu0 0
  %377 = vmatpush1.bf16.msra.mxu0 0
  %378 = vmatprep.subr.bf16.mxu0 0
  %379 = vmatpush1.bf16.msra.mxu0 0
  %380 = vmatprep.subr.bf16.mxu0 0
  %381 = vmatpush1.bf16.msra.mxu0 0
  %382 = vmatprep.subr.bf16.mxu0 0
  %383 = vmatpush1.bf16.msra.mxu0 0
  %384 = vmatprep.subr.bf16.mxu0 0
  %385 = vmatpush1.bf16.msra.mxu0 0
  %386 = vmatprep.subr.bf16.mxu0 0
  %387 = vmatpush1.bf16.msra.mxu0 0
  %388 = vmatprep.subr.bf16.mxu0 0
  %389 = vmatpush1.bf16.msra.mxu0 0
  %390 = vmatprep.subr.bf16.mxu0 0
  %391 = vmatpush1.bf16.msra.mxu0 0
  %392 = vmatprep.subr.bf16.mxu0 0
  %393 = vmatpush1.bf16.msra.mxu0 0
  %394 = vmatprep.subr.bf16.mxu0 0
  %395 = vmatpush1.bf16.msra.mxu0 0
  %396 = vmatprep.subr.bf16.mxu0 0
  %397 = vmatpush1.bf16.msra.mxu0 0
  %398 = vmatprep.subr.bf16.mxu0 0
  %399 = vmatpush1.bf16.msra.mxu0 0
  %400 = vmatprep.subr.bf16.mxu0 0
  %401 = vmatpush1.bf16.msra.mxu0 0
  %402 = vmatprep.subr.bf16.mxu0 0
  %403 = vmatpush1.bf16.msra.mxu0 0
  %404 = vmatprep.mubr.bf16.mxu0 0
  %405 = vmatmul.mubr.bf16.gmra.mrb[0].mxu0 %v219
  %v406 = vpop.f32.mrb[0].mxu0
  %v407 = vadd.f32 %v206, %v406
  %v408 = vpop.f32.mrb[0].mxu0
  %v409 = vpop.f32.mrb[0].mxu0
  %v410 = vadd.f32 %v206, %v409
  %v411 = vpop.f32.mrb[0].mxu0
  %412 = vmatprep.mubr.bf16.mxu0 0
  %413 = vmatmul.mubr.bf16.gmra.mrb[0].mxu0 %v222
  %v414 = vpop.f32.mrb[0].mxu0
  %v415 = vadd.f32 %v206, %v414
  %v416 = vpop.f32.mrb[0].mxu0
  %v417 = vpop.f32.mrb[0].mxu0
  %v418 = vadd.f32 %v206, %v417
  %v419 = vpop.f32.mrb[0].mxu0
  %420 = vmatprep.mubr.bf16.mxu0 0
  %421 = vmatmul.mubr.bf16.gmra.mrb[0].mxu0 %v225
  %v422 = vpop.f32.mrb[0].mxu0
  %v423 = vadd.f32 %v206, %v422
  %v424 = vpop.f32.mrb[0].mxu0
  %v425 = vpop.f32.mrb[0].mxu0
  %v426 = vadd.f32 %v206, %v425
  %v427 = vpop.f32.mrb[0].mxu0
  %428 = vmatprep.mubr.bf16.mxu0 0
  %429 = vmatmul.mubr.bf16.gmra.mrb[0].mxu0 %v228
  %v430 = vpop.f32.mrb[0].mxu0
  %v431 = vadd.f32 %v206, %v430
  %v432 = vpop.f32.mrb[0].mxu0
  %v433 = vpop.f32.mrb[0].mxu0
  %v434 = vadd.f32 %v206, %v433
  %v435 = vpop.f32.mrb[0].mxu0
  %436 = vmatprep.mubr.bf16.mxu0 0
  %437 = vmatmul.mubr.bf16.gmra.mrb[0].mxu0 %v231
  %v438 = vpop.f32.mrb[0].mxu0
  %v439 = vadd.f32 %v206, %v438
  %v440 = vpop.f32.mrb[0].mxu0
  %v441 = vpop.f32.mrb[0].mxu0
  %v442 = vadd.f32 %v206, %v441
  %v443 = vpop.f32.mrb[0].mxu0
  %444 = vmatprep.mubr.bf16.mxu0 0
  %445 = vmatmul.mubr.bf16.gmra.mrb[0].mxu0 %v234
  %v446 = vpop.f32.mrb[0].mxu0
  %v447 = vadd.f32 %v206, %v446
  %v448 = vpop.f32.mrb[0].mxu0
  %v449 = vpop.f32.mrb[0].mxu0
  %v450 = vadd.f32 %v206, %v449
  %v451 = vpop.f32.mrb[0].mxu0
  %452 = vmatprep.mubr.bf16.mxu0 0
  %453 = vmatmul.mubr.bf16.gmra.mrb[0].mxu0 %v237
  %v454 = vpop.f32.mrb[0].mxu0
  %v455 = vadd.f32 %v206, %v454
  %v456 = vpop.f32.mrb[0].mxu0
  %v457 = vpop.f32.mrb[0].mxu0
  %v458 = vadd.f32 %v206, %v457
  %v459 = vpop.f32.mrb[0].mxu0
  %460 = vmatprep.mubr.bf16.mxu0 0
  %461 = vmatmul.mubr.bf16.gmra.mrb[0].mxu0 %v240
  %v462 = vpop.f32.mrb[0].mxu0
  %v463 = vadd.f32 %v206, %v462
  %v464 = vpop.f32.mrb[0].mxu0
  %v465 = vpop.f32.mrb[0].mxu0
  %v466 = vadd.f32 %v206, %v465
  %v467 = vpop.f32.mrb[0].mxu0
  %468 = vmatprep.mubr.bf16.mxu0 0
  %469 = vmatmul.mubr.bf16.gmra.mrb[0].mxu0 %v243
  %v470 = vpop.f32.mrb[0].mxu0
  %v471 = vadd.f32 %v206, %v470
  %v472 = vpop.f32.mrb[0].mxu0
  %v473 = vpop.f32.mrb[0].mxu0
  %v474 = vadd.f32 %v206, %v473
  %v475 = vpop.f32.mrb[0].mxu0
  %476 = vmatprep.mubr.bf16.mxu0 0
  %477 = vmatmul.mubr.bf16.gmra.mrb[0].mxu0 %v246
  %v478 = vpop.f32.mrb[0].mxu0
  %v479 = vadd.f32 %v206, %v478
  %v480 = vpop.f32.mrb[0].mxu0
  %v481 = vpop.f32.mrb[0].mxu0
  %v482 = vadd.f32 %v206, %v481
  %v483 = vpop.f32.mrb[0].mxu0
  %484 = vmatprep.mubr.bf16.mxu0 0
  %485 = vmatmul.mubr.bf16.gmra.mrb[0].mxu0 %v249
  %v486 = vpop.f32.mrb[0].mxu0
  %v487 = vadd.f32 %v206, %v486
  %v488 = vpop.f32.mrb[0].mxu0
  %v489 = vpop.f32.mrb[0].mxu0
  %v490 = vadd.f32 %v206, %v489
  %v491 = vpop.f32.mrb[0].mxu0
  %492 = vmatprep.mubr.bf16.mxu0 0
  %493 = vmatmul.mubr.bf16.gmra.mrb[0].mxu0 %v252
  %v494 = vpop.f32.mrb[0].mxu0
  %v495 = vadd.f32 %v206, %v494
  %v496 = vpop.f32.mrb[0].mxu0
  %v497 = vpop.f32.mrb[0].mxu0
  %v498 = vadd.f32 %v206, %v497
  %v499 = vpop.f32.mrb[0].mxu0
  %500 = vmatprep.mubr.bf16.mxu0 0
  %501 = vmatmul.mubr.bf16.gmra.mrb[0].mxu0 %v255
  %v502 = vpop.f32.mrb[0].mxu0
  %v503 = vadd.f32 %v206, %v502
  %v504 = vpop.f32.mrb[0].mxu0
  %v505 = vpop.f32.mrb[0].mxu0
  %v506 = vadd.f32 %v206, %v505
  %v507 = vpop.f32.mrb[0].mxu0
  %508 = vmatprep.mubr.bf16.mxu0 0
  %509 = vmatmul.mubr.bf16.gmra.mrb[0].mxu0 %v258
  %v510 = vpop.f32.mrb[0].mxu0
  %v511 = vadd.f32 %v206, %v510
  %v512 = vpop.f32.mrb[0].mxu0
  %v513 = vpop.f32.mrb[0].mxu0
  %v514 = vadd.f32 %v206, %v513
  %v515 = vpop.f32.mrb[0].mxu0
  %516 = vmatprep.mubr.bf16.mxu0 0
  %517 = vmatmul.mubr.bf16.gmra.mrb[0].mxu0 %v261
  %v518 = vpop.f32.mrb[0].mxu0
  %v519 = vadd.f32 %v206, %v518
  %v520 = vpop.f32.mrb[0].mxu0
  %v521 = vpop.f32.mrb[0].mxu0
  %v522 = vadd.f32 %v206, %v521
  %v523 = vpop.f32.mrb[0].mxu0
  %524 = vmatprep.mubr.bf16.mxu0 0
  %525 = vmatmul.mubr.bf16.gmra.mrb[0].mxu0 %v264
  %v526 = vpop.f32.mrb[0].mxu0
  %v527 = vadd.f32 %v206, %v526
  %v528 = vpop.f32.mrb[0].mxu0
  %v529 = vpop.f32.mrb[0].mxu0
  %v530 = vadd.f32 %v206, %v529
  %v531 = vpop.f32.mrb[0].mxu0
  %532 = vmatprep.mubr.bf16.mxu0 0
  %533 = vmatmul.mubr.bf16.gmra.mrb[0].mxu0 %v267
  %v534 = vpop.f32.mrb[0].mxu0
  %v535 = vadd.f32 %v206, %v534
  %v536 = vpop.f32.mrb[0].mxu0
  %v537 = vpop.f32.mrb[0].mxu0
  %v538 = vadd.f32 %v206, %v537
  %v539 = vpop.f32.mrb[0].mxu0
  %540 = vmatprep.mubr.bf16.mxu0 0
  %541 = vmatmul.mubr.bf16.gmra.mrb[0].mxu0 %v270
  %v542 = vpop.f32.mrb[0].mxu0
  %v543 = vadd.f32 %v206, %v542
  %v544 = vpop.f32.mrb[0].mxu0
  %v545 = vpop.f32.mrb[0].mxu0
  %v546 = vadd.f32 %v206, %v545
  %v547 = vpop.f32.mrb[0].mxu0
  %548 = vmatprep.mubr.bf16.mxu0 0
  %549 = vmatmul.mubr.bf16.gmra.mrb[0].mxu0 %v273
  %v550 = vpop.f32.mrb[0].mxu0
  %v551 = vadd.f32 %v206, %v550
  %v552 = vpop.f32.mrb[0].mxu0
  %v553 = vpop.f32.mrb[0].mxu0
  %v554 = vadd.f32 %v206, %v553
  %v555 = vpop.f32.mrb[0].mxu0
  %556 = vmatprep.mubr.bf16.mxu0 0
  %557 = vmatmul.mubr.bf16.gmra.mrb[0].mxu0 %v276
  %v558 = vpop.f32.mrb[0].mxu0
  %v559 = vadd.f32 %v206, %v558
  %v560 = vpop.f32.mrb[0].mxu0
  %v561 = vpop.f32.mrb[0].mxu0
  %v562 = vadd.f32 %v206, %v561
  %v563 = vpop.f32.mrb[0].mxu0
  %564 = vmatprep.mubr.bf16.mxu0 0
  %565 = vmatmul.mubr.bf16.gmra.mrb[0].mxu0 %v279
  %v566 = vpop.f32.mrb[0].mxu0
  %v567 = vadd.f32 %v206, %v566
  %v568 = vpop.f32.mrb[0].mxu0
  %v569 = vpop.f32.mrb[0].mxu0
  %v570 = vadd.f32 %v206, %v569
  %v571 = vpop.f32.mrb[0].mxu0
  %572 = vmatprep.mubr.bf16.mxu0 0
  %573 = vmatmul.mubr.bf16.gmra.mrb[0].mxu0 %v282
  %v574 = vpop.f32.mrb[0].mxu0
  %v575 = vadd.f32 %v206, %v574
  %v576 = vpop.f32.mrb[0].mxu0
  %v577 = vpop.f32.mrb[0].mxu0
  %v578 = vadd.f32 %v206, %v577
  %v579 = vpop.f32.mrb[0].mxu0
  %580 = vmatprep.mubr.bf16.mxu0 0
  %581 = vmatmul.mubr.bf16.gmra.mrb[0].mxu0 %v285
  %v582 = vpop.f32.mrb[0].mxu0
  %v583 = vadd.f32 %v206, %v582
  %v584 = vpop.f32.mrb[0].mxu0
  %v585 = vpop.f32.mrb[0].mxu0
  %v586 = vadd.f32 %v206, %v585
  %v587 = vpop.f32.mrb[0].mxu0
  %588 = vmatprep.mubr.bf16.mxu0 0
  %589 = vmatmul.mubr.bf16.gmra.mrb[0].mxu0 %v288
  %v590 = vpop.f32.mrb[0].mxu0
  %v591 = vadd.f32 %v206, %v590
  %v592 = vpop.f32.mrb[0].mxu0
  %v593 = vpop.f32.mrb[0].mxu0
  %v594 = vadd.f32 %v206, %v593
  %v595 = vpop.f32.mrb[0].mxu0
  %596 = vmatprep.mubr.bf16.mxu0 0
  %597 = vmatmul.mubr.bf16.gmra.mrb[0].mxu0 %v291
  %v598 = vpop.f32.mrb[0].mxu0
  %v599 = vadd.f32 %v206, %v598
  %v600 = vpop.f32.mrb[0].mxu0
  %v601 = vpop.f32.mrb[0].mxu0
  %v602 = vadd.f32 %v206, %v601
  %v603 = vpop.f32.mrb[0].mxu0
  %604 = vmatprep.mubr.bf16.mxu0 0
  %605 = vmatmul.mubr.bf16.gmra.mrb[0].mxu0 %v294
  %v606 = vpop.f32.mrb[0].mxu0
  %v607 = vadd.f32 %v206, %v606
  %v608 = vpop.f32.mrb[0].mxu0
  %v609 = vpop.f32.mrb[0].mxu0
  %v610 = vadd.f32 %v206, %v609
  %v611 = vpop.f32.mrb[0].mxu0
  %612 = vmatprep.mubr.bf16.mxu0 0
  %613 = vmatmul.mubr.bf16.gmra.mrb[0].mxu0 %v297
  %v614 = vpop.f32.mrb[0].mxu0
  %v615 = vadd.f32 %v206, %v614
  %v616 = vpop.f32.mrb[0].mxu0
  %v617 = vpop.f32.mrb[0].mxu0
  %v618 = vadd.f32 %v206, %v617
  %v619 = vpop.f32.mrb[0].mxu0
  %620 = vmatprep.mubr.bf16.mxu0 0
  %621 = vmatmul.mubr.bf16.gmra.mrb[0].mxu0 %v300
  %v622 = vpop.f32.mrb[0].mxu0
  %v623 = vadd.f32 %v206, %v622
  %v624 = vpop.f32.mrb[0].mxu0
  %v625 = vpop.f32.mrb[0].mxu0
  %v626 = vadd.f32 %v206, %v625
  %v627 = vpop.f32.mrb[0].mxu0
  %628 = vmatprep.mubr.bf16.mxu0 0
  %629 = vmatmul.mubr.bf16.gmra.mrb[0].mxu0 %v303
  %v630 = vpop.f32.mrb[0].mxu0
  %v631 = vadd.f32 %v206, %v630
  %v632 = vpop.f32.mrb[0].mxu0
  %v633 = vpop.f32.mrb[0].mxu0
  %v634 = vadd.f32 %v206, %v633
  %v635 = vpop.f32.mrb[0].mxu0
  %636 = vmatprep.mubr.bf16.mxu0 0
  %637 = vmatmul.mubr.bf16.gmra.mrb[0].mxu0 %v306
  %v638 = vpop.f32.mrb[0].mxu0
  %v639 = vadd.f32 %v206, %v638
  %v640 = vpop.f32.mrb[0].mxu0
  %v641 = vpop.f32.mrb[0].mxu0
  %v642 = vadd.f32 %v206, %v641
  %v643 = vpop.f32.mrb[0].mxu0
  %644 = vmatprep.mubr.bf16.mxu0 0
  %645 = vmatmul.mubr.bf16.gmra.mrb[0].mxu0 %v309
  %v646 = vpop.f32.mrb[0].mxu0
  %v647 = vadd.f32 %v206, %v646
  %v648 = vpop.f32.mrb[0].mxu0
  %v649 = vpop.f32.mrb[0].mxu0
  %v650 = vadd.f32 %v206, %v649
  %v651 = vpop.f32.mrb[0].mxu0
  %652 = vmatprep.mubr.bf16.mxu0 0
  %653 = vmatmul.mubr.bf16.gmra.mrb[0].mxu0 %v312
  %v654 = vpop.f32.mrb[0].mxu0
  %v655 = vadd.f32 %v206, %v654
  %v656 = vpop.f32.mrb[0].mxu0
  %v657 = vpop.f32.mrb[0].mxu0
  %v658 = vadd.f32 %v206, %v657
  %v659 = vpop.f32.mrb[0].mxu0
  %660 = vmatprep.mubr.bf16.mxu0 0
  %661 = vmatmul.mubr.bf16.gmra.mrb[0].mxu0 %v315
  %v662 = vpop.f32.mrb[0].mxu0
  %v663 = vadd.f32 %v206, %v662
  %v664 = vpop.f32.mrb[0].mxu0
  %v665 = vpop.f32.mrb[0].mxu0
  %v666 = vadd.f32 %v206, %v665
  %v667 = vpop.f32.mrb[0].mxu0
  %668 = vmatprep.mubr.bf16.mxu0 0
  %669 = vmatmul.mubr.bf16.gmra.mrb[0].mxu0 %v318
  %v670 = vpop.f32.mrb[0].mxu0
  %v671 = vadd.f32 %v206, %v670
  %v672 = vpop.f32.mrb[0].mxu0
  %v673 = vpop.f32.mrb[0].mxu0
  %v674 = vadd.f32 %v206, %v673
  %v675 = vpop.f32.mrb[0].mxu0
  %676 = vmatprep.mubr.bf16.mxu0 0
  %677 = vmatmul.mubr.bf16.gmra.mrb[0].mxu0 %v321
  %v678 = vpop.f32.mrb[0].mxu0
  %v679 = vadd.f32 %v206, %v678
  %v680 = vpop.f32.mrb[0].mxu0
  %v681 = vpop.f32.mrb[0].mxu0
  %v682 = vadd.f32 %v206, %v681
  %v683 = vpop.f32.mrb[0].mxu0
  %684 = vmatprep.mubr.bf16.mxu0 0
  %685 = vmatmul.mubr.bf16.gmra.mrb[0].mxu0 %v324
  %v686 = vpop.f32.mrb[0].mxu0
  %v687 = vadd.f32 %v206, %v686
  %v688 = vpop.f32.mrb[0].mxu0
  %v689 = vpop.f32.mrb[0].mxu0
  %v690 = vadd.f32 %v206, %v689
  %v691 = vpop.f32.mrb[0].mxu0
  %692 = vmatprep.mubr.bf16.mxu0 0
  %693 = vmatmul.mubr.bf16.gmra.mrb[0].mxu0 %v327
  %v694 = vpop.f32.mrb[0].mxu0
  %v695 = vadd.f32 %v206, %v694
  %v696 = vpop.f32.mrb[0].mxu0
  %v697 = vpop.f32.mrb[0].mxu0
  %v698 = vadd.f32 %v206, %v697
  %v699 = vpop.f32.mrb[0].mxu0
  %700 = vmatprep.mubr.bf16.mxu0 0
  %701 = vmatmul.mubr.bf16.gmra.mrb[0].mxu0 %v330
  %v702 = vpop.f32.mrb[0].mxu0
  %v703 = vadd.f32 %v206, %v702
  %v704 = vpop.f32.mrb[0].mxu0
  %v705 = vpop.f32.mrb[0].mxu0
  %v706 = vadd.f32 %v206, %v705
  %v707 = vpop.f32.mrb[0].mxu0
  %708 = vmatprep.mubr.bf16.mxu0 0
  %709 = vmatmul.mubr.bf16.gmra.mrb[0].mxu0 %v333
  %v710 = vpop.f32.mrb[0].mxu0
  %v711 = vadd.f32 %v206, %v710
  %v712 = vpop.f32.mrb[0].mxu0
  %v713 = vpop.f32.mrb[0].mxu0
  %v714 = vadd.f32 %v206, %v713
  %v715 = vpop.f32.mrb[0].mxu0
  %716 = vmatprep.mubr.bf16.mxu0 0
  %717 = vmatmul.mubr.bf16.gmra.mrb[0].mxu0 %v336
  %v718 = vpop.f32.mrb[0].mxu0
  %v719 = vadd.f32 %v206, %v718
  %v720 = vpop.f32.mrb[0].mxu0
  %v721 = vpop.f32.mrb[0].mxu0
  %v722 = vadd.f32 %v206, %v721
  %v723 = vpop.f32.mrb[0].mxu0
  %724 = vmatprep.mubr.bf16.mxu0 0
  %725 = vmatmul.mubr.bf16.gmra.mrb[0].mxu0 %v339
  %v726 = vpop.f32.mrb[0].mxu0
  %v727 = vadd.f32 %v206, %v726
  %v728 = vpop.f32.mrb[0].mxu0
  %v729 = vpop.f32.mrb[0].mxu0
  %v730 = vadd.f32 %v206, %v729
  %v731 = vpop.f32.mrb[0].mxu0
  %732 = vmatprep.mubr.bf16.mxu0 0
  %733 = vmatmul.mubr.bf16.gmra.mrb[0].mxu0 %v342
  %v734 = vpop.f32.mrb[0].mxu0
  %v735 = vadd.f32 %v206, %v734
  %v736 = vpop.f32.mrb[0].mxu0
  %v737 = vpop.f32.mrb[0].mxu0
  %v738 = vadd.f32 %v206, %v737
  %v739 = vpop.f32.mrb[0].mxu0
  %740 = vmatprep.mubr.bf16.mxu0 0
  %741 = vmatmul.mubr.bf16.gmra.mrb[0].mxu0 %v345
  %v742 = vpop.f32.mrb[0].mxu0
  %v743 = vadd.f32 %v206, %v742
  %v744 = vpop.f32.mrb[0].mxu0
  %v745 = vpop.f32.mrb[0].mxu0
  %v746 = vadd.f32 %v206, %v745
  %v747 = vpop.f32.mrb[0].mxu0
  %748 = vmatprep.mubr.bf16.mxu0 0
  %749 = vmatmul.mubr.bf16.gmra.mrb[0].mxu0 %v348
  %v750 = vpop.f32.mrb[0].mxu0
  %v751 = vadd.f32 %v206, %v750
  %v752 = vpop.f32.mrb[0].mxu0
  %v753 = vpop.f32.mrb[0].mxu0
  %v754 = vadd.f32 %v206, %v753
  %v755 = vpop.f32.mrb[0].mxu0
  %756 = vmatprep.mubr.bf16.mxu0 0
  %757 = vmatmul.mubr.bf16.gmra.mrb[0].mxu0 %v351
  %v758 = vpop.f32.mrb[0].mxu0
  %v759 = vadd.f32 %v206, %v758
  %v760 = vpop.f32.mrb[0].mxu0
  %v761 = vpop.f32.mrb[0].mxu0
  %v762 = vadd.f32 %v206, %v761
  %v763 = vpop.f32.mrb[0].mxu0
  %764 = vmatprep.mubr.bf16.mxu0 0
  %765 = vmatmul.mubr.bf16.gmra.mrb[0].mxu0 %v354
  %v766 = vpop.f32.mrb[0].mxu0
  %v767 = vadd.f32 %v206, %v766
  %v768 = vpop.f32.mrb[0].mxu0
  %v769 = vpop.f32.mrb[0].mxu0
  %v770 = vadd.f32 %v206, %v769
  %v771 = vpop.f32.mrb[0].mxu0
  %772 = vmatprep.mubr.bf16.mxu0 0
  %773 = vmatmul.mubr.bf16.gmra.mrb[0].mxu0 %v357
  %v774 = vpop.f32.mrb[0].mxu0
  %v775 = vadd.f32 %v206, %v774
  %v776 = vpop.f32.mrb[0].mxu0
  %v777 = vpop.f32.mrb[0].mxu0
  %v778 = vadd.f32 %v206, %v777
  %v779 = vpop.f32.mrb[0].mxu0
  %780 = vmatprep.mubr.bf16.mxu0 0
  %781 = vmatmul.mubr.bf16.gmra.mrb[0].mxu0 %v360
  %v782 = vpop.f32.mrb[0].mxu0
  %v783 = vadd.f32 %v206, %v782
  %v784 = vpop.f32.mrb[0].mxu0
  %v785 = vpop.f32.mrb[0].mxu0
  %v786 = vadd.f32 %v206, %v785
  %v787 = vpop.f32.mrb[0].mxu0
  %788 = vmatprep.mubr.bf16.mxu0 0
  %789 = vmatmul.mubr.bf16.gmra.mrb[0].mxu0 %v363
  %v790 = vpop.f32.mrb[0].mxu0
  %v791 = vadd.f32 %v206, %v790
  %v792 = vpop.f32.mrb[0].mxu0
  %v793 = vpop.f32.mrb[0].mxu0
  %v794 = vadd.f32 %v206, %v793
  %v795 = vpop.f32.mrb[0].mxu0
  %796 = vmatprep.mubr.bf16.mxu0 0
  %797 = vmatmul.mubr.bf16.gmra.mrb[0].mxu0 %v366
  %v798 = vpop.f32.mrb[0].mxu0
  %v799 = vadd.f32 %v206, %v798
  %v800 = vpop.f32.mrb[0].mxu0
  %v801 = vpop.f32.mrb[0].mxu0
  %v802 = vadd.f32 %v206, %v801
  %v803 = vpop.f32.mrb[0].mxu0
  %804 = vdwg.mxu0
  %v805 = vadd.f32 %v407, 3.0
  %v806 = vadd.f32 %v410, 3.0
  %v807 = vadd.f32 %v415, 3.0
  %v808 = vadd.f32 %v418, 3.0
  %v809 = vadd.f32 %v423, 3.0
  %v810 = vadd.f32 %v426, 3.0
  %v811 = vadd.f32 %v431, 3.0
  %v812 = vadd.f32 %v434, 3.0
  %v813 = vadd.f32 %v439, 3.0
  %v814 = vadd.f32 %v442, 3.0
  %v815 = vadd.f32 %v447, 3.0
  %v816 = vadd.f32 %v450, 3.0
  %v817 = vadd.f32 %v455, 3.0
  %v818 = vadd.f32 %v458, 3.0
  %v819 = vadd.f32 %v463, 3.0
  %v820 = vadd.f32 %v466, 3.0
  %v821 = vadd.f32 %v471, 3.0
  %v822 = vadd.f32 %v474, 3.0
  %v823 = vadd.f32 %v479, 3.0
  %v824 = vadd.f32 %v482, 3.0
  %v825 = vadd.f32 %v487, 3.0
  %v826 = vadd.f32 %v490, 3.0
  %v827 = vadd.f32 %v495, 3.0
  %v828 = vadd.f32 %v498, 3.0
  %v829 = vadd.f32 %v503, 3.0
  %v830 = vadd.f32 %v506, 3.0
  %v831 = vadd.f32 %v511, 3.0
  %v832 = vadd.f32 %v514, 3.0
  %v833 = vadd.f32 %v519, 3.0
  %v834 = vadd.f32 %v522, 3.0
  %v835 = vadd.f32 %v527, 3.0
  %v836 = vadd.f32 %v530, 3.0
  %v837 = vadd.f32 %v535, 3.0
  %v838 = vadd.f32 %v538, 3.0
  %v839 = vadd.f32 %v543, 3.0
  %v840 = vadd.f32 %v546, 3.0
  %v841 = vadd.f32 %v551, 3.0
  %v842 = vadd.f32 %v554, 3.0
  %v843 = vadd.f32 %v559, 3.0
  %v844 = vadd.f32 %v562, 3.0
  %v845 = vadd.f32 %v567, 3.0
  %v846 = vadd.f32 %v570, 3.0
  %v847 = vadd.f32 %v575, 3.0
  %v848 = vadd.f32 %v578, 3.0
  %v849 = vadd.f32 %v583, 3.0
  %v850 = vadd.f32 %v586, 3.0
  %v851 = vadd.f32 %v591, 3.0
  %v852 = vadd.f32 %v594, 3.0
  %v853 = vadd.f32 %v599, 3.0
  %v854 = vadd.f32 %v602, 3.0
  %v855 = vadd.f32 %v607, 3.0
  %v856 = vadd.f32 %v610, 3.0
  %v857 = vadd.f32 %v615, 3.0
  %v858 = vadd.f32 %v618, 3.0
  %v859 = vadd.f32 %v623, 3.0
  %v860 = vadd.f32 %v626, 3.0
  %v861 = vadd.f32 %v631, 3.0
  %v862 = vadd.f32 %v634, 3.0
  %v863 = vadd.f32 %v639, 3.0
  %v864 = vadd.f32 %v642, 3.0
  %v865 = vadd.f32 %v647, 3.0
  %v866 = vadd.f32 %v650, 3.0
  %v867 = vadd.f32 %v655, 3.0
  %v868 = vadd.f32 %v658, 3.0
  %v869 = vadd.f32 %v663, 3.0
  %v870 = vadd.f32 %v666, 3.0
  %v871 = vadd.f32 %v671, 3.0
  %v872 = vadd.f32 %v674, 3.0
  %v873 = vadd.f32 %v679, 3.0
  %v874 = vadd.f32 %v682, 3.0
  %v875 = vadd.f32 %v687, 3.0
  %v876 = vadd.f32 %v690, 3.0
  %v877 = vadd.f32 %v695, 3.0
  %v878 = vadd.f32 %v698, 3.0
  %v879 = vadd.f32 %v703, 3.0
  %v880 = vadd.f32 %v706, 3.0
  %v881 = vadd.f32 %v711, 3.0
  %v882 = vadd.f32 %v714, 3.0
  %v883 = vadd.f32 %v719, 3.0
  %v884 = vadd.f32 %v722, 3.0
  %v885 = vadd.f32 %v727, 3.0
  %v886 = vadd.f32 %v730, 3.0
  %v887 = vadd.f32 %v735, 3.0
  %v888 = vadd.f32 %v738, 3.0
  %v889 = vadd.f32 %v743, 3.0
  %v890 = vadd.f32 %v746, 3.0
  %v891 = vadd.f32 %v751, 3.0
  %v892 = vadd.f32 %v754, 3.0
  %v893 = vadd.f32 %v759, 3.0
  %v894 = vadd.f32 %v762, 3.0
  %v895 = vadd.f32 %v767, 3.0
  %v896 = vadd.f32 %v770, 3.0
  %v897 = vadd.f32 %v775, 3.0
  %v898 = vadd.f32 %v778, 3.0
  %v899 = vadd.f32 %v783, 3.0
  %v900 = vadd.f32 %v786, 3.0
  %v901 = vadd.f32 %v791, 3.0
  %v902 = vadd.f32 %v794, 3.0
  %v903 = vadd.f32 %v799, 3.0
  %v904 = vadd.f32 %v802, 3.0
  %v905 = vmax.f32 %v805, 0.0
  %v906 = vmax.f32 %v806, 0.0
  %v907 = vmax.f32 %v807, 0.0
  %v908 = vmax.f32 %v808, 0.0
  %v909 = vmax.f32 %v809, 0.0
  %v910 = vmax.f32 %v810, 0.0
  %v911 = vmax.f32 %v811, 0.0
  %v912 = vmax.f32 %v812, 0.0
  %v913 = vmax.f32 %v813, 0.0
  %v914 = vmax.f32 %v814, 0.0
  %v915 = vmax.f32 %v815, 0.0
  %v916 = vmax.f32 %v816, 0.0
  %v917 = vmax.f32 %v817, 0.0
  %v918 = vmax.f32 %v818, 0.0
  %v919 = vmax.f32 %v819, 0.0
  %v920 = vmax.f32 %v820, 0.0
  %v921 = vmax.f32 %v821, 0.0
  %v922 = vmax.f32 %v822, 0.0
  %v923 = vmax.f32 %v823, 0.0
  %v924 = vmax.f32 %v824, 0.0
  %v925 = vmax.f32 %v825, 0.0
  %v926 = vmax.f32 %v826, 0.0
  %v927 = vmax.f32 %v827, 0.0
  %v928 = vmax.f32 %v828, 0.0
  %v929 = vmax.f32 %v829, 0.0
  %v930 = vmax.f32 %v830, 0.0
  %v931 = vmax.f32 %v831, 0.0
  %v932 = vmax.f32 %v832, 0.0
  %v933 = vmax.f32 %v833, 0.0
  %v934 = vmax.f32 %v834, 0.0
  %v935 = vmax.f32 %v835, 0.0
  %v936 = vmax.f32 %v836, 0.0
  %v937 = vmax.f32 %v837, 0.0
  %v938 = vmax.f32 %v838, 0.0
  %v939 = vmax.f32 %v839, 0.0
  %v940 = vmax.f32 %v840, 0.0
  %v941 = vmax.f32 %v841, 0.0
  %v942 = vmax.f32 %v842, 0.0
  %v943 = vmax.f32 %v843, 0.0
  %v944 = vmax.f32 %v844, 0.0
  %v945 = vmax.f32 %v845, 0.0
  %v946 = vmax.f32 %v846, 0.0
  %v947 = vmax.f32 %v847, 0.0
  %v948 = vmax.f32 %v848, 0.0
  %v949 = vmax.f32 %v849, 0.0
  %v950 = vmax.f32 %v850, 0.0
  %v951 = vmax.f32 %v851, 0.0
  %v952 = vmax.f32 %v852, 0.0
  %v953 = vmax.f32 %v853, 0.0
  %v954 = vmax.f32 %v854, 0.0
  %v955 = vmax.f32 %v855, 0.0
  %v956 = vmax.f32 %v856, 0.0
  %v957 = vmax.f32 %v857, 0.0
  %v958 = vmax.f32 %v858, 0.0
  %v959 = vmax.f32 %v859, 0.0
  %v960 = vmax.f32 %v860, 0.0
  %v961 = vmax.f32 %v861, 0.0
  %v962 = vmax.f32 %v862, 0.0
  %v963 = vmax.f32 %v863, 0.0
  %v964 = vmax.f32 %v864, 0.0
  %v965 = vmax.f32 %v865, 0.0
  %v966 = vmax.f32 %v866, 0.0
  %v967 = vmax.f32 %v867, 0.0
  %v968 = vmax.f32 %v868, 0.0
  %v969 = vmax.f32 %v869, 0.0
  %v970 = vmax.f32 %v870, 0.0
  %v971 = vmax.f32 %v871, 0.0
  %v972 = vmax.f32 %v872, 0.0
  %v973 = vmax.f32 %v873, 0.0
  %v974 = vmax.f32 %v874, 0.0
  %v975 = vmax.f32 %v875, 0.0
  %v976 = vmax.f32 %v876, 0.0
  %v977 = vmax.f32 %v877, 0.0
  %v978 = vmax.f32 %v878, 0.0
  %v979 = vmax.f32 %v879, 0.0
  %v980 = vmax.f32 %v880, 0.0
  %v981 = vmax.f32 %v881, 0.0
  %v982 = vmax.f32 %v882, 0.0
  %v983 = vmax.f32 %v883, 0.0
  %v984 = vmax.f32 %v884, 0.0
  %v985 = vmax.f32 %v885, 0.0
  %v986 = vmax.f32 %v886, 0.0
  %v987 = vmax.f32 %v887, 0.0
  %v988 = vmax.f32 %v888, 0.0
  %v989 = vmax.f32 %v889, 0.0
  %v990 = vmax.f32 %v890, 0.0
  %v991 = vmax.f32 %v891, 0.0
  %v992 = vmax.f32 %v892, 0.0
  %v993 = vmax.f32 %v893, 0.0
  %v994 = vmax.f32 %v894, 0.0
  %v995 = vmax.f32 %v895, 0.0
  %v996 = vmax.f32 %v896, 0.0
  %v997 = vmax.f32 %v897, 0.0
  %v998 = vmax.f32 %v898, 0.0
  %v999 = vmax.f32 %v899, 0.0
  %v1000 = vmax.f32 %v900, 0.0
  %v1001 = vmax.f32 %v901, 0.0
  %v1002 = vmax.f32 %v902, 0.0
  %v1003 = vmax.f32 %v903, 0.0
  %v1004 = vmax.f32 %v904, 0.0
  %v1005 = vmin.f32 %v905, 6.0
  %v1006 = vmin.f32 %v906, 6.0
  %v1007 = vmin.f32 %v907, 6.0
  %v1008 = vmin.f32 %v908, 6.0
  %v1009 = vmin.f32 %v909, 6.0
  %v1010 = vmin.f32 %v910, 6.0
  %v1011 = vmin.f32 %v911, 6.0
  %v1012 = vmin.f32 %v912, 6.0
  %v1013 = vmin.f32 %v913, 6.0
  %v1014 = vmin.f32 %v914, 6.0
  %v1015 = vmin.f32 %v915, 6.0
  %v1016 = vmin.f32 %v916, 6.0
  %v1017 = vmin.f32 %v917, 6.0
  %v1018 = vmin.f32 %v918, 6.0
  %v1019 = vmin.f32 %v919, 6.0
  %v1020 = vmin.f32 %v920, 6.0
  %v1021 = vmin.f32 %v921, 6.0
  %v1022 = vmin.f32 %v922, 6.0
  %v1023 = vmin.f32 %v923, 6.0
  %v1024 = vmin.f32 %v924, 6.0
  %v1025 = vmin.f32 %v925, 6.0
  %v1026 = vmin.f32 %v926, 6.0
  %v1027 = vmin.f32 %v927, 6.0
  %v1028 = vmin.f32 %v928, 6.0
  %v1029 = vmin.f32 %v929, 6.0
  %v1030 = vmin.f32 %v930, 6.0
  %v1031 = vmin.f32 %v931, 6.0
  %v1032 = vmin.f32 %v932, 6.0
  %v1033 = vmin.f32 %v933, 6.0
  %v1034 = vmin.f32 %v934, 6.0
  %v1035 = vmin.f32 %v935, 6.0
  %v1036 = vmin.f32 %v936, 6.0
  %v1037 = vmin.f32 %v937, 6.0
  %v1038 = vmin.f32 %v938, 6.0
  %v1039 = vmin.f32 %v939, 6.0
  %v1040 = vmin.f32 %v940, 6.0
  %v1041 = vmin.f32 %v941, 6.0
  %v1042 = vmin.f32 %v942, 6.0
  %v1043 = vmin.f32 %v943, 6.0
  %v1044 = vmin.f32 %v944, 6.0
  %v1045 = vmin.f32 %v945, 6.0
  %v1046 = vmin.f32 %v946, 6.0
  %v1047 = vmin.f32 %v947, 6.0
  %v1048 = vmin.f32 %v948, 6.0
  %v1049 = vmin.f32 %v949, 6.0
  %v1050 = vmin.f32 %v950, 6.0
  %v1051 = vmin.f32 %v951, 6.0
  %v1052 = vmin.f32 %v952, 6.0
  %v1053 = vmin.f32 %v953, 6.0
  %v1054 = vmin.f32 %v954, 6.0
  %v1055 = vmin.f32 %v955, 6.0
  %v1056 = vmin.f32 %v956, 6.0
  %v1057 = vmin.f32 %v957, 6.0
  %v1058 = vmin.f32 %v958, 6.0
  %v1059 = vmin.f32 %v959, 6.0
  %v1060 = vmin.f32 %v960, 6.0
  %v1061 = vmin.f32 %v961, 6.0
  %v1062 = vmin.f32 %v962, 6.0
  %v1063 = vmin.f32 %v963, 6.0
  %v1064 = vmin.f32 %v964, 6.0
  %v1065 = vmin.f32 %v965, 6.0
  %v1066 = vmin.f32 %v966, 6.0
  %v1067 = vmin.f32 %v967, 6.0
  %v1068 = vmin.f32 %v968, 6.0
  %v1069 = vmin.f32 %v969, 6.0
  %v1070 = vmin.f32 %v970, 6.0
  %v1071 = vmin.f32 %v971, 6.0
  %v1072 = vmin.f32 %v972, 6.0
  %v1073 = vmin.f32 %v973, 6.0
  %v1074 = vmin.f32 %v974, 6.0
  %v1075 = vmin.f32 %v975, 6.0
  %v1076 = vmin.f32 %v976, 6.0
  %v1077 = vmin.f32 %v977, 6.0
  %v1078 = vmin.f32 %v978, 6.0
  %v1079 = vmin.f32 %v979, 6.0
  %v1080 = vmin.f32 %v980, 6.0
  %v1081 = vmin.f32 %v981, 6.0
  %v1082 = vmin.f32 %v982, 6.0
  %v1083 = vmin.f32 %v983, 6.0
  %v1084 = vmin.f32 %v984, 6.0
  %v1085 = vmin.f32 %v985, 6.0
  %v1086 = vmin.f32 %v986, 6.0
  %v1087 = vmin.f32 %v987, 6.0
  %v1088 = vmin.f32 %v988, 6.0
  %v1089 = vmin.f32 %v989, 6.0
  %v1090 = vmin.f32 %v990, 6.0
  %v1091 = vmin.f32 %v991, 6.0
  %v1092 = vmin.f32 %v992, 6.0
  %v1093 = vmin.f32 %v993, 6.0
  %v1094 = vmin.f32 %v994, 6.0
  %v1095 = vmin.f32 %v995, 6.0
  %v1096 = vmin.f32 %v996, 6.0
  %v1097 = vmin.f32 %v997, 6.0
  %v1098 = vmin.f32 %v998, 6.0
  %v1099 = vmin.f32 %v999, 6.0
  %v1100 = vmin.f32 %v1000, 6.0
  %v1101 = vmin.f32 %v1001, 6.0
  %v1102 = vmin.f32 %v1002, 6.0
  %v1103 = vmin.f32 %v1003, 6.0
  %v1104 = vmin.f32 %v1004, 6.0
  %v1105 = vmul.f32 %v407, %v1005
  %v1106 = vmul.f32 %v410, %v1006
  %v1107 = vmul.f32 %v415, %v1007
  %v1108 = vmul.f32 %v418, %v1008
  %v1109 = vmul.f32 %v423, %v1009
  %v1110 = vmul.f32 %v426, %v1010
  %v1111 = vmul.f32 %v431, %v1011
  %v1112 = vmul.f32 %v434, %v1012
  %v1113 = vmul.f32 %v439, %v1013
  %v1114 = vmul.f32 %v442, %v1014
  %v1115 = vmul.f32 %v447, %v1015
  %v1116 = vmul.f32 %v450, %v1016
  %v1117 = vmul.f32 %v455, %v1017
  %v1118 = vmul.f32 %v458, %v1018
  %v1119 = vmul.f32 %v463, %v1019
  %v1120 = vmul.f32 %v466, %v1020
  %v1121 = vmul.f32 %v471, %v1021
  %v1122 = vmul.f32 %v474, %v1022
  %v1123 = vmul.f32 %v479, %v1023
  %v1124 = vmul.f32 %v482, %v1024
  %v1125 = vmul.f32 %v487, %v1025
  %v1126 = vmul.f32 %v490, %v1026
  %v1127 = vmul.f32 %v495, %v1027
  %v1128 = vmul.f32 %v498, %v1028
  %v1129 = vmul.f32 %v503, %v1029
  %v1130 = vmul.f32 %v506, %v1030
  %v1131 = vmul.f32 %v511, %v1031
  %v1132 = vmul.f32 %v514, %v1032
  %v1133 = vmul.f32 %v519, %v1033
  %v1134 = vmul.f32 %v522, %v1034
  %v1135 = vmul.f32 %v527, %v1035
  %v1136 = vmul.f32 %v530, %v1036
  %v1137 = vmul.f32 %v535, %v1037
  %v1138 = vmul.f32 %v538, %v1038
  %v1139 = vmul.f32 %v543, %v1039
  %v1140 = vmul.f32 %v546, %v1040
  %v1141 = vmul.f32 %v551, %v1041
  %v1142 = vmul.f32 %v554, %v1042
  %v1143 = vmul.f32 %v559, %v1043
  %v1144 = vmul.f32 %v562, %v1044
  %v1145 = vmul.f32 %v567, %v1045
  %v1146 = vmul.f32 %v570, %v1046
  %v1147 = vmul.f32 %v575, %v1047
  %v1148 = vmul.f32 %v578, %v1048
  %v1149 = vmul.f32 %v583, %v1049
  %v1150 = vmul.f32 %v586, %v1050
  %v1151 = vmul.f32 %v591, %v1051
  %v1152 = vmul.f32 %v594, %v1052
  %v1153 = vmul.f32 %v599, %v1053
  %v1154 = vmul.f32 %v602, %v1054
  %v1155 = vmul.f32 %v607, %v1055
  %v1156 = vmul.f32 %v610, %v1056
  %v1157 = vmul.f32 %v615, %v1057
  %v1158 = vmul.f32 %v618, %v1058
  %v1159 = vmul.f32 %v623, %v1059
  %v1160 = vmul.f32 %v626, %v1060
  %v1161 = vmul.f32 %v631, %v1061
  %v1162 = vmul.f32 %v634, %v1062
  %v1163 = vmul.f32 %v639, %v1063
  %v1164 = vmul.f32 %v642, %v1064
  %v1165 = vmul.f32 %v647, %v1065
  %v1166 = vmul.f32 %v650, %v1066
  %v1167 = vmul.f32 %v655, %v1067
  %v1168 = vmul.f32 %v658, %v1068
  %v1169 = vmul.f32 %v663, %v1069
  %v1170 = vmul.f32 %v666, %v1070
  %v1171 = vmul.f32 %v671, %v1071
  %v1172 = vmul.f32 %v674, %v1072
  %v1173 = vmul.f32 %v679, %v1073
  %v1174 = vmul.f32 %v682, %v1074
  %v1175 = vmul.f32 %v687, %v1075
  %v1176 = vmul.f32 %v690, %v1076
  %v1177 = vmul.f32 %v695, %v1077
  %v1178 = vmul.f32 %v698, %v1078
  %v1179 = vmul.f32 %v703, %v1079
  %v1180 = vmul.f32 %v706, %v1080
  %v1181 = vmul.f32 %v711, %v1081
  %v1182 = vmul.f32 %v714, %v1082
  %v1183 = vmul.f32 %v719, %v1083
  %v1184 = vmul.f32 %v722, %v1084
  %v1185 = vmul.f32 %v727, %v1085
  %v1186 = vmul.f32 %v730, %v1086
  %v1187 = vmul.f32 %v735, %v1087
  %v1188 = vmul.f32 %v738, %v1088
  %v1189 = vmul.f32 %v743, %v1089
  %v1190 = vmul.f32 %v746, %v1090
  %v1191 = vmul.f32 %v751, %v1091
  %v1192 = vmul.f32 %v754, %v1092
  %v1193 = vmul.f32 %v759, %v1093
  %v1194 = vmul.f32 %v762, %v1094
  %v1195 = vmul.f32 %v767, %v1095
  %v1196 = vmul.f32 %v770, %v1096
  %v1197 = vmul.f32 %v775, %v1097
  %v1198 = vmul.f32 %v778, %v1098
  %v1199 = vmul.f32 %v783, %v1099
  %v1200 = vmul.f32 %v786, %v1100
  %v1201 = vmul.f32 %v791, %v1101
  %v1202 = vmul.f32 %v794, %v1102
  %v1203 = vmul.f32 %v799, %v1103
  %v1204 = vmul.f32 %v802, %v1104
  %v1205 = vmul.f32 %v1105, 0.16666667
  %v1206 = vmul.f32 %v1106, 0.16666667
  %v1207 = vmul.f32 %v1107, 0.16666667
  %v1208 = vmul.f32 %v1108, 0.16666667
  %v1209 = vmul.f32 %v1109, 0.16666667
  %v1210 = vmul.f32 %v1110, 0.16666667
  %v1211 = vmul.f32 %v1111, 0.16666667
  %v1212 = vmul.f32 %v1112, 0.16666667
  %v1213 = vmul.f32 %v1113, 0.16666667
  %v1214 = vmul.f32 %v1114, 0.16666667
  %v1215 = vmul.f32 %v1115, 0.16666667
  %v1216 = vmul.f32 %v1116, 0.16666667
  %v1217 = vmul.f32 %v1117, 0.16666667
  %v1218 = vmul.f32 %v1118, 0.16666667
  %v1219 = vmul.f32 %v1119, 0.16666667
  %v1220 = vmul.f32 %v1120, 0.16666667
  %v1221 = vmul.f32 %v1121, 0.16666667
  %v1222 = vmul.f32 %v1122, 0.16666667
  %v1223 = vmul.f32 %v1123, 0.16666667
  %v1224 = vmul.f32 %v1124, 0.16666667
  %v1225 = vmul.f32 %v1125, 0.16666667
  %v1226 = vmul.f32 %v1126, 0.16666667
  %v1227 = vmul.f32 %v1127, 0.16666667
  %v1228 = vmul.f32 %v1128, 0.16666667
  %v1229 = vmul.f32 %v1129, 0.16666667
  %v1230 = vmul.f32 %v1130, 0.16666667
  %v1231 = vmul.f32 %v1131, 0.16666667
  %v1232 = vmul.f32 %v1132, 0.16666667
  %v1233 = vmul.f32 %v1133, 0.16666667
  %v1234 = vmul.f32 %v1134, 0.16666667
  %v1235 = vmul.f32 %v1135, 0.16666667
  %v1236 = vmul.f32 %v1136, 0.16666667
  %v1237 = vmul.f32 %v1137, 0.16666667
  %v1238 = vmul.f32 %v1138, 0.16666667
  %v1239 = vmul.f32 %v1139, 0.16666667
  %v1240 = vmul.f32 %v1140, 0.16666667
  %v1241 = vmul.f32 %v1141, 0.16666667
  %v1242 = vmul.f32 %v1142, 0.16666667
  %v1243 = vmul.f32 %v1143, 0.16666667
  %v1244 = vmul.f32 %v1144, 0.16666667
  %v1245 = vmul.f32 %v1145, 0.16666667
  %v1246 = vmul.f32 %v1146, 0.16666667
  %v1247 = vmul.f32 %v1147, 0.16666667
  %v1248 = vmul.f32 %v1148, 0.16666667
  %v1249 = vmul.f32 %v1149, 0.16666667
  %v1250 = vmul.f32 %v1150, 0.16666667
  %v1251 = vmul.f32 %v1151, 0.16666667
  %v1252 = vmul.f32 %v1152, 0.16666667
  %v1253 = vmul.f32 %v1153, 0.16666667
  %v1254 = vmul.f32 %v1154, 0.16666667
  %v1255 = vmul.f32 %v1155, 0.16666667
  %v1256 = vmul.f32 %v1156, 0.16666667
  %v1257 = vmul.f32 %v1157, 0.16666667
  %v1258 = vmul.f32 %v1158, 0.16666667
  %v1259 = vmul.f32 %v1159, 0.16666667
  %v1260 = vmul.f32 %v1160, 0.16666667
  %v1261 = vmul.f32 %v1161, 0.16666667
  %v1262 = vmul.f32 %v1162, 0.16666667
  %v1263 = vmul.f32 %v1163, 0.16666667
  %v1264 = vmul.f32 %v1164, 0.16666667
  %v1265 = vmul.f32 %v1165, 0.16666667
  %v1266 = vmul.f32 %v1166, 0.16666667
  %v1267 = vmul.f32 %v1167, 0.16666667
  %v1268 = vmul.f32 %v1168, 0.16666667
  %v1269 = vmul.f32 %v1169, 0.16666667
  %v1270 = vmul.f32 %v1170, 0.16666667
  %v1271 = vmul.f32 %v1171, 0.16666667
  %v1272 = vmul.f32 %v1172, 0.16666667
  %v1273 = vmul.f32 %v1173, 0.16666667
  %v1274 = vmul.f32 %v1174, 0.16666667
  %v1275 = vmul.f32 %v1175, 0.16666667
  %v1276 = vmul.f32 %v1176, 0.16666667
  %v1277 = vmul.f32 %v1177, 0.16666667
  %v1278 = vmul.f32 %v1178, 0.16666667
  %v1279 = vmul.f32 %v1179, 0.16666667
  %v1280 = vmul.f32 %v1180, 0.16666667
  %v1281 = vmul.f32 %v1181, 0.16666667
  %v1282 = vmul.f32 %v1182, 0.16666667
  %v1283 = vmul.f32 %v1183, 0.16666667
  %v1284 = vmul.f32 %v1184, 0.16666667
  %v1285 = vmul.f32 %v1185, 0.16666667
  %v1286 = vmul.f32 %v1186, 0.16666667
  %v1287 = vmul.f32 %v1187, 0.16666667
  %v1288 = vmul.f32 %v1188, 0.16666667
  %v1289 = vmul.f32 %v1189, 0.16666667
  %v1290 = vmul.f32 %v1190, 0.16666667
  %v1291 = vmul.f32 %v1191, 0.16666667
  %v1292 = vmul.f32 %v1192, 0.16666667
  %v1293 = vmul.f32 %v1193, 0.16666667
  %v1294 = vmul.f32 %v1194, 0.16666667
  %v1295 = vmul.f32 %v1195, 0.16666667
  %v1296 = vmul.f32 %v1196, 0.16666667
  %v1297 = vmul.f32 %v1197, 0.16666667
  %v1298 = vmul.f32 %v1198, 0.16666667
  %v1299 = vmul.f32 %v1199, 0.16666667
  %v1300 = vmul.f32 %v1200, 0.16666667
  %v1301 = vmul.f32 %v1201, 0.16666667
  %v1302 = vmul.f32 %v1202, 0.16666667
  %v1303 = vmul.f32 %v1203, 0.16666667
  %v1304 = vmul.f32 %v1204, 0.16666667
  %v1305 = vld [vmem:[%s1] sm:$0xff]
  %v1306 = vld [vmem:[%s1 + $0x8] sm:$0xff]
  %v1307 = vld [vmem:[%s1 + $0x10] sm:$0xff]
  %v1308 = vld [vmem:[%s1 + $0x18] sm:$0xff]
  %v1309 = vld [vmem:[%s1 + $0x20] sm:$0xff]
  %v1310 = vld [vmem:[%s1 + $0x28] sm:$0xff]
  %v1311 = vld [vmem:[%s1 + $0x30] sm:$0xff]
  %v1312 = vld [vmem:[%s1 + $0x38] sm:$0xff]
  %v1313 = vld [vmem:[%s1 + $0x40] sm:$0xff]
  %v1314 = vld [vmem:[%s1 + $0x48] sm:$0xff]
  %v1315 = vld [vmem:[%s1 + $0x50] sm:$0xff]
  %v1316 = vld [vmem:[%s1 + $0x58] sm:$0xff]
  %v1317 = vld [vmem:[%s1 + $0x60] sm:$0xff]
  %v1318 = vld [vmem:[%s1 + $0x68] sm:$0xff]
  %v1319 = vld [vmem:[%s1 + $0x70] sm:$0xff]
  %v1320 = vld [vmem:[%s1 + $0x78] sm:$0xff]
  %v1321 = vld [vmem:[%s1 + $0x80] sm:$0xff]
  %v1322 = vld [vmem:[%s1 + $0x88] sm:$0xff]
  %v1323 = vld [vmem:[%s1 + $0x90] sm:$0xff]
  %v1324 = vld [vmem:[%s1 + $0x98] sm:$0xff]
  %v1325 = vld [vmem:[%s1 + $0xa0] sm:$0xff]
  %v1326 = vld [vmem:[%s1 + $0xa8] sm:$0xff]
  %v1327 = vld [vmem:[%s1 + $0xb0] sm:$0xff]
  %v1328 = vld [vmem:[%s1 + $0xb8] sm:$0xff]
  %v1329 = vld [vmem:[%s1 + $0xc0] sm:$0xff]
  %v1330 = vld [vmem:[%s1 + $0xc8] sm:$0xff]
  %v1331 = vld [vmem:[%s1 + $0xd0] sm:$0xff]
  %v1332 = vld [vmem:[%s1 + $0xd8] sm:$0xff]
  %v1333 = vld [vmem:[%s1 + $0xe0] sm:$0xff]
  %v1334 = vld [vmem:[%s1 + $0xe8] sm:$0xff]
  %v1335 = vld [vmem:[%s1 + $0xf0] sm:$0xff]
  %v1336 = vld [vmem:[%s1 + $0xf8] sm:$0xff]
  %v1337 = vld [vmem:[%s1 + $0x100] sm:$0xff]
  %v1338 = vld [vmem:[%s1 + $0x108] sm:$0xff]
  %v1339 = vld [vmem:[%s1 + $0x110] sm:$0xff]
  %v1340 = vld [vmem:[%s1 + $0x118] sm:$0xff]
  %v1341 = vld [vmem:[%s1 + $0x120] sm:$0xff]
  %v1342 = vld [vmem:[%s1 + $0x128] sm:$0xff]
  %v1343 = vld [vmem:[%s1 + $0x130] sm:$0xff]
  %v1344 = vld [vmem:[%s1 + $0x138] sm:$0xff]
  %v1345 = vld [vmem:[%s1 + $0x140] sm:$0xff]
  %v1346 = vld [vmem:[%s1 + $0x148] sm:$0xff]
  %v1347 = vld [vmem:[%s1 + $0x150] sm:$0xff]
  %v1348 = vld [vmem:[%s1 + $0x158] sm:$0xff]
  %v1349 = vld [vmem:[%s1 + $0x160] sm:$0xff]
  %v1350 = vld [vmem:[%s1 + $0x168] sm:$0xff]
  %v1351 = vld [vmem:[%s1 + $0x170] sm:$0xff]
  %v1352 = vld [vmem:[%s1 + $0x178] sm:$0xff]
  %v1353 = vld [vmem:[%s1 + $0x180] sm:$0xff]
  %v1354 = vld [vmem:[%s1 + $0x188] sm:$0xff]
  %v1355 = vld [vmem:[%s1 + $0x190] sm:$0xff]
  %v1356 = vld [vmem:[%s1 + $0x198] sm:$0xff]
  %v1357 = vld [vmem:[%s1 + $0x1a0] sm:$0xff]
  %v1358 = vld [vmem:[%s1 + $0x1a8] sm:$0xff]
  %v1359 = vld [vmem:[%s1 + $0x1b0] sm:$0xff]
  %v1360 = vld [vmem:[%s1 + $0x1b8] sm:$0xff]
  %v1361 = vld [vmem:[%s1 + $0x1c0] sm:$0xff]
  %v1362 = vld [vmem:[%s1 + $0x1c8] sm:$0xff]
  %v1363 = vld [vmem:[%s1 + $0x1d0] sm:$0xff]
  %v1364 = vld [vmem:[%s1 + $0x1d8] sm:$0xff]
  %v1365 = vld [vmem:[%s1 + $0x1e0] sm:$0xff]
  %v1366 = vld [vmem:[%s1 + $0x1e8] sm:$0xff]
  %v1367 = vld [vmem:[%s1 + $0x1f0] sm:$0xff]
  %v1368 = vld [vmem:[%s1 + $0x1f8] sm:$0xff]
  %v1369 = vld [vmem:[%s1 + $0x200] sm:$0xff]
  %v1370 = vld [vmem:[%s1 + $0x208] sm:$0xff]
  %v1371 = vld [vmem:[%s1 + $0x210] sm:$0xff]
  %v1372 = vld [vmem:[%s1 + $0x218] sm:$0xff]
  %v1373 = vld [vmem:[%s1 + $0x220] sm:$0xff]
  %v1374 = vld [vmem:[%s1 + $0x228] sm:$0xff]
  %v1375 = vld [vmem:[%s1 + $0x230] sm:$0xff]
  %v1376 = vld [vmem:[%s1 + $0x238] sm:$0xff]
  %v1377 = vld [vmem:[%s1 + $0x240] sm:$0xff]
  %v1378 = vld [vmem:[%s1 + $0x248] sm:$0xff]
  %v1379 = vld [vmem:[%s1 + $0x250] sm:$0xff]
  %v1380 = vld [vmem:[%s1 + $0x258] sm:$0xff]
  %v1381 = vld [vmem:[%s1 + $0x260] sm:$0xff]
  %v1382 = vld [vmem:[%s1 + $0x268] sm:$0xff]
  %v1383 = vld [vmem:[%s1 + $0x270] sm:$0xff]
  %v1384 = vld [vmem:[%s1 + $0x278] sm:$0xff]
  %v1385 = vld [vmem:[%s1 + $0x280] sm:$0xff]
  %v1386 = vld [vmem:[%s1 + $0x288] sm:$0xff]
  %v1387 = vld [vmem:[%s1 + $0x290] sm:$0xff]
  %v1388 = vld [vmem:[%s1 + $0x298] sm:$0xff]
  %v1389 = vld [vmem:[%s1 + $0x2a0] sm:$0xff]
  %v1390 = vld [vmem:[%s1 + $0x2a8] sm:$0xff]
  %v1391 = vld [vmem:[%s1 + $0x2b0] sm:$0xff]
  %v1392 = vld [vmem:[%s1 + $0x2b8] sm:$0xff]
  %v1393 = vld [vmem:[%s1 + $0x2c0] sm:$0xff]
  %v1394 = vld [vmem:[%s1 + $0x2c8] sm:$0xff]
  %v1395 = vld [vmem:[%s1 + $0x2d0] sm:$0xff]
  %v1396 = vld [vmem:[%s1 + $0x2d8] sm:$0xff]
  %v1397 = vld [vmem:[%s1 + $0x2e0] sm:$0xff]
  %v1398 = vld [vmem:[%s1 + $0x2e8] sm:$0xff]
  %v1399 = vld [vmem:[%s1 + $0x2f0] sm:$0xff]
  %v1400 = vld [vmem:[%s1 + $0x2f8] sm:$0xff]
  %v1401 = vld [vmem:[%s1 + $0x300] sm:$0xff]
  %v1402 = vld [vmem:[%s1 + $0x308] sm:$0xff]
  %v1403 = vld [vmem:[%s1 + $0x310] sm:$0xff]
  %v1404 = vld [vmem:[%s1 + $0x318] sm:$0xff]
  %1406 = vset.pattern.permute.xlu0 0
  %1407 = vperm.xlu0 %1406, %v1305
  %v1408 = vpop.permute.xlu0 %1407
  %1411 = vset.pattern.permute.xlu0 0
  %1412 = vperm.xlu0 %1411, %v1306
  %v1413 = vpop.permute.xlu0 %1412
  %1416 = vset.pattern.permute.xlu0 0
  %1417 = vperm.xlu0 %1416, %v1307
  %v1418 = vpop.permute.xlu0 %1417
  %1421 = vset.pattern.permute.xlu0 0
  %1422 = vperm.xlu0 %1421, %v1308
  %v1423 = vpop.permute.xlu0 %1422
  %1426 = vset.pattern.permute.xlu0 0
  %1427 = vperm.xlu0 %1426, %v1309
  %v1428 = vpop.permute.xlu0 %1427
  %1431 = vset.pattern.permute.xlu0 0
  %1432 = vperm.xlu0 %1431, %v1310
  %v1433 = vpop.permute.xlu0 %1432
  %1436 = vset.pattern.permute.xlu0 0
  %1437 = vperm.xlu0 %1436, %v1311
  %v1438 = vpop.permute.xlu0 %1437
  %1441 = vset.pattern.permute.xlu0 0
  %1442 = vperm.xlu0 %1441, %v1312
  %v1443 = vpop.permute.xlu0 %1442
  %1446 = vset.pattern.permute.xlu0 0
  %1447 = vperm.xlu0 %1446, %v1313
  %v1448 = vpop.permute.xlu0 %1447
  %1451 = vset.pattern.permute.xlu0 0
  %1452 = vperm.xlu0 %1451, %v1314
  %v1453 = vpop.permute.xlu0 %1452
  %1456 = vset.pattern.permute.xlu0 0
  %1457 = vperm.xlu0 %1456, %v1315
  %v1458 = vpop.permute.xlu0 %1457
  %1461 = vset.pattern.permute.xlu0 0
  %1462 = vperm.xlu0 %1461, %v1316
  %v1463 = vpop.permute.xlu0 %1462
  %1466 = vset.pattern.permute.xlu0 0
  %1467 = vperm.xlu0 %1466, %v1317
  %v1468 = vpop.permute.xlu0 %1467
  %1471 = vset.pattern.permute.xlu0 0
  %1472 = vperm.xlu0 %1471, %v1318
  %v1473 = vpop.permute.xlu0 %1472
  %1476 = vset.pattern.permute.xlu0 0
  %1477 = vperm.xlu0 %1476, %v1319
  %v1478 = vpop.permute.xlu0 %1477
  %1481 = vset.pattern.permute.xlu0 0
  %1482 = vperm.xlu0 %1481, %v1320
  %v1483 = vpop.permute.xlu0 %1482
  %1486 = vset.pattern.permute.xlu0 0
  %1487 = vperm.xlu0 %1486, %v1321
  %v1488 = vpop.permute.xlu0 %1487
  %1491 = vset.pattern.permute.xlu0 0
  %1492 = vperm.xlu0 %1491, %v1322
  %v1493 = vpop.permute.xlu0 %1492
  %1496 = vset.pattern.permute.xlu0 0
  %1497 = vperm.xlu0 %1496, %v1323
  %v1498 = vpop.permute.xlu0 %1497
  %1501 = vset.pattern.permute.xlu0 0
  %1502 = vperm.xlu0 %1501, %v1324
  %v1503 = vpop.permute.xlu0 %1502
  %1506 = vset.pattern.permute.xlu0 0
  %1507 = vperm.xlu0 %1506, %v1325
  %v1508 = vpop.permute.xlu0 %1507
  %1511 = vset.pattern.permute.xlu0 0
  %1512 = vperm.xlu0 %1511, %v1326
  %v1513 = vpop.permute.xlu0 %1512
  %1516 = vset.pattern.permute.xlu0 0
  %1517 = vperm.xlu0 %1516, %v1327
  %v1518 = vpop.permute.xlu0 %1517
  %1521 = vset.pattern.permute.xlu0 0
  %1522 = vperm.xlu0 %1521, %v1328
  %v1523 = vpop.permute.xlu0 %1522
  %1526 = vset.pattern.permute.xlu0 0
  %1527 = vperm.xlu0 %1526, %v1329
  %v1528 = vpop.permute.xlu0 %1527
  %1531 = vset.pattern.permute.xlu0 0
  %1532 = vperm.xlu0 %1531, %v1330
  %v1533 = vpop.permute.xlu0 %1532
  %1536 = vset.pattern.permute.xlu0 0
  %1537 = vperm.xlu0 %1536, %v1331
  %v1538 = vpop.permute.xlu0 %1537
  %1541 = vset.pattern.permute.xlu0 0
  %1542 = vperm.xlu0 %1541, %v1332
  %v1543 = vpop.permute.xlu0 %1542
  %1546 = vset.pattern.permute.xlu0 0
  %1547 = vperm.xlu0 %1546, %v1333
  %v1548 = vpop.permute.xlu0 %1547
  %1551 = vset.pattern.permute.xlu0 0
  %1552 = vperm.xlu0 %1551, %v1334
  %v1553 = vpop.permute.xlu0 %1552
  %1556 = vset.pattern.permute.xlu0 0
  %1557 = vperm.xlu0 %1556, %v1335
  %v1558 = vpop.permute.xlu0 %1557
  %1561 = vset.pattern.permute.xlu0 0
  %1562 = vperm.xlu0 %1561, %v1336
  %v1563 = vpop.permute.xlu0 %1562
  %1566 = vset.pattern.permute.xlu0 0
  %1567 = vperm.xlu0 %1566, %v1337
  %v1568 = vpop.permute.xlu0 %1567
  %1571 = vset.pattern.permute.xlu0 0
  %1572 = vperm.xlu0 %1571, %v1338
  %v1573 = vpop.permute.xlu0 %1572
  %1576 = vset.pattern.permute.xlu0 0
  %1577 = vperm.xlu0 %1576, %v1339
  %v1578 = vpop.permute.xlu0 %1577
  %1581 = vset.pattern.permute.xlu0 0
  %1582 = vperm.xlu0 %1581, %v1340
  %v1583 = vpop.permute.xlu0 %1582
  %1586 = vset.pattern.permute.xlu0 0
  %1587 = vperm.xlu0 %1586, %v1341
  %v1588 = vpop.permute.xlu0 %1587
  %1591 = vset.pattern.permute.xlu0 0
  %1592 = vperm.xlu0 %1591, %v1342
  %v1593 = vpop.permute.xlu0 %1592
  %1596 = vset.pattern.permute.xlu0 0
  %1597 = vperm.xlu0 %1596, %v1343
  %v1598 = vpop.permute.xlu0 %1597
  %1601 = vset.pattern.permute.xlu0 0
  %1602 = vperm.xlu0 %1601, %v1344
  %v1603 = vpop.permute.xlu0 %1602
  %1606 = vset.pattern.permute.xlu0 0
  %1607 = vperm.xlu0 %1606, %v1345
  %v1608 = vpop.permute.xlu0 %1607
  %1611 = vset.pattern.permute.xlu0 0
  %1612 = vperm.xlu0 %1611, %v1346
  %v1613 = vpop.permute.xlu0 %1612
  %1616 = vset.pattern.permute.xlu0 0
  %1617 = vperm.xlu0 %1616, %v1347
  %v1618 = vpop.permute.xlu0 %1617
  %1621 = vset.pattern.permute.xlu0 0
  %1622 = vperm.xlu0 %1621, %v1348
  %v1623 = vpop.permute.xlu0 %1622
  %1626 = vset.pattern.permute.xlu0 0
  %1627 = vperm.xlu0 %1626, %v1349
  %v1628 = vpop.permute.xlu0 %1627
  %1631 = vset.pattern.permute.xlu0 0
  %1632 = vperm.xlu0 %1631, %v1350
  %v1633 = vpop.permute.xlu0 %1632
  %1636 = vset.pattern.permute.xlu0 0
  %1637 = vperm.xlu0 %1636, %v1351
  %v1638 = vpop.permute.xlu0 %1637
  %1641 = vset.pattern.permute.xlu0 0
  %1642 = vperm.xlu0 %1641, %v1352
  %v1643 = vpop.permute.xlu0 %1642
  %1646 = vset.pattern.permute.xlu0 0
  %1647 = vperm.xlu0 %1646, %v1353
  %v1648 = vpop.permute.xlu0 %1647
  %1651 = vset.pattern.permute.xlu0 0
  %1652 = vperm.xlu0 %1651, %v1354
  %v1653 = vpop.permute.xlu0 %1652
  %1656 = vset.pattern.permute.xlu0 0
  %1657 = vperm.xlu0 %1656, %v1355
  %v1658 = vpop.permute.xlu0 %1657
  %1661 = vset.pattern.permute.xlu0 0
  %1662 = vperm.xlu0 %1661, %v1356
  %v1663 = vpop.permute.xlu0 %1662
  %1666 = vset.pattern.permute.xlu0 0
  %1667 = vperm.xlu0 %1666, %v1357
  %v1668 = vpop.permute.xlu0 %1667
  %1671 = vset.pattern.permute.xlu0 0
  %1672 = vperm.xlu0 %1671, %v1358
  %v1673 = vpop.permute.xlu0 %1672
  %1676 = vset.pattern.permute.xlu0 0
  %1677 = vperm.xlu0 %1676, %v1359
  %v1678 = vpop.permute.xlu0 %1677
  %1681 = vset.pattern.permute.xlu0 0
  %1682 = vperm.xlu0 %1681, %v1360
  %v1683 = vpop.permute.xlu0 %1682
  %1686 = vset.pattern.permute.xlu0 0
  %1687 = vperm.xlu0 %1686, %v1361
  %v1688 = vpop.permute.xlu0 %1687
  %1691 = vset.pattern.permute.xlu0 0
  %1692 = vperm.xlu0 %1691, %v1362
  %v1693 = vpop.permute.xlu0 %1692
  %1696 = vset.pattern.permute.xlu0 0
  %1697 = vperm.xlu0 %1696, %v1363
  %v1698 = vpop.permute.xlu0 %1697
  %1701 = vset.pattern.permute.xlu0 0
  %1702 = vperm.xlu0 %1701, %v1364
  %v1703 = vpop.permute.xlu0 %1702
  %1706 = vset.pattern.permute.xlu0 0
  %1707 = vperm.xlu0 %1706, %v1365
  %v1708 = vpop.permute.xlu0 %1707
  %1711 = vset.pattern.permute.xlu0 0
  %1712 = vperm.xlu0 %1711, %v1366
  %v1713 = vpop.permute.xlu0 %1712
  %1716 = vset.pattern.permute.xlu0 0
  %1717 = vperm.xlu0 %1716, %v1367
  %v1718 = vpop.permute.xlu0 %1717
  %1721 = vset.pattern.permute.xlu0 0
  %1722 = vperm.xlu0 %1721, %v1368
  %v1723 = vpop.permute.xlu0 %1722
  %1726 = vset.pattern.permute.xlu0 0
  %1727 = vperm.xlu0 %1726, %v1369
  %v1728 = vpop.permute.xlu0 %1727
  %1731 = vset.pattern.permute.xlu0 0
  %1732 = vperm.xlu0 %1731, %v1370
  %v1733 = vpop.permute.xlu0 %1732
  %1736 = vset.pattern.permute.xlu0 0
  %1737 = vperm.xlu0 %1736, %v1371
  %v1738 = vpop.permute.xlu0 %1737
  %1741 = vset.pattern.permute.xlu0 0
  %1742 = vperm.xlu0 %1741, %v1372
  %v1743 = vpop.permute.xlu0 %1742
  %1746 = vset.pattern.permute.xlu0 0
  %1747 = vperm.xlu0 %1746, %v1373
  %v1748 = vpop.permute.xlu0 %1747
  %1751 = vset.pattern.permute.xlu0 0
  %1752 = vperm.xlu0 %1751, %v1374
  %v1753 = vpop.permute.xlu0 %1752
  %1756 = vset.pattern.permute.xlu0 0
  %1757 = vperm.xlu0 %1756, %v1375
  %v1758 = vpop.permute.xlu0 %1757
  %1761 = vset.pattern.permute.xlu0 0
  %1762 = vperm.xlu0 %1761, %v1376
  %v1763 = vpop.permute.xlu0 %1762
  %1766 = vset.pattern.permute.xlu0 0
  %1767 = vperm.xlu0 %1766, %v1377
  %v1768 = vpop.permute.xlu0 %1767
  %1771 = vset.pattern.permute.xlu0 0
  %1772 = vperm.xlu0 %1771, %v1378
  %v1773 = vpop.permute.xlu0 %1772
  %1776 = vset.pattern.permute.xlu0 0
  %1777 = vperm.xlu0 %1776, %v1379
  %v1778 = vpop.permute.xlu0 %1777
  %1781 = vset.pattern.permute.xlu0 0
  %1782 = vperm.xlu0 %1781, %v1380
  %v1783 = vpop.permute.xlu0 %1782
  %1786 = vset.pattern.permute.xlu0 0
  %1787 = vperm.xlu0 %1786, %v1381
  %v1788 = vpop.permute.xlu0 %1787
  %1791 = vset.pattern.permute.xlu0 0
  %1792 = vperm.xlu0 %1791, %v1382
  %v1793 = vpop.permute.xlu0 %1792
  %1796 = vset.pattern.permute.xlu0 0
  %1797 = vperm.xlu0 %1796, %v1383
  %v1798 = vpop.permute.xlu0 %1797
  %1801 = vset.pattern.permute.xlu0 0
  %1802 = vperm.xlu0 %1801, %v1384
  %v1803 = vpop.permute.xlu0 %1802
  %1806 = vset.pattern.permute.xlu0 0
  %1807 = vperm.xlu0 %1806, %v1385
  %v1808 = vpop.permute.xlu0 %1807
  %1811 = vset.pattern.permute.xlu0 0
  %1812 = vperm.xlu0 %1811, %v1386
  %v1813 = vpop.permute.xlu0 %1812
  %1816 = vset.pattern.permute.xlu0 0
  %1817 = vperm.xlu0 %1816, %v1387
  %v1818 = vpop.permute.xlu0 %1817
  %1821 = vset.pattern.permute.xlu0 0
  %1822 = vperm.xlu0 %1821, %v1388
  %v1823 = vpop.permute.xlu0 %1822
  %1826 = vset.pattern.permute.xlu0 0
  %1827 = vperm.xlu0 %1826, %v1389
  %v1828 = vpop.permute.xlu0 %1827
  %1831 = vset.pattern.permute.xlu0 0
  %1832 = vperm.xlu0 %1831, %v1390
  %v1833 = vpop.permute.xlu0 %1832
  %1836 = vset.pattern.permute.xlu0 0
  %1837 = vperm.xlu0 %1836, %v1391
  %v1838 = vpop.permute.xlu0 %1837
  %1841 = vset.pattern.permute.xlu0 0
  %1842 = vperm.xlu0 %1841, %v1392
  %v1843 = vpop.permute.xlu0 %1842
  %1846 = vset.pattern.permute.xlu0 0
  %1847 = vperm.xlu0 %1846, %v1393
  %v1848 = vpop.permute.xlu0 %1847
  %1851 = vset.pattern.permute.xlu0 0
  %1852 = vperm.xlu0 %1851, %v1394
  %v1853 = vpop.permute.xlu0 %1852
  %1856 = vset.pattern.permute.xlu0 0
  %1857 = vperm.xlu0 %1856, %v1395
  %v1858 = vpop.permute.xlu0 %1857
  %1861 = vset.pattern.permute.xlu0 0
  %1862 = vperm.xlu0 %1861, %v1396
  %v1863 = vpop.permute.xlu0 %1862
  %1866 = vset.pattern.permute.xlu0 0
  %1867 = vperm.xlu0 %1866, %v1397
  %v1868 = vpop.permute.xlu0 %1867
  %1871 = vset.pattern.permute.xlu0 0
  %1872 = vperm.xlu0 %1871, %v1398
  %v1873 = vpop.permute.xlu0 %1872
  %1876 = vset.pattern.permute.xlu0 0
  %1877 = vperm.xlu0 %1876, %v1399
  %v1878 = vpop.permute.xlu0 %1877
  %1881 = vset.pattern.permute.xlu0 0
  %1882 = vperm.xlu0 %1881, %v1400
  %v1883 = vpop.permute.xlu0 %1882
  %1886 = vset.pattern.permute.xlu0 0
  %1887 = vperm.xlu0 %1886, %v1401
  %v1888 = vpop.permute.xlu0 %1887
  %1891 = vset.pattern.permute.xlu0 0
  %1892 = vperm.xlu0 %1891, %v1402
  %v1893 = vpop.permute.xlu0 %1892
  %1896 = vset.pattern.permute.xlu0 0
  %1897 = vperm.xlu0 %1896, %v1403
  %v1898 = vpop.permute.xlu0 %1897
  %1901 = vset.pattern.permute.xlu0 0
  %1902 = vperm.xlu0 %1901, %v1404
  %v1903 = vpop.permute.xlu0 %1902
  %v1905 = vmul.f32 %v1205, %v1408
  %v1906 = vmul.f32 %v1206, %v1413
  %v1907 = vmul.f32 %v1207, %v1418
  %v1908 = vmul.f32 %v1208, %v1423
  %v1909 = vmul.f32 %v1209, %v1428
  %v1910 = vmul.f32 %v1210, %v1433
  %v1911 = vmul.f32 %v1211, %v1438
  %v1912 = vmul.f32 %v1212, %v1443
  %v1913 = vmul.f32 %v1213, %v1448
  %v1914 = vmul.f32 %v1214, %v1453
  %v1915 = vmul.f32 %v1215, %v1458
  %v1916 = vmul.f32 %v1216, %v1463
  %v1917 = vmul.f32 %v1217, %v1468
  %v1918 = vmul.f32 %v1218, %v1473
  %v1919 = vmul.f32 %v1219, %v1478
  %v1920 = vmul.f32 %v1220, %v1483
  %v1921 = vmul.f32 %v1221, %v1488
  %v1922 = vmul.f32 %v1222, %v1493
  %v1923 = vmul.f32 %v1223, %v1498
  %v1924 = vmul.f32 %v1224, %v1503
  %v1925 = vmul.f32 %v1225, %v1508
  %v1926 = vmul.f32 %v1226, %v1513
  %v1927 = vmul.f32 %v1227, %v1518
  %v1928 = vmul.f32 %v1228, %v1523
  %v1929 = vmul.f32 %v1229, %v1528
  %v1930 = vmul.f32 %v1230, %v1533
  %v1931 = vmul.f32 %v1231, %v1538
  %v1932 = vmul.f32 %v1232, %v1543
  %v1933 = vmul.f32 %v1233, %v1548
  %v1934 = vmul.f32 %v1234, %v1553
  %v1935 = vmul.f32 %v1235, %v1558
  %v1936 = vmul.f32 %v1236, %v1563
  %v1937 = vmul.f32 %v1237, %v1568
  %v1938 = vmul.f32 %v1238, %v1573
  %v1939 = vmul.f32 %v1239, %v1578
  %v1940 = vmul.f32 %v1240, %v1583
  %v1941 = vmul.f32 %v1241, %v1588
  %v1942 = vmul.f32 %v1242, %v1593
  %v1943 = vmul.f32 %v1243, %v1598
  %v1944 = vmul.f32 %v1244, %v1603
  %v1945 = vmul.f32 %v1245, %v1608
  %v1946 = vmul.f32 %v1246, %v1613
  %v1947 = vmul.f32 %v1247, %v1618
  %v1948 = vmul.f32 %v1248, %v1623
  %v1949 = vmul.f32 %v1249, %v1628
  %v1950 = vmul.f32 %v1250, %v1633
  %v1951 = vmul.f32 %v1251, %v1638
  %v1952 = vmul.f32 %v1252, %v1643
  %v1953 = vmul.f32 %v1253, %v1648
  %v1954 = vmul.f32 %v1254, %v1653
  %v1955 = vmul.f32 %v1255, %v1658
  %v1956 = vmul.f32 %v1256, %v1663
  %v1957 = vmul.f32 %v1257, %v1668
  %v1958 = vmul.f32 %v1258, %v1673
  %v1959 = vmul.f32 %v1259, %v1678
  %v1960 = vmul.f32 %v1260, %v1683
  %v1961 = vmul.f32 %v1261, %v1688
  %v1962 = vmul.f32 %v1262, %v1693
  %v1963 = vmul.f32 %v1263, %v1698
  %v1964 = vmul.f32 %v1264, %v1703
  %v1965 = vmul.f32 %v1265, %v1708
  %v1966 = vmul.f32 %v1266, %v1713
  %v1967 = vmul.f32 %v1267, %v1718
  %v1968 = vmul.f32 %v1268, %v1723
  %v1969 = vmul.f32 %v1269, %v1728
  %v1970 = vmul.f32 %v1270, %v1733
  %v1971 = vmul.f32 %v1271, %v1738
  %v1972 = vmul.f32 %v1272, %v1743
  %v1973 = vmul.f32 %v1273, %v1748
  %v1974 = vmul.f32 %v1274, %v1753
  %v1975 = vmul.f32 %v1275, %v1758
  %v1976 = vmul.f32 %v1276, %v1763
  %v1977 = vmul.f32 %v1277, %v1768
  %v1978 = vmul.f32 %v1278, %v1773
  %v1979 = vmul.f32 %v1279, %v1778
  %v1980 = vmul.f32 %v1280, %v1783
  %v1981 = vmul.f32 %v1281, %v1788
  %v1982 = vmul.f32 %v1282, %v1793
  %v1983 = vmul.f32 %v1283, %v1798
  %v1984 = vmul.f32 %v1284, %v1803
  %v1985 = vmul.f32 %v1285, %v1808
  %v1986 = vmul.f32 %v1286, %v1813
  %v1987 = vmul.f32 %v1287, %v1818
  %v1988 = vmul.f32 %v1288, %v1823
  %v1989 = vmul.f32 %v1289, %v1828
  %v1990 = vmul.f32 %v1290, %v1833
  %v1991 = vmul.f32 %v1291, %v1838
  %v1992 = vmul.f32 %v1292, %v1843
  %v1993 = vmul.f32 %v1293, %v1848
  %v1994 = vmul.f32 %v1294, %v1853
  %v1995 = vmul.f32 %v1295, %v1858
  %v1996 = vmul.f32 %v1296, %v1863
  %v1997 = vmul.f32 %v1297, %v1868
  %v1998 = vmul.f32 %v1298, %v1873
  %v1999 = vmul.f32 %v1299, %v1878
  %v2000 = vmul.f32 %v1300, %v1883
  %v2001 = vmul.f32 %v1301, %v1888
  %v2002 = vmul.f32 %v1302, %v1893
  %v2003 = vmul.f32 %v1303, %v1898
  %v2004 = vmul.f32 %v1304, %v1903
  %v2005 = vld [vmem:[%s4] sm:$0x1]
  %v2007 = vlaneseq
  %v2008 = vshrl.u32 %v2007, 7
  %v2009 = vsub.s32 0, %v2008
  %v2010 = vrot.slane %v2005, %v2009
  %v2012 = vmul.f32 %v1905, %v2010
  %v2013 = vmul.f32 %v1906, %v2010
  %v2014 = vmul.f32 %v1907, %v2010
  %v2015 = vmul.f32 %v1908, %v2010
  %s2016 = scalar_lea.vmem %s4, 1
  %v2017 = vld [vmem:[%s2016] sm:$0x1]
  %v2019 = vlaneseq
  %v2020 = vshrl.u32 %v2019, 7
  %v2021 = vsub.s32 0, %v2020
  %v2022 = vrot.slane %v2017, %v2021
  %v2024 = vmul.f32 %v1909, %v2022
  %v2025 = vmul.f32 %v1910, %v2022
  %v2026 = vmul.f32 %v1911, %v2022
  %v2027 = vmul.f32 %v1912, %v2022
  %v2028 = vadd.f32 %v2012, %v2024
  %v2029 = vadd.f32 %v2013, %v2025
  %v2030 = vadd.f32 %v2014, %v2026
  %v2031 = vadd.f32 %v2015, %v2027
  %s2032 = scalar_lea.vmem %s4, 2
  %v2033 = vld [vmem:[%s2032] sm:$0x1]
  %v2035 = vlaneseq
  %v2036 = vshrl.u32 %v2035, 7
  %v2037 = vsub.s32 0, %v2036
  %v2038 = vrot.slane %v2033, %v2037
  %v2040 = vmul.f32 %v1913, %v2038
  %v2041 = vmul.f32 %v1914, %v2038
  %v2042 = vmul.f32 %v1915, %v2038
  %v2043 = vmul.f32 %v1916, %v2038
  %v2044 = vadd.f32 %v2028, %v2040
  %v2045 = vadd.f32 %v2029, %v2041
  %v2046 = vadd.f32 %v2030, %v2042
  %v2047 = vadd.f32 %v2031, %v2043
  %s2048 = scalar_lea.vmem %s4, 3
  %v2049 = vld [vmem:[%s2048] sm:$0x1]
  %v2051 = vlaneseq
  %v2052 = vshrl.u32 %v2051, 7
  %v2053 = vsub.s32 0, %v2052
  %v2054 = vrot.slane %v2049, %v2053
  %v2056 = vmul.f32 %v1917, %v2054
  %v2057 = vmul.f32 %v1918, %v2054
  %v2058 = vmul.f32 %v1919, %v2054
  %v2059 = vmul.f32 %v1920, %v2054
  %v2060 = vadd.f32 %v2044, %v2056
  %v2061 = vadd.f32 %v2045, %v2057
  %v2062 = vadd.f32 %v2046, %v2058
  %v2063 = vadd.f32 %v2047, %v2059
  %s2064 = scalar_lea.vmem %s4, 4
  %v2065 = vld [vmem:[%s2064] sm:$0x1]
  %v2067 = vlaneseq
  %v2068 = vshrl.u32 %v2067, 7
  %v2069 = vsub.s32 0, %v2068
  %v2070 = vrot.slane %v2065, %v2069
  %v2072 = vmul.f32 %v1921, %v2070
  %v2073 = vmul.f32 %v1922, %v2070
  %v2074 = vmul.f32 %v1923, %v2070
  %v2075 = vmul.f32 %v1924, %v2070
  %v2076 = vadd.f32 %v2060, %v2072
  %v2077 = vadd.f32 %v2061, %v2073
  %v2078 = vadd.f32 %v2062, %v2074
  %v2079 = vadd.f32 %v2063, %v2075
  %s2080 = scalar_lea.vmem %s4, 5
  %v2081 = vld [vmem:[%s2080] sm:$0x1]
  %v2083 = vlaneseq
  %v2084 = vshrl.u32 %v2083, 7
  %v2085 = vsub.s32 0, %v2084
  %v2086 = vrot.slane %v2081, %v2085
  %v2088 = vmul.f32 %v1925, %v2086
  %v2089 = vmul.f32 %v1926, %v2086
  %v2090 = vmul.f32 %v1927, %v2086
  %v2091 = vmul.f32 %v1928, %v2086
  %v2092 = vadd.f32 %v2076, %v2088
  %v2093 = vadd.f32 %v2077, %v2089
  %v2094 = vadd.f32 %v2078, %v2090
  %v2095 = vadd.f32 %v2079, %v2091
  %s2096 = scalar_lea.vmem %s4, 6
  %v2097 = vld [vmem:[%s2096] sm:$0x1]
  %v2099 = vlaneseq
  %v2100 = vshrl.u32 %v2099, 7
  %v2101 = vsub.s32 0, %v2100
  %v2102 = vrot.slane %v2097, %v2101
  %v2104 = vmul.f32 %v1929, %v2102
  %v2105 = vmul.f32 %v1930, %v2102
  %v2106 = vmul.f32 %v1931, %v2102
  %v2107 = vmul.f32 %v1932, %v2102
  %v2108 = vadd.f32 %v2092, %v2104
  %v2109 = vadd.f32 %v2093, %v2105
  %v2110 = vadd.f32 %v2094, %v2106
  %v2111 = vadd.f32 %v2095, %v2107
  %s2112 = scalar_lea.vmem %s4, 7
  %v2113 = vld [vmem:[%s2112] sm:$0x1]
  %v2115 = vlaneseq
  %v2116 = vshrl.u32 %v2115, 7
  %v2117 = vsub.s32 0, %v2116
  %v2118 = vrot.slane %v2113, %v2117
  %v2120 = vmul.f32 %v1933, %v2118
  %v2121 = vmul.f32 %v1934, %v2118
  %v2122 = vmul.f32 %v1935, %v2118
  %v2123 = vmul.f32 %v1936, %v2118
  %v2124 = vadd.f32 %v2108, %v2120
  %v2125 = vadd.f32 %v2109, %v2121
  %v2126 = vadd.f32 %v2110, %v2122
  %v2127 = vadd.f32 %v2111, %v2123
  %s2128 = scalar_lea.vmem %s4, 8
  %v2129 = vld [vmem:[%s2128] sm:$0x1]
  %v2131 = vlaneseq
  %v2132 = vshrl.u32 %v2131, 7
  %v2133 = vsub.s32 0, %v2132
  %v2134 = vrot.slane %v2129, %v2133
  %v2136 = vmul.f32 %v1937, %v2134
  %v2137 = vmul.f32 %v1938, %v2134
  %v2138 = vmul.f32 %v1939, %v2134
  %v2139 = vmul.f32 %v1940, %v2134
  %v2140 = vadd.f32 %v2124, %v2136
  %v2141 = vadd.f32 %v2125, %v2137
  %v2142 = vadd.f32 %v2126, %v2138
  %v2143 = vadd.f32 %v2127, %v2139
  %s2144 = scalar_lea.vmem %s4, 9
  %v2145 = vld [vmem:[%s2144] sm:$0x1]
  %v2147 = vlaneseq
  %v2148 = vshrl.u32 %v2147, 7
  %v2149 = vsub.s32 0, %v2148
  %v2150 = vrot.slane %v2145, %v2149
  %v2152 = vmul.f32 %v1941, %v2150
  %v2153 = vmul.f32 %v1942, %v2150
  %v2154 = vmul.f32 %v1943, %v2150
  %v2155 = vmul.f32 %v1944, %v2150
  %v2156 = vadd.f32 %v2140, %v2152
  %v2157 = vadd.f32 %v2141, %v2153
  %v2158 = vadd.f32 %v2142, %v2154
  %v2159 = vadd.f32 %v2143, %v2155
  %s2160 = scalar_lea.vmem %s4, 10
  %v2161 = vld [vmem:[%s2160] sm:$0x1]
  %v2163 = vlaneseq
  %v2164 = vshrl.u32 %v2163, 7
  %v2165 = vsub.s32 0, %v2164
  %v2166 = vrot.slane %v2161, %v2165
  %v2168 = vmul.f32 %v1945, %v2166
  %v2169 = vmul.f32 %v1946, %v2166
  %v2170 = vmul.f32 %v1947, %v2166
  %v2171 = vmul.f32 %v1948, %v2166
  %v2172 = vadd.f32 %v2156, %v2168
  %v2173 = vadd.f32 %v2157, %v2169
  %v2174 = vadd.f32 %v2158, %v2170
  %v2175 = vadd.f32 %v2159, %v2171
  %s2176 = scalar_lea.vmem %s4, 11
  %v2177 = vld [vmem:[%s2176] sm:$0x1]
  %v2179 = vlaneseq
  %v2180 = vshrl.u32 %v2179, 7
  %v2181 = vsub.s32 0, %v2180
  %v2182 = vrot.slane %v2177, %v2181
  %v2184 = vmul.f32 %v1949, %v2182
  %v2185 = vmul.f32 %v1950, %v2182
  %v2186 = vmul.f32 %v1951, %v2182
  %v2187 = vmul.f32 %v1952, %v2182
  %v2188 = vadd.f32 %v2172, %v2184
  %v2189 = vadd.f32 %v2173, %v2185
  %v2190 = vadd.f32 %v2174, %v2186
  %v2191 = vadd.f32 %v2175, %v2187
  %s2192 = scalar_lea.vmem %s4, 12
  %v2193 = vld [vmem:[%s2192] sm:$0x1]
  %v2195 = vlaneseq
  %v2196 = vshrl.u32 %v2195, 7
  %v2197 = vsub.s32 0, %v2196
  %v2198 = vrot.slane %v2193, %v2197
  %v2200 = vmul.f32 %v1953, %v2198
  %v2201 = vmul.f32 %v1954, %v2198
  %v2202 = vmul.f32 %v1955, %v2198
  %v2203 = vmul.f32 %v1956, %v2198
  %v2204 = vadd.f32 %v2188, %v2200
  %v2205 = vadd.f32 %v2189, %v2201
  %v2206 = vadd.f32 %v2190, %v2202
  %v2207 = vadd.f32 %v2191, %v2203
  %s2208 = scalar_lea.vmem %s4, 13
  %v2209 = vld [vmem:[%s2208] sm:$0x1]
  %v2211 = vlaneseq
  %v2212 = vshrl.u32 %v2211, 7
  %v2213 = vsub.s32 0, %v2212
  %v2214 = vrot.slane %v2209, %v2213
  %v2216 = vmul.f32 %v1957, %v2214
  %v2217 = vmul.f32 %v1958, %v2214
  %v2218 = vmul.f32 %v1959, %v2214
  %v2219 = vmul.f32 %v1960, %v2214
  %v2220 = vadd.f32 %v2204, %v2216
  %v2221 = vadd.f32 %v2205, %v2217
  %v2222 = vadd.f32 %v2206, %v2218
  %v2223 = vadd.f32 %v2207, %v2219
  %s2224 = scalar_lea.vmem %s4, 14
  %v2225 = vld [vmem:[%s2224] sm:$0x1]
  %v2227 = vlaneseq
  %v2228 = vshrl.u32 %v2227, 7
  %v2229 = vsub.s32 0, %v2228
  %v2230 = vrot.slane %v2225, %v2229
  %v2232 = vmul.f32 %v1961, %v2230
  %v2233 = vmul.f32 %v1962, %v2230
  %v2234 = vmul.f32 %v1963, %v2230
  %v2235 = vmul.f32 %v1964, %v2230
  %v2236 = vadd.f32 %v2220, %v2232
  %v2237 = vadd.f32 %v2221, %v2233
  %v2238 = vadd.f32 %v2222, %v2234
  %v2239 = vadd.f32 %v2223, %v2235
  %s2240 = scalar_lea.vmem %s4, 15
  %v2241 = vld [vmem:[%s2240] sm:$0x1]
  %v2243 = vlaneseq
  %v2244 = vshrl.u32 %v2243, 7
  %v2245 = vsub.s32 0, %v2244
  %v2246 = vrot.slane %v2241, %v2245
  %v2248 = vmul.f32 %v1965, %v2246
  %v2249 = vmul.f32 %v1966, %v2246
  %v2250 = vmul.f32 %v1967, %v2246
  %v2251 = vmul.f32 %v1968, %v2246
  %v2252 = vadd.f32 %v2236, %v2248
  %v2253 = vadd.f32 %v2237, %v2249
  %v2254 = vadd.f32 %v2238, %v2250
  %v2255 = vadd.f32 %v2239, %v2251
  %s2256 = scalar_lea.vmem %s4, 16
  %v2257 = vld [vmem:[%s2256] sm:$0x1]
  %v2259 = vlaneseq
  %v2260 = vshrl.u32 %v2259, 7
  %v2261 = vsub.s32 0, %v2260
  %v2262 = vrot.slane %v2257, %v2261
  %v2264 = vmul.f32 %v1969, %v2262
  %v2265 = vmul.f32 %v1970, %v2262
  %v2266 = vmul.f32 %v1971, %v2262
  %v2267 = vmul.f32 %v1972, %v2262
  %v2268 = vadd.f32 %v2252, %v2264
  %v2269 = vadd.f32 %v2253, %v2265
  %v2270 = vadd.f32 %v2254, %v2266
  %v2271 = vadd.f32 %v2255, %v2267
  %s2272 = scalar_lea.vmem %s4, 17
  %v2273 = vld [vmem:[%s2272] sm:$0x1]
  %v2275 = vlaneseq
  %v2276 = vshrl.u32 %v2275, 7
  %v2277 = vsub.s32 0, %v2276
  %v2278 = vrot.slane %v2273, %v2277
  %v2280 = vmul.f32 %v1973, %v2278
  %v2281 = vmul.f32 %v1974, %v2278
  %v2282 = vmul.f32 %v1975, %v2278
  %v2283 = vmul.f32 %v1976, %v2278
  %v2284 = vadd.f32 %v2268, %v2280
  %v2285 = vadd.f32 %v2269, %v2281
  %v2286 = vadd.f32 %v2270, %v2282
  %v2287 = vadd.f32 %v2271, %v2283
  %s2288 = scalar_lea.vmem %s4, 18
  %v2289 = vld [vmem:[%s2288] sm:$0x1]
  %v2291 = vlaneseq
  %v2292 = vshrl.u32 %v2291, 7
  %v2293 = vsub.s32 0, %v2292
  %v2294 = vrot.slane %v2289, %v2293
  %v2296 = vmul.f32 %v1977, %v2294
  %v2297 = vmul.f32 %v1978, %v2294
  %v2298 = vmul.f32 %v1979, %v2294
  %v2299 = vmul.f32 %v1980, %v2294
  %v2300 = vadd.f32 %v2284, %v2296
  %v2301 = vadd.f32 %v2285, %v2297
  %v2302 = vadd.f32 %v2286, %v2298
  %v2303 = vadd.f32 %v2287, %v2299
  %s2304 = scalar_lea.vmem %s4, 19
  %v2305 = vld [vmem:[%s2304] sm:$0x1]
  %v2307 = vlaneseq
  %v2308 = vshrl.u32 %v2307, 7
  %v2309 = vsub.s32 0, %v2308
  %v2310 = vrot.slane %v2305, %v2309
  %v2312 = vmul.f32 %v1981, %v2310
  %v2313 = vmul.f32 %v1982, %v2310
  %v2314 = vmul.f32 %v1983, %v2310
  %v2315 = vmul.f32 %v1984, %v2310
  %v2316 = vadd.f32 %v2300, %v2312
  %v2317 = vadd.f32 %v2301, %v2313
  %v2318 = vadd.f32 %v2302, %v2314
  %v2319 = vadd.f32 %v2303, %v2315
  %s2320 = scalar_lea.vmem %s4, 20
  %v2321 = vld [vmem:[%s2320] sm:$0x1]
  %v2323 = vlaneseq
  %v2324 = vshrl.u32 %v2323, 7
  %v2325 = vsub.s32 0, %v2324
  %v2326 = vrot.slane %v2321, %v2325
  %v2328 = vmul.f32 %v1985, %v2326
  %v2329 = vmul.f32 %v1986, %v2326
  %v2330 = vmul.f32 %v1987, %v2326
  %v2331 = vmul.f32 %v1988, %v2326
  %v2332 = vadd.f32 %v2316, %v2328
  %v2333 = vadd.f32 %v2317, %v2329
  %v2334 = vadd.f32 %v2318, %v2330
  %v2335 = vadd.f32 %v2319, %v2331
  %s2336 = scalar_lea.vmem %s4, 21
  %v2337 = vld [vmem:[%s2336] sm:$0x1]
  %v2339 = vlaneseq
  %v2340 = vshrl.u32 %v2339, 7
  %v2341 = vsub.s32 0, %v2340
  %v2342 = vrot.slane %v2337, %v2341
  %v2344 = vmul.f32 %v1989, %v2342
  %v2345 = vmul.f32 %v1990, %v2342
  %v2346 = vmul.f32 %v1991, %v2342
  %v2347 = vmul.f32 %v1992, %v2342
  %v2348 = vadd.f32 %v2332, %v2344
  %v2349 = vadd.f32 %v2333, %v2345
  %v2350 = vadd.f32 %v2334, %v2346
  %v2351 = vadd.f32 %v2335, %v2347
  %s2352 = scalar_lea.vmem %s4, 22
  %v2353 = vld [vmem:[%s2352] sm:$0x1]
  %v2355 = vlaneseq
  %v2356 = vshrl.u32 %v2355, 7
  %v2357 = vsub.s32 0, %v2356
  %v2358 = vrot.slane %v2353, %v2357
  %v2360 = vmul.f32 %v1993, %v2358
  %v2361 = vmul.f32 %v1994, %v2358
  %v2362 = vmul.f32 %v1995, %v2358
  %v2363 = vmul.f32 %v1996, %v2358
  %v2364 = vadd.f32 %v2348, %v2360
  %v2365 = vadd.f32 %v2349, %v2361
  %v2366 = vadd.f32 %v2350, %v2362
  %v2367 = vadd.f32 %v2351, %v2363
  %s2368 = scalar_lea.vmem %s4, 23
  %v2369 = vld [vmem:[%s2368] sm:$0x1]
  %v2371 = vlaneseq
  %v2372 = vshrl.u32 %v2371, 7
  %v2373 = vsub.s32 0, %v2372
  %v2374 = vrot.slane %v2369, %v2373
  %v2376 = vmul.f32 %v1997, %v2374
  %v2377 = vmul.f32 %v1998, %v2374
  %v2378 = vmul.f32 %v1999, %v2374
  %v2379 = vmul.f32 %v2000, %v2374
  %v2380 = vadd.f32 %v2364, %v2376
  %v2381 = vadd.f32 %v2365, %v2377
  %v2382 = vadd.f32 %v2366, %v2378
  %v2383 = vadd.f32 %v2367, %v2379
  %s2384 = scalar_lea.vmem %s4, 24
  %v2385 = vld [vmem:[%s2384] sm:$0x1]
  %v2387 = vlaneseq
  %v2388 = vshrl.u32 %v2387, 7
  %v2389 = vsub.s32 0, %v2388
  %v2390 = vrot.slane %v2385, %v2389
  %v2392 = vmul.f32 %v2001, %v2390
  %v2393 = vmul.f32 %v2002, %v2390
  %v2394 = vmul.f32 %v2003, %v2390
  %v2395 = vmul.f32 %v2004, %v2390
  %v2396 = vadd.f32 %v2380, %v2392
  %v2397 = vadd.f32 %v2381, %v2393
  %v2398 = vadd.f32 %v2382, %v2394
  %v2399 = vadd.f32 %v2383, %v2395
  %v2400 = vld [vmem:[%s5] sm:$0x1]
  %v2402 = vlaneseq
  %v2403 = vshrl.u32 %v2402, 7
  %v2404 = vsub.s32 0, %v2403
  %v2405 = vrot.slane %v2400, %v2404
  %v2407 = vadd.f32 %v2396, %v2405
  %v2408 = vadd.f32 %v2397, %v2405
  %v2409 = vadd.f32 %v2398, %v2405
  %v2410 = vadd.f32 %v2399, %v2405
  %v2411 = vld [vmem:[%s6] sm:$0xff]
  %v2412 = vld [vmem:[%s6 + $0x8] sm:$0xff]
  %v2413 = vld [vmem:[%s6 + $0x10] sm:$0xff]
  %v2414 = vld [vmem:[%s6 + $0x18] sm:$0xff]
  %v2415 = vld [vmem:[%s7] sm:$0xf]
  %v2416 = vld [vmem:[%s7 + $0x4] sm:$0xf]
  %v2417 = vld [vmem:[%s7 + $0x8] sm:$0xf]
  %v2418 = vld [vmem:[%s7 + $0xc] sm:$0xf]
  %v2419 = vld [vmem:[%s7 + $0x10] sm:$0xf]
  %v2420 = vld [vmem:[%s7 + $0x14] sm:$0xf]
  %v2421 = vld [vmem:[%s8] sm:$0x1]
  %v2422 = vld [vmem:[%s9] sm:$0xf]
  %v2423 = vld [vmem:[%s9 + $0x4] sm:$0x3]
  %v2424 = vld [vmem:[%s10] sm:$0x1]
  %vm2425 = vcmask 392192
  %v2426 = vsel %vm2425, %v2407, 0.0
  %v2427 = vsel %vm2425, %v2408, 0.0
  %v2428 = vadd.f32 %v2426, %v2427
  %v2429 = vrot.slane %v2428, 4
  %v2430 = vadd.f32 %v2428, %v2429
  %v2431 = vrot.slane %v2430, 2
  %v2432 = vadd.f32 %v2430, %v2431
  %v2433 = vrot.slane %v2432, 1
  %v2434 = vadd.f32 %v2432, %v2433
  %v2435 = vmul.f32 %v2434, 0.0625
  %v2436 = vpack.c.bf16 %v2435, %v2435
  %v2443 = vunpack.c.l.b16 %v2415
  %v2444 = vunpack.c.l.b16 %v2416
  %v2445 = vunpack.c.l.b16 %v2417
  %v2446 = vunpack.c.l.b16 %v2418
  %v2447 = vunpack.c.l.b16 %v2419
  %v2448 = vunpack.c.l.b16 %v2420
  %v2449 = vpack.c.b16 %v2444, %v2443
  %v2450 = vpack.c.b16 %v2446, %v2445
  %v2451 = vpack.c.b16 %v2448, %v2447
  %v2456 = vsel %vm2425, %v2436, 0
  %2458 = vmatprep.subr.bf16.mxu0 0
  %2459 = vmatpush1.bf16.msra.mxu0 %v2449
  %2460 = vmatprep.subr.bf16.mxu0 0
  %2461 = vmatpush1.bf16.msra.mxu0 %v2450
  %2462 = vmatprep.subr.bf16.mxu0 0
  %2463 = vmatpush1.bf16.msra.mxu0 %v2451
  %2464 = vmatprep.subr.bf16.mxu0 0
  %2465 = vmatpush1.bf16.msra.mxu0 0
  %2466 = vmatprep.subr.bf16.mxu0 0
  %2467 = vmatpush1.bf16.msra.mxu0 0
  %2468 = vmatprep.subr.bf16.mxu0 0
  %2469 = vmatpush1.bf16.msra.mxu0 0
  %2470 = vmatprep.subr.bf16.mxu0 0
  %2471 = vmatpush1.bf16.msra.mxu0 0
  %2472 = vmatprep.subr.bf16.mxu0 0
  %2473 = vmatpush1.bf16.msra.mxu0 0
  %2474 = vmatprep.subr.bf16.mxu0 0
  %2475 = vmatpush1.bf16.msra.mxu0 0
  %2476 = vmatprep.subr.bf16.mxu0 0
  %2477 = vmatpush1.bf16.msra.mxu0 0
  %2478 = vmatprep.subr.bf16.mxu0 0
  %2479 = vmatpush1.bf16.msra.mxu0 0
  %2480 = vmatprep.subr.bf16.mxu0 0
  %2481 = vmatpush1.bf16.msra.mxu0 0
  %2482 = vmatprep.subr.bf16.mxu0 0
  %2483 = vmatpush1.bf16.msra.mxu0 0
  %2484 = vmatprep.subr.bf16.mxu0 0
  %2485 = vmatpush1.bf16.msra.mxu0 0
  %2486 = vmatprep.subr.bf16.mxu0 0
  %2487 = vmatpush1.bf16.msra.mxu0 0
  %2488 = vmatprep.subr.bf16.mxu0 0
  %2489 = vmatpush1.bf16.msra.mxu0 0
  %2490 = vmatprep.mubr.bf16.mxu0 0
  %2491 = vmatmul.mubr.bf16.gmra.mrb[0].mxu0 %v2456
  %v2492 = vpop.f32.mrb[0].mxu0
  %v2493 = vadd.f32 %v2421, %v2492
  %v2494 = vpop.f32.mrb[0].mxu0
  %v2495 = vpop.f32.mrb[0].mxu0
  %v2496 = vpop.f32.mrb[0].mxu0
  %2497 = vdwg.mxu0
  %v2498 = vmax.f32 %v2493, 0.0
  %v2499 = vpack.c.bf16 %v2498, %v2498
  %v2502 = vunpack.c.l.b16 %v2422
  %v2503 = vunpack.c.l.b16 %v2423
  %v2504 = vpack.c.b16 %v2503, %v2502
  %vm2505 = vcmask 97280
  %v2507 = vsel %vm2505, %v2499, 0
  %vm2509 = vcmask 1045504
  %v2511 = vsel %vm2509, %v2504, 0
  %2513 = vmatprep.subr.bf16.mxu0 0
  %2514 = vmatpush1.bf16.msra.mxu0 %v2511
  %2515 = vmatprep.subr.bf16.mxu0 0
  %2516 = vmatpush1.bf16.msra.mxu0 0
  %2517 = vmatprep.subr.bf16.mxu0 0
  %2518 = vmatpush1.bf16.msra.mxu0 0
  %2519 = vmatprep.subr.bf16.mxu0 0
  %2520 = vmatpush1.bf16.msra.mxu0 0
  %2521 = vmatprep.subr.bf16.mxu0 0
  %2522 = vmatpush1.bf16.msra.mxu0 0
  %2523 = vmatprep.subr.bf16.mxu0 0
  %2524 = vmatpush1.bf16.msra.mxu0 0
  %2525 = vmatprep.subr.bf16.mxu0 0
  %2526 = vmatpush1.bf16.msra.mxu0 0
  %2527 = vmatprep.subr.bf16.mxu0 0
  %2528 = vmatpush1.bf16.msra.mxu0 0
  %2529 = vmatprep.subr.bf16.mxu0 0
  %2530 = vmatpush1.bf16.msra.mxu0 0
  %2531 = vmatprep.subr.bf16.mxu0 0
  %2532 = vmatpush1.bf16.msra.mxu0 0
  %2533 = vmatprep.subr.bf16.mxu0 0
  %2534 = vmatpush1.bf16.msra.mxu0 0
  %2535 = vmatprep.subr.bf16.mxu0 0
  %2536 = vmatpush1.bf16.msra.mxu0 0
  %2537 = vmatprep.subr.bf16.mxu0 0
  %2538 = vmatpush1.bf16.msra.mxu0 0
  %2539 = vmatprep.subr.bf16.mxu0 0
  %2540 = vmatpush1.bf16.msra.mxu0 0
  %2541 = vmatprep.subr.bf16.mxu0 0
  %2542 = vmatpush1.bf16.msra.mxu0 0
  %2543 = vmatprep.subr.bf16.mxu0 0
  %2544 = vmatpush1.bf16.msra.mxu0 0
  %2545 = vmatprep.mubr.bf16.mxu0 0
  %2546 = vmatmul.mubr.bf16.gmra.mrb[0].mxu0 %v2507
  %v2547 = vpop.f32.mrb[0].mxu0
  %v2548 = vadd.f32 %v2424, %v2547
  %v2549 = vpop.f32.mrb[0].mxu0
  %v2550 = vpop.f32.mrb[0].mxu0
  %v2551 = vpop.f32.mrb[0].mxu0
  %2552 = vdwg.mxu0
  %v2553 = vadd.f32 %v2548, 3.0
  %v2554 = vmax.f32 %v2553, 0.0
  %v2555 = vmin.f32 %v2554, 6.0
  %v2556 = vmul.f32 %v2555, 0.16666667
  %2558 = vset.pattern.permute.xlu0 0
  %2559 = vperm.xlu0 %2558, %v2411
  %v2560 = vpop.permute.xlu0 %2559
  %2563 = vset.pattern.permute.xlu0 0
  %2564 = vperm.xlu0 %2563, %v2412
  %v2565 = vpop.permute.xlu0 %2564
  %2568 = vset.pattern.permute.xlu0 0
  %2569 = vperm.xlu0 %2568, %v2413
  %v2570 = vpop.permute.xlu0 %2569
  %2573 = vset.pattern.permute.xlu0 0
  %2574 = vperm.xlu0 %2573, %v2414
  %v2575 = vpop.permute.xlu0 %2574
  %v2577 = vlaneseq
  %v2578 = vshrl.u32 %v2577, 7
  %v2579 = vsub.s32 0, %v2578
  %v2580 = vrot.slane %v2556, %v2579
  %v2581 = vmul.f32 %v2560, %v2580
  %v2582 = vmul.f32 %v2565, %v2580
  %v2583 = vmul.f32 %v2570, %v2580
  %v2584 = vmul.f32 %v2575, %v2580
  %v2585 = vsel %vm2425, %v2409, 0.0
  %v2586 = vsel %vm2425, %v2410, 0.0
  %v2587 = vadd.f32 %v2585, %v2586
  %v2588 = vrot.slane %v2587, 4
  %v2589 = vadd.f32 %v2587, %v2588
  %v2590 = vrot.slane %v2589, 2
  %v2591 = vadd.f32 %v2589, %v2590
  %v2592 = vrot.slane %v2591, 1
  %v2593 = vadd.f32 %v2591, %v2592
  %v2594 = vmul.f32 %v2593, 0.0625
  %v2595 = vpack.c.bf16 %v2594, %v2594
  %v2597 = vsel %vm2425, %v2595, 0
  %2599 = vmatprep.subr.bf16.mxu0 0
  %2600 = vmatpush1.bf16.msra.mxu0 %v2449
  %2601 = vmatprep.subr.bf16.mxu0 0
  %2602 = vmatpush1.bf16.msra.mxu0 %v2450
  %2603 = vmatprep.subr.bf16.mxu0 0
  %2604 = vmatpush1.bf16.msra.mxu0 %v2451
  %2605 = vmatprep.subr.bf16.mxu0 0
  %2606 = vmatpush1.bf16.msra.mxu0 0
  %2607 = vmatprep.subr.bf16.mxu0 0
  %2608 = vmatpush1.bf16.msra.mxu0 0
  %2609 = vmatprep.subr.bf16.mxu0 0
  %2610 = vmatpush1.bf16.msra.mxu0 0
  %2611 = vmatprep.subr.bf16.mxu0 0
  %2612 = vmatpush1.bf16.msra.mxu0 0
  %2613 = vmatprep.subr.bf16.mxu0 0
  %2614 = vmatpush1.bf16.msra.mxu0 0
  %2615 = vmatprep.subr.bf16.mxu0 0
  %2616 = vmatpush1.bf16.msra.mxu0 0
  %2617 = vmatprep.subr.bf16.mxu0 0
  %2618 = vmatpush1.bf16.msra.mxu0 0
  %2619 = vmatprep.subr.bf16.mxu0 0
  %2620 = vmatpush1.bf16.msra.mxu0 0
  %2621 = vmatprep.subr.bf16.mxu0 0
  %2622 = vmatpush1.bf16.msra.mxu0 0
  %2623 = vmatprep.subr.bf16.mxu0 0
  %2624 = vmatpush1.bf16.msra.mxu0 0
  %2625 = vmatprep.subr.bf16.mxu0 0
  %2626 = vmatpush1.bf16.msra.mxu0 0
  %2627 = vmatprep.subr.bf16.mxu0 0
  %2628 = vmatpush1.bf16.msra.mxu0 0
  %2629 = vmatprep.subr.bf16.mxu0 0
  %2630 = vmatpush1.bf16.msra.mxu0 0
  %2631 = vmatprep.mubr.bf16.mxu0 0
  %2632 = vmatmul.mubr.bf16.gmra.mrb[0].mxu0 %v2597
  %v2633 = vpop.f32.mrb[0].mxu0
  %v2634 = vadd.f32 %v2421, %v2633
  %v2635 = vpop.f32.mrb[0].mxu0
  %v2636 = vpop.f32.mrb[0].mxu0
  %v2637 = vpop.f32.mrb[0].mxu0
  %2638 = vdwg.mxu0
  %v2639 = vmax.f32 %v2634, 0.0
  %v2640 = vpack.c.bf16 %v2639, %v2639
  %v2642 = vsel %vm2505, %v2640, 0
  %2644 = vmatprep.subr.bf16.mxu0 0
  %2645 = vmatpush1.bf16.msra.mxu0 %v2511
  %2646 = vmatprep.subr.bf16.mxu0 0
  %2647 = vmatpush1.bf16.msra.mxu0 0
  %2648 = vmatprep.subr.bf16.mxu0 0
  %2649 = vmatpush1.bf16.msra.mxu0 0
  %2650 = vmatprep.subr.bf16.mxu0 0
  %2651 = vmatpush1.bf16.msra.mxu0 0
  %2652 = vmatprep.subr.bf16.mxu0 0
  %2653 = vmatpush1.bf16.msra.mxu0 0
  %2654 = vmatprep.subr.bf16.mxu0 0
  %2655 = vmatpush1.bf16.msra.mxu0 0
  %2656 = vmatprep.subr.bf16.mxu0 0
  %2657 = vmatpush1.bf16.msra.mxu0 0
  %2658 = vmatprep.subr.bf16.mxu0 0
  %2659 = vmatpush1.bf16.msra.mxu0 0
  %2660 = vmatprep.subr.bf16.mxu0 0
  %2661 = vmatpush1.bf16.msra.mxu0 0
  %2662 = vmatprep.subr.bf16.mxu0 0
  %2663 = vmatpush1.bf16.msra.mxu0 0
  %2664 = vmatprep.subr.bf16.mxu0 0
  %2665 = vmatpush1.bf16.msra.mxu0 0
  %2666 = vmatprep.subr.bf16.mxu0 0
  %2667 = vmatpush1.bf16.msra.mxu0 0
  %2668 = vmatprep.subr.bf16.mxu0 0
  %2669 = vmatpush1.bf16.msra.mxu0 0
  %2670 = vmatprep.subr.bf16.mxu0 0
  %2671 = vmatpush1.bf16.msra.mxu0 0
  %2672 = vmatprep.subr.bf16.mxu0 0
  %2673 = vmatpush1.bf16.msra.mxu0 0
  %2674 = vmatprep.subr.bf16.mxu0 0
  %2675 = vmatpush1.bf16.msra.mxu0 0
  %2676 = vmatprep.mubr.bf16.mxu0 0
  %2677 = vmatmul.mubr.bf16.gmra.mrb[0].mxu0 %v2642
  %v2678 = vpop.f32.mrb[0].mxu0
  %v2679 = vadd.f32 %v2424, %v2678
  %v2680 = vpop.f32.mrb[0].mxu0
  %v2681 = vpop.f32.mrb[0].mxu0
  %v2682 = vpop.f32.mrb[0].mxu0
  %2683 = vdwg.mxu0
  %v2684 = vadd.f32 %v2679, 3.0
  %v2685 = vmax.f32 %v2684, 0.0
  %v2686 = vmin.f32 %v2685, 6.0
  %v2687 = vmul.f32 %v2686, 0.16666667
  %2688 = vset.pattern.permute.xlu0 1
  %2689 = vperm.xlu0 %2688, %v2411
  %v2690 = vpop.permute.xlu0 %2689
  %2692 = vset.pattern.permute.xlu0 1
  %2693 = vperm.xlu0 %2692, %v2412
  %v2694 = vpop.permute.xlu0 %2693
  %2696 = vset.pattern.permute.xlu0 1
  %2697 = vperm.xlu0 %2696, %v2413
  %v2698 = vpop.permute.xlu0 %2697
  %2700 = vset.pattern.permute.xlu0 1
  %2701 = vperm.xlu0 %2700, %v2414
  %v2702 = vpop.permute.xlu0 %2701
  %v2704 = vlaneseq
  %v2705 = vshrl.u32 %v2704, 7
  %v2706 = vsub.s32 0, %v2705
  %v2707 = vrot.slane %v2687, %v2706
  %v2708 = vmul.f32 %v2690, %v2707
  %v2709 = vmul.f32 %v2694, %v2707
  %v2710 = vmul.f32 %v2698, %v2707
  %v2711 = vmul.f32 %v2702, %v2707
  %v2712 = vadd.f32 %v2581, %v2708
  %v2713 = vadd.f32 %v2582, %v2709
  %v2714 = vadd.f32 %v2583, %v2710
  %v2715 = vadd.f32 %v2584, %v2711
  %v2716 = vmul.f32 %v2407, %v2712
  %v2717 = vmul.f32 %v2408, %v2713
  %v2718 = vmul.f32 %v2409, %v2714
  %v2719 = vmul.f32 %v2410, %v2715
  %v2720 = vadd.f32 %v2716, 3.0
  %v2721 = vadd.f32 %v2717, 3.0
  %v2722 = vadd.f32 %v2718, 3.0
  %v2723 = vadd.f32 %v2719, 3.0
  %v2724 = vmax.f32 %v2720, 0.0
  %v2725 = vmax.f32 %v2721, 0.0
  %v2726 = vmax.f32 %v2722, 0.0
  %v2727 = vmax.f32 %v2723, 0.0
  %v2728 = vmin.f32 %v2724, 6.0
  %v2729 = vmin.f32 %v2725, 6.0
  %v2730 = vmin.f32 %v2726, 6.0
  %v2731 = vmin.f32 %v2727, 6.0
  %v2732 = vmul.f32 %v2716, %v2728
  %v2733 = vmul.f32 %v2717, %v2729
  %v2734 = vmul.f32 %v2718, %v2730
  %v2735 = vmul.f32 %v2719, %v2731
  %v2736 = vmul.f32 %v2732, 0.16666667
  %v2737 = vmul.f32 %v2733, 0.16666667
  %v2738 = vmul.f32 %v2734, 0.16666667
  %v2739 = vmul.f32 %v2735, 0.16666667
  %v2740 = vld [vmem:[%s11] sm:$0xf]
  %v2741 = vld [vmem:[%s11 + $0x4] sm:$0xf]
  %v2742 = vld [vmem:[%s11 + $0x8] sm:$0xf]
  %v2743 = vld [vmem:[%s11 + $0xc] sm:$0xf]
  %v2744 = vld [vmem:[%s11 + $0x10] sm:$0xf]
  %v2745 = vld [vmem:[%s11 + $0x14] sm:$0xf]
  %v2746 = vpack.c.bf16 %v2737, %v2736
  %v2747 = vpack.c.bf16 %v2739, %v2738
  %v2748 = vld [vmem:[%s12] sm:$0x1]
  %v2750 = vlaneseq
  %v2751 = vshrl.u32 %v2750, 7
  %v2752 = vsub.s32 0, %v2751
  %v2753 = vrot.slane %v2748, %v2752
  %v2761 = vunpack.c.l.b16 %v2740
  %v2762 = vunpack.c.l.b16 %v2741
  %v2763 = vunpack.c.l.b16 %v2742
  %v2764 = vunpack.c.l.b16 %v2743
  %v2765 = vunpack.c.l.b16 %v2744
  %v2766 = vunpack.c.l.b16 %v2745
  %v2767 = vpack.c.b16 %v2762, %v2761
  %v2768 = vpack.c.b16 %v2764, %v2763
  %v2769 = vpack.c.b16 %v2766, %v2765
  %v2774 = vsel %vm2425, %v2746, 0
  %v2777 = vsel %vm2425, %v2747, 0
  %2779 = vmatprep.subr.bf16.mxu0 0
  %2780 = vmatpush1.bf16.msra.mxu0 %v2767
  %2781 = vmatprep.subr.bf16.mxu0 0
  %2782 = vmatpush1.bf16.msra.mxu0 %v2768
  %2783 = vmatprep.subr.bf16.mxu0 0
  %2784 = vmatpush1.bf16.msra.mxu0 %v2769
  %2785 = vmatprep.subr.bf16.mxu0 0
  %2786 = vmatpush1.bf16.msra.mxu0 0
  %2787 = vmatprep.subr.bf16.mxu0 0
  %2788 = vmatpush1.bf16.msra.mxu0 0
  %2789 = vmatprep.subr.bf16.mxu0 0
  %2790 = vmatpush1.bf16.msra.mxu0 0
  %2791 = vmatprep.subr.bf16.mxu0 0
  %2792 = vmatpush1.bf16.msra.mxu0 0
  %2793 = vmatprep.subr.bf16.mxu0 0
  %2794 = vmatpush1.bf16.msra.mxu0 0
  %2795 = vmatprep.subr.bf16.mxu0 0
  %2796 = vmatpush1.bf16.msra.mxu0 0
  %2797 = vmatprep.subr.bf16.mxu0 0
  %2798 = vmatpush1.bf16.msra.mxu0 0
  %2799 = vmatprep.subr.bf16.mxu0 0
  %2800 = vmatpush1.bf16.msra.mxu0 0
  %2801 = vmatprep.subr.bf16.mxu0 0
  %2802 = vmatpush1.bf16.msra.mxu0 0
  %2803 = vmatprep.subr.bf16.mxu0 0
  %2804 = vmatpush1.bf16.msra.mxu0 0
  %2805 = vmatprep.subr.bf16.mxu0 0
  %2806 = vmatpush1.bf16.msra.mxu0 0
  %2807 = vmatprep.subr.bf16.mxu0 0
  %2808 = vmatpush1.bf16.msra.mxu0 0
  %2809 = vmatprep.subr.bf16.mxu0 0
  %2810 = vmatpush1.bf16.msra.mxu0 0
  %2811 = vmatprep.mubr.bf16.mxu0 0
  %2812 = vmatmul.mubr.bf16.gmra.mrb[0].mxu0 %v2774
  %v2813 = vpop.f32.mrb[0].mxu0
  %v2814 = vadd.f32 %v2753, %v2813
  %v2815 = vpop.f32.mrb[0].mxu0
  %v2816 = vpop.f32.mrb[0].mxu0
  %v2817 = vadd.f32 %v2753, %v2816
  %v2818 = vpop.f32.mrb[0].mxu0
  %2819 = vmatprep.mubr.bf16.mxu0 0
  %2820 = vmatmul.mubr.bf16.gmra.mrb[0].mxu0 %v2777
  %v2821 = vpop.f32.mrb[0].mxu0
  %v2822 = vadd.f32 %v2753, %v2821
  %v2823 = vpop.f32.mrb[0].mxu0
  %v2824 = vpop.f32.mrb[0].mxu0
  %v2825 = vadd.f32 %v2753, %v2824
  %v2826 = vpop.f32.mrb[0].mxu0
  %2827 = vdwg.mxu0
  %v2828 = vld [vmem:[%s13] sm:$0xff]
  %v2829 = vld [vmem:[%s13 + $0x8] sm:$0xff]
  %v2830 = vld [vmem:[%s13 + $0x10] sm:$0xff]
  %v2831 = vld [vmem:[%s13 + $0x18] sm:$0xff]
  %v2832 = vadd.f32 %v2814, %v2828
  %v2833 = vadd.f32 %v2817, %v2829
  %v2834 = vadd.f32 %v2822, %v2830
  %v2835 = vadd.f32 %v2825, %v2831
  %2836 = vst.msk [vmem:[%s14] sm:$0xff] %vm217, %v2832
  %2837 = vst.msk [vmem:[%s14 + $0x8] sm:$0xff] %vm217, %v2833
  %2838 = vst.msk [vmem:[%s14 + $0x10] sm:$0xff] %vm217, %v2834
  %2839 = vst.msk [vmem:[%s14 + $0x18] sm:$0xff] %vm217, %v2835
  // Predicated region
  $region58: #{_lambda_.10} parent=0 // pred_check
    _
  $region59: #{_lambda_.10} parent=0 // pred_check_branch
    %2841 = sbr.rel (0) target = $region61
  $region60: #{_lambda_.10} parent=0 // pred_region
    _
  $region61: #{_lambda_.10} parent=0 // pred_fallthru
    _
  // Predicated region
  $region62: #{_lambda_.10} parent=0 // pred_check
    _
  $region63: #{_lambda_.10} parent=0 // pred_check_branch
    %2843 = sbr.rel (0) target = $region65
  $region64: #{_lambda_.10} parent=0 // pred_region
    _
  $region65: #{_lambda_.10} parent=0 // pred_fallthru
    _

// kernel: _lambda_.11
$region0: #{_lambda_.11}
  #allocation0 [shape = 'u32[]', space=smem, size = 0x4, offset = 0x4, fixed_abs, tag = 'smem constant byte address 0x4 - core index']
  #allocation1 [shape = 'u32[144,128]{1,0:T(1,128)}', space=vmem, size = 0x12000, scoped, tag = 'internal scratch']
  %s0 = inlined_call_operand.vmem [shape: f32[72,24], index: 0, kind: input, shape index: {}]
  %s1 = inlined_call_operand.vmem [shape: f32[72,1], index: 1, kind: input, shape index: {}]
  %s2 = inlined_call_operand.vmem [shape: bf16[24,64], index: 2, kind: input, shape index: {}]
  %s3 = inlined_call_operand.vmem [shape: f32[1,64], index: 3, kind: input, shape index: {}, may-alias: {3,5,10}]
  %s4 = inlined_call_operand.vmem [shape: f32[9,1,64], index: 4, kind: input, shape index: {}]
  %s5 = inlined_call_operand.vmem [shape: f32[1,64], index: 5, kind: input, shape index: {}, may-alias: {3,5,10}]
  %s6 = inlined_call_operand.vmem [shape: f32[8,2], index: 6, kind: input, shape index: {}]
  %s7 = inlined_call_operand.vmem [shape: bf16[64,16], index: 7, kind: input, shape index: {}]
  %s8 = inlined_call_operand.vmem [shape: f32[1,16], index: 8, kind: input, shape index: {}]
  %s9 = inlined_call_operand.vmem [shape: bf16[16,64], index: 9, kind: input, shape index: {}]
  %s10 = inlined_call_operand.vmem [shape: f32[1,64], index: 10, kind: input, shape index: {}, may-alias: {3,5,10}]
  %s11 = inlined_call_operand.vmem [shape: bf16[64,40], index: 11, kind: input, shape index: {}]
  %s12 = inlined_call_operand.vmem [shape: f32[1,40], index: 12, kind: input, shape index: {}]
  %s13 = inlined_call_operand.vmem [shape: f32[8,40], index: 13, kind: output, shape index: {}]
  %s14 = sld [smem:[#allocation0]]
  $region62: #{_lambda_.11} parent=0
    _
  %s16 = ssub.s32 1, %s14
  %s17 = scalar_select 0, %s16, %s14
  // Predicated region
  $region2: #{_lambda_.11} parent=0 // pred_check
    _
  $region3: #{_lambda_.11} parent=0 // pred_check_branch
    %19 = sbr.rel (0) target = $region5
  $region4: #{_lambda_.11} parent=0 // pred_region
    _
  $region5: #{_lambda_.11} parent=0 // pred_fallthru
    _
  // Predicated region
  $region6: #{_lambda_.11} parent=0 // pred_check
    _
  $region7: #{_lambda_.11} parent=0 // pred_check_branch
    %21 = sbr.rel (0) target = $region9
  $region8: #{_lambda_.11} parent=0 // pred_region
    _
  $region9: #{_lambda_.11} parent=0 // pred_fallthru
    _
  // Predicated region
  $region10: #{_lambda_.11} parent=0 // pred_check
    _
  $region11: #{_lambda_.11} parent=0 // pred_check_branch
    %23 = sbr.rel (0) target = $region13
  $region12: #{_lambda_.11} parent=0 // pred_region
    _
  $region13: #{_lambda_.11} parent=0 // pred_fallthru
    _
  // Predicated region
  $region14: #{_lambda_.11} parent=0 // pred_check
    _
  $region15: #{_lambda_.11} parent=0 // pred_check_branch
    %25 = sbr.rel (0) target = $region17
  $region16: #{_lambda_.11} parent=0 // pred_region
    _
  $region17: #{_lambda_.11} parent=0 // pred_fallthru
    _
  // Predicated region
  $region18: #{_lambda_.11} parent=0 // pred_check
    _
  $region19: #{_lambda_.11} parent=0 // pred_check_branch
    %27 = sbr.rel (0) target = $region21
  $region20: #{_lambda_.11} parent=0 // pred_region
    _
  $region21: #{_lambda_.11} parent=0 // pred_fallthru
    _
  // Predicated region
  $region22: #{_lambda_.11} parent=0 // pred_check
    _
  $region23: #{_lambda_.11} parent=0 // pred_check_branch
    %29 = sbr.rel (0) target = $region25
  $region24: #{_lambda_.11} parent=0 // pred_region
    _
  $region25: #{_lambda_.11} parent=0 // pred_fallthru
    _
  // Predicated region
  $region26: #{_lambda_.11} parent=0 // pred_check
    _
  $region27: #{_lambda_.11} parent=0 // pred_check_branch
    %31 = sbr.rel (0) target = $region29
  $region28: #{_lambda_.11} parent=0 // pred_region
    _
  $region29: #{_lambda_.11} parent=0 // pred_fallthru
    _
  // Predicated region
  $region30: #{_lambda_.11} parent=0 // pred_check
    _
  $region31: #{_lambda_.11} parent=0 // pred_check_branch
    %33 = sbr.rel (0) target = $region33
  $region32: #{_lambda_.11} parent=0 // pred_region
    _
  $region33: #{_lambda_.11} parent=0 // pred_fallthru
    _
  // Predicated region
  $region34: #{_lambda_.11} parent=0 // pred_check
    _
  $region35: #{_lambda_.11} parent=0 // pred_check_branch
    %35 = sbr.rel (0) target = $region37
  $region36: #{_lambda_.11} parent=0 // pred_region
    _
  $region37: #{_lambda_.11} parent=0 // pred_fallthru
    _
  // Predicated region
  $region38: #{_lambda_.11} parent=0 // pred_check
    _
  $region39: #{_lambda_.11} parent=0 // pred_check_branch
    %37 = sbr.rel (0) target = $region41
  $region40: #{_lambda_.11} parent=0 // pred_region
    _
  $region41: #{_lambda_.11} parent=0 // pred_fallthru
    _
  // Predicated region
  $region42: #{_lambda_.11} parent=0 // pred_check
    _
  $region43: #{_lambda_.11} parent=0 // pred_check_branch
    %39 = sbr.rel (0) target = $region45
  $region44: #{_lambda_.11} parent=0 // pred_region
    _
  $region45: #{_lambda_.11} parent=0 // pred_fallthru
    _
  // Predicated region
  $region46: #{_lambda_.11} parent=0 // pred_check
    _
  $region47: #{_lambda_.11} parent=0 // pred_check_branch
    %41 = sbr.rel (0) target = $region49
  $region48: #{_lambda_.11} parent=0 // pred_region
    _
  $region49: #{_lambda_.11} parent=0 // pred_fallthru
    _
  // Predicated region
  $region50: #{_lambda_.11} parent=0 // pred_check
    _
  $region51: #{_lambda_.11} parent=0 // pred_check_branch
    %43 = sbr.rel (0) target = $region53
  $region52: #{_lambda_.11} parent=0 // pred_region
    _
  $region53: #{_lambda_.11} parent=0 // pred_fallthru
    _
  %v45 = vld [vmem:[%s0] sm:$0xff]
  %v46 = vld [vmem:[%s0 + $0x8] sm:$0xff]
  %v47 = vld [vmem:[%s0 + $0x10] sm:$0xff]
  %v48 = vld [vmem:[%s0 + $0x18] sm:$0xff]
  %v49 = vld [vmem:[%s0 + $0x20] sm:$0xff]
  %v50 = vld [vmem:[%s0 + $0x28] sm:$0xff]
  %v51 = vld [vmem:[%s0 + $0x30] sm:$0xff]
  %v52 = vld [vmem:[%s0 + $0x38] sm:$0xff]
  %v53 = vld [vmem:[%s0 + $0x40] sm:$0xff]
  %v54 = vld [vmem:[%s2] sm:$0xf]
  %v55 = vld [vmem:[%s2 + $0x4] sm:$0xf]
  %v56 = vld [vmem:[%s2 + $0x8] sm:$0xf]
  %v57 = vpack.c.bf16 %v46, %v45
  %v58 = vpack.c.bf16 %v48, %v47
  %v59 = vpack.c.bf16 %v50, %v49
  %v60 = vpack.c.bf16 %v52, %v51
  %v61 = vpack.c.bf16 %v53, %v53
  %v62 = vld [vmem:[%s3] sm:$0x1]
  %v64 = vlaneseq
  %v65 = vshrl.u32 %v64, 7
  %v66 = vsub.s32 0, %v65
  %v67 = vrot.slane %v62, %v66
  %v72 = vunpack.c.l.b16 %v54
  %v73 = vunpack.c.l.b16 %v55
  %v74 = vunpack.c.l.b16 %v56
  %v75 = vpack.c.b16 %v73, %v72
  %v76 = vpack.c.b16 %v74, %v74
  %vm78 = vcmask 195584
  %v80 = vsel %vm78, %v57, 0
  %v83 = vsel %vm78, %v58, 0
  %v86 = vsel %vm78, %v59, 0
  %v89 = vsel %vm78, %v60, 0
  %v92 = vsel %vm78, %v61, 0
  %vm94 = vcmask 1043456
  %v96 = vsel %vm94, %v76, 0
  %98 = vmatprep.subr.bf16.mxu0 0
  %99 = vmatpush1.bf16.msra.mxu0 %v75
  %100 = vmatprep.subr.bf16.mxu0 0
  %101 = vmatpush1.bf16.msra.mxu0 %v96
  %102 = vmatprep.subr.bf16.mxu0 0
  %103 = vmatpush1.bf16.msra.mxu0 0
  %104 = vmatprep.subr.bf16.mxu0 0
  %105 = vmatpush1.bf16.msra.mxu0 0
  %106 = vmatprep.subr.bf16.mxu0 0
  %107 = vmatpush1.bf16.msra.mxu0 0
  %108 = vmatprep.subr.bf16.mxu0 0
  %109 = vmatpush1.bf16.msra.mxu0 0
  %110 = vmatprep.subr.bf16.mxu0 0
  %111 = vmatpush1.bf16.msra.mxu0 0
  %112 = vmatprep.subr.bf16.mxu0 0
  %113 = vmatpush1.bf16.msra.mxu0 0
  %114 = vmatprep.subr.bf16.mxu0 0
  %115 = vmatpush1.bf16.msra.mxu0 0
  %116 = vmatprep.subr.bf16.mxu0 0
  %117 = vmatpush1.bf16.msra.mxu0 0
  %118 = vmatprep.subr.bf16.mxu0 0
  %119 = vmatpush1.bf16.msra.mxu0 0
  %120 = vmatprep.subr.bf16.mxu0 0
  %121 = vmatpush1.bf16.msra.mxu0 0
  %122 = vmatprep.subr.bf16.mxu0 0
  %123 = vmatpush1.bf16.msra.mxu0 0
  %124 = vmatprep.subr.bf16.mxu0 0
  %125 = vmatpush1.bf16.msra.mxu0 0
  %126 = vmatprep.subr.bf16.mxu0 0
  %127 = vmatpush1.bf16.msra.mxu0 0
  %128 = vmatprep.subr.bf16.mxu0 0
  %129 = vmatpush1.bf16.msra.mxu0 0
  %130 = vmatprep.mubr.bf16.mxu0 0
  %131 = vmatmul.mubr.bf16.gmra.mrb[0].mxu0 %v80
  %v132 = vpop.f32.mrb[0].mxu0
  %v133 = vadd.f32 %v67, %v132
  %v134 = vpop.f32.mrb[0].mxu0
  %v135 = vpop.f32.mrb[0].mxu0
  %v136 = vadd.f32 %v67, %v135
  %v137 = vpop.f32.mrb[0].mxu0
  %138 = vmatprep.mubr.bf16.mxu0 0
  %139 = vmatmul.mubr.bf16.gmra.mrb[0].mxu0 %v83
  %v140 = vpop.f32.mrb[0].mxu0
  %v141 = vadd.f32 %v67, %v140
  %v142 = vpop.f32.mrb[0].mxu0
  %v143 = vpop.f32.mrb[0].mxu0
  %v144 = vadd.f32 %v67, %v143
  %v145 = vpop.f32.mrb[0].mxu0
  %146 = vmatprep.mubr.bf16.mxu0 0
  %147 = vmatmul.mubr.bf16.gmra.mrb[0].mxu0 %v86
  %v148 = vpop.f32.mrb[0].mxu0
  %v149 = vadd.f32 %v67, %v148
  %v150 = vpop.f32.mrb[0].mxu0
  %v151 = vpop.f32.mrb[0].mxu0
  %v152 = vadd.f32 %v67, %v151
  %v153 = vpop.f32.mrb[0].mxu0
  %154 = vmatprep.mubr.bf16.mxu0 0
  %155 = vmatmul.mubr.bf16.gmra.mrb[0].mxu0 %v89
  %v156 = vpop.f32.mrb[0].mxu0
  %v157 = vadd.f32 %v67, %v156
  %v158 = vpop.f32.mrb[0].mxu0
  %v159 = vpop.f32.mrb[0].mxu0
  %v160 = vadd.f32 %v67, %v159
  %v161 = vpop.f32.mrb[0].mxu0
  %162 = vmatprep.mubr.bf16.mxu0 0
  %163 = vmatmul.mubr.bf16.gmra.mrb[0].mxu0 %v92
  %v164 = vpop.f32.mrb[0].mxu0
  %v165 = vadd.f32 %v67, %v164
  %v166 = vpop.f32.mrb[0].mxu0
  %v167 = vpop.f32.mrb[0].mxu0
  %v168 = vpop.f32.mrb[0].mxu0
  %169 = vdwg.mxu0
  %v170 = vadd.f32 %v133, 3.0
  %v171 = vadd.f32 %v136, 3.0
  %v172 = vadd.f32 %v141, 3.0
  %v173 = vadd.f32 %v144, 3.0
  %v174 = vadd.f32 %v149, 3.0
  %v175 = vadd.f32 %v152, 3.0
  %v176 = vadd.f32 %v157, 3.0
  %v177 = vadd.f32 %v160, 3.0
  %v178 = vadd.f32 %v165, 3.0
  %v179 = vmax.f32 %v170, 0.0
  %v180 = vmax.f32 %v171, 0.0
  %v181 = vmax.f32 %v172, 0.0
  %v182 = vmax.f32 %v173, 0.0
  %v183 = vmax.f32 %v174, 0.0
  %v184 = vmax.f32 %v175, 0.0
  %v185 = vmax.f32 %v176, 0.0
  %v186 = vmax.f32 %v177, 0.0
  %v187 = vmax.f32 %v178, 0.0
  %v188 = vmin.f32 %v179, 6.0
  %v189 = vmin.f32 %v180, 6.0
  %v190 = vmin.f32 %v181, 6.0
  %v191 = vmin.f32 %v182, 6.0
  %v192 = vmin.f32 %v183, 6.0
  %v193 = vmin.f32 %v184, 6.0
  %v194 = vmin.f32 %v185, 6.0
  %v195 = vmin.f32 %v186, 6.0
  %v196 = vmin.f32 %v187, 6.0
  %v197 = vmul.f32 %v133, %v188
  %v198 = vmul.f32 %v136, %v189
  %v199 = vmul.f32 %v141, %v190
  %v200 = vmul.f32 %v144, %v191
  %v201 = vmul.f32 %v149, %v192
  %v202 = vmul.f32 %v152, %v193
  %v203 = vmul.f32 %v157, %v194
  %v204 = vmul.f32 %v160, %v195
  %v205 = vmul.f32 %v165, %v196
  %v206 = vmul.f32 %v197, 0.16666667
  %v207 = vmul.f32 %v198, 0.16666667
  %v208 = vmul.f32 %v199, 0.16666667
  %v209 = vmul.f32 %v200, 0.16666667
  %v210 = vmul.f32 %v201, 0.16666667
  %v211 = vmul.f32 %v202, 0.16666667
  %v212 = vmul.f32 %v203, 0.16666667
  %v213 = vmul.f32 %v204, 0.16666667
  %v214 = vmul.f32 %v205, 0.16666667
  %v215 = vld [vmem:[%s1] sm:$0xff]
  %v216 = vld [vmem:[%s1 + $0x8] sm:$0xff]
  %v217 = vld [vmem:[%s1 + $0x10] sm:$0xff]
  %v218 = vld [vmem:[%s1 + $0x18] sm:$0xff]
  %v219 = vld [vmem:[%s1 + $0x20] sm:$0xff]
  %v220 = vld [vmem:[%s1 + $0x28] sm:$0xff]
  %v221 = vld [vmem:[%s1 + $0x30] sm:$0xff]
  %v222 = vld [vmem:[%s1 + $0x38] sm:$0xff]
  %v223 = vld [vmem:[%s1 + $0x40] sm:$0xff]
  %225 = vset.pattern.permute.xlu0 0
  %226 = vperm.xlu0 %225, %v215
  %v227 = vpop.permute.xlu0 %226
  %230 = vset.pattern.permute.xlu0 0
  %231 = vperm.xlu0 %230, %v216
  %v232 = vpop.permute.xlu0 %231
  %235 = vset.pattern.permute.xlu0 0
  %236 = vperm.xlu0 %235, %v217
  %v237 = vpop.permute.xlu0 %236
  %240 = vset.pattern.permute.xlu0 0
  %241 = vperm.xlu0 %240, %v218
  %v242 = vpop.permute.xlu0 %241
  %245 = vset.pattern.permute.xlu0 0
  %246 = vperm.xlu0 %245, %v219
  %v247 = vpop.permute.xlu0 %246
  %250 = vset.pattern.permute.xlu0 0
  %251 = vperm.xlu0 %250, %v220
  %v252 = vpop.permute.xlu0 %251
  %255 = vset.pattern.permute.xlu0 0
  %256 = vperm.xlu0 %255, %v221
  %v257 = vpop.permute.xlu0 %256
  %260 = vset.pattern.permute.xlu0 0
  %261 = vperm.xlu0 %260, %v222
  %v262 = vpop.permute.xlu0 %261
  %265 = vset.pattern.permute.xlu0 0
  %266 = vperm.xlu0 %265, %v223
  %v267 = vpop.permute.xlu0 %266
  %v269 = vmul.f32 %v206, %v227
  %v270 = vmul.f32 %v207, %v232
  %v271 = vmul.f32 %v208, %v237
  %v272 = vmul.f32 %v209, %v242
  %v273 = vmul.f32 %v210, %v247
  %v274 = vmul.f32 %v211, %v252
  %v275 = vmul.f32 %v212, %v257
  %v276 = vmul.f32 %v213, %v262
  %v277 = vmul.f32 %v214, %v267
  %v278 = vld [vmem:[%s4] sm:$0x1]
  %v280 = vlaneseq
  %v281 = vshrl.u32 %v280, 7
  %v282 = vsub.s32 0, %v281
  %v283 = vrot.slane %v278, %v282
  %v285 = vmul.f32 %v269, %v283
  %s286 = scalar_lea.vmem %s4, 1
  %v287 = vld [vmem:[%s286] sm:$0x1]
  %v289 = vlaneseq
  %v290 = vshrl.u32 %v289, 7
  %v291 = vsub.s32 0, %v290
  %v292 = vrot.slane %v287, %v291
  %v294 = vmul.f32 %v270, %v292
  %v295 = vadd.f32 %v285, %v294
  %s296 = scalar_lea.vmem %s4, 2
  %v297 = vld [vmem:[%s296] sm:$0x1]
  %v299 = vlaneseq
  %v300 = vshrl.u32 %v299, 7
  %v301 = vsub.s32 0, %v300
  %v302 = vrot.slane %v297, %v301
  %v304 = vmul.f32 %v271, %v302
  %v305 = vadd.f32 %v295, %v304
  %s306 = scalar_lea.vmem %s4, 3
  %v307 = vld [vmem:[%s306] sm:$0x1]
  %v309 = vlaneseq
  %v310 = vshrl.u32 %v309, 7
  %v311 = vsub.s32 0, %v310
  %v312 = vrot.slane %v307, %v311
  %v314 = vmul.f32 %v272, %v312
  %v315 = vadd.f32 %v305, %v314
  %s316 = scalar_lea.vmem %s4, 4
  %v317 = vld [vmem:[%s316] sm:$0x1]
  %v319 = vlaneseq
  %v320 = vshrl.u32 %v319, 7
  %v321 = vsub.s32 0, %v320
  %v322 = vrot.slane %v317, %v321
  %v324 = vmul.f32 %v273, %v322
  %v325 = vadd.f32 %v315, %v324
  %s326 = scalar_lea.vmem %s4, 5
  %v327 = vld [vmem:[%s326] sm:$0x1]
  %v329 = vlaneseq
  %v330 = vshrl.u32 %v329, 7
  %v331 = vsub.s32 0, %v330
  %v332 = vrot.slane %v327, %v331
  %v334 = vmul.f32 %v274, %v332
  %v335 = vadd.f32 %v325, %v334
  %s336 = scalar_lea.vmem %s4, 6
  %v337 = vld [vmem:[%s336] sm:$0x1]
  %v339 = vlaneseq
  %v340 = vshrl.u32 %v339, 7
  %v341 = vsub.s32 0, %v340
  %v342 = vrot.slane %v337, %v341
  %v344 = vmul.f32 %v275, %v342
  %v345 = vadd.f32 %v335, %v344
  %s346 = scalar_lea.vmem %s4, 7
  %v347 = vld [vmem:[%s346] sm:$0x1]
  %v349 = vlaneseq
  %v350 = vshrl.u32 %v349, 7
  %v351 = vsub.s32 0, %v350
  %v352 = vrot.slane %v347, %v351
  %v354 = vmul.f32 %v276, %v352
  %v355 = vadd.f32 %v345, %v354
  %s356 = scalar_lea.vmem %s4, 8
  %v357 = vld [vmem:[%s356] sm:$0x1]
  %v359 = vlaneseq
  %v360 = vshrl.u32 %v359, 7
  %v361 = vsub.s32 0, %v360
  %v362 = vrot.slane %v357, %v361
  %v364 = vmul.f32 %v277, %v362
  %v365 = vadd.f32 %v355, %v364
  %v366 = vld [vmem:[%s5] sm:$0x1]
  %v368 = vlaneseq
  %v369 = vshrl.u32 %v368, 7
  %v370 = vsub.s32 0, %v369
  %v371 = vrot.slane %v366, %v370
  %v373 = vadd.f32 %v365, %v371
  %v374 = vld [vmem:[%s6] sm:$0xff]
  %v375 = vld [vmem:[%s7] sm:$0xf]
  %v376 = vld [vmem:[%s7 + $0x4] sm:$0xf]
  %v377 = vld [vmem:[%s7 + $0x8] sm:$0xf]
  %v378 = vld [vmem:[%s7 + $0xc] sm:$0xf]
  %v379 = vld [vmem:[%s7 + $0x10] sm:$0xf]
  %v380 = vld [vmem:[%s7 + $0x14] sm:$0xf]
  %v381 = vld [vmem:[%s7 + $0x18] sm:$0xf]
  %v382 = vld [vmem:[%s7 + $0x1c] sm:$0xf]
  %v383 = vld [vmem:[%s8] sm:$0x1]
  %v384 = vld [vmem:[%s9] sm:$0xf]
  %v385 = vld [vmem:[%s9 + $0x4] sm:$0xf]
  %v386 = vld [vmem:[%s10] sm:$0x1]
  %vm387 = vcmask 519168
  %v388 = vsel %vm387, %v373, 0.0
  %v389 = vrot.slane %v388, 4
  %v390 = vadd.f32 %v388, %v389
  %v391 = vrot.slane %v390, 2
  %v392 = vadd.f32 %v390, %v391
  %v393 = vrot.slane %v392, 1
  %v394 = vadd.f32 %v392, %v393
  %v395 = vmul.f32 %v394, 0.25
  %v396 = vpack.c.bf16 %v395, %v395
  %v405 = vunpack.c.l.b16 %v375
  %v406 = vunpack.c.l.b16 %v376
  %v407 = vunpack.c.l.b16 %v377
  %v408 = vunpack.c.l.b16 %v378
  %v409 = vunpack.c.l.b16 %v379
  %v410 = vunpack.c.l.b16 %v380
  %v411 = vunpack.c.l.b16 %v381
  %v412 = vunpack.c.l.b16 %v382
  %v413 = vpack.c.b16 %v406, %v405
  %v414 = vpack.c.b16 %v408, %v407
  %v415 = vpack.c.b16 %v410, %v409
  %v416 = vpack.c.b16 %v412, %v411
  %vm421 = vcmask 523264
  %v423 = vsel %vm421, %v396, 0
  %425 = vmatprep.subr.bf16.mxu0 0
  %426 = vmatpush1.bf16.msra.mxu0 %v413
  %427 = vmatprep.subr.bf16.mxu0 0
  %428 = vmatpush1.bf16.msra.mxu0 %v414
  %429 = vmatprep.subr.bf16.mxu0 0
  %430 = vmatpush1.bf16.msra.mxu0 %v415
  %431 = vmatprep.subr.bf16.mxu0 0
  %432 = vmatpush1.bf16.msra.mxu0 %v416
  %433 = vmatprep.subr.bf16.mxu0 0
  %434 = vmatpush1.bf16.msra.mxu0 0
  %435 = vmatprep.subr.bf16.mxu0 0
  %436 = vmatpush1.bf16.msra.mxu0 0
  %437 = vmatprep.subr.bf16.mxu0 0
  %438 = vmatpush1.bf16.msra.mxu0 0
  %439 = vmatprep.subr.bf16.mxu0 0
  %440 = vmatpush1.bf16.msra.mxu0 0
  %441 = vmatprep.subr.bf16.mxu0 0
  %442 = vmatpush1.bf16.msra.mxu0 0
  %443 = vmatprep.subr.bf16.mxu0 0
  %444 = vmatpush1.bf16.msra.mxu0 0
  %445 = vmatprep.subr.bf16.mxu0 0
  %446 = vmatpush1.bf16.msra.mxu0 0
  %447 = vmatprep.subr.bf16.mxu0 0
  %448 = vmatpush1.bf16.msra.mxu0 0
  %449 = vmatprep.subr.bf16.mxu0 0
  %450 = vmatpush1.bf16.msra.mxu0 0
  %451 = vmatprep.subr.bf16.mxu0 0
  %452 = vmatpush1.bf16.msra.mxu0 0
  %453 = vmatprep.subr.bf16.mxu0 0
  %454 = vmatpush1.bf16.msra.mxu0 0
  %455 = vmatprep.subr.bf16.mxu0 0
  %456 = vmatpush1.bf16.msra.mxu0 0
  %457 = vmatprep.mubr.bf16.mxu0 0
  %458 = vmatmul.mubr.bf16.gmra.mrb[0].mxu0 %v423
  %v459 = vpop.f32.mrb[0].mxu0
  %v460 = vadd.f32 %v383, %v459
  %v461 = vpop.f32.mrb[0].mxu0
  %v462 = vpop.f32.mrb[0].mxu0
  %v463 = vpop.f32.mrb[0].mxu0
  %464 = vdwg.mxu0
  %v465 = vmax.f32 %v460, 0.0
  %v466 = vpack.c.bf16 %v465, %v465
  %v469 = vunpack.c.l.b16 %v384
  %v470 = vunpack.c.l.b16 %v385
  %v471 = vpack.c.b16 %v470, %v469
  %vm473 = vcmask 130048
  %v475 = vsel %vm473, %v466, 0
  %477 = vmatprep.subr.bf16.mxu0 0
  %478 = vmatpush1.bf16.msra.mxu0 %v471
  %479 = vmatprep.subr.bf16.mxu0 0
  %480 = vmatpush1.bf16.msra.mxu0 0
  %481 = vmatprep.subr.bf16.mxu0 0
  %482 = vmatpush1.bf16.msra.mxu0 0
  %483 = vmatprep.subr.bf16.mxu0 0
  %484 = vmatpush1.bf16.msra.mxu0 0
  %485 = vmatprep.subr.bf16.mxu0 0
  %486 = vmatpush1.bf16.msra.mxu0 0
  %487 = vmatprep.subr.bf16.mxu0 0
  %488 = vmatpush1.bf16.msra.mxu0 0
  %489 = vmatprep.subr.bf16.mxu0 0
  %490 = vmatpush1.bf16.msra.mxu0 0
  %491 = vmatprep.subr.bf16.mxu0 0
  %492 = vmatpush1.bf16.msra.mxu0 0
  %493 = vmatprep.subr.bf16.mxu0 0
  %494 = vmatpush1.bf16.msra.mxu0 0
  %495 = vmatprep.subr.bf16.mxu0 0
  %496 = vmatpush1.bf16.msra.mxu0 0
  %497 = vmatprep.subr.bf16.mxu0 0
  %498 = vmatpush1.bf16.msra.mxu0 0
  %499 = vmatprep.subr.bf16.mxu0 0
  %500 = vmatpush1.bf16.msra.mxu0 0
  %501 = vmatprep.subr.bf16.mxu0 0
  %502 = vmatpush1.bf16.msra.mxu0 0
  %503 = vmatprep.subr.bf16.mxu0 0
  %504 = vmatpush1.bf16.msra.mxu0 0
  %505 = vmatprep.subr.bf16.mxu0 0
  %506 = vmatpush1.bf16.msra.mxu0 0
  %507 = vmatprep.subr.bf16.mxu0 0
  %508 = vmatpush1.bf16.msra.mxu0 0
  %509 = vmatprep.mubr.bf16.mxu0 0
  %510 = vmatmul.mubr.bf16.gmra.mrb[0].mxu0 %v475
  %v511 = vpop.f32.mrb[0].mxu0
  %v512 = vadd.f32 %v386, %v511
  %v513 = vpop.f32.mrb[0].mxu0
  %v514 = vpop.f32.mrb[0].mxu0
  %v515 = vpop.f32.mrb[0].mxu0
  %516 = vdwg.mxu0
  %v517 = vadd.f32 %v512, 3.0
  %v518 = vmax.f32 %v517, 0.0
  %v519 = vmin.f32 %v518, 6.0
  %v520 = vmul.f32 %v519, 0.16666667
  %522 = vset.pattern.permute.xlu0 0
  %523 = vperm.xlu0 %522, %v374
  %v524 = vpop.permute.xlu0 %523
  %v526 = vlaneseq
  %v527 = vshrl.u32 %v526, 7
  %v528 = vsub.s32 0, %v527
  %v529 = vrot.slane %v520, %v528
  %v530 = vmul.f32 %v524, %v529
  %v532 = vrot.slane %v373, 4
  %v534 = vsel %vm387, %v532, 0.0
  %v535 = vrot.slane %v534, 4
  %v536 = vadd.f32 %v534, %v535
  %v537 = vrot.slane %v536, 2
  %v538 = vadd.f32 %v536, %v537
  %v539 = vrot.slane %v538, 1
  %v540 = vadd.f32 %v538, %v539
  %v541 = vmul.f32 %v540, 0.25
  %v542 = vpack.c.bf16 %v541, %v541
  %v544 = vsel %vm421, %v542, 0
  %546 = vmatprep.subr.bf16.mxu0 0
  %547 = vmatpush1.bf16.msra.mxu0 %v413
  %548 = vmatprep.subr.bf16.mxu0 0
  %549 = vmatpush1.bf16.msra.mxu0 %v414
  %550 = vmatprep.subr.bf16.mxu0 0
  %551 = vmatpush1.bf16.msra.mxu0 %v415
  %552 = vmatprep.subr.bf16.mxu0 0
  %553 = vmatpush1.bf16.msra.mxu0 %v416
  %554 = vmatprep.subr.bf16.mxu0 0
  %555 = vmatpush1.bf16.msra.mxu0 0
  %556 = vmatprep.subr.bf16.mxu0 0
  %557 = vmatpush1.bf16.msra.mxu0 0
  %558 = vmatprep.subr.bf16.mxu0 0
  %559 = vmatpush1.bf16.msra.mxu0 0
  %560 = vmatprep.subr.bf16.mxu0 0
  %561 = vmatpush1.bf16.msra.mxu0 0
  %562 = vmatprep.subr.bf16.mxu0 0
  %563 = vmatpush1.bf16.msra.mxu0 0
  %564 = vmatprep.subr.bf16.mxu0 0
  %565 = vmatpush1.bf16.msra.mxu0 0
  %566 = vmatprep.subr.bf16.mxu0 0
  %567 = vmatpush1.bf16.msra.mxu0 0
  %568 = vmatprep.subr.bf16.mxu0 0
  %569 = vmatpush1.bf16.msra.mxu0 0
  %570 = vmatprep.subr.bf16.mxu0 0
  %571 = vmatpush1.bf16.msra.mxu0 0
  %572 = vmatprep.subr.bf16.mxu0 0
  %573 = vmatpush1.bf16.msra.mxu0 0
  %574 = vmatprep.subr.bf16.mxu0 0
  %575 = vmatpush1.bf16.msra.mxu0 0
  %576 = vmatprep.subr.bf16.mxu0 0
  %577 = vmatpush1.bf16.msra.mxu0 0
  %578 = vmatprep.mubr.bf16.mxu0 0
  %579 = vmatmul.mubr.bf16.gmra.mrb[0].mxu0 %v544
  %v580 = vpop.f32.mrb[0].mxu0
  %v581 = vadd.f32 %v383, %v580
  %v582 = vpop.f32.mrb[0].mxu0
  %v583 = vpop.f32.mrb[0].mxu0
  %v584 = vpop.f32.mrb[0].mxu0
  %585 = vdwg.mxu0
  %v586 = vmax.f32 %v581, 0.0
  %v587 = vpack.c.bf16 %v586, %v586
  %v589 = vsel %vm473, %v587, 0
  %591 = vmatprep.subr.bf16.mxu0 0
  %592 = vmatpush1.bf16.msra.mxu0 %v471
  %593 = vmatprep.subr.bf16.mxu0 0
  %594 = vmatpush1.bf16.msra.mxu0 0
  %595 = vmatprep.subr.bf16.mxu0 0
  %596 = vmatpush1.bf16.msra.mxu0 0
  %597 = vmatprep.subr.bf16.mxu0 0
  %598 = vmatpush1.bf16.msra.mxu0 0
  %599 = vmatprep.subr.bf16.mxu0 0
  %600 = vmatpush1.bf16.msra.mxu0 0
  %601 = vmatprep.subr.bf16.mxu0 0
  %602 = vmatpush1.bf16.msra.mxu0 0
  %603 = vmatprep.subr.bf16.mxu0 0
  %604 = vmatpush1.bf16.msra.mxu0 0
  %605 = vmatprep.subr.bf16.mxu0 0
  %606 = vmatpush1.bf16.msra.mxu0 0
  %607 = vmatprep.subr.bf16.mxu0 0
  %608 = vmatpush1.bf16.msra.mxu0 0
  %609 = vmatprep.subr.bf16.mxu0 0
  %610 = vmatpush1.bf16.msra.mxu0 0
  %611 = vmatprep.subr.bf16.mxu0 0
  %612 = vmatpush1.bf16.msra.mxu0 0
  %613 = vmatprep.subr.bf16.mxu0 0
  %614 = vmatpush1.bf16.msra.mxu0 0
  %615 = vmatprep.subr.bf16.mxu0 0
  %616 = vmatpush1.bf16.msra.mxu0 0
  %617 = vmatprep.subr.bf16.mxu0 0
  %618 = vmatpush1.bf16.msra.mxu0 0
  %619 = vmatprep.subr.bf16.mxu0 0
  %620 = vmatpush1.bf16.msra.mxu0 0
  %621 = vmatprep.subr.bf16.mxu0 0
  %622 = vmatpush1.bf16.msra.mxu0 0
  %623 = vmatprep.mubr.bf16.mxu0 0
  %624 = vmatmul.mubr.bf16.gmra.mrb[0].mxu0 %v589
  %v625 = vpop.f32.mrb[0].mxu0
  %v626 = vadd.f32 %v386, %v625
  %v627 = vpop.f32.mrb[0].mxu0
  %v628 = vpop.f32.mrb[0].mxu0
  %v629 = vpop.f32.mrb[0].mxu0
  %630 = vdwg.mxu0
  %v631 = vadd.f32 %v626, 3.0
  %v632 = vmax.f32 %v631, 0.0
  %v633 = vmin.f32 %v632, 6.0
  %v634 = vmul.f32 %v633, 0.16666667
  %635 = vset.pattern.permute.xlu0 1
  %636 = vperm.xlu0 %635, %v374
  %v637 = vpop.permute.xlu0 %636
  %v639 = vlaneseq
  %v640 = vshrl.u32 %v639, 7
  %v641 = vsub.s32 0, %v640
  %v642 = vrot.slane %v634, %v641
  %v643 = vmul.f32 %v637, %v642
  %v644 = vadd.f32 %v530, %v643
  %v645 = vmul.f32 %v373, %v644
  %v646 = vadd.f32 %v645, 3.0
  %v647 = vmax.f32 %v646, 0.0
  %v648 = vmin.f32 %v647, 6.0
  %v649 = vmul.f32 %v645, %v648
  %v650 = vmul.f32 %v649, 0.16666667
  %v651 = vld [vmem:[%s11] sm:$0xf]
  %v652 = vld [vmem:[%s11 + $0x4] sm:$0xf]
  %v653 = vld [vmem:[%s11 + $0x8] sm:$0xf]
  %v654 = vld [vmem:[%s11 + $0xc] sm:$0xf]
  %v655 = vld [vmem:[%s11 + $0x10] sm:$0xf]
  %v656 = vld [vmem:[%s11 + $0x14] sm:$0xf]
  %v657 = vld [vmem:[%s11 + $0x18] sm:$0xf]
  %v658 = vld [vmem:[%s11 + $0x1c] sm:$0xf]
  %v659 = vpack.c.bf16 %v650, %v650
  %v660 = vld [vmem:[%s12] sm:$0x1]
  %v662 = vlaneseq
  %v663 = vshrl.u32 %v662, 7
  %v664 = vsub.s32 0, %v663
  %v665 = vrot.slane %v660, %v664
  %v675 = vunpack.c.l.b16 %v651
  %v676 = vunpack.c.l.b16 %v652
  %v677 = vunpack.c.l.b16 %v653
  %v678 = vunpack.c.l.b16 %v654
  %v679 = vunpack.c.l.b16 %v655
  %v680 = vunpack.c.l.b16 %v656
  %v681 = vunpack.c.l.b16 %v657
  %v682 = vunpack.c.l.b16 %v658
  %v683 = vpack.c.b16 %v676, %v675
  %v684 = vpack.c.b16 %v678, %v677
  %v685 = vpack.c.b16 %v680, %v679
  %v686 = vpack.c.b16 %v682, %v681
  %v692 = vsel %vm421, %v659, 0
  %694 = vmatprep.subr.bf16.mxu0 0
  %695 = vmatpush1.bf16.msra.mxu0 %v683
  %696 = vmatprep.subr.bf16.mxu0 0
  %697 = vmatpush1.bf16.msra.mxu0 %v684
  %698 = vmatprep.subr.bf16.mxu0 0
  %699 = vmatpush1.bf16.msra.mxu0 %v685
  %700 = vmatprep.subr.bf16.mxu0 0
  %701 = vmatpush1.bf16.msra.mxu0 %v686
  %702 = vmatprep.subr.bf16.mxu0 0
  %703 = vmatpush1.bf16.msra.mxu0 0
  %704 = vmatprep.subr.bf16.mxu0 0
  %705 = vmatpush1.bf16.msra.mxu0 0
  %706 = vmatprep.subr.bf16.mxu0 0
  %707 = vmatpush1.bf16.msra.mxu0 0
  %708 = vmatprep.subr.bf16.mxu0 0
  %709 = vmatpush1.bf16.msra.mxu0 0
  %710 = vmatprep.subr.bf16.mxu0 0
  %711 = vmatpush1.bf16.msra.mxu0 0
  %712 = vmatprep.subr.bf16.mxu0 0
  %713 = vmatpush1.bf16.msra.mxu0 0
  %714 = vmatprep.subr.bf16.mxu0 0
  %715 = vmatpush1.bf16.msra.mxu0 0
  %716 = vmatprep.subr.bf16.mxu0 0
  %717 = vmatpush1.bf16.msra.mxu0 0
  %718 = vmatprep.subr.bf16.mxu0 0
  %719 = vmatpush1.bf16.msra.mxu0 0
  %720 = vmatprep.subr.bf16.mxu0 0
  %721 = vmatpush1.bf16.msra.mxu0 0
  %722 = vmatprep.subr.bf16.mxu0 0
  %723 = vmatpush1.bf16.msra.mxu0 0
  %724 = vmatprep.subr.bf16.mxu0 0
  %725 = vmatpush1.bf16.msra.mxu0 0
  %726 = vmatprep.mubr.bf16.mxu0 0
  %727 = vmatmul.mubr.bf16.gmra.mrb[0].mxu0 %v692
  %v728 = vpop.f32.mrb[0].mxu0
  %v729 = vadd.f32 %v665, %v728
  %v730 = vpop.f32.mrb[0].mxu0
  %v731 = vpop.f32.mrb[0].mxu0
  %v732 = vpop.f32.mrb[0].mxu0
  %733 = vdwg.mxu0
  %vm734 = vcmask 326656
  %735 = vst.msk [vmem:[%s13] sm:$0xff] %vm734, %v729
  // Predicated region
  $region54: #{_lambda_.11} parent=0 // pred_check
    _
  $region55: #{_lambda_.11} parent=0 // pred_check_branch
    %737 = sbr.rel (0) target = $region57
  $region56: #{_lambda_.11} parent=0 // pred_region
    _
  $region57: #{_lambda_.11} parent=0 // pred_fallthru
    _
  // Predicated region
  $region58: #{_lambda_.11} parent=0 // pred_check
    _
  $region59: #{_lambda_.11} parent=0 // pred_check_branch
    %739 = sbr.rel (0) target = $region61
  $region60: #{_lambda_.11} parent=0 // pred_region
    _
  $region61: #{_lambda_.11} parent=0 // pred_fallthru
    _

// kernel: _lambda_.12
$region0: #{_lambda_.12}
  #allocation0 [shape = 'u32[]', space=smem, size = 0x4, offset = 0x4, fixed_abs, tag = 'smem constant byte address 0x4 - core index']
  #allocation1 [shape = 'u32[144,128]{1,0:T(1,128)}', space=vmem, size = 0x12000, scoped, tag = 'internal scratch']
  %s0 = inlined_call_operand.vmem [shape: f32[50,40], index: 0, kind: input, shape index: {}]
  %s1 = inlined_call_operand.vmem [shape: f32[50,1], index: 1, kind: input, shape index: {}]
  %s2 = inlined_call_operand.vmem [shape: bf16[40,96], index: 2, kind: input, shape index: {}]
  %s3 = inlined_call_operand.vmem [shape: f32[1,96], index: 3, kind: input, shape index: {}, may-alias: {3,5,10}]
  %s4 = inlined_call_operand.vmem [shape: f32[25,1,96], index: 4, kind: input, shape index: {}]
  %s5 = inlined_call_operand.vmem [shape: f32[1,96], index: 5, kind: input, shape index: {}, may-alias: {3,5,10}]
  %s6 = inlined_call_operand.vmem [shape: f32[2,2], index: 6, kind: input, shape index: {}]
  %s7 = inlined_call_operand.vmem [shape: bf16[96,24], index: 7, kind: input, shape index: {}]
  %s8 = inlined_call_operand.vmem [shape: f32[1,24], index: 8, kind: input, shape index: {}]
  %s9 = inlined_call_operand.vmem [shape: bf16[24,96], index: 9, kind: input, shape index: {}]
  %s10 = inlined_call_operand.vmem [shape: f32[1,96], index: 10, kind: input, shape index: {}, may-alias: {3,5,10}]
  %s11 = inlined_call_operand.vmem [shape: bf16[96,48], index: 11, kind: input, shape index: {}]
  %s12 = inlined_call_operand.vmem [shape: f32[1,48], index: 12, kind: input, shape index: {}]
  %s13 = inlined_call_operand.vmem [shape: f32[2,48], index: 13, kind: output, shape index: {}]
  %s14 = sld [smem:[#allocation0]]
  $region62: #{_lambda_.12} parent=0
    _
  %s16 = ssub.s32 1, %s14
  %s17 = scalar_select 0, %s16, %s14
  // Predicated region
  $region2: #{_lambda_.12} parent=0 // pred_check
    _
  $region3: #{_lambda_.12} parent=0 // pred_check_branch
    %19 = sbr.rel (0) target = $region5
  $region4: #{_lambda_.12} parent=0 // pred_region
    _
  $region5: #{_lambda_.12} parent=0 // pred_fallthru
    _
  // Predicated region
  $region6: #{_lambda_.12} parent=0 // pred_check
    _
  $region7: #{_lambda_.12} parent=0 // pred_check_branch
    %21 = sbr.rel (0) target = $region9
  $region8: #{_lambda_.12} parent=0 // pred_region
    _
  $region9: #{_lambda_.12} parent=0 // pred_fallthru
    _
  // Predicated region
  $region10: #{_lambda_.12} parent=0 // pred_check
    _
  $region11: #{_lambda_.12} parent=0 // pred_check_branch
    %23 = sbr.rel (0) target = $region13
  $region12: #{_lambda_.12} parent=0 // pred_region
    _
  $region13: #{_lambda_.12} parent=0 // pred_fallthru
    _
  // Predicated region
  $region14: #{_lambda_.12} parent=0 // pred_check
    _
  $region15: #{_lambda_.12} parent=0 // pred_check_branch
    %25 = sbr.rel (0) target = $region17
  $region16: #{_lambda_.12} parent=0 // pred_region
    _
  $region17: #{_lambda_.12} parent=0 // pred_fallthru
    _
  // Predicated region
  $region18: #{_lambda_.12} parent=0 // pred_check
    _
  $region19: #{_lambda_.12} parent=0 // pred_check_branch
    %27 = sbr.rel (0) target = $region21
  $region20: #{_lambda_.12} parent=0 // pred_region
    _
  $region21: #{_lambda_.12} parent=0 // pred_fallthru
    _
  // Predicated region
  $region22: #{_lambda_.12} parent=0 // pred_check
    _
  $region23: #{_lambda_.12} parent=0 // pred_check_branch
    %29 = sbr.rel (0) target = $region25
  $region24: #{_lambda_.12} parent=0 // pred_region
    _
  $region25: #{_lambda_.12} parent=0 // pred_fallthru
    _
  // Predicated region
  $region26: #{_lambda_.12} parent=0 // pred_check
    _
  $region27: #{_lambda_.12} parent=0 // pred_check_branch
    %31 = sbr.rel (0) target = $region29
  $region28: #{_lambda_.12} parent=0 // pred_region
    _
  $region29: #{_lambda_.12} parent=0 // pred_fallthru
    _
  // Predicated region
  $region30: #{_lambda_.12} parent=0 // pred_check
    _
  $region31: #{_lambda_.12} parent=0 // pred_check_branch
    %33 = sbr.rel (0) target = $region33
  $region32: #{_lambda_.12} parent=0 // pred_region
    _
  $region33: #{_lambda_.12} parent=0 // pred_fallthru
    _
  // Predicated region
  $region34: #{_lambda_.12} parent=0 // pred_check
    _
  $region35: #{_lambda_.12} parent=0 // pred_check_branch
    %35 = sbr.rel (0) target = $region37
  $region36: #{_lambda_.12} parent=0 // pred_region
    _
  $region37: #{_lambda_.12} parent=0 // pred_fallthru
    _
  // Predicated region
  $region38: #{_lambda_.12} parent=0 // pred_check
    _
  $region39: #{_lambda_.12} parent=0 // pred_check_branch
    %37 = sbr.rel (0) target = $region41
  $region40: #{_lambda_.12} parent=0 // pred_region
    _
  $region41: #{_lambda_.12} parent=0 // pred_fallthru
    _
  // Predicated region
  $region42: #{_lambda_.12} parent=0 // pred_check
    _
  $region43: #{_lambda_.12} parent=0 // pred_check_branch
    %39 = sbr.rel (0) target = $region45
  $region44: #{_lambda_.12} parent=0 // pred_region
    _
  $region45: #{_lambda_.12} parent=0 // pred_fallthru
    _
  // Predicated region
  $region46: #{_lambda_.12} parent=0 // pred_check
    _
  $region47: #{_lambda_.12} parent=0 // pred_check_branch
    %41 = sbr.rel (0) target = $region49
  $region48: #{_lambda_.12} parent=0 // pred_region
    _
  $region49: #{_lambda_.12} parent=0 // pred_fallthru
    _
  // Predicated region
  $region50: #{_lambda_.12} parent=0 // pred_check
    _
  $region51: #{_lambda_.12} parent=0 // pred_check_branch
    %43 = sbr.rel (0) target = $region53
  $region52: #{_lambda_.12} parent=0 // pred_region
    _
  $region53: #{_lambda_.12} parent=0 // pred_fallthru
    _
  %v45 = vld [vmem:[%s0] sm:$0xff]
  %v46 = vld [vmem:[%s0 + $0x8] sm:$0xff]
  %v47 = vld [vmem:[%s0 + $0x10] sm:$0xff]
  %v48 = vld [vmem:[%s0 + $0x18] sm:$0xff]
  %v49 = vld [vmem:[%s0 + $0x20] sm:$0xff]
  %v50 = vld [vmem:[%s0 + $0x28] sm:$0xff]
  %v51 = vld [vmem:[%s0 + $0x30] sm:$0x3]
  %v52 = vld [vmem:[%s2] sm:$0xf]
  %v53 = vld [vmem:[%s2 + $0x4] sm:$0xf]
  %v54 = vld [vmem:[%s2 + $0x8] sm:$0xf]
  %v55 = vld [vmem:[%s2 + $0xc] sm:$0xf]
  %v56 = vld [vmem:[%s2 + $0x10] sm:$0xf]
  %v57 = vpack.c.bf16 %v46, %v45
  %v58 = vpack.c.bf16 %v48, %v47
  %v59 = vpack.c.bf16 %v50, %v49
  %v60 = vpack.c.bf16 %v51, %v51
  %v61 = vld [vmem:[%s3] sm:$0x1]
  %v63 = vlaneseq
  %v64 = vshrl.u32 %v63, 7
  %v65 = vsub.s32 0, %v64
  %v66 = vrot.slane %v61, %v65
  %v73 = vunpack.c.l.b16 %v52
  %v74 = vunpack.c.l.b16 %v53
  %v75 = vunpack.c.l.b16 %v54
  %v76 = vunpack.c.l.b16 %v55
  %v77 = vunpack.c.l.b16 %v56
  %v78 = vpack.c.b16 %v74, %v73
  %v79 = vpack.c.b16 %v76, %v75
  %v80 = vpack.c.b16 %v77, %v77
  %vm83 = vcmask 326656
  %v85 = vsel %vm83, %v57, 0
  %v88 = vsel %vm83, %v58, 0
  %v91 = vsel %vm83, %v59, 0
  %v94 = vsel %vm83, %v60, 0
  %vm96 = vcmask 1043456
  %v98 = vsel %vm96, %v80, 0
  %100 = vmatprep.subr.bf16.mxu0 0
  %101 = vmatpush1.bf16.msra.mxu0 %v78
  %102 = vmatprep.subr.bf16.mxu0 0
  %103 = vmatpush1.bf16.msra.mxu0 %v79
  %104 = vmatprep.subr.bf16.mxu0 0
  %105 = vmatpush1.bf16.msra.mxu0 %v98
  %106 = vmatprep.subr.bf16.mxu0 0
  %107 = vmatpush1.bf16.msra.mxu0 0
  %108 = vmatprep.subr.bf16.mxu0 0
  %109 = vmatpush1.bf16.msra.mxu0 0
  %110 = vmatprep.subr.bf16.mxu0 0
  %111 = vmatpush1.bf16.msra.mxu0 0
  %112 = vmatprep.subr.bf16.mxu0 0
  %113 = vmatpush1.bf16.msra.mxu0 0
  %114 = vmatprep.subr.bf16.mxu0 0
  %115 = vmatpush1.bf16.msra.mxu0 0
  %116 = vmatprep.subr.bf16.mxu0 0
  %117 = vmatpush1.bf16.msra.mxu0 0
  %118 = vmatprep.subr.bf16.mxu0 0
  %119 = vmatpush1.bf16.msra.mxu0 0
  %120 = vmatprep.subr.bf16.mxu0 0
  %121 = vmatpush1.bf16.msra.mxu0 0
  %122 = vmatprep.subr.bf16.mxu0 0
  %123 = vmatpush1.bf16.msra.mxu0 0
  %124 = vmatprep.subr.bf16.mxu0 0
  %125 = vmatpush1.bf16.msra.mxu0 0
  %126 = vmatprep.subr.bf16.mxu0 0
  %127 = vmatpush1.bf16.msra.mxu0 0
  %128 = vmatprep.subr.bf16.mxu0 0
  %129 = vmatpush1.bf16.msra.mxu0 0
  %130 = vmatprep.subr.bf16.mxu0 0
  %131 = vmatpush1.bf16.msra.mxu0 0
  %132 = vmatprep.mubr.bf16.mxu0 0
  %133 = vmatmul.mubr.bf16.gmra.mrb[0].mxu0 %v85
  %v134 = vpop.f32.mrb[0].mxu0
  %v135 = vadd.f32 %v66, %v134
  %v136 = vpop.f32.mrb[0].mxu0
  %v137 = vpop.f32.mrb[0].mxu0
  %v138 = vadd.f32 %v66, %v137
  %v139 = vpop.f32.mrb[0].mxu0
  %140 = vmatprep.mubr.bf16.mxu0 0
  %141 = vmatmul.mubr.bf16.gmra.mrb[0].mxu0 %v88
  %v142 = vpop.f32.mrb[0].mxu0
  %v143 = vadd.f32 %v66, %v142
  %v144 = vpop.f32.mrb[0].mxu0
  %v145 = vpop.f32.mrb[0].mxu0
  %v146 = vadd.f32 %v66, %v145
  %v147 = vpop.f32.mrb[0].mxu0
  %148 = vmatprep.mubr.bf16.mxu0 0
  %149 = vmatmul.mubr.bf16.gmra.mrb[0].mxu0 %v91
  %v150 = vpop.f32.mrb[0].mxu0
  %v151 = vadd.f32 %v66, %v150
  %v152 = vpop.f32.mrb[0].mxu0
  %v153 = vpop.f32.mrb[0].mxu0
  %v154 = vadd.f32 %v66, %v153
  %v155 = vpop.f32.mrb[0].mxu0
  %156 = vmatprep.mubr.bf16.mxu0 0
  %157 = vmatmul.mubr.bf16.gmra.mrb[0].mxu0 %v94
  %v158 = vpop.f32.mrb[0].mxu0
  %v159 = vadd.f32 %v66, %v158
  %v160 = vpop.f32.mrb[0].mxu0
  %v161 = vpop.f32.mrb[0].mxu0
  %v162 = vpop.f32.mrb[0].mxu0
  %163 = vdwg.mxu0
  %v164 = vadd.f32 %v135, 3.0
  %v165 = vadd.f32 %v138, 3.0
  %v166 = vadd.f32 %v143, 3.0
  %v167 = vadd.f32 %v146, 3.0
  %v168 = vadd.f32 %v151, 3.0
  %v169 = vadd.f32 %v154, 3.0
  %v170 = vadd.f32 %v159, 3.0
  %v171 = vmax.f32 %v164, 0.0
  %v172 = vmax.f32 %v165, 0.0
  %v173 = vmax.f32 %v166, 0.0
  %v174 = vmax.f32 %v167, 0.0
  %v175 = vmax.f32 %v168, 0.0
  %v176 = vmax.f32 %v169, 0.0
  %v177 = vmax.f32 %v170, 0.0
  %v178 = vmin.f32 %v171, 6.0
  %v179 = vmin.f32 %v172, 6.0
  %v180 = vmin.f32 %v173, 6.0
  %v181 = vmin.f32 %v174, 6.0
  %v182 = vmin.f32 %v175, 6.0
  %v183 = vmin.f32 %v176, 6.0
  %v184 = vmin.f32 %v177, 6.0
  %v185 = vmul.f32 %v135, %v178
  %v186 = vmul.f32 %v138, %v179
  %v187 = vmul.f32 %v143, %v180
  %v188 = vmul.f32 %v146, %v181
  %v189 = vmul.f32 %v151, %v182
  %v190 = vmul.f32 %v154, %v183
  %v191 = vmul.f32 %v159, %v184
  %v192 = vmul.f32 %v185, 0.16666667
  %v193 = vmul.f32 %v186, 0.16666667
  %v194 = vmul.f32 %v187, 0.16666667
  %v195 = vmul.f32 %v188, 0.16666667
  %v196 = vmul.f32 %v189, 0.16666667
  %v197 = vmul.f32 %v190, 0.16666667
  %v198 = vmul.f32 %v191, 0.16666667
  %v199 = vld [vmem:[%s1] sm:$0xff]
  %v200 = vld [vmem:[%s1 + $0x8] sm:$0xff]
  %v201 = vld [vmem:[%s1 + $0x10] sm:$0xff]
  %v202 = vld [vmem:[%s1 + $0x18] sm:$0xff]
  %v203 = vld [vmem:[%s1 + $0x20] sm:$0xff]
  %v204 = vld [vmem:[%s1 + $0x28] sm:$0xff]
  %v205 = vld [vmem:[%s1 + $0x30] sm:$0x3]
  %207 = vset.pattern.permute.xlu0 0
  %208 = vperm.xlu0 %207, %v199
  %v209 = vpop.permute.xlu0 %208
  %212 = vset.pattern.permute.xlu0 0
  %213 = vperm.xlu0 %212, %v200
  %v214 = vpop.permute.xlu0 %213
  %217 = vset.pattern.permute.xlu0 0
  %218 = vperm.xlu0 %217, %v201
  %v219 = vpop.permute.xlu0 %218
  %222 = vset.pattern.permute.xlu0 0
  %223 = vperm.xlu0 %222, %v202
  %v224 = vpop.permute.xlu0 %223
  %227 = vset.pattern.permute.xlu0 0
  %228 = vperm.xlu0 %227, %v203
  %v229 = vpop.permute.xlu0 %228
  %232 = vset.pattern.permute.xlu0 0
  %233 = vperm.xlu0 %232, %v204
  %v234 = vpop.permute.xlu0 %233
  %237 = vset.pattern.permute.xlu0 0
  %238 = vperm.xlu0 %237, %v205
  %v239 = vpop.permute.xlu0 %238
  %v241 = vmul.f32 %v192, %v209
  %v242 = vmul.f32 %v193, %v214
  %v243 = vmul.f32 %v194, %v219
  %v244 = vmul.f32 %v195, %v224
  %v245 = vmul.f32 %v196, %v229
  %v246 = vmul.f32 %v197, %v234
  %v247 = vmul.f32 %v198, %v239
  %v248 = vld [vmem:[%s4] sm:$0x1]
  %v250 = vlaneseq
  %v251 = vshrl.u32 %v250, 7
  %v252 = vsub.s32 0, %v251
  %v253 = vrot.slane %v248, %v252
  %v255 = vmul.f32 %v241, %v253
  %s256 = scalar_lea.vmem %s4, 1
  %v257 = vld [vmem:[%s256] sm:$0x1]
  %v259 = vlaneseq
  %v260 = vshrl.u32 %v259, 7
  %v261 = vsub.s32 0, %v260
  %v262 = vrot.slane %v257, %v261
  %v264 = vmul.f32 %v241, %v262
  %v266 = vrot.slane %v264, 2
  %v268 = vadd.f32 %v255, %v266
  %s269 = scalar_lea.vmem %s4, 2
  %v270 = vld [vmem:[%s269] sm:$0x1]
  %v272 = vlaneseq
  %v273 = vshrl.u32 %v272, 7
  %v274 = vsub.s32 0, %v273
  %v275 = vrot.slane %v270, %v274
  %v277 = vmul.f32 %v241, %v275
  %v279 = vrot.slane %v277, 4
  %v281 = vadd.f32 %v268, %v279
  %s282 = scalar_lea.vmem %s4, 3
  %v283 = vld [vmem:[%s282] sm:$0x1]
  %v285 = vlaneseq
  %v286 = vshrl.u32 %v285, 7
  %v287 = vsub.s32 0, %v286
  %v288 = vrot.slane %v283, %v287
  %v290 = vmul.f32 %v241, %v288
  %v292 = vrot.slane %v290, 6
  %v294 = vadd.f32 %v281, %v292
  %s295 = scalar_lea.vmem %s4, 4
  %v296 = vld [vmem:[%s295] sm:$0x1]
  %v298 = vlaneseq
  %v299 = vshrl.u32 %v298, 7
  %v300 = vsub.s32 0, %v299
  %v301 = vrot.slane %v296, %v300
  %v303 = vmul.f32 %v242, %v301
  %v304 = vadd.f32 %v294, %v303
  %s305 = scalar_lea.vmem %s4, 5
  %v306 = vld [vmem:[%s305] sm:$0x1]
  %v308 = vlaneseq
  %v309 = vshrl.u32 %v308, 7
  %v310 = vsub.s32 0, %v309
  %v311 = vrot.slane %v306, %v310
  %v313 = vmul.f32 %v242, %v311
  %v315 = vrot.slane %v313, 2
  %v317 = vadd.f32 %v304, %v315
  %s318 = scalar_lea.vmem %s4, 6
  %v319 = vld [vmem:[%s318] sm:$0x1]
  %v321 = vlaneseq
  %v322 = vshrl.u32 %v321, 7
  %v323 = vsub.s32 0, %v322
  %v324 = vrot.slane %v319, %v323
  %v326 = vmul.f32 %v242, %v324
  %v328 = vrot.slane %v326, 4
  %v330 = vadd.f32 %v317, %v328
  %s331 = scalar_lea.vmem %s4, 7
  %v332 = vld [vmem:[%s331] sm:$0x1]
  %v334 = vlaneseq
  %v335 = vshrl.u32 %v334, 7
  %v336 = vsub.s32 0, %v335
  %v337 = vrot.slane %v332, %v336
  %v339 = vmul.f32 %v242, %v337
  %v341 = vrot.slane %v339, 6
  %v343 = vadd.f32 %v330, %v341
  %s344 = scalar_lea.vmem %s4, 8
  %v345 = vld [vmem:[%s344] sm:$0x1]
  %v347 = vlaneseq
  %v348 = vshrl.u32 %v347, 7
  %v349 = vsub.s32 0, %v348
  %v350 = vrot.slane %v345, %v349
  %v352 = vmul.f32 %v243, %v350
  %v353 = vadd.f32 %v343, %v352
  %s354 = scalar_lea.vmem %s4, 9
  %v355 = vld [vmem:[%s354] sm:$0x1]
  %v357 = vlaneseq
  %v358 = vshrl.u32 %v357, 7
  %v359 = vsub.s32 0, %v358
  %v360 = vrot.slane %v355, %v359
  %v362 = vmul.f32 %v243, %v360
  %v364 = vrot.slane %v362, 2
  %v366 = vadd.f32 %v353, %v364
  %s367 = scalar_lea.vmem %s4, 10
  %v368 = vld [vmem:[%s367] sm:$0x1]
  %v370 = vlaneseq
  %v371 = vshrl.u32 %v370, 7
  %v372 = vsub.s32 0, %v371
  %v373 = vrot.slane %v368, %v372
  %v375 = vmul.f32 %v243, %v373
  %v377 = vrot.slane %v375, 4
  %v379 = vadd.f32 %v366, %v377
  %s380 = scalar_lea.vmem %s4, 11
  %v381 = vld [vmem:[%s380] sm:$0x1]
  %v383 = vlaneseq
  %v384 = vshrl.u32 %v383, 7
  %v385 = vsub.s32 0, %v384
  %v386 = vrot.slane %v381, %v385
  %v388 = vmul.f32 %v243, %v386
  %v390 = vrot.slane %v388, 6
  %v392 = vadd.f32 %v379, %v390
  %s393 = scalar_lea.vmem %s4, 12
  %v394 = vld [vmem:[%s393] sm:$0x1]
  %v396 = vlaneseq
  %v397 = vshrl.u32 %v396, 7
  %v398 = vsub.s32 0, %v397
  %v399 = vrot.slane %v394, %v398
  %v401 = vmul.f32 %v244, %v399
  %v402 = vadd.f32 %v392, %v401
  %s403 = scalar_lea.vmem %s4, 13
  %v404 = vld [vmem:[%s403] sm:$0x1]
  %v406 = vlaneseq
  %v407 = vshrl.u32 %v406, 7
  %v408 = vsub.s32 0, %v407
  %v409 = vrot.slane %v404, %v408
  %v411 = vmul.f32 %v244, %v409
  %v413 = vrot.slane %v411, 2
  %v415 = vadd.f32 %v402, %v413
  %s416 = scalar_lea.vmem %s4, 14
  %v417 = vld [vmem:[%s416] sm:$0x1]
  %v419 = vlaneseq
  %v420 = vshrl.u32 %v419, 7
  %v421 = vsub.s32 0, %v420
  %v422 = vrot.slane %v417, %v421
  %v424 = vmul.f32 %v244, %v422
  %v426 = vrot.slane %v424, 4
  %v428 = vadd.f32 %v415, %v426
  %s429 = scalar_lea.vmem %s4, 15
  %v430 = vld [vmem:[%s429] sm:$0x1]
  %v432 = vlaneseq
  %v433 = vshrl.u32 %v432, 7
  %v434 = vsub.s32 0, %v433
  %v435 = vrot.slane %v430, %v434
  %v437 = vmul.f32 %v244, %v435
  %v439 = vrot.slane %v437, 6
  %v441 = vadd.f32 %v428, %v439
  %s442 = scalar_lea.vmem %s4, 16
  %v443 = vld [vmem:[%s442] sm:$0x1]
  %v445 = vlaneseq
  %v446 = vshrl.u32 %v445, 7
  %v447 = vsub.s32 0, %v446
  %v448 = vrot.slane %v443, %v447
  %v450 = vmul.f32 %v245, %v448
  %v451 = vadd.f32 %v441, %v450
  %s452 = scalar_lea.vmem %s4, 17
  %v453 = vld [vmem:[%s452] sm:$0x1]
  %v455 = vlaneseq
  %v456 = vshrl.u32 %v455, 7
  %v457 = vsub.s32 0, %v456
  %v458 = vrot.slane %v453, %v457
  %v460 = vmul.f32 %v245, %v458
  %v462 = vrot.slane %v460, 2
  %v464 = vadd.f32 %v451, %v462
  %s465 = scalar_lea.vmem %s4, 18
  %v466 = vld [vmem:[%s465] sm:$0x1]
  %v468 = vlaneseq
  %v469 = vshrl.u32 %v468, 7
  %v470 = vsub.s32 0, %v469
  %v471 = vrot.slane %v466, %v470
  %v473 = vmul.f32 %v245, %v471
  %v475 = vrot.slane %v473, 4
  %v477 = vadd.f32 %v464, %v475
  %s478 = scalar_lea.vmem %s4, 19
  %v479 = vld [vmem:[%s478] sm:$0x1]
  %v481 = vlaneseq
  %v482 = vshrl.u32 %v481, 7
  %v483 = vsub.s32 0, %v482
  %v484 = vrot.slane %v479, %v483
  %v486 = vmul.f32 %v245, %v484
  %v488 = vrot.slane %v486, 6
  %v490 = vadd.f32 %v477, %v488
  %s491 = scalar_lea.vmem %s4, 20
  %v492 = vld [vmem:[%s491] sm:$0x1]
  %v494 = vlaneseq
  %v495 = vshrl.u32 %v494, 7
  %v496 = vsub.s32 0, %v495
  %v497 = vrot.slane %v492, %v496
  %v499 = vmul.f32 %v246, %v497
  %v500 = vadd.f32 %v490, %v499
  %s501 = scalar_lea.vmem %s4, 21
  %v502 = vld [vmem:[%s501] sm:$0x1]
  %v504 = vlaneseq
  %v505 = vshrl.u32 %v504, 7
  %v506 = vsub.s32 0, %v505
  %v507 = vrot.slane %v502, %v506
  %v509 = vmul.f32 %v246, %v507
  %v511 = vrot.slane %v509, 2
  %v513 = vadd.f32 %v500, %v511
  %s514 = scalar_lea.vmem %s4, 22
  %v515 = vld [vmem:[%s514] sm:$0x1]
  %v517 = vlaneseq
  %v518 = vshrl.u32 %v517, 7
  %v519 = vsub.s32 0, %v518
  %v520 = vrot.slane %v515, %v519
  %v522 = vmul.f32 %v246, %v520
  %v524 = vrot.slane %v522, 4
  %v526 = vadd.f32 %v513, %v524
  %s527 = scalar_lea.vmem %s4, 23
  %v528 = vld [vmem:[%s527] sm:$0x1]
  %v530 = vlaneseq
  %v531 = vshrl.u32 %v530, 7
  %v532 = vsub.s32 0, %v531
  %v533 = vrot.slane %v528, %v532
  %v535 = vmul.f32 %v246, %v533
  %v537 = vrot.slane %v535, 6
  %v539 = vadd.f32 %v526, %v537
  %s540 = scalar_lea.vmem %s4, 24
  %v541 = vld [vmem:[%s540] sm:$0x1]
  %v543 = vlaneseq
  %v544 = vshrl.u32 %v543, 7
  %v545 = vsub.s32 0, %v544
  %v546 = vrot.slane %v541, %v545
  %v548 = vmul.f32 %v247, %v546
  %v549 = vadd.f32 %v539, %v548
  %v550 = vld [vmem:[%s5] sm:$0x1]
  %v552 = vlaneseq
  %v553 = vshrl.u32 %v552, 7
  %v554 = vsub.s32 0, %v553
  %v555 = vrot.slane %v550, %v554
  %v557 = vadd.f32 %v549, %v555
  %v558 = vld [vmem:[%s6] sm:$0x3]
  %v559 = vld [vmem:[%s7] sm:$0xf]
  %v560 = vld [vmem:[%s7 + $0x4] sm:$0xf]
  %v561 = vld [vmem:[%s7 + $0x8] sm:$0xf]
  %v562 = vld [vmem:[%s7 + $0xc] sm:$0xf]
  %v563 = vld [vmem:[%s7 + $0x10] sm:$0xf]
  %v564 = vld [vmem:[%s7 + $0x14] sm:$0xf]
  %v565 = vld [vmem:[%s7 + $0x18] sm:$0xf]
  %v566 = vld [vmem:[%s7 + $0x1c] sm:$0xf]
  %v567 = vld [vmem:[%s7 + $0x20] sm:$0xf]
  %v568 = vld [vmem:[%s7 + $0x24] sm:$0xf]
  %v569 = vld [vmem:[%s7 + $0x28] sm:$0xf]
  %v570 = vld [vmem:[%s7 + $0x2c] sm:$0xf]
  %v571 = vld [vmem:[%s8] sm:$0x1]
  %v572 = vld [vmem:[%s9] sm:$0xf]
  %v573 = vld [vmem:[%s9 + $0x4] sm:$0xf]
  %v574 = vld [vmem:[%s9 + $0x8] sm:$0xf]
  %v575 = vld [vmem:[%s10] sm:$0x1]
  %v576 = vadd.f32 %v557, 0.0
  %v577 = vpack.c.bf16 %v576, %v576
  %v590 = vunpack.c.l.b16 %v559
  %v591 = vunpack.c.l.b16 %v560
  %v592 = vunpack.c.l.b16 %v561
  %v593 = vunpack.c.l.b16 %v562
  %v594 = vunpack.c.l.b16 %v563
  %v595 = vunpack.c.l.b16 %v564
  %v596 = vunpack.c.l.b16 %v565
  %v597 = vunpack.c.l.b16 %v566
  %v598 = vunpack.c.l.b16 %v567
  %v599 = vunpack.c.l.b16 %v568
  %v600 = vunpack.c.l.b16 %v569
  %v601 = vunpack.c.l.b16 %v570
  %v602 = vpack.c.b16 %v591, %v590
  %v603 = vpack.c.b16 %v593, %v592
  %v604 = vpack.c.b16 %v595, %v594
  %v605 = vpack.c.b16 %v597, %v596
  %v606 = vpack.c.b16 %v599, %v598
  %v607 = vpack.c.b16 %v601, %v600
  %vm614 = vcmask 785408
  %v616 = vsel %vm614, %v577, 0
  %618 = vmatprep.subr.bf16.mxu0 0
  %619 = vmatpush1.bf16.msra.mxu0 %v602
  %620 = vmatprep.subr.bf16.mxu0 0
  %621 = vmatpush1.bf16.msra.mxu0 %v603
  %622 = vmatprep.subr.bf16.mxu0 0
  %623 = vmatpush1.bf16.msra.mxu0 %v604
  %624 = vmatprep.subr.bf16.mxu0 0
  %625 = vmatpush1.bf16.msra.mxu0 %v605
  %626 = vmatprep.subr.bf16.mxu0 0
  %627 = vmatpush1.bf16.msra.mxu0 %v606
  %628 = vmatprep.subr.bf16.mxu0 0
  %629 = vmatpush1.bf16.msra.mxu0 %v607
  %630 = vmatprep.subr.bf16.mxu0 0
  %631 = vmatpush1.bf16.msra.mxu0 0
  %632 = vmatprep.subr.bf16.mxu0 0
  %633 = vmatpush1.bf16.msra.mxu0 0
  %634 = vmatprep.subr.bf16.mxu0 0
  %635 = vmatpush1.bf16.msra.mxu0 0
  %636 = vmatprep.subr.bf16.mxu0 0
  %637 = vmatpush1.bf16.msra.mxu0 0
  %638 = vmatprep.subr.bf16.mxu0 0
  %639 = vmatpush1.bf16.msra.mxu0 0
  %640 = vmatprep.subr.bf16.mxu0 0
  %641 = vmatpush1.bf16.msra.mxu0 0
  %642 = vmatprep.subr.bf16.mxu0 0
  %643 = vmatpush1.bf16.msra.mxu0 0
  %644 = vmatprep.subr.bf16.mxu0 0
  %645 = vmatpush1.bf16.msra.mxu0 0
  %646 = vmatprep.subr.bf16.mxu0 0
  %647 = vmatpush1.bf16.msra.mxu0 0
  %648 = vmatprep.subr.bf16.mxu0 0
  %649 = vmatpush1.bf16.msra.mxu0 0
  %650 = vmatprep.mubr.bf16.mxu0 0
  %651 = vmatmul.mubr.bf16.gmra.mrb[0].mxu0 %v616
  %v652 = vpop.f32.mrb[0].mxu0
  %v653 = vadd.f32 %v571, %v652
  %v654 = vpop.f32.mrb[0].mxu0
  %v655 = vpop.f32.mrb[0].mxu0
  %v656 = vpop.f32.mrb[0].mxu0
  %657 = vdwg.mxu0
  %v658 = vmax.f32 %v653, 0.0
  %v659 = vpack.c.bf16 %v658, %v658
  %v663 = vunpack.c.l.b16 %v572
  %v664 = vunpack.c.l.b16 %v573
  %v665 = vunpack.c.l.b16 %v574
  %v666 = vpack.c.b16 %v664, %v663
  %v667 = vpack.c.b16 %v665, %v665
  %vm669 = vcmask 195584
  %v671 = vsel %vm669, %v659, 0
  %v674 = vsel %vm96, %v667, 0
  %676 = vmatprep.subr.bf16.mxu0 0
  %677 = vmatpush1.bf16.msra.mxu0 %v666
  %678 = vmatprep.subr.bf16.mxu0 0
  %679 = vmatpush1.bf16.msra.mxu0 %v674
  %680 = vmatprep.subr.bf16.mxu0 0
  %681 = vmatpush1.bf16.msra.mxu0 0
  %682 = vmatprep.subr.bf16.mxu0 0
  %683 = vmatpush1.bf16.msra.mxu0 0
  %684 = vmatprep.subr.bf16.mxu0 0
  %685 = vmatpush1.bf16.msra.mxu0 0
  %686 = vmatprep.subr.bf16.mxu0 0
  %687 = vmatpush1.bf16.msra.mxu0 0
  %688 = vmatprep.subr.bf16.mxu0 0
  %689 = vmatpush1.bf16.msra.mxu0 0
  %690 = vmatprep.subr.bf16.mxu0 0
  %691 = vmatpush1.bf16.msra.mxu0 0
  %692 = vmatprep.subr.bf16.mxu0 0
  %693 = vmatpush1.bf16.msra.mxu0 0
  %694 = vmatprep.subr.bf16.mxu0 0
  %695 = vmatpush1.bf16.msra.mxu0 0
  %696 = vmatprep.subr.bf16.mxu0 0
  %697 = vmatpush1.bf16.msra.mxu0 0
  %698 = vmatprep.subr.bf16.mxu0 0
  %699 = vmatpush1.bf16.msra.mxu0 0
  %700 = vmatprep.subr.bf16.mxu0 0
  %701 = vmatpush1.bf16.msra.mxu0 0
  %702 = vmatprep.subr.bf16.mxu0 0
  %703 = vmatpush1.bf16.msra.mxu0 0
  %704 = vmatprep.subr.bf16.mxu0 0
  %705 = vmatpush1.bf16.msra.mxu0 0
  %706 = vmatprep.subr.bf16.mxu0 0
  %707 = vmatpush1.bf16.msra.mxu0 0
  %708 = vmatprep.mubr.bf16.mxu0 0
  %709 = vmatmul.mubr.bf16.gmra.mrb[0].mxu0 %v671
  %v710 = vpop.f32.mrb[0].mxu0
  %v711 = vadd.f32 %v575, %v710
  %v712 = vpop.f32.mrb[0].mxu0
  %v713 = vpop.f32.mrb[0].mxu0
  %v714 = vpop.f32.mrb[0].mxu0
  %715 = vdwg.mxu0
  %v716 = vadd.f32 %v711, 3.0
  %v717 = vmax.f32 %v716, 0.0
  %v718 = vmin.f32 %v717, 6.0
  %v719 = vmul.f32 %v718, 0.16666667
  %721 = vset.pattern.permute.xlu0 0
  %722 = vperm.xlu0 %721, %v558
  %v723 = vpop.permute.xlu0 %722
  %v725 = vlaneseq
  %v726 = vshrl.u32 %v725, 7
  %v727 = vsub.s32 0, %v726
  %v728 = vrot.slane %v719, %v727
  %v729 = vmul.f32 %v723, %v728
  %v730 = vshrl.u32 %v577, 16
  %v733 = vsel %vm614, %v730, 0
  %735 = vmatprep.subr.bf16.mxu0 0
  %736 = vmatpush1.bf16.msra.mxu0 %v602
  %737 = vmatprep.subr.bf16.mxu0 0
  %738 = vmatpush1.bf16.msra.mxu0 %v603
  %739 = vmatprep.subr.bf16.mxu0 0
  %740 = vmatpush1.bf16.msra.mxu0 %v604
  %741 = vmatprep.subr.bf16.mxu0 0
  %742 = vmatpush1.bf16.msra.mxu0 %v605
  %743 = vmatprep.subr.bf16.mxu0 0
  %744 = vmatpush1.bf16.msra.mxu0 %v606
  %745 = vmatprep.subr.bf16.mxu0 0
  %746 = vmatpush1.bf16.msra.mxu0 %v607
  %747 = vmatprep.subr.bf16.mxu0 0
  %748 = vmatpush1.bf16.msra.mxu0 0
  %749 = vmatprep.subr.bf16.mxu0 0
  %750 = vmatpush1.bf16.msra.mxu0 0
  %751 = vmatprep.subr.bf16.mxu0 0
  %752 = vmatpush1.bf16.msra.mxu0 0
  %753 = vmatprep.subr.bf16.mxu0 0
  %754 = vmatpush1.bf16.msra.mxu0 0
  %755 = vmatprep.subr.bf16.mxu0 0
  %756 = vmatpush1.bf16.msra.mxu0 0
  %757 = vmatprep.subr.bf16.mxu0 0
  %758 = vmatpush1.bf16.msra.mxu0 0
  %759 = vmatprep.subr.bf16.mxu0 0
  %760 = vmatpush1.bf16.msra.mxu0 0
  %761 = vmatprep.subr.bf16.mxu0 0
  %762 = vmatpush1.bf16.msra.mxu0 0
  %763 = vmatprep.subr.bf16.mxu0 0
  %764 = vmatpush1.bf16.msra.mxu0 0
  %765 = vmatprep.subr.bf16.mxu0 0
  %766 = vmatpush1.bf16.msra.mxu0 0
  %767 = vmatprep.mubr.bf16.mxu0 0
  %768 = vmatmul.mubr.bf16.gmra.mrb[0].mxu0 %v733
  %v769 = vpop.f32.mrb[0].mxu0
  %v770 = vadd.f32 %v571, %v769
  %v771 = vpop.f32.mrb[0].mxu0
  %v772 = vpop.f32.mrb[0].mxu0
  %v773 = vpop.f32.mrb[0].mxu0
  %774 = vdwg.mxu0
  %v775 = vmax.f32 %v770, 0.0
  %v776 = vpack.c.bf16 %v775, %v775
  %v778 = vsel %vm669, %v776, 0
  %780 = vmatprep.subr.bf16.mxu0 0
  %781 = vmatpush1.bf16.msra.mxu0 %v666
  %782 = vmatprep.subr.bf16.mxu0 0
  %783 = vmatpush1.bf16.msra.mxu0 %v674
  %784 = vmatprep.subr.bf16.mxu0 0
  %785 = vmatpush1.bf16.msra.mxu0 0
  %786 = vmatprep.subr.bf16.mxu0 0
  %787 = vmatpush1.bf16.msra.mxu0 0
  %788 = vmatprep.subr.bf16.mxu0 0
  %789 = vmatpush1.bf16.msra.mxu0 0
  %790 = vmatprep.subr.bf16.mxu0 0
  %791 = vmatpush1.bf16.msra.mxu0 0
  %792 = vmatprep.subr.bf16.mxu0 0
  %793 = vmatpush1.bf16.msra.mxu0 0
  %794 = vmatprep.subr.bf16.mxu0 0
  %795 = vmatpush1.bf16.msra.mxu0 0
  %796 = vmatprep.subr.bf16.mxu0 0
  %797 = vmatpush1.bf16.msra.mxu0 0
  %798 = vmatprep.subr.bf16.mxu0 0
  %799 = vmatpush1.bf16.msra.mxu0 0
  %800 = vmatprep.subr.bf16.mxu0 0
  %801 = vmatpush1.bf16.msra.mxu0 0
  %802 = vmatprep.subr.bf16.mxu0 0
  %803 = vmatpush1.bf16.msra.mxu0 0
  %804 = vmatprep.subr.bf16.mxu0 0
  %805 = vmatpush1.bf16.msra.mxu0 0
  %806 = vmatprep.subr.bf16.mxu0 0
  %807 = vmatpush1.bf16.msra.mxu0 0
  %808 = vmatprep.subr.bf16.mxu0 0
  %809 = vmatpush1.bf16.msra.mxu0 0
  %810 = vmatprep.subr.bf16.mxu0 0
  %811 = vmatpush1.bf16.msra.mxu0 0
  %812 = vmatprep.mubr.bf16.mxu0 0
  %813 = vmatmul.mubr.bf16.gmra.mrb[0].mxu0 %v778
  %v814 = vpop.f32.mrb[0].mxu0
  %v815 = vadd.f32 %v575, %v814
  %v816 = vpop.f32.mrb[0].mxu0
  %v817 = vpop.f32.mrb[0].mxu0
  %v818 = vpop.f32.mrb[0].mxu0
  %819 = vdwg.mxu0
  %v820 = vadd.f32 %v815, 3.0
  %v821 = vmax.f32 %v820, 0.0
  %v822 = vmin.f32 %v821, 6.0
  %v823 = vmul.f32 %v822, 0.16666667
  %824 = vset.pattern.permute.xlu0 1
  %825 = vperm.xlu0 %824, %v558
  %v826 = vpop.permute.xlu0 %825
  %v828 = vlaneseq
  %v829 = vshrl.u32 %v828, 7
  %v830 = vsub.s32 0, %v829
  %v831 = vrot.slane %v823, %v830
  %v832 = vmul.f32 %v826, %v831
  %v833 = vadd.f32 %v729, %v832
  %v834 = vmul.f32 %v557, %v833
  %v835 = vadd.f32 %v834, 3.0
  %v836 = vmax.f32 %v835, 0.0
  %v837 = vmin.f32 %v836, 6.0
  %v838 = vmul.f32 %v834, %v837
  %v839 = vmul.f32 %v838, 0.16666667
  %v840 = vld [vmem:[%s11] sm:$0xf]
  %v841 = vld [vmem:[%s11 + $0x4] sm:$0xf]
  %v842 = vld [vmem:[%s11 + $0x8] sm:$0xf]
  %v843 = vld [vmem:[%s11 + $0xc] sm:$0xf]
  %v844 = vld [vmem:[%s11 + $0x10] sm:$0xf]
  %v845 = vld [vmem:[%s11 + $0x14] sm:$0xf]
  %v846 = vld [vmem:[%s11 + $0x18] sm:$0xf]
  %v847 = vld [vmem:[%s11 + $0x1c] sm:$0xf]
  %v848 = vld [vmem:[%s11 + $0x20] sm:$0xf]
  %v849 = vld [vmem:[%s11 + $0x24] sm:$0xf]
  %v850 = vld [vmem:[%s11 + $0x28] sm:$0xf]
  %v851 = vld [vmem:[%s11 + $0x2c] sm:$0xf]
  %v852 = vpack.c.bf16 %v839, %v839
  %v853 = vld [vmem:[%s12] sm:$0x1]
  %v855 = vlaneseq
  %v856 = vshrl.u32 %v855, 7
  %v857 = vsub.s32 0, %v856
  %v858 = vrot.slane %v853, %v857
  %v872 = vunpack.c.l.b16 %v840
  %v873 = vunpack.c.l.b16 %v841
  %v874 = vunpack.c.l.b16 %v842
  %v875 = vunpack.c.l.b16 %v843
  %v876 = vunpack.c.l.b16 %v844
  %v877 = vunpack.c.l.b16 %v845
  %v878 = vunpack.c.l.b16 %v846
  %v879 = vunpack.c.l.b16 %v847
  %v880 = vunpack.c.l.b16 %v848
  %v881 = vunpack.c.l.b16 %v849
  %v882 = vunpack.c.l.b16 %v850
  %v883 = vunpack.c.l.b16 %v851
  %v884 = vpack.c.b16 %v873, %v872
  %v885 = vpack.c.b16 %v875, %v874
  %v886 = vpack.c.b16 %v877, %v876
  %v887 = vpack.c.b16 %v879, %v878
  %v888 = vpack.c.b16 %v881, %v880
  %v889 = vpack.c.b16 %v883, %v882
  %v897 = vsel %vm614, %v852, 0
  %899 = vmatprep.subr.bf16.mxu0 0
  %900 = vmatpush1.bf16.msra.mxu0 %v884
  %901 = vmatprep.subr.bf16.mxu0 0
  %902 = vmatpush1.bf16.msra.mxu0 %v885
  %903 = vmatprep.subr.bf16.mxu0 0
  %904 = vmatpush1.bf16.msra.mxu0 %v886
  %905 = vmatprep.subr.bf16.mxu0 0
  %906 = vmatpush1.bf16.msra.mxu0 %v887
  %907 = vmatprep.subr.bf16.mxu0 0
  %908 = vmatpush1.bf16.msra.mxu0 %v888
  %909 = vmatprep.subr.bf16.mxu0 0
  %910 = vmatpush1.bf16.msra.mxu0 %v889
  %911 = vmatprep.subr.bf16.mxu0 0
  %912 = vmatpush1.bf16.msra.mxu0 0
  %913 = vmatprep.subr.bf16.mxu0 0
  %914 = vmatpush1.bf16.msra.mxu0 0
  %915 = vmatprep.subr.bf16.mxu0 0
  %916 = vmatpush1.bf16.msra.mxu0 0
  %917 = vmatprep.subr.bf16.mxu0 0
  %918 = vmatpush1.bf16.msra.mxu0 0
  %919 = vmatprep.subr.bf16.mxu0 0
  %920 = vmatpush1.bf16.msra.mxu0 0
  %921 = vmatprep.subr.bf16.mxu0 0
  %922 = vmatpush1.bf16.msra.mxu0 0
  %923 = vmatprep.subr.bf16.mxu0 0
  %924 = vmatpush1.bf16.msra.mxu0 0
  %925 = vmatprep.subr.bf16.mxu0 0
  %926 = vmatpush1.bf16.msra.mxu0 0
  %927 = vmatprep.subr.bf16.mxu0 0
  %928 = vmatpush1.bf16.msra.mxu0 0
  %929 = vmatprep.subr.bf16.mxu0 0
  %930 = vmatpush1.bf16.msra.mxu0 0
  %931 = vmatprep.mubr.bf16.mxu0 0
  %932 = vmatmul.mubr.bf16.gmra.mrb[0].mxu0 %v897
  %v933 = vpop.f32.mrb[0].mxu0
  %v934 = vadd.f32 %v858, %v933
  %v935 = vpop.f32.mrb[0].mxu0
  %v936 = vpop.f32.mrb[0].mxu0
  %v937 = vpop.f32.mrb[0].mxu0
  %938 = vdwg.mxu0
  %vm939 = vcmask 386048
  %940 = vst.msk [vmem:[%s13] sm:$0x3] %vm939, %v934
  // Predicated region
  $region54: #{_lambda_.12} parent=0 // pred_check
    _
  $region55: #{_lambda_.12} parent=0 // pred_check_branch
    %942 = sbr.rel (0) target = $region57
  $region56: #{_lambda_.12} parent=0 // pred_region
    _
  $region57: #{_lambda_.12} parent=0 // pred_fallthru
    _
  // Predicated region
  $region58: #{_lambda_.12} parent=0 // pred_check
    _
  $region59: #{_lambda_.12} parent=0 // pred_check_branch
    %944 = sbr.rel (0) target = $region61
  $region60: #{_lambda_.12} parent=0 // pred_region
    _
  $region61: #{_lambda_.12} parent=0 // pred_fallthru
    _

// kernel: _lambda_.13
$region0: #{_lambda_.13}
  #allocation0 [shape = 'u32[]', space=smem, size = 0x4, offset = 0x4, fixed_abs, tag = 'smem constant byte address 0x4 - core index']
  #allocation1 [shape = 'u32[144,128]{1,0:T(1,128)}', space=vmem, size = 0x12000, scoped, tag = 'internal scratch']
  %s0 = inlined_call_operand.vmem [shape: f32[2,48], index: 0, kind: input, shape index: {}]
  %s1 = inlined_call_operand.vmem [shape: bf16[48,96], index: 1, kind: input, shape index: {}]
  %s2 = inlined_call_operand.vmem [shape: f32[1,96], index: 2, kind: input, shape index: {}]
  %s3 = inlined_call_operand.vmem [shape: bf16[96,1280], index: 3, kind: input, shape index: {}]
  %s4 = inlined_call_operand.vmem [shape: f32[1,1280], index: 4, kind: input, shape index: {}]
  %s5 = inlined_call_operand.vmem [shape: bf16[1280,16], index: 5, kind: input, shape index: {}]
  %s6 = inlined_call_operand.vmem [shape: f32[1,16], index: 6, kind: input, shape index: {}]
  %s7 = inlined_call_operand.hbm [shape: f32[2,16], index: 7, kind: output, shape index: {}]
  %s8 = sld [smem:[#allocation0]]
  $region38: #{_lambda_.13} parent=0
    _
  %s10 = ssub.s32 1, %s8
  %s11 = scalar_select 0, %s10, %s8
  $region1: #{_lambda_.13} parent=0
    #allocation2 [shape = 'u8[1024]{0}', space=vmem, size = 0x400, scoped, tag = 'output window, operand 0, single buffered']
    #allocation3 [shape = 's32[1]{0}', space=sflag, size = 0x4, scoped, tag = 'scoped memory for _lambda_.13']
    %12 = vsyncpa [#allocation3], 0
    // Predicated region
    $region2: #{_lambda_.13} parent=1 // pred_check
      _
    $region3: #{_lambda_.13} parent=1 // pred_check_branch
      %14 = sbr.rel (0) target = $region5
    $region4: #{_lambda_.13} parent=1 // pred_region
      _
    $region5: #{_lambda_.13} parent=1 // pred_fallthru
      _
    // Predicated region
    $region6: #{_lambda_.13} parent=1 // pred_check
      _
    $region7: #{_lambda_.13} parent=1 // pred_check_branch
      %16 = sbr.rel (0) target = $region9
    $region8: #{_lambda_.13} parent=1 // pred_region
      _
    $region9: #{_lambda_.13} parent=1 // pred_fallthru
      _
    // Predicated region
    $region10: #{_lambda_.13} parent=1 // pred_check
      _
    $region11: #{_lambda_.13} parent=1 // pred_check_branch
      %18 = sbr.rel (0) target = $region13
    $region12: #{_lambda_.13} parent=1 // pred_region
      _
    $region13: #{_lambda_.13} parent=1 // pred_fallthru
      _
    // Predicated region
    $region14: #{_lambda_.13} parent=1 // pred_check
      _
    $region15: #{_lambda_.13} parent=1 // pred_check_branch
      %20 = sbr.rel (0) target = $region17
    $region16: #{_lambda_.13} parent=1 // pred_region
      _
    $region17: #{_lambda_.13} parent=1 // pred_fallthru
      _
    // Predicated region
    $region18: #{_lambda_.13} parent=1 // pred_check
      _
    $region19: #{_lambda_.13} parent=1 // pred_check_branch
      %22 = sbr.rel (0) target = $region21
    $region20: #{_lambda_.13} parent=1 // pred_region
      _
    $region21: #{_lambda_.13} parent=1 // pred_fallthru
      _
    // Predicated region
    $region22: #{_lambda_.13} parent=1 // pred_check
      _
    $region23: #{_lambda_.13} parent=1 // pred_check_branch
      %24 = sbr.rel (0) target = $region25
    $region24: #{_lambda_.13} parent=1 // pred_region
      _
    $region25: #{_lambda_.13} parent=1 // pred_fallthru
      _
    // Predicated region
    $region26: #{_lambda_.13} parent=1 // pred_check
      _
    $region27: #{_lambda_.13} parent=1 // pred_check_branch
      %26 = sbr.rel (0) target = $region29
    $region28: #{_lambda_.13} parent=1 // pred_region
      _
    $region29: #{_lambda_.13} parent=1 // pred_fallthru
      _
    %v28 = vld [vmem:[%s0] sm:$0x3]
    %v29 = vld [vmem:[%s1] sm:$0xf]
    %v30 = vld [vmem:[%s1 + $0x4] sm:$0xf]
    %v31 = vld [vmem:[%s1 + $0x8] sm:$0xf]
    %v32 = vld [vmem:[%s1 + $0xc] sm:$0xf]
    %v33 = vld [vmem:[%s1 + $0x10] sm:$0xf]
    %v34 = vld [vmem:[%s1 + $0x14] sm:$0xf]
    %v35 = vpack.c.bf16 %v28, %v28
    %v36 = vld [vmem:[%s2] sm:$0x1]
    %v38 = vlaneseq
    %v39 = vshrl.u32 %v38, 7
    %v40 = vsub.s32 0, %v39
    %v41 = vrot.slane %v36, %v40
    %v49 = vunpack.c.l.b16 %v29
    %v50 = vunpack.c.l.b16 %v30
    %v51 = vunpack.c.l.b16 %v31
    %v52 = vunpack.c.l.b16 %v32
    %v53 = vunpack.c.l.b16 %v33
    %v54 = vunpack.c.l.b16 %v34
    %v55 = vpack.c.b16 %v50, %v49
    %v56 = vpack.c.b16 %v52, %v51
    %v57 = vpack.c.b16 %v54, %v53
    %vm61 = vcmask 392192
    %v63 = vsel %vm61, %v35, 0
    %65 = vmatprep.subr.bf16.mxu0 0
    %66 = vmatpush1.bf16.msra.mxu0 %v55
    %67 = vmatprep.subr.bf16.mxu0 0
    %68 = vmatpush1.bf16.msra.mxu0 %v56
    %69 = vmatprep.subr.bf16.mxu0 0
    %70 = vmatpush1.bf16.msra.mxu0 %v57
    %71 = vmatprep.subr.bf16.mxu0 0
    %72 = vmatpush1.bf16.msra.mxu0 0
    %73 = vmatprep.subr.bf16.mxu0 0
    %74 = vmatpush1.bf16.msra.mxu0 0
    %75 = vmatprep.subr.bf16.mxu0 0
    %76 = vmatpush1.bf16.msra.mxu0 0
    %77 = vmatprep.subr.bf16.mxu0 0
    %78 = vmatpush1.bf16.msra.mxu0 0
    %79 = vmatprep.subr.bf16.mxu0 0
    %80 = vmatpush1.bf16.msra.mxu0 0
    %81 = vmatprep.subr.bf16.mxu0 0
    %82 = vmatpush1.bf16.msra.mxu0 0
    %83 = vmatprep.subr.bf16.mxu0 0
    %84 = vmatpush1.bf16.msra.mxu0 0
    %85 = vmatprep.subr.bf16.mxu0 0
    %86 = vmatpush1.bf16.msra.mxu0 0
    %87 = vmatprep.subr.bf16.mxu0 0
    %88 = vmatpush1.bf16.msra.mxu0 0
    %89 = vmatprep.subr.bf16.mxu0 0
    %90 = vmatpush1.bf16.msra.mxu0 0
    %91 = vmatprep.subr.bf16.mxu0 0
    %92 = vmatpush1.bf16.msra.mxu0 0
    %93 = vmatprep.subr.bf16.mxu0 0
    %94 = vmatpush1.bf16.msra.mxu0 0
    %95 = vmatprep.subr.bf16.mxu0 0
    %96 = vmatpush1.bf16.msra.mxu0 0
    %97 = vmatprep.mubr.bf16.mxu0 0
    %98 = vmatmul.mubr.bf16.gmra.mrb[0].mxu0 %v63
    %v99 = vpop.f32.mrb[0].mxu0
    %v100 = vadd.f32 %v41, %v99
    %v101 = vpop.f32.mrb[0].mxu0
    %v102 = vpop.f32.mrb[0].mxu0
    %v103 = vpop.f32.mrb[0].mxu0
    %104 = vdwg.mxu0
    %v105 = vadd.f32 %v100, 3.0
    %v106 = vmax.f32 %v105, 0.0
    %v107 = vmin.f32 %v106, 6.0
    %v108 = vmul.f32 %v100, %v107
    %v109 = vmul.f32 %v108, 0.16666667
    %v110 = vld [vmem:[%s3] sm:$0xff]
    %v111 = vld [vmem:[%s3 + $0x8] sm:$0xff]
    %v112 = vld [vmem:[%s3 + $0x10] sm:$0xff]
    %v113 = vld [vmem:[%s3 + $0x18] sm:$0xff]
    %v114 = vld [vmem:[%s3 + $0x20] sm:$0xff]
    %v115 = vld [vmem:[%s3 + $0x28] sm:$0xff]
    %v116 = vld [vmem:[%s3 + $0x30] sm:$0xff]
    %v117 = vld [vmem:[%s3 + $0x38] sm:$0xff]
    %v118 = vld [vmem:[%s3 + $0x40] sm:$0xff]
    %v119 = vld [vmem:[%s3 + $0x48] sm:$0xff]
    %v120 = vld [vmem:[%s3 + $0x50] sm:$0xff]
    %v121 = vld [vmem:[%s3 + $0x58] sm:$0xff]
    %v122 = vld [vmem:[%s3 + $0x60] sm:$0xff]
    %v123 = vld [vmem:[%s3 + $0x68] sm:$0xff]
    %v124 = vld [vmem:[%s3 + $0x70] sm:$0xff]
    %v125 = vld [vmem:[%s3 + $0x78] sm:$0xff]
    %v126 = vld [vmem:[%s3 + $0x80] sm:$0xff]
    %v127 = vld [vmem:[%s3 + $0x88] sm:$0xff]
    %v128 = vld [vmem:[%s3 + $0x90] sm:$0xff]
    %v129 = vld [vmem:[%s3 + $0x98] sm:$0xff]
    %v130 = vld [vmem:[%s3 + $0xa0] sm:$0xff]
    %v131 = vld [vmem:[%s3 + $0xa8] sm:$0xff]
    %v132 = vld [vmem:[%s3 + $0xb0] sm:$0xff]
    %v133 = vld [vmem:[%s3 + $0xb8] sm:$0xff]
    %v134 = vld [vmem:[%s3 + $0xc0] sm:$0xff]
    %v135 = vld [vmem:[%s3 + $0xc8] sm:$0xff]
    %v136 = vld [vmem:[%s3 + $0xd0] sm:$0xff]
    %v137 = vld [vmem:[%s3 + $0xd8] sm:$0xff]
    %v138 = vld [vmem:[%s3 + $0xe0] sm:$0xff]
    %v139 = vld [vmem:[%s3 + $0xe8] sm:$0xff]
    %v140 = vld [vmem:[%s3 + $0xf0] sm:$0xff]
    %v141 = vld [vmem:[%s3 + $0xf8] sm:$0xff]
    %v142 = vld [vmem:[%s3 + $0x100] sm:$0xff]
    %v143 = vld [vmem:[%s3 + $0x108] sm:$0xff]
    %v144 = vld [vmem:[%s3 + $0x110] sm:$0xff]
    %v145 = vld [vmem:[%s3 + $0x118] sm:$0xff]
    %v146 = vld [vmem:[%s3 + $0x120] sm:$0xff]
    %v147 = vld [vmem:[%s3 + $0x128] sm:$0xff]
    %v148 = vld [vmem:[%s3 + $0x130] sm:$0xff]
    %v149 = vld [vmem:[%s3 + $0x138] sm:$0xff]
    %v150 = vld [vmem:[%s3 + $0x140] sm:$0xff]
    %v151 = vld [vmem:[%s3 + $0x148] sm:$0xff]
    %v152 = vld [vmem:[%s3 + $0x150] sm:$0xff]
    %v153 = vld [vmem:[%s3 + $0x158] sm:$0xff]
    %v154 = vld [vmem:[%s3 + $0x160] sm:$0xff]
    %v155 = vld [vmem:[%s3 + $0x168] sm:$0xff]
    %v156 = vld [vmem:[%s3 + $0x170] sm:$0xff]
    %v157 = vld [vmem:[%s3 + $0x178] sm:$0xff]
    %v158 = vld [vmem:[%s3 + $0x180] sm:$0xff]
    %v159 = vld [vmem:[%s3 + $0x188] sm:$0xff]
    %v160 = vld [vmem:[%s3 + $0x190] sm:$0xff]
    %v161 = vld [vmem:[%s3 + $0x198] sm:$0xff]
    %v162 = vld [vmem:[%s3 + $0x1a0] sm:$0xff]
    %v163 = vld [vmem:[%s3 + $0x1a8] sm:$0xff]
    %v164 = vld [vmem:[%s3 + $0x1b0] sm:$0xff]
    %v165 = vld [vmem:[%s3 + $0x1b8] sm:$0xff]
    %v166 = vld [vmem:[%s3 + $0x1c0] sm:$0xff]
    %v167 = vld [vmem:[%s3 + $0x1c8] sm:$0xff]
    %v168 = vld [vmem:[%s3 + $0x1d0] sm:$0xff]
    %v169 = vld [vmem:[%s3 + $0x1d8] sm:$0xff]
    %v170 = vld [vmem:[%s4] sm:$0xff]
    %v171 = vld [vmem:[%s4 + $0x8] sm:$0x3]
    %v172 = vld [vmem:[%s5] sm:$0xf]
    %v173 = vld [vmem:[%s5 + $0x4] sm:$0xf]
    %v174 = vld [vmem:[%s5 + $0x8] sm:$0xf]
    %v175 = vld [vmem:[%s5 + $0xc] sm:$0xf]
    %v176 = vld [vmem:[%s5 + $0x10] sm:$0xf]
    %v177 = vld [vmem:[%s5 + $0x14] sm:$0xf]
    %v178 = vld [vmem:[%s5 + $0x18] sm:$0xf]
    %v179 = vld [vmem:[%s5 + $0x1c] sm:$0xf]
    %v180 = vld [vmem:[%s5 + $0x20] sm:$0xf]
    %v181 = vld [vmem:[%s5 + $0x24] sm:$0xf]
    %v182 = vld [vmem:[%s5 + $0x28] sm:$0xf]
    %v183 = vld [vmem:[%s5 + $0x2c] sm:$0xf]
    %v184 = vld [vmem:[%s5 + $0x30] sm:$0xf]
    %v185 = vld [vmem:[%s5 + $0x34] sm:$0xf]
    %v186 = vld [vmem:[%s5 + $0x38] sm:$0xf]
    %v187 = vld [vmem:[%s5 + $0x3c] sm:$0xf]
    %v188 = vld [vmem:[%s5 + $0x40] sm:$0xf]
    %v189 = vld [vmem:[%s5 + $0x44] sm:$0xf]
    %v190 = vld [vmem:[%s5 + $0x48] sm:$0xf]
    %v191 = vld [vmem:[%s5 + $0x4c] sm:$0xf]
    %v192 = vld [vmem:[%s5 + $0x50] sm:$0xf]
    %v193 = vld [vmem:[%s5 + $0x54] sm:$0xf]
    %v194 = vld [vmem:[%s5 + $0x58] sm:$0xf]
    %v195 = vld [vmem:[%s5 + $0x5c] sm:$0xf]
    %v196 = vld [vmem:[%s5 + $0x60] sm:$0xf]
    %v197 = vld [vmem:[%s5 + $0x64] sm:$0xf]
    %v198 = vld [vmem:[%s5 + $0x68] sm:$0xf]
    %v199 = vld [vmem:[%s5 + $0x6c] sm:$0xf]
    %v200 = vld [vmem:[%s5 + $0x70] sm:$0xf]
    %v201 = vld [vmem:[%s5 + $0x74] sm:$0xf]
    %v202 = vld [vmem:[%s5 + $0x78] sm:$0xf]
    %v203 = vld [vmem:[%s5 + $0x7c] sm:$0xf]
    %v204 = vld [vmem:[%s5 + $0x80] sm:$0xf]
    %v205 = vld [vmem:[%s5 + $0x84] sm:$0xf]
    %v206 = vld [vmem:[%s5 + $0x88] sm:$0xf]
    %v207 = vld [vmem:[%s5 + $0x8c] sm:$0xf]
    %v208 = vld [vmem:[%s5 + $0x90] sm:$0xf]
    %v209 = vld [vmem:[%s5 + $0x94] sm:$0xf]
    %v210 = vld [vmem:[%s5 + $0x98] sm:$0xf]
    %v211 = vld [vmem:[%s5 + $0x9c] sm:$0xf]
    %v212 = vld [vmem:[%s5 + $0xa0] sm:$0xf]
    %v213 = vld [vmem:[%s5 + $0xa4] sm:$0xf]
    %v214 = vld [vmem:[%s5 + $0xa8] sm:$0xf]
    %v215 = vld [vmem:[%s5 + $0xac] sm:$0xf]
    %v216 = vld [vmem:[%s5 + $0xb0] sm:$0xf]
    %v217 = vld [vmem:[%s5 + $0xb4] sm:$0xf]
    %v218 = vld [vmem:[%s5 + $0xb8] sm:$0xf]
    %v219 = vld [vmem:[%s5 + $0xbc] sm:$0xf]
    %v220 = vld [vmem:[%s5 + $0xc0] sm:$0xf]
    %v221 = vld [vmem:[%s5 + $0xc4] sm:$0xf]
    %v222 = vld [vmem:[%s5 + $0xc8] sm:$0xf]
    %v223 = vld [vmem:[%s5 + $0xcc] sm:$0xf]
    %v224 = vld [vmem:[%s5 + $0xd0] sm:$0xf]
    %v225 = vld [vmem:[%s5 + $0xd4] sm:$0xf]
    %v226 = vld [vmem:[%s5 + $0xd8] sm:$0xf]
    %v227 = vld [vmem:[%s5 + $0xdc] sm:$0xf]
    %v228 = vld [vmem:[%s5 + $0xe0] sm:$0xf]
    %v229 = vld [vmem:[%s5 + $0xe4] sm:$0xf]
    %v230 = vld [vmem:[%s5 + $0xe8] sm:$0xf]
    %v231 = vld [vmem:[%s5 + $0xec] sm:$0xf]
    %v232 = vld [vmem:[%s5 + $0xf0] sm:$0xf]
    %v233 = vld [vmem:[%s5 + $0xf4] sm:$0xf]
    %v234 = vld [vmem:[%s5 + $0xf8] sm:$0xf]
    %v235 = vld [vmem:[%s5 + $0xfc] sm:$0xf]
    %v236 = vld [vmem:[%s5 + $0x100] sm:$0xf]
    %v237 = vld [vmem:[%s5 + $0x104] sm:$0xf]
    %v238 = vld [vmem:[%s5 + $0x108] sm:$0xf]
    %v239 = vld [vmem:[%s5 + $0x10c] sm:$0xf]
    %v240 = vld [vmem:[%s5 + $0x110] sm:$0xf]
    %v241 = vld [vmem:[%s5 + $0x114] sm:$0xf]
    %v242 = vld [vmem:[%s5 + $0x118] sm:$0xf]
    %v243 = vld [vmem:[%s5 + $0x11c] sm:$0xf]
    %v244 = vld [vmem:[%s5 + $0x120] sm:$0xf]
    %v245 = vld [vmem:[%s5 + $0x124] sm:$0xf]
    %v246 = vld [vmem:[%s5 + $0x128] sm:$0xf]
    %v247 = vld [vmem:[%s5 + $0x12c] sm:$0xf]
    %v248 = vld [vmem:[%s5 + $0x130] sm:$0xf]
    %v249 = vld [vmem:[%s5 + $0x134] sm:$0xf]
    %v250 = vld [vmem:[%s5 + $0x138] sm:$0xf]
    %v251 = vld [vmem:[%s5 + $0x13c] sm:$0xf]
    %v252 = vld [vmem:[%s5 + $0x140] sm:$0xf]
    %v253 = vld [vmem:[%s5 + $0x144] sm:$0xf]
    %v254 = vld [vmem:[%s5 + $0x148] sm:$0xf]
    %v255 = vld [vmem:[%s5 + $0x14c] sm:$0xf]
    %v256 = vld [vmem:[%s5 + $0x150] sm:$0xf]
    %v257 = vld [vmem:[%s5 + $0x154] sm:$0xf]
    %v258 = vld [vmem:[%s5 + $0x158] sm:$0xf]
    %v259 = vld [vmem:[%s5 + $0x15c] sm:$0xf]
    %v260 = vld [vmem:[%s5 + $0x160] sm:$0xf]
    %v261 = vld [vmem:[%s5 + $0x164] sm:$0xf]
    %v262 = vld [vmem:[%s5 + $0x168] sm:$0xf]
    %v263 = vld [vmem:[%s5 + $0x16c] sm:$0xf]
    %v264 = vld [vmem:[%s5 + $0x170] sm:$0xf]
    %v265 = vld [vmem:[%s5 + $0x174] sm:$0xf]
    %v266 = vld [vmem:[%s5 + $0x178] sm:$0xf]
    %v267 = vld [vmem:[%s5 + $0x17c] sm:$0xf]
    %v268 = vld [vmem:[%s5 + $0x180] sm:$0xf]
    %v269 = vld [vmem:[%s5 + $0x184] sm:$0xf]
    %v270 = vld [vmem:[%s5 + $0x188] sm:$0xf]
    %v271 = vld [vmem:[%s5 + $0x18c] sm:$0xf]
    %v272 = vld [vmem:[%s5 + $0x190] sm:$0xf]
    %v273 = vld [vmem:[%s5 + $0x194] sm:$0xf]
    %v274 = vld [vmem:[%s5 + $0x198] sm:$0xf]
    %v275 = vld [vmem:[%s5 + $0x19c] sm:$0xf]
    %v276 = vld [vmem:[%s5 + $0x1a0] sm:$0xf]
    %v277 = vld [vmem:[%s5 + $0x1a4] sm:$0xf]
    %v278 = vld [vmem:[%s5 + $0x1a8] sm:$0xf]
    %v279 = vld [vmem:[%s5 + $0x1ac] sm:$0xf]
    %v280 = vld [vmem:[%s5 + $0x1b0] sm:$0xf]
    %v281 = vld [vmem:[%s5 + $0x1b4] sm:$0xf]
    %v282 = vld [vmem:[%s5 + $0x1b8] sm:$0xf]
    %v283 = vld [vmem:[%s5 + $0x1bc] sm:$0xf]
    %v284 = vld [vmem:[%s5 + $0x1c0] sm:$0xf]
    %v285 = vld [vmem:[%s5 + $0x1c4] sm:$0xf]
    %v286 = vld [vmem:[%s5 + $0x1c8] sm:$0xf]
    %v287 = vld [vmem:[%s5 + $0x1cc] sm:$0xf]
    %v288 = vld [vmem:[%s5 + $0x1d0] sm:$0xf]
    %v289 = vld [vmem:[%s5 + $0x1d4] sm:$0xf]
    %v290 = vld [vmem:[%s5 + $0x1d8] sm:$0xf]
    %v291 = vld [vmem:[%s5 + $0x1dc] sm:$0xf]
    %v292 = vld [vmem:[%s5 + $0x1e0] sm:$0xf]
    %v293 = vld [vmem:[%s5 + $0x1e4] sm:$0xf]
    %v294 = vld [vmem:[%s5 + $0x1e8] sm:$0xf]
    %v295 = vld [vmem:[%s5 + $0x1ec] sm:$0xf]
    %v296 = vld [vmem:[%s5 + $0x1f0] sm:$0xf]
    %v297 = vld [vmem:[%s5 + $0x1f4] sm:$0xf]
    %v298 = vld [vmem:[%s5 + $0x1f8] sm:$0xf]
    %v299 = vld [vmem:[%s5 + $0x1fc] sm:$0xf]
    %v300 = vld [vmem:[%s5 + $0x200] sm:$0xf]
    %v301 = vld [vmem:[%s5 + $0x204] sm:$0xf]
    %v302 = vld [vmem:[%s5 + $0x208] sm:$0xf]
    %v303 = vld [vmem:[%s5 + $0x20c] sm:$0xf]
    %v304 = vld [vmem:[%s5 + $0x210] sm:$0xf]
    %v305 = vld [vmem:[%s5 + $0x214] sm:$0xf]
    %v306 = vld [vmem:[%s5 + $0x218] sm:$0xf]
    %v307 = vld [vmem:[%s5 + $0x21c] sm:$0xf]
    %v308 = vld [vmem:[%s5 + $0x220] sm:$0xf]
    %v309 = vld [vmem:[%s5 + $0x224] sm:$0xf]
    %v310 = vld [vmem:[%s5 + $0x228] sm:$0xf]
    %v311 = vld [vmem:[%s5 + $0x22c] sm:$0xf]
    %v312 = vld [vmem:[%s5 + $0x230] sm:$0xf]
    %v313 = vld [vmem:[%s5 + $0x234] sm:$0xf]
    %v314 = vld [vmem:[%s5 + $0x238] sm:$0xf]
    %v315 = vld [vmem:[%s5 + $0x23c] sm:$0xf]
    %v316 = vld [vmem:[%s5 + $0x240] sm:$0xf]
    %v317 = vld [vmem:[%s5 + $0x244] sm:$0xf]
    %v318 = vld [vmem:[%s5 + $0x248] sm:$0xf]
    %v319 = vld [vmem:[%s5 + $0x24c] sm:$0xf]
    %v320 = vld [vmem:[%s5 + $0x250] sm:$0xf]
    %v321 = vld [vmem:[%s5 + $0x254] sm:$0xf]
    %v322 = vld [vmem:[%s5 + $0x258] sm:$0xf]
    %v323 = vld [vmem:[%s5 + $0x25c] sm:$0xf]
    %v324 = vld [vmem:[%s5 + $0x260] sm:$0xf]
    %v325 = vld [vmem:[%s5 + $0x264] sm:$0xf]
    %v326 = vld [vmem:[%s5 + $0x268] sm:$0xf]
    %v327 = vld [vmem:[%s5 + $0x26c] sm:$0xf]
    %v328 = vld [vmem:[%s5 + $0x270] sm:$0xf]
    %v329 = vld [vmem:[%s5 + $0x274] sm:$0xf]
    %v330 = vld [vmem:[%s5 + $0x278] sm:$0xf]
    %v331 = vld [vmem:[%s5 + $0x27c] sm:$0xf]
    %v332 = vld [vmem:[%s6] sm:$0x1]
    %v333 = vadd.f32 %v109, 0.0
    %v334 = vadd.f32 %v333, 3.0
    %v335 = vmax.f32 %v334, 0.0
    %v336 = vmin.f32 %v335, 6.0
    %v337 = vmul.f32 %v333, %v336
    %v338 = vmul.f32 %v337, 0.16666667
    %v339 = vpack.c.bf16 %v338, %v338
    %v400 = vunpack.c.l.b16 %v110
    %v401 = vunpack.c.h.b16 %v110
    %v402 = vunpack.c.l.b16 %v111
    %v403 = vunpack.c.h.b16 %v111
    %v404 = vunpack.c.l.b16 %v112
    %v405 = vunpack.c.h.b16 %v112
    %v406 = vunpack.c.l.b16 %v113
    %v407 = vunpack.c.h.b16 %v113
    %v408 = vunpack.c.l.b16 %v114
    %v409 = vunpack.c.h.b16 %v114
    %v410 = vunpack.c.l.b16 %v115
    %v411 = vunpack.c.h.b16 %v115
    %v412 = vunpack.c.l.b16 %v116
    %v413 = vunpack.c.h.b16 %v116
    %v414 = vunpack.c.l.b16 %v117
    %v415 = vunpack.c.h.b16 %v117
    %v416 = vunpack.c.l.b16 %v118
    %v417 = vunpack.c.h.b16 %v118
    %v418 = vunpack.c.l.b16 %v119
    %v419 = vunpack.c.h.b16 %v119
    %v420 = vunpack.c.l.b16 %v120
    %v421 = vunpack.c.h.b16 %v120
    %v422 = vunpack.c.l.b16 %v121
    %v423 = vunpack.c.h.b16 %v121
    %v424 = vunpack.c.l.b16 %v122
    %v425 = vunpack.c.h.b16 %v122
    %v426 = vunpack.c.l.b16 %v123
    %v427 = vunpack.c.h.b16 %v123
    %v428 = vunpack.c.l.b16 %v124
    %v429 = vunpack.c.h.b16 %v124
    %v430 = vunpack.c.l.b16 %v125
    %v431 = vunpack.c.h.b16 %v125
    %v432 = vunpack.c.l.b16 %v126
    %v433 = vunpack.c.h.b16 %v126
    %v434 = vunpack.c.l.b16 %v127
    %v435 = vunpack.c.h.b16 %v127
    %v436 = vunpack.c.l.b16 %v128
    %v437 = vunpack.c.h.b16 %v128
    %v438 = vunpack.c.l.b16 %v129
    %v439 = vunpack.c.h.b16 %v129
    %v440 = vunpack.c.l.b16 %v130
    %v441 = vunpack.c.h.b16 %v130
    %v442 = vunpack.c.l.b16 %v131
    %v443 = vunpack.c.h.b16 %v131
    %v444 = vunpack.c.l.b16 %v132
    %v445 = vunpack.c.h.b16 %v132
    %v446 = vunpack.c.l.b16 %v133
    %v447 = vunpack.c.h.b16 %v133
    %v448 = vunpack.c.l.b16 %v134
    %v449 = vunpack.c.h.b16 %v134
    %v450 = vunpack.c.l.b16 %v135
    %v451 = vunpack.c.h.b16 %v135
    %v452 = vunpack.c.l.b16 %v136
    %v453 = vunpack.c.h.b16 %v136
    %v454 = vunpack.c.l.b16 %v137
    %v455 = vunpack.c.h.b16 %v137
    %v456 = vunpack.c.l.b16 %v138
    %v457 = vunpack.c.h.b16 %v138
    %v458 = vunpack.c.l.b16 %v139
    %v459 = vunpack.c.h.b16 %v139
    %v460 = vunpack.c.l.b16 %v140
    %v461 = vunpack.c.h.b16 %v140
    %v462 = vunpack.c.l.b16 %v141
    %v463 = vunpack.c.h.b16 %v141
    %v464 = vunpack.c.l.b16 %v142
    %v465 = vunpack.c.h.b16 %v142
    %v466 = vunpack.c.l.b16 %v143
    %v467 = vunpack.c.h.b16 %v143
    %v468 = vunpack.c.l.b16 %v144
    %v469 = vunpack.c.h.b16 %v144
    %v470 = vunpack.c.l.b16 %v145
    %v471 = vunpack.c.h.b16 %v145
    %v472 = vunpack.c.l.b16 %v146
    %v473 = vunpack.c.h.b16 %v146
    %v474 = vunpack.c.l.b16 %v147
    %v475 = vunpack.c.h.b16 %v147
    %v476 = vunpack.c.l.b16 %v148
    %v477 = vunpack.c.h.b16 %v148
    %v478 = vunpack.c.l.b16 %v149
    %v479 = vunpack.c.h.b16 %v149
    %v480 = vunpack.c.l.b16 %v150
    %v481 = vunpack.c.h.b16 %v150
    %v482 = vunpack.c.l.b16 %v151
    %v483 = vunpack.c.h.b16 %v151
    %v484 = vunpack.c.l.b16 %v152
    %v485 = vunpack.c.h.b16 %v152
    %v486 = vunpack.c.l.b16 %v153
    %v487 = vunpack.c.h.b16 %v153
    %v488 = vunpack.c.l.b16 %v154
    %v489 = vunpack.c.h.b16 %v154
    %v490 = vunpack.c.l.b16 %v155
    %v491 = vunpack.c.h.b16 %v155
    %v492 = vunpack.c.l.b16 %v156
    %v493 = vunpack.c.h.b16 %v156
    %v494 = vunpack.c.l.b16 %v157
    %v495 = vunpack.c.h.b16 %v157
    %v496 = vunpack.c.l.b16 %v158
    %v497 = vunpack.c.h.b16 %v158
    %v498 = vunpack.c.l.b16 %v159
    %v499 = vunpack.c.h.b16 %v159
    %v500 = vunpack.c.l.b16 %v160
    %v501 = vunpack.c.h.b16 %v160
    %v502 = vunpack.c.l.b16 %v161
    %v503 = vunpack.c.h.b16 %v161
    %v504 = vunpack.c.l.b16 %v162
    %v505 = vunpack.c.h.b16 %v162
    %v506 = vunpack.c.l.b16 %v163
    %v507 = vunpack.c.h.b16 %v163
    %v508 = vunpack.c.l.b16 %v164
    %v509 = vunpack.c.h.b16 %v164
    %v510 = vunpack.c.l.b16 %v165
    %v511 = vunpack.c.h.b16 %v165
    %v512 = vunpack.c.l.b16 %v166
    %v513 = vunpack.c.h.b16 %v166
    %v514 = vunpack.c.l.b16 %v167
    %v515 = vunpack.c.h.b16 %v167
    %v516 = vunpack.c.l.b16 %v168
    %v517 = vunpack.c.h.b16 %v168
    %v518 = vunpack.c.l.b16 %v169
    %v519 = vunpack.c.h.b16 %v169
    %v520 = vpack.c.b16 %v410, %v400
    %v521 = vpack.c.b16 %v411, %v401
    %v522 = vpack.c.b16 %v412, %v402
    %v523 = vpack.c.b16 %v413, %v403
    %v524 = vpack.c.b16 %v414, %v404
    %v525 = vpack.c.b16 %v415, %v405
    %v526 = vpack.c.b16 %v416, %v406
    %v527 = vpack.c.b16 %v417, %v407
    %v528 = vpack.c.b16 %v418, %v408
    %v529 = vpack.c.b16 %v419, %v409
    %v530 = vpack.c.b16 %v430, %v420
    %v531 = vpack.c.b16 %v431, %v421
    %v532 = vpack.c.b16 %v432, %v422
    %v533 = vpack.c.b16 %v433, %v423
    %v534 = vpack.c.b16 %v434, %v424
    %v535 = vpack.c.b16 %v435, %v425
    %v536 = vpack.c.b16 %v436, %v426
    %v537 = vpack.c.b16 %v437, %v427
    %v538 = vpack.c.b16 %v438, %v428
    %v539 = vpack.c.b16 %v439, %v429
    %v540 = vpack.c.b16 %v450, %v440
    %v541 = vpack.c.b16 %v451, %v441
    %v542 = vpack.c.b16 %v452, %v442
    %v543 = vpack.c.b16 %v453, %v443
    %v544 = vpack.c.b16 %v454, %v444
    %v545 = vpack.c.b16 %v455, %v445
    %v546 = vpack.c.b16 %v456, %v446
    %v547 = vpack.c.b16 %v457, %v447
    %v548 = vpack.c.b16 %v458, %v448
    %v549 = vpack.c.b16 %v459, %v449
    %v550 = vpack.c.b16 %v470, %v460
    %v551 = vpack.c.b16 %v471, %v461
    %v552 = vpack.c.b16 %v472, %v462
    %v553 = vpack.c.b16 %v473, %v463
    %v554 = vpack.c.b16 %v474, %v464
    %v555 = vpack.c.b16 %v475, %v465
    %v556 = vpack.c.b16 %v476, %v466
    %v557 = vpack.c.b16 %v477, %v467
    %v558 = vpack.c.b16 %v478, %v468
    %v559 = vpack.c.b16 %v479, %v469
    %v560 = vpack.c.b16 %v490, %v480
    %v561 = vpack.c.b16 %v491, %v481
    %v562 = vpack.c.b16 %v492, %v482
    %v563 = vpack.c.b16 %v493, %v483
    %v564 = vpack.c.b16 %v494, %v484
    %v565 = vpack.c.b16 %v495, %v485
    %v566 = vpack.c.b16 %v496, %v486
    %v567 = vpack.c.b16 %v497, %v487
    %v568 = vpack.c.b16 %v498, %v488
    %v569 = vpack.c.b16 %v499, %v489
    %v570 = vpack.c.b16 %v510, %v500
    %v571 = vpack.c.b16 %v511, %v501
    %v572 = vpack.c.b16 %v512, %v502
    %v573 = vpack.c.b16 %v513, %v503
    %v574 = vpack.c.b16 %v514, %v504
    %v575 = vpack.c.b16 %v515, %v505
    %v576 = vpack.c.b16 %v516, %v506
    %v577 = vpack.c.b16 %v517, %v507
    %v578 = vpack.c.b16 %v518, %v508
    %v579 = vpack.c.b16 %v519, %v509
    %v642 = vlaneseq
    %v643 = vshrl.u32 %v642, 7
    %v644 = vsub.s32 0, %v643
    %v645 = vrot.slane %v170, %v644
    %v646 = vlaneseq
    %v647 = vshrl.u32 %v646, 7
    %v648 = vsub.s32 1, %v647
    %v649 = vrot.slane %v170, %v648
    %v650 = vlaneseq
    %v651 = vshrl.u32 %v650, 7
    %v652 = vsub.s32 2, %v651
    %v653 = vrot.slane %v170, %v652
    %v654 = vlaneseq
    %v655 = vshrl.u32 %v654, 7
    %v656 = vsub.s32 3, %v655
    %v657 = vrot.slane %v170, %v656
    %v658 = vlaneseq
    %v659 = vshrl.u32 %v658, 7
    %v660 = vsub.s32 4, %v659
    %v661 = vrot.slane %v170, %v660
    %v662 = vlaneseq
    %v663 = vshrl.u32 %v662, 7
    %v664 = vsub.s32 5, %v663
    %v665 = vrot.slane %v170, %v664
    %v666 = vlaneseq
    %v667 = vshrl.u32 %v666, 7
    %v668 = vsub.s32 6, %v667
    %v669 = vrot.slane %v170, %v668
    %v670 = vlaneseq
    %v671 = vshrl.u32 %v670, 7
    %v672 = vsub.s32 7, %v671
    %v673 = vrot.slane %v170, %v672
    %v674 = vlaneseq
    %v675 = vshrl.u32 %v674, 7
    %v676 = vsub.s32 0, %v675
    %v677 = vrot.slane %v171, %v676
    %v678 = vlaneseq
    %v679 = vshrl.u32 %v678, 7
    %v680 = vsub.s32 1, %v679
    %v681 = vrot.slane %v171, %v680
    %vm692 = vcmask 785408
    %v694 = vsel %vm692, %v339, 0
    %696 = vmatprep.subr.bf16.mxu0 %v521
    %697 = vmatpush1.bf16.msra.mxu0 %v520
    %698 = vmatprep.subr.bf16.mxu0 %v531
    %699 = vmatpush1.bf16.msra.mxu0 %v530
    %700 = vmatprep.subr.bf16.mxu0 %v541
    %701 = vmatpush1.bf16.msra.mxu0 %v540
    %702 = vmatprep.subr.bf16.mxu0 %v551
    %703 = vmatpush1.bf16.msra.mxu0 %v550
    %704 = vmatprep.subr.bf16.mxu0 %v561
    %705 = vmatpush1.bf16.msra.mxu0 %v560
    %706 = vmatprep.subr.bf16.mxu0 %v571
    %707 = vmatpush1.bf16.msra.mxu0 %v570
    %708 = vmatprep.subr.bf16.mxu0 0
    %709 = vmatpush1.bf16.msra.mxu0 0
    %710 = vmatprep.subr.bf16.mxu0 0
    %711 = vmatpush1.bf16.msra.mxu0 0
    %712 = vmatprep.subr.bf16.mxu0 0
    %713 = vmatpush1.bf16.msra.mxu0 0
    %714 = vmatprep.subr.bf16.mxu0 0
    %715 = vmatpush1.bf16.msra.mxu0 0
    %716 = vmatprep.subr.bf16.mxu0 0
    %717 = vmatpush1.bf16.msra.mxu0 0
    %718 = vmatprep.subr.bf16.mxu0 0
    %719 = vmatpush1.bf16.msra.mxu0 0
    %720 = vmatprep.subr.bf16.mxu0 0
    %721 = vmatpush1.bf16.msra.mxu0 0
    %722 = vmatprep.subr.bf16.mxu0 0
    %723 = vmatpush1.bf16.msra.mxu0 0
    %724 = vmatprep.subr.bf16.mxu0 0
    %725 = vmatpush1.bf16.msra.mxu0 0
    %726 = vmatprep.subr.bf16.mxu0 0
    %727 = vmatpush1.bf16.msra.mxu0 0
    %728 = vmatprep.mubr.bf16.mxu0 0
    %729 = vmatmul.mubr.bf16.gmra.mrb[0].mxu0 %v694
    %v730 = vpop.f32.mrb[0].mxu0
    %v731 = vadd.f32 %v645, %v730
    %v732 = vpop.f32.mrb[0].mxu0
    %v733 = vadd.f32 %v649, %v732
    %v734 = vpop.f32.mrb[0].mxu0
    %v735 = vpop.f32.mrb[0].mxu0
    %736 = vdwg.mxu0
    %737 = vmatprep.subr.bf16.mxu0 %v523
    %738 = vmatpush1.bf16.msra.mxu0 %v522
    %739 = vmatprep.subr.bf16.mxu0 %v533
    %740 = vmatpush1.bf16.msra.mxu0 %v532
    %741 = vmatprep.subr.bf16.mxu0 %v543
    %742 = vmatpush1.bf16.msra.mxu0 %v542
    %743 = vmatprep.subr.bf16.mxu0 %v553
    %744 = vmatpush1.bf16.msra.mxu0 %v552
    %745 = vmatprep.subr.bf16.mxu0 %v563
    %746 = vmatpush1.bf16.msra.mxu0 %v562
    %747 = vmatprep.subr.bf16.mxu0 %v573
    %748 = vmatpush1.bf16.msra.mxu0 %v572
    %749 = vmatprep.subr.bf16.mxu0 0
    %750 = vmatpush1.bf16.msra.mxu0 0
    %751 = vmatprep.subr.bf16.mxu0 0
    %752 = vmatpush1.bf16.msra.mxu0 0
    %753 = vmatprep.subr.bf16.mxu0 0
    %754 = vmatpush1.bf16.msra.mxu0 0
    %755 = vmatprep.subr.bf16.mxu0 0
    %756 = vmatpush1.bf16.msra.mxu0 0
    %757 = vmatprep.subr.bf16.mxu0 0
    %758 = vmatpush1.bf16.msra.mxu0 0
    %759 = vmatprep.subr.bf16.mxu0 0
    %760 = vmatpush1.bf16.msra.mxu0 0
    %761 = vmatprep.subr.bf16.mxu0 0
    %762 = vmatpush1.bf16.msra.mxu0 0
    %763 = vmatprep.subr.bf16.mxu0 0
    %764 = vmatpush1.bf16.msra.mxu0 0
    %765 = vmatprep.subr.bf16.mxu0 0
    %766 = vmatpush1.bf16.msra.mxu0 0
    %767 = vmatprep.subr.bf16.mxu0 0
    %768 = vmatpush1.bf16.msra.mxu0 0
    %769 = vmatprep.mubr.bf16.mxu0 0
    %770 = vmatmul.mubr.bf16.gmra.mrb[0].mxu0 %v694
    %v771 = vpop.f32.mrb[0].mxu0
    %v772 = vadd.f32 %v653, %v771
    %v773 = vpop.f32.mrb[0].mxu0
    %v774 = vadd.f32 %v657, %v773
    %v775 = vpop.f32.mrb[0].mxu0
    %v776 = vpop.f32.mrb[0].mxu0
    %777 = vdwg.mxu0
    %778 = vmatprep.subr.bf16.mxu0 %v525
    %779 = vmatpush1.bf16.msra.mxu0 %v524
    %780 = vmatprep.subr.bf16.mxu0 %v535
    %781 = vmatpush1.bf16.msra.mxu0 %v534
    %782 = vmatprep.subr.bf16.mxu0 %v545
    %783 = vmatpush1.bf16.msra.mxu0 %v544
    %784 = vmatprep.subr.bf16.mxu0 %v555
    %785 = vmatpush1.bf16.msra.mxu0 %v554
    %786 = vmatprep.subr.bf16.mxu0 %v565
    %787 = vmatpush1.bf16.msra.mxu0 %v564
    %788 = vmatprep.subr.bf16.mxu0 %v575
    %789 = vmatpush1.bf16.msra.mxu0 %v574
    %790 = vmatprep.subr.bf16.mxu0 0
    %791 = vmatpush1.bf16.msra.mxu0 0
    %792 = vmatprep.subr.bf16.mxu0 0
    %793 = vmatpush1.bf16.msra.mxu0 0
    %794 = vmatprep.subr.bf16.mxu0 0
    %795 = vmatpush1.bf16.msra.mxu0 0
    %796 = vmatprep.subr.bf16.mxu0 0
    %797 = vmatpush1.bf16.msra.mxu0 0
    %798 = vmatprep.subr.bf16.mxu0 0
    %799 = vmatpush1.bf16.msra.mxu0 0
    %800 = vmatprep.subr.bf16.mxu0 0
    %801 = vmatpush1.bf16.msra.mxu0 0
    %802 = vmatprep.subr.bf16.mxu0 0
    %803 = vmatpush1.bf16.msra.mxu0 0
    %804 = vmatprep.subr.bf16.mxu0 0
    %805 = vmatpush1.bf16.msra.mxu0 0
    %806 = vmatprep.subr.bf16.mxu0 0
    %807 = vmatpush1.bf16.msra.mxu0 0
    %808 = vmatprep.subr.bf16.mxu0 0
    %809 = vmatpush1.bf16.msra.mxu0 0
    %810 = vmatprep.mubr.bf16.mxu0 0
    %811 = vmatmul.mubr.bf16.gmra.mrb[0].mxu0 %v694
    %v812 = vpop.f32.mrb[0].mxu0
    %v813 = vadd.f32 %v661, %v812
    %v814 = vpop.f32.mrb[0].mxu0
    %v815 = vadd.f32 %v665, %v814
    %v816 = vpop.f32.mrb[0].mxu0
    %v817 = vpop.f32.mrb[0].mxu0
    %818 = vdwg.mxu0
    %819 = vmatprep.subr.bf16.mxu0 %v527
    %820 = vmatpush1.bf16.msra.mxu0 %v526
    %821 = vmatprep.subr.bf16.mxu0 %v537
    %822 = vmatpush1.bf16.msra.mxu0 %v536
    %823 = vmatprep.subr.bf16.mxu0 %v547
    %824 = vmatpush1.bf16.msra.mxu0 %v546
    %825 = vmatprep.subr.bf16.mxu0 %v557
    %826 = vmatpush1.bf16.msra.mxu0 %v556
    %827 = vmatprep.subr.bf16.mxu0 %v567
    %828 = vmatpush1.bf16.msra.mxu0 %v566
    %829 = vmatprep.subr.bf16.mxu0 %v577
    %830 = vmatpush1.bf16.msra.mxu0 %v576
    %831 = vmatprep.subr.bf16.mxu0 0
    %832 = vmatpush1.bf16.msra.mxu0 0
    %833 = vmatprep.subr.bf16.mxu0 0
    %834 = vmatpush1.bf16.msra.mxu0 0
    %835 = vmatprep.subr.bf16.mxu0 0
    %836 = vmatpush1.bf16.msra.mxu0 0
    %837 = vmatprep.subr.bf16.mxu0 0
    %838 = vmatpush1.bf16.msra.mxu0 0
    %839 = vmatprep.subr.bf16.mxu0 0
    %840 = vmatpush1.bf16.msra.mxu0 0
    %841 = vmatprep.subr.bf16.mxu0 0
    %842 = vmatpush1.bf16.msra.mxu0 0
    %843 = vmatprep.subr.bf16.mxu0 0
    %844 = vmatpush1.bf16.msra.mxu0 0
    %845 = vmatprep.subr.bf16.mxu0 0
    %846 = vmatpush1.bf16.msra.mxu0 0
    %847 = vmatprep.subr.bf16.mxu0 0
    %848 = vmatpush1.bf16.msra.mxu0 0
    %849 = vmatprep.subr.bf16.mxu0 0
    %850 = vmatpush1.bf16.msra.mxu0 0
    %851 = vmatprep.mubr.bf16.mxu0 0
    %852 = vmatmul.mubr.bf16.gmra.mrb[0].mxu0 %v694
    %v853 = vpop.f32.mrb[0].mxu0
    %v854 = vadd.f32 %v669, %v853
    %v855 = vpop.f32.mrb[0].mxu0
    %v856 = vadd.f32 %v673, %v855
    %v857 = vpop.f32.mrb[0].mxu0
    %v858 = vpop.f32.mrb[0].mxu0
    %859 = vdwg.mxu0
    %860 = vmatprep.subr.bf16.mxu0 %v529
    %861 = vmatpush1.bf16.msra.mxu0 %v528
    %862 = vmatprep.subr.bf16.mxu0 %v539
    %863 = vmatpush1.bf16.msra.mxu0 %v538
    %864 = vmatprep.subr.bf16.mxu0 %v549
    %865 = vmatpush1.bf16.msra.mxu0 %v548
    %866 = vmatprep.subr.bf16.mxu0 %v559
    %867 = vmatpush1.bf16.msra.mxu0 %v558
    %868 = vmatprep.subr.bf16.mxu0 %v569
    %869 = vmatpush1.bf16.msra.mxu0 %v568
    %870 = vmatprep.subr.bf16.mxu0 %v579
    %871 = vmatpush1.bf16.msra.mxu0 %v578
    %872 = vmatprep.subr.bf16.mxu0 0
    %873 = vmatpush1.bf16.msra.mxu0 0
    %874 = vmatprep.subr.bf16.mxu0 0
    %875 = vmatpush1.bf16.msra.mxu0 0
    %876 = vmatprep.subr.bf16.mxu0 0
    %877 = vmatpush1.bf16.msra.mxu0 0
    %878 = vmatprep.subr.bf16.mxu0 0
    %879 = vmatpush1.bf16.msra.mxu0 0
    %880 = vmatprep.subr.bf16.mxu0 0
    %881 = vmatpush1.bf16.msra.mxu0 0
    %882 = vmatprep.subr.bf16.mxu0 0
    %883 = vmatpush1.bf16.msra.mxu0 0
    %884 = vmatprep.subr.bf16.mxu0 0
    %885 = vmatpush1.bf16.msra.mxu0 0
    %886 = vmatprep.subr.bf16.mxu0 0
    %887 = vmatpush1.bf16.msra.mxu0 0
    %888 = vmatprep.subr.bf16.mxu0 0
    %889 = vmatpush1.bf16.msra.mxu0 0
    %890 = vmatprep.subr.bf16.mxu0 0
    %891 = vmatpush1.bf16.msra.mxu0 0
    %892 = vmatprep.mubr.bf16.mxu0 0
    %893 = vmatmul.mubr.bf16.gmra.mrb[0].mxu0 %v694
    %v894 = vpop.f32.mrb[0].mxu0
    %v895 = vadd.f32 %v677, %v894
    %v896 = vpop.f32.mrb[0].mxu0
    %v897 = vadd.f32 %v681, %v896
    %v898 = vpop.f32.mrb[0].mxu0
    %v899 = vpop.f32.mrb[0].mxu0
    %900 = vdwg.mxu0
    %v901 = vadd.f32 %v731, 3.0
    %v902 = vadd.f32 %v733, 3.0
    %v903 = vadd.f32 %v772, 3.0
    %v904 = vadd.f32 %v774, 3.0
    %v905 = vadd.f32 %v813, 3.0
    %v906 = vadd.f32 %v815, 3.0
    %v907 = vadd.f32 %v854, 3.0
    %v908 = vadd.f32 %v856, 3.0
    %v909 = vadd.f32 %v895, 3.0
    %v910 = vadd.f32 %v897, 3.0
    %v911 = vmax.f32 %v901, 0.0
    %v912 = vmax.f32 %v902, 0.0
    %v913 = vmax.f32 %v903, 0.0
    %v914 = vmax.f32 %v904, 0.0
    %v915 = vmax.f32 %v905, 0.0
    %v916 = vmax.f32 %v906, 0.0
    %v917 = vmax.f32 %v907, 0.0
    %v918 = vmax.f32 %v908, 0.0
    %v919 = vmax.f32 %v909, 0.0
    %v920 = vmax.f32 %v910, 0.0
    %v921 = vmin.f32 %v911, 6.0
    %v922 = vmin.f32 %v912, 6.0
    %v923 = vmin.f32 %v913, 6.0
    %v924 = vmin.f32 %v914, 6.0
    %v925 = vmin.f32 %v915, 6.0
    %v926 = vmin.f32 %v916, 6.0
    %v927 = vmin.f32 %v917, 6.0
    %v928 = vmin.f32 %v918, 6.0
    %v929 = vmin.f32 %v919, 6.0
    %v930 = vmin.f32 %v920, 6.0
    %v931 = vmul.f32 %v731, %v921
    %v932 = vmul.f32 %v733, %v922
    %v933 = vmul.f32 %v772, %v923
    %v934 = vmul.f32 %v774, %v924
    %v935 = vmul.f32 %v813, %v925
    %v936 = vmul.f32 %v815, %v926
    %v937 = vmul.f32 %v854, %v927
    %v938 = vmul.f32 %v856, %v928
    %v939 = vmul.f32 %v895, %v929
    %v940 = vmul.f32 %v897, %v930
    %v941 = vmul.f32 %v931, 0.16666667
    %v942 = vmul.f32 %v932, 0.16666667
    %v943 = vmul.f32 %v933, 0.16666667
    %v944 = vmul.f32 %v934, 0.16666667
    %v945 = vmul.f32 %v935, 0.16666667
    %v946 = vmul.f32 %v936, 0.16666667
    %v947 = vmul.f32 %v937, 0.16666667
    %v948 = vmul.f32 %v938, 0.16666667
    %v949 = vmul.f32 %v939, 0.16666667
    %v950 = vmul.f32 %v940, 0.16666667
    %v951 = vpack.c.bf16 %v941, %v941
    %v952 = vpack.c.bf16 %v942, %v942
    %v953 = vpack.c.bf16 %v943, %v943
    %v954 = vpack.c.bf16 %v944, %v944
    %v955 = vpack.c.bf16 %v945, %v945
    %v956 = vpack.c.bf16 %v946, %v946
    %v957 = vpack.c.bf16 %v947, %v947
    %v958 = vpack.c.bf16 %v948, %v948
    %v959 = vpack.c.bf16 %v949, %v949
    %v960 = vpack.c.bf16 %v950, %v950
    %v1121 = vunpack.c.l.b16 %v172
    %v1122 = vunpack.c.l.b16 %v173
    %v1123 = vunpack.c.l.b16 %v174
    %v1124 = vunpack.c.l.b16 %v175
    %v1125 = vunpack.c.l.b16 %v176
    %v1126 = vunpack.c.l.b16 %v177
    %v1127 = vunpack.c.l.b16 %v178
    %v1128 = vunpack.c.l.b16 %v179
    %v1129 = vunpack.c.l.b16 %v180
    %v1130 = vunpack.c.l.b16 %v181
    %v1131 = vunpack.c.l.b16 %v182
    %v1132 = vunpack.c.l.b16 %v183
    %v1133 = vunpack.c.l.b16 %v184
    %v1134 = vunpack.c.l.b16 %v185
    %v1135 = vunpack.c.l.b16 %v186
    %v1136 = vunpack.c.l.b16 %v187
    %v1137 = vunpack.c.l.b16 %v188
    %v1138 = vunpack.c.l.b16 %v189
    %v1139 = vunpack.c.l.b16 %v190
    %v1140 = vunpack.c.l.b16 %v191
    %v1141 = vunpack.c.l.b16 %v192
    %v1142 = vunpack.c.l.b16 %v193
    %v1143 = vunpack.c.l.b16 %v194
    %v1144 = vunpack.c.l.b16 %v195
    %v1145 = vunpack.c.l.b16 %v196
    %v1146 = vunpack.c.l.b16 %v197
    %v1147 = vunpack.c.l.b16 %v198
    %v1148 = vunpack.c.l.b16 %v199
    %v1149 = vunpack.c.l.b16 %v200
    %v1150 = vunpack.c.l.b16 %v201
    %v1151 = vunpack.c.l.b16 %v202
    %v1152 = vunpack.c.l.b16 %v203
    %v1153 = vunpack.c.l.b16 %v204
    %v1154 = vunpack.c.l.b16 %v205
    %v1155 = vunpack.c.l.b16 %v206
    %v1156 = vunpack.c.l.b16 %v207
    %v1157 = vunpack.c.l.b16 %v208
    %v1158 = vunpack.c.l.b16 %v209
    %v1159 = vunpack.c.l.b16 %v210
    %v1160 = vunpack.c.l.b16 %v211
    %v1161 = vunpack.c.l.b16 %v212
    %v1162 = vunpack.c.l.b16 %v213
    %v1163 = vunpack.c.l.b16 %v214
    %v1164 = vunpack.c.l.b16 %v215
    %v1165 = vunpack.c.l.b16 %v216
    %v1166 = vunpack.c.l.b16 %v217
    %v1167 = vunpack.c.l.b16 %v218
    %v1168 = vunpack.c.l.b16 %v219
    %v1169 = vunpack.c.l.b16 %v220
    %v1170 = vunpack.c.l.b16 %v221
    %v1171 = vunpack.c.l.b16 %v222
    %v1172 = vunpack.c.l.b16 %v223
    %v1173 = vunpack.c.l.b16 %v224
    %v1174 = vunpack.c.l.b16 %v225
    %v1175 = vunpack.c.l.b16 %v226
    %v1176 = vunpack.c.l.b16 %v227
    %v1177 = vunpack.c.l.b16 %v228
    %v1178 = vunpack.c.l.b16 %v229
    %v1179 = vunpack.c.l.b16 %v230
    %v1180 = vunpack.c.l.b16 %v231
    %v1181 = vunpack.c.l.b16 %v232
    %v1182 = vunpack.c.l.b16 %v233
    %v1183 = vunpack.c.l.b16 %v234
    %v1184 = vunpack.c.l.b16 %v235
    %v1185 = vunpack.c.l.b16 %v236
    %v1186 = vunpack.c.l.b16 %v237
    %v1187 = vunpack.c.l.b16 %v238
    %v1188 = vunpack.c.l.b16 %v239
    %v1189 = vunpack.c.l.b16 %v240
    %v1190 = vunpack.c.l.b16 %v241
    %v1191 = vunpack.c.l.b16 %v242
    %v1192 = vunpack.c.l.b16 %v243
    %v1193 = vunpack.c.l.b16 %v244
    %v1194 = vunpack.c.l.b16 %v245
    %v1195 = vunpack.c.l.b16 %v246
    %v1196 = vunpack.c.l.b16 %v247
    %v1197 = vunpack.c.l.b16 %v248
    %v1198 = vunpack.c.l.b16 %v249
    %v1199 = vunpack.c.l.b16 %v250
    %v1200 = vunpack.c.l.b16 %v251
    %v1201 = vunpack.c.l.b16 %v252
    %v1202 = vunpack.c.l.b16 %v253
    %v1203 = vunpack.c.l.b16 %v254
    %v1204 = vunpack.c.l.b16 %v255
    %v1205 = vunpack.c.l.b16 %v256
    %v1206 = vunpack.c.l.b16 %v257
    %v1207 = vunpack.c.l.b16 %v258
    %v1208 = vunpack.c.l.b16 %v259
    %v1209 = vunpack.c.l.b16 %v260
    %v1210 = vunpack.c.l.b16 %v261
    %v1211 = vunpack.c.l.b16 %v262
    %v1212 = vunpack.c.l.b16 %v263
    %v1213 = vunpack.c.l.b16 %v264
    %v1214 = vunpack.c.l.b16 %v265
    %v1215 = vunpack.c.l.b16 %v266
    %v1216 = vunpack.c.l.b16 %v267
    %v1217 = vunpack.c.l.b16 %v268
    %v1218 = vunpack.c.l.b16 %v269
    %v1219 = vunpack.c.l.b16 %v270
    %v1220 = vunpack.c.l.b16 %v271
    %v1221 = vunpack.c.l.b16 %v272
    %v1222 = vunpack.c.l.b16 %v273
    %v1223 = vunpack.c.l.b16 %v274
    %v1224 = vunpack.c.l.b16 %v275
    %v1225 = vunpack.c.l.b16 %v276
    %v1226 = vunpack.c.l.b16 %v277
    %v1227 = vunpack.c.l.b16 %v278
    %v1228 = vunpack.c.l.b16 %v279
    %v1229 = vunpack.c.l.b16 %v280
    %v1230 = vunpack.c.l.b16 %v281
    %v1231 = vunpack.c.l.b16 %v282
    %v1232 = vunpack.c.l.b16 %v283
    %v1233 = vunpack.c.l.b16 %v284
    %v1234 = vunpack.c.l.b16 %v285
    %v1235 = vunpack.c.l.b16 %v286
    %v1236 = vunpack.c.l.b16 %v287
    %v1237 = vunpack.c.l.b16 %v288
    %v1238 = vunpack.c.l.b16 %v289
    %v1239 = vunpack.c.l.b16 %v290
    %v1240 = vunpack.c.l.b16 %v291
    %v1241 = vunpack.c.l.b16 %v292
    %v1242 = vunpack.c.l.b16 %v293
    %v1243 = vunpack.c.l.b16 %v294
    %v1244 = vunpack.c.l.b16 %v295
    %v1245 = vunpack.c.l.b16 %v296
    %v1246 = vunpack.c.l.b16 %v297
    %v1247 = vunpack.c.l.b16 %v298
    %v1248 = vunpack.c.l.b16 %v299
    %v1249 = vunpack.c.l.b16 %v300
    %v1250 = vunpack.c.l.b16 %v301
    %v1251 = vunpack.c.l.b16 %v302
    %v1252 = vunpack.c.l.b16 %v303
    %v1253 = vunpack.c.l.b16 %v304
    %v1254 = vunpack.c.l.b16 %v305
    %v1255 = vunpack.c.l.b16 %v306
    %v1256 = vunpack.c.l.b16 %v307
    %v1257 = vunpack.c.l.b16 %v308
    %v1258 = vunpack.c.l.b16 %v309
    %v1259 = vunpack.c.l.b16 %v310
    %v1260 = vunpack.c.l.b16 %v311
    %v1261 = vunpack.c.l.b16 %v312
    %v1262 = vunpack.c.l.b16 %v313
    %v1263 = vunpack.c.l.b16 %v314
    %v1264 = vunpack.c.l.b16 %v315
    %v1265 = vunpack.c.l.b16 %v316
    %v1266 = vunpack.c.l.b16 %v317
    %v1267 = vunpack.c.l.b16 %v318
    %v1268 = vunpack.c.l.b16 %v319
    %v1269 = vunpack.c.l.b16 %v320
    %v1270 = vunpack.c.l.b16 %v321
    %v1271 = vunpack.c.l.b16 %v322
    %v1272 = vunpack.c.l.b16 %v323
    %v1273 = vunpack.c.l.b16 %v324
    %v1274 = vunpack.c.l.b16 %v325
    %v1275 = vunpack.c.l.b16 %v326
    %v1276 = vunpack.c.l.b16 %v327
    %v1277 = vunpack.c.l.b16 %v328
    %v1278 = vunpack.c.l.b16 %v329
    %v1279 = vunpack.c.l.b16 %v330
    %v1280 = vunpack.c.l.b16 %v331
    %v1281 = vpack.c.b16 %v1122, %v1121
    %v1282 = vpack.c.b16 %v1124, %v1123
    %v1283 = vpack.c.b16 %v1126, %v1125
    %v1284 = vpack.c.b16 %v1128, %v1127
    %v1285 = vpack.c.b16 %v1130, %v1129
    %v1286 = vpack.c.b16 %v1132, %v1131
    %v1287 = vpack.c.b16 %v1134, %v1133
    %v1288 = vpack.c.b16 %v1136, %v1135
    %v1289 = vpack.c.b16 %v1138, %v1137
    %v1290 = vpack.c.b16 %v1140, %v1139
    %v1291 = vpack.c.b16 %v1142, %v1141
    %v1292 = vpack.c.b16 %v1144, %v1143
    %v1293 = vpack.c.b16 %v1146, %v1145
    %v1294 = vpack.c.b16 %v1148, %v1147
    %v1295 = vpack.c.b16 %v1150, %v1149
    %v1296 = vpack.c.b16 %v1152, %v1151
    %v1297 = vpack.c.b16 %v1154, %v1153
    %v1298 = vpack.c.b16 %v1156, %v1155
    %v1299 = vpack.c.b16 %v1158, %v1157
    %v1300 = vpack.c.b16 %v1160, %v1159
    %v1301 = vpack.c.b16 %v1162, %v1161
    %v1302 = vpack.c.b16 %v1164, %v1163
    %v1303 = vpack.c.b16 %v1166, %v1165
    %v1304 = vpack.c.b16 %v1168, %v1167
    %v1305 = vpack.c.b16 %v1170, %v1169
    %v1306 = vpack.c.b16 %v1172, %v1171
    %v1307 = vpack.c.b16 %v1174, %v1173
    %v1308 = vpack.c.b16 %v1176, %v1175
    %v1309 = vpack.c.b16 %v1178, %v1177
    %v1310 = vpack.c.b16 %v1180, %v1179
    %v1311 = vpack.c.b16 %v1182, %v1181
    %v1312 = vpack.c.b16 %v1184, %v1183
    %v1313 = vpack.c.b16 %v1186, %v1185
    %v1314 = vpack.c.b16 %v1188, %v1187
    %v1315 = vpack.c.b16 %v1190, %v1189
    %v1316 = vpack.c.b16 %v1192, %v1191
    %v1317 = vpack.c.b16 %v1194, %v1193
    %v1318 = vpack.c.b16 %v1196, %v1195
    %v1319 = vpack.c.b16 %v1198, %v1197
    %v1320 = vpack.c.b16 %v1200, %v1199
    %v1321 = vpack.c.b16 %v1202, %v1201
    %v1322 = vpack.c.b16 %v1204, %v1203
    %v1323 = vpack.c.b16 %v1206, %v1205
    %v1324 = vpack.c.b16 %v1208, %v1207
    %v1325 = vpack.c.b16 %v1210, %v1209
    %v1326 = vpack.c.b16 %v1212, %v1211
    %v1327 = vpack.c.b16 %v1214, %v1213
    %v1328 = vpack.c.b16 %v1216, %v1215
    %v1329 = vpack.c.b16 %v1218, %v1217
    %v1330 = vpack.c.b16 %v1220, %v1219
    %v1331 = vpack.c.b16 %v1222, %v1221
    %v1332 = vpack.c.b16 %v1224, %v1223
    %v1333 = vpack.c.b16 %v1226, %v1225
    %v1334 = vpack.c.b16 %v1228, %v1227
    %v1335 = vpack.c.b16 %v1230, %v1229
    %v1336 = vpack.c.b16 %v1232, %v1231
    %v1337 = vpack.c.b16 %v1234, %v1233
    %v1338 = vpack.c.b16 %v1236, %v1235
    %v1339 = vpack.c.b16 %v1238, %v1237
    %v1340 = vpack.c.b16 %v1240, %v1239
    %v1341 = vpack.c.b16 %v1242, %v1241
    %v1342 = vpack.c.b16 %v1244, %v1243
    %v1343 = vpack.c.b16 %v1246, %v1245
    %v1344 = vpack.c.b16 %v1248, %v1247
    %v1345 = vpack.c.b16 %v1250, %v1249
    %v1346 = vpack.c.b16 %v1252, %v1251
    %v1347 = vpack.c.b16 %v1254, %v1253
    %v1348 = vpack.c.b16 %v1256, %v1255
    %v1349 = vpack.c.b16 %v1258, %v1257
    %v1350 = vpack.c.b16 %v1260, %v1259
    %v1351 = vpack.c.b16 %v1262, %v1261
    %v1352 = vpack.c.b16 %v1264, %v1263
    %v1353 = vpack.c.b16 %v1266, %v1265
    %v1354 = vpack.c.b16 %v1268, %v1267
    %v1355 = vpack.c.b16 %v1270, %v1269
    %v1356 = vpack.c.b16 %v1272, %v1271
    %v1357 = vpack.c.b16 %v1274, %v1273
    %v1358 = vpack.c.b16 %v1276, %v1275
    %v1359 = vpack.c.b16 %v1278, %v1277
    %v1360 = vpack.c.b16 %v1280, %v1279
    %1441 = vmatprep.subr.bf16.mxu0 0
    %1442 = vmatpush1.bf16.msra.mxu0 %v1281
    %1443 = vmatprep.subr.bf16.mxu0 0
    %1444 = vmatpush1.bf16.msra.mxu0 %v1282
    %1445 = vmatprep.subr.bf16.mxu0 0
    %1446 = vmatpush1.bf16.msra.mxu0 %v1283
    %1447 = vmatprep.subr.bf16.mxu0 0
    %1448 = vmatpush1.bf16.msra.mxu0 %v1284
    %1449 = vmatprep.subr.bf16.mxu0 0
    %1450 = vmatpush1.bf16.msra.mxu0 %v1285
    %1451 = vmatprep.subr.bf16.mxu0 0
    %1452 = vmatpush1.bf16.msra.mxu0 %v1286
    %1453 = vmatprep.subr.bf16.mxu0 0
    %1454 = vmatpush1.bf16.msra.mxu0 %v1287
    %1455 = vmatprep.subr.bf16.mxu0 0
    %1456 = vmatpush1.bf16.msra.mxu0 %v1288
    %1457 = vmatprep.subr.bf16.mxu0 0
    %1458 = vmatpush1.bf16.msra.mxu0 %v1289
    %1459 = vmatprep.subr.bf16.mxu0 0
    %1460 = vmatpush1.bf16.msra.mxu0 %v1290
    %1461 = vmatprep.subr.bf16.mxu0 0
    %1462 = vmatpush1.bf16.msra.mxu0 %v1291
    %1463 = vmatprep.subr.bf16.mxu0 0
    %1464 = vmatpush1.bf16.msra.mxu0 %v1292
    %1465 = vmatprep.subr.bf16.mxu0 0
    %1466 = vmatpush1.bf16.msra.mxu0 %v1293
    %1467 = vmatprep.subr.bf16.mxu0 0
    %1468 = vmatpush1.bf16.msra.mxu0 %v1294
    %1469 = vmatprep.subr.bf16.mxu0 0
    %1470 = vmatpush1.bf16.msra.mxu0 %v1295
    %1471 = vmatprep.subr.bf16.mxu0 0
    %1472 = vmatpush1.bf16.msra.mxu0 %v1296
    %1473 = vmatprep.mubr.bf16.mxu0 %v952
    %1474 = vmatmul.mubr.bf16.gmra.mrb[0].mxu0 %v951
    %v1475 = vpop.f32.mrb[0].mxu0
    %v1476 = vadd.f32 %v332, %v1475
    %v1477 = vpop.f32.mrb[0].mxu0
    %v1478 = vpop.f32.mrb[0].mxu0
    %v1479 = vpop.f32.mrb[0].mxu0
    %1480 = vdwg.mxu0
    %1481 = vmatprep.subr.bf16.mxu0 0
    %1482 = vmatpush1.bf16.msra.mxu0 %v1297
    %1483 = vmatprep.subr.bf16.mxu0 0
    %1484 = vmatpush1.bf16.msra.mxu0 %v1298
    %1485 = vmatprep.subr.bf16.mxu0 0
    %1486 = vmatpush1.bf16.msra.mxu0 %v1299
    %1487 = vmatprep.subr.bf16.mxu0 0
    %1488 = vmatpush1.bf16.msra.mxu0 %v1300
    %1489 = vmatprep.subr.bf16.mxu0 0
    %1490 = vmatpush1.bf16.msra.mxu0 %v1301
    %1491 = vmatprep.subr.bf16.mxu0 0
    %1492 = vmatpush1.bf16.msra.mxu0 %v1302
    %1493 = vmatprep.subr.bf16.mxu0 0
    %1494 = vmatpush1.bf16.msra.mxu0 %v1303
    %1495 = vmatprep.subr.bf16.mxu0 0
    %1496 = vmatpush1.bf16.msra.mxu0 %v1304
    %1497 = vmatprep.subr.bf16.mxu0 0
    %1498 = vmatpush1.bf16.msra.mxu0 %v1305
    %1499 = vmatprep.subr.bf16.mxu0 0
    %1500 = vmatpush1.bf16.msra.mxu0 %v1306
    %1501 = vmatprep.subr.bf16.mxu0 0
    %1502 = vmatpush1.bf16.msra.mxu0 %v1307
    %1503 = vmatprep.subr.bf16.mxu0 0
    %1504 = vmatpush1.bf16.msra.mxu0 %v1308
    %1505 = vmatprep.subr.bf16.mxu0 0
    %1506 = vmatpush1.bf16.msra.mxu0 %v1309
    %1507 = vmatprep.subr.bf16.mxu0 0
    %1508 = vmatpush1.bf16.msra.mxu0 %v1310
    %1509 = vmatprep.subr.bf16.mxu0 0
    %1510 = vmatpush1.bf16.msra.mxu0 %v1311
    %1511 = vmatprep.subr.bf16.mxu0 0
    %1512 = vmatpush1.bf16.msra.mxu0 %v1312
    %1513 = vmatprep.mubr.bf16.mxu0 %v954
    %1514 = vmatmul.mubr.bf16.gmra.mrb[0].mxu0 %v953
    %v1515 = vpop.f32.mrb[0].mxu0
    %v1516 = vadd.f32 %v1476, %v1515
    %v1517 = vpop.f32.mrb[0].mxu0
    %v1518 = vpop.f32.mrb[0].mxu0
    %v1519 = vpop.f32.mrb[0].mxu0
    %1520 = vdwg.mxu0
    %1521 = vmatprep.subr.bf16.mxu0 0
    %1522 = vmatpush1.bf16.msra.mxu0 %v1313
    %1523 = vmatprep.subr.bf16.mxu0 0
    %1524 = vmatpush1.bf16.msra.mxu0 %v1314
    %1525 = vmatprep.subr.bf16.mxu0 0
    %1526 = vmatpush1.bf16.msra.mxu0 %v1315
    %1527 = vmatprep.subr.bf16.mxu0 0
    %1528 = vmatpush1.bf16.msra.mxu0 %v1316
    %1529 = vmatprep.subr.bf16.mxu0 0
    %1530 = vmatpush1.bf16.msra.mxu0 %v1317
    %1531 = vmatprep.subr.bf16.mxu0 0
    %1532 = vmatpush1.bf16.msra.mxu0 %v1318
    %1533 = vmatprep.subr.bf16.mxu0 0
    %1534 = vmatpush1.bf16.msra.mxu0 %v1319
    %1535 = vmatprep.subr.bf16.mxu0 0
    %1536 = vmatpush1.bf16.msra.mxu0 %v1320
    %1537 = vmatprep.subr.bf16.mxu0 0
    %1538 = vmatpush1.bf16.msra.mxu0 %v1321
    %1539 = vmatprep.subr.bf16.mxu0 0
    %1540 = vmatpush1.bf16.msra.mxu0 %v1322
    %1541 = vmatprep.subr.bf16.mxu0 0
    %1542 = vmatpush1.bf16.msra.mxu0 %v1323
    %1543 = vmatprep.subr.bf16.mxu0 0
    %1544 = vmatpush1.bf16.msra.mxu0 %v1324
    %1545 = vmatprep.subr.bf16.mxu0 0
    %1546 = vmatpush1.bf16.msra.mxu0 %v1325
    %1547 = vmatprep.subr.bf16.mxu0 0
    %1548 = vmatpush1.bf16.msra.mxu0 %v1326
    %1549 = vmatprep.subr.bf16.mxu0 0
    %1550 = vmatpush1.bf16.msra.mxu0 %v1327
    %1551 = vmatprep.subr.bf16.mxu0 0
    %1552 = vmatpush1.bf16.msra.mxu0 %v1328
    %1553 = vmatprep.mubr.bf16.mxu0 %v956
    %1554 = vmatmul.mubr.bf16.gmra.mrb[0].mxu0 %v955
    %v1555 = vpop.f32.mrb[0].mxu0
    %v1556 = vadd.f32 %v1516, %v1555
    %v1557 = vpop.f32.mrb[0].mxu0
    %v1558 = vpop.f32.mrb[0].mxu0
    %v1559 = vpop.f32.mrb[0].mxu0
    %1560 = vdwg.mxu0
    %1561 = vmatprep.subr.bf16.mxu0 0
    %1562 = vmatpush1.bf16.msra.mxu0 %v1329
    %1563 = vmatprep.subr.bf16.mxu0 0
    %1564 = vmatpush1.bf16.msra.mxu0 %v1330
    %1565 = vmatprep.subr.bf16.mxu0 0
    %1566 = vmatpush1.bf16.msra.mxu0 %v1331
    %1567 = vmatprep.subr.bf16.mxu0 0
    %1568 = vmatpush1.bf16.msra.mxu0 %v1332
    %1569 = vmatprep.subr.bf16.mxu0 0
    %1570 = vmatpush1.bf16.msra.mxu0 %v1333
    %1571 = vmatprep.subr.bf16.mxu0 0
    %1572 = vmatpush1.bf16.msra.mxu0 %v1334
    %1573 = vmatprep.subr.bf16.mxu0 0
    %1574 = vmatpush1.bf16.msra.mxu0 %v1335
    %1575 = vmatprep.subr.bf16.mxu0 0
    %1576 = vmatpush1.bf16.msra.mxu0 %v1336
    %1577 = vmatprep.subr.bf16.mxu0 0
    %1578 = vmatpush1.bf16.msra.mxu0 %v1337
    %1579 = vmatprep.subr.bf16.mxu0 0
    %1580 = vmatpush1.bf16.msra.mxu0 %v1338
    %1581 = vmatprep.subr.bf16.mxu0 0
    %1582 = vmatpush1.bf16.msra.mxu0 %v1339
    %1583 = vmatprep.subr.bf16.mxu0 0
    %1584 = vmatpush1.bf16.msra.mxu0 %v1340
    %1585 = vmatprep.subr.bf16.mxu0 0
    %1586 = vmatpush1.bf16.msra.mxu0 %v1341
    %1587 = vmatprep.subr.bf16.mxu0 0
    %1588 = vmatpush1.bf16.msra.mxu0 %v1342
    %1589 = vmatprep.subr.bf16.mxu0 0
    %1590 = vmatpush1.bf16.msra.mxu0 %v1343
    %1591 = vmatprep.subr.bf16.mxu0 0
    %1592 = vmatpush1.bf16.msra.mxu0 %v1344
    %1593 = vmatprep.mubr.bf16.mxu0 %v958
    %1594 = vmatmul.mubr.bf16.gmra.mrb[0].mxu0 %v957
    %v1595 = vpop.f32.mrb[0].mxu0
    %v1596 = vadd.f32 %v1556, %v1595
    %v1597 = vpop.f32.mrb[0].mxu0
    %v1598 = vpop.f32.mrb[0].mxu0
    %v1599 = vpop.f32.mrb[0].mxu0
    %1600 = vdwg.mxu0
    %1601 = vmatprep.subr.bf16.mxu0 0
    %1602 = vmatpush1.bf16.msra.mxu0 %v1345
    %1603 = vmatprep.subr.bf16.mxu0 0
    %1604 = vmatpush1.bf16.msra.mxu0 %v1346
    %1605 = vmatprep.subr.bf16.mxu0 0
    %1606 = vmatpush1.bf16.msra.mxu0 %v1347
    %1607 = vmatprep.subr.bf16.mxu0 0
    %1608 = vmatpush1.bf16.msra.mxu0 %v1348
    %1609 = vmatprep.subr.bf16.mxu0 0
    %1610 = vmatpush1.bf16.msra.mxu0 %v1349
    %1611 = vmatprep.subr.bf16.mxu0 0
    %1612 = vmatpush1.bf16.msra.mxu0 %v1350
    %1613 = vmatprep.subr.bf16.mxu0 0
    %1614 = vmatpush1.bf16.msra.mxu0 %v1351
    %1615 = vmatprep.subr.bf16.mxu0 0
    %1616 = vmatpush1.bf16.msra.mxu0 %v1352
    %1617 = vmatprep.subr.bf16.mxu0 0
    %1618 = vmatpush1.bf16.msra.mxu0 %v1353
    %1619 = vmatprep.subr.bf16.mxu0 0
    %1620 = vmatpush1.bf16.msra.mxu0 %v1354
    %1621 = vmatprep.subr.bf16.mxu0 0
    %1622 = vmatpush1.bf16.msra.mxu0 %v1355
    %1623 = vmatprep.subr.bf16.mxu0 0
    %1624 = vmatpush1.bf16.msra.mxu0 %v1356
    %1625 = vmatprep.subr.bf16.mxu0 0
    %1626 = vmatpush1.bf16.msra.mxu0 %v1357
    %1627 = vmatprep.subr.bf16.mxu0 0
    %1628 = vmatpush1.bf16.msra.mxu0 %v1358
    %1629 = vmatprep.subr.bf16.mxu0 0
    %1630 = vmatpush1.bf16.msra.mxu0 %v1359
    %1631 = vmatprep.subr.bf16.mxu0 0
    %1632 = vmatpush1.bf16.msra.mxu0 %v1360
    %1633 = vmatprep.mubr.bf16.mxu0 %v960
    %1634 = vmatmul.mubr.bf16.gmra.mrb[0].mxu0 %v959
    %v1635 = vpop.f32.mrb[0].mxu0
    %v1636 = vadd.f32 %v1596, %v1635
    %v1637 = vpop.f32.mrb[0].mxu0
    %v1638 = vpop.f32.mrb[0].mxu0
    %v1639 = vpop.f32.mrb[0].mxu0
    %1640 = vdwg.mxu0
    %vm1641 = vcmask 122880
    %1642 = vst.msk [vmem:[#allocation2] sm:$0x1] %vm1641, %v1636
    %v1643 = vshrl.u32 %v339, 16
    %v1646 = vsel %vm692, %v1643, 0
    %1648 = vmatprep.subr.bf16.mxu0 %v521
    %1649 = vmatpush1.bf16.msra.mxu0 %v520
    %1650 = vmatprep.subr.bf16.mxu0 %v531
    %1651 = vmatpush1.bf16.msra.mxu0 %v530
    %1652 = vmatprep.subr.bf16.mxu0 %v541
    %1653 = vmatpush1.bf16.msra.mxu0 %v540
    %1654 = vmatprep.subr.bf16.mxu0 %v551
    %1655 = vmatpush1.bf16.msra.mxu0 %v550
    %1656 = vmatprep.subr.bf16.mxu0 %v561
    %1657 = vmatpush1.bf16.msra.mxu0 %v560
    %1658 = vmatprep.subr.bf16.mxu0 %v571
    %1659 = vmatpush1.bf16.msra.mxu0 %v570
    %1660 = vmatprep.subr.bf16.mxu0 0
    %1661 = vmatpush1.bf16.msra.mxu0 0
    %1662 = vmatprep.subr.bf16.mxu0 0
    %1663 = vmatpush1.bf16.msra.mxu0 0
    %1664 = vmatprep.subr.bf16.mxu0 0
    %1665 = vmatpush1.bf16.msra.mxu0 0
    %1666 = vmatprep.subr.bf16.mxu0 0
    %1667 = vmatpush1.bf16.msra.mxu0 0
    %1668 = vmatprep.subr.bf16.mxu0 0
    %1669 = vmatpush1.bf16.msra.mxu0 0
    %1670 = vmatprep.subr.bf16.mxu0 0
    %1671 = vmatpush1.bf16.msra.mxu0 0
    %1672 = vmatprep.subr.bf16.mxu0 0
    %1673 = vmatpush1.bf16.msra.mxu0 0
    %1674 = vmatprep.subr.bf16.mxu0 0
    %1675 = vmatpush1.bf16.msra.mxu0 0
    %1676 = vmatprep.subr.bf16.mxu0 0
    %1677 = vmatpush1.bf16.msra.mxu0 0
    %1678 = vmatprep.subr.bf16.mxu0 0
    %1679 = vmatpush1.bf16.msra.mxu0 0
    %1680 = vmatprep.mubr.bf16.mxu0 0
    %1681 = vmatmul.mubr.bf16.gmra.mrb[0].mxu0 %v1646
    %v1682 = vpop.f32.mrb[0].mxu0
    %v1683 = vadd.f32 %v645, %v1682
    %v1684 = vpop.f32.mrb[0].mxu0
    %v1685 = vadd.f32 %v649, %v1684
    %v1686 = vpop.f32.mrb[0].mxu0
    %v1687 = vpop.f32.mrb[0].mxu0
    %1688 = vdwg.mxu0
    %1689 = vmatprep.subr.bf16.mxu0 %v523
    %1690 = vmatpush1.bf16.msra.mxu0 %v522
    %1691 = vmatprep.subr.bf16.mxu0 %v533
    %1692 = vmatpush1.bf16.msra.mxu0 %v532
    %1693 = vmatprep.subr.bf16.mxu0 %v543
    %1694 = vmatpush1.bf16.msra.mxu0 %v542
    %1695 = vmatprep.subr.bf16.mxu0 %v553
    %1696 = vmatpush1.bf16.msra.mxu0 %v552
    %1697 = vmatprep.subr.bf16.mxu0 %v563
    %1698 = vmatpush1.bf16.msra.mxu0 %v562
    %1699 = vmatprep.subr.bf16.mxu0 %v573
    %1700 = vmatpush1.bf16.msra.mxu0 %v572
    %1701 = vmatprep.subr.bf16.mxu0 0
    %1702 = vmatpush1.bf16.msra.mxu0 0
    %1703 = vmatprep.subr.bf16.mxu0 0
    %1704 = vmatpush1.bf16.msra.mxu0 0
    %1705 = vmatprep.subr.bf16.mxu0 0
    %1706 = vmatpush1.bf16.msra.mxu0 0
    %1707 = vmatprep.subr.bf16.mxu0 0
    %1708 = vmatpush1.bf16.msra.mxu0 0
    %1709 = vmatprep.subr.bf16.mxu0 0
    %1710 = vmatpush1.bf16.msra.mxu0 0
    %1711 = vmatprep.subr.bf16.mxu0 0
    %1712 = vmatpush1.bf16.msra.mxu0 0
    %1713 = vmatprep.subr.bf16.mxu0 0
    %1714 = vmatpush1.bf16.msra.mxu0 0
    %1715 = vmatprep.subr.bf16.mxu0 0
    %1716 = vmatpush1.bf16.msra.mxu0 0
    %1717 = vmatprep.subr.bf16.mxu0 0
    %1718 = vmatpush1.bf16.msra.mxu0 0
    %1719 = vmatprep.subr.bf16.mxu0 0
    %1720 = vmatpush1.bf16.msra.mxu0 0
    %1721 = vmatprep.mubr.bf16.mxu0 0
    %1722 = vmatmul.mubr.bf16.gmra.mrb[0].mxu0 %v1646
    %v1723 = vpop.f32.mrb[0].mxu0
    %v1724 = vadd.f32 %v653, %v1723
    %v1725 = vpop.f32.mrb[0].mxu0
    %v1726 = vadd.f32 %v657, %v1725
    %v1727 = vpop.f32.mrb[0].mxu0
    %v1728 = vpop.f32.mrb[0].mxu0
    %1729 = vdwg.mxu0
    %1730 = vmatprep.subr.bf16.mxu0 %v525
    %1731 = vmatpush1.bf16.msra.mxu0 %v524
    %1732 = vmatprep.subr.bf16.mxu0 %v535
    %1733 = vmatpush1.bf16.msra.mxu0 %v534
    %1734 = vmatprep.subr.bf16.mxu0 %v545
    %1735 = vmatpush1.bf16.msra.mxu0 %v544
    %1736 = vmatprep.subr.bf16.mxu0 %v555
    %1737 = vmatpush1.bf16.msra.mxu0 %v554
    %1738 = vmatprep.subr.bf16.mxu0 %v565
    %1739 = vmatpush1.bf16.msra.mxu0 %v564
    %1740 = vmatprep.subr.bf16.mxu0 %v575
    %1741 = vmatpush1.bf16.msra.mxu0 %v574
    %1742 = vmatprep.subr.bf16.mxu0 0
    %1743 = vmatpush1.bf16.msra.mxu0 0
    %1744 = vmatprep.subr.bf16.mxu0 0
    %1745 = vmatpush1.bf16.msra.mxu0 0
    %1746 = vmatprep.subr.bf16.mxu0 0
    %1747 = vmatpush1.bf16.msra.mxu0 0
    %1748 = vmatprep.subr.bf16.mxu0 0
    %1749 = vmatpush1.bf16.msra.mxu0 0
    %1750 = vmatprep.subr.bf16.mxu0 0
    %1751 = vmatpush1.bf16.msra.mxu0 0
    %1752 = vmatprep.subr.bf16.mxu0 0
    %1753 = vmatpush1.bf16.msra.mxu0 0
    %1754 = vmatprep.subr.bf16.mxu0 0
    %1755 = vmatpush1.bf16.msra.mxu0 0
    %1756 = vmatprep.subr.bf16.mxu0 0
    %1757 = vmatpush1.bf16.msra.mxu0 0
    %1758 = vmatprep.subr.bf16.mxu0 0
    %1759 = vmatpush1.bf16.msra.mxu0 0
    %1760 = vmatprep.subr.bf16.mxu0 0
    %1761 = vmatpush1.bf16.msra.mxu0 0
    %1762 = vmatprep.mubr.bf16.mxu0 0
    %1763 = vmatmul.mubr.bf16.gmra.mrb[0].mxu0 %v1646
    %v1764 = vpop.f32.mrb[0].mxu0
    %v1765 = vadd.f32 %v661, %v1764
    %v1766 = vpop.f32.mrb[0].mxu0
    %v1767 = vadd.f32 %v665, %v1766
    %v1768 = vpop.f32.mrb[0].mxu0
    %v1769 = vpop.f32.mrb[0].mxu0
    %1770 = vdwg.mxu0
    %1771 = vmatprep.subr.bf16.mxu0 %v527
    %1772 = vmatpush1.bf16.msra.mxu0 %v526
    %1773 = vmatprep.subr.bf16.mxu0 %v537
    %1774 = vmatpush1.bf16.msra.mxu0 %v536
    %1775 = vmatprep.subr.bf16.mxu0 %v547
    %1776 = vmatpush1.bf16.msra.mxu0 %v546
    %1777 = vmatprep.subr.bf16.mxu0 %v557
    %1778 = vmatpush1.bf16.msra.mxu0 %v556
    %1779 = vmatprep.subr.bf16.mxu0 %v567
    %1780 = vmatpush1.bf16.msra.mxu0 %v566
    %1781 = vmatprep.subr.bf16.mxu0 %v577
    %1782 = vmatpush1.bf16.msra.mxu0 %v576
    %1783 = vmatprep.subr.bf16.mxu0 0
    %1784 = vmatpush1.bf16.msra.mxu0 0
    %1785 = vmatprep.subr.bf16.mxu0 0
    %1786 = vmatpush1.bf16.msra.mxu0 0
    %1787 = vmatprep.subr.bf16.mxu0 0
    %1788 = vmatpush1.bf16.msra.mxu0 0
    %1789 = vmatprep.subr.bf16.mxu0 0
    %1790 = vmatpush1.bf16.msra.mxu0 0
    %1791 = vmatprep.subr.bf16.mxu0 0
    %1792 = vmatpush1.bf16.msra.mxu0 0
    %1793 = vmatprep.subr.bf16.mxu0 0
    %1794 = vmatpush1.bf16.msra.mxu0 0
    %1795 = vmatprep.subr.bf16.mxu0 0
    %1796 = vmatpush1.bf16.msra.mxu0 0
    %1797 = vmatprep.subr.bf16.mxu0 0
    %1798 = vmatpush1.bf16.msra.mxu0 0
    %1799 = vmatprep.subr.bf16.mxu0 0
    %1800 = vmatpush1.bf16.msra.mxu0 0
    %1801 = vmatprep.subr.bf16.mxu0 0
    %1802 = vmatpush1.bf16.msra.mxu0 0
    %1803 = vmatprep.mubr.bf16.mxu0 0
    %1804 = vmatmul.mubr.bf16.gmra.mrb[0].mxu0 %v1646
    %v1805 = vpop.f32.mrb[0].mxu0
    %v1806 = vadd.f32 %v669, %v1805
    %v1807 = vpop.f32.mrb[0].mxu0
    %v1808 = vadd.f32 %v673, %v1807
    %v1809 = vpop.f32.mrb[0].mxu0
    %v1810 = vpop.f32.mrb[0].mxu0
    %1811 = vdwg.mxu0
    %1812 = vmatprep.subr.bf16.mxu0 %v529
    %1813 = vmatpush1.bf16.msra.mxu0 %v528
    %1814 = vmatprep.subr.bf16.mxu0 %v539
    %1815 = vmatpush1.bf16.msra.mxu0 %v538
    %1816 = vmatprep.subr.bf16.mxu0 %v549
    %1817 = vmatpush1.bf16.msra.mxu0 %v548
    %1818 = vmatprep.subr.bf16.mxu0 %v559
    %1819 = vmatpush1.bf16.msra.mxu0 %v558
    %1820 = vmatprep.subr.bf16.mxu0 %v569
    %1821 = vmatpush1.bf16.msra.mxu0 %v568
    %1822 = vmatprep.subr.bf16.mxu0 %v579
    %1823 = vmatpush1.bf16.msra.mxu0 %v578
    %1824 = vmatprep.subr.bf16.mxu0 0
    %1825 = vmatpush1.bf16.msra.mxu0 0
    %1826 = vmatprep.subr.bf16.mxu0 0
    %1827 = vmatpush1.bf16.msra.mxu0 0
    %1828 = vmatprep.subr.bf16.mxu0 0
    %1829 = vmatpush1.bf16.msra.mxu0 0
    %1830 = vmatprep.subr.bf16.mxu0 0
    %1831 = vmatpush1.bf16.msra.mxu0 0
    %1832 = vmatprep.subr.bf16.mxu0 0
    %1833 = vmatpush1.bf16.msra.mxu0 0
    %1834 = vmatprep.subr.bf16.mxu0 0
    %1835 = vmatpush1.bf16.msra.mxu0 0
    %1836 = vmatprep.subr.bf16.mxu0 0
    %1837 = vmatpush1.bf16.msra.mxu0 0
    %1838 = vmatprep.subr.bf16.mxu0 0
    %1839 = vmatpush1.bf16.msra.mxu0 0
    %1840 = vmatprep.subr.bf16.mxu0 0
    %1841 = vmatpush1.bf16.msra.mxu0 0
    %1842 = vmatprep.subr.bf16.mxu0 0
    %1843 = vmatpush1.bf16.msra.mxu0 0
    %1844 = vmatprep.mubr.bf16.mxu0 0
    %1845 = vmatmul.mubr.bf16.gmra.mrb[0].mxu0 %v1646
    %v1846 = vpop.f32.mrb[0].mxu0
    %v1847 = vadd.f32 %v677, %v1846
    %v1848 = vpop.f32.mrb[0].mxu0
    %v1849 = vadd.f32 %v681, %v1848
    %v1850 = vpop.f32.mrb[0].mxu0
    %v1851 = vpop.f32.mrb[0].mxu0
    %1852 = vdwg.mxu0
    %v1853 = vadd.f32 %v1683, 3.0
    %v1854 = vadd.f32 %v1685, 3.0
    %v1855 = vadd.f32 %v1724, 3.0
    %v1856 = vadd.f32 %v1726, 3.0
    %v1857 = vadd.f32 %v1765, 3.0
    %v1858 = vadd.f32 %v1767, 3.0
    %v1859 = vadd.f32 %v1806, 3.0
    %v1860 = vadd.f32 %v1808, 3.0
    %v1861 = vadd.f32 %v1847, 3.0
    %v1862 = vadd.f32 %v1849, 3.0
    %v1863 = vmax.f32 %v1853, 0.0
    %v1864 = vmax.f32 %v1854, 0.0
    %v1865 = vmax.f32 %v1855, 0.0
    %v1866 = vmax.f32 %v1856, 0.0
    %v1867 = vmax.f32 %v1857, 0.0
    %v1868 = vmax.f32 %v1858, 0.0
    %v1869 = vmax.f32 %v1859, 0.0
    %v1870 = vmax.f32 %v1860, 0.0
    %v1871 = vmax.f32 %v1861, 0.0
    %v1872 = vmax.f32 %v1862, 0.0
    %v1873 = vmin.f32 %v1863, 6.0
    %v1874 = vmin.f32 %v1864, 6.0
    %v1875 = vmin.f32 %v1865, 6.0
    %v1876 = vmin.f32 %v1866, 6.0
    %v1877 = vmin.f32 %v1867, 6.0
    %v1878 = vmin.f32 %v1868, 6.0
    %v1879 = vmin.f32 %v1869, 6.0
    %v1880 = vmin.f32 %v1870, 6.0
    %v1881 = vmin.f32 %v1871, 6.0
    %v1882 = vmin.f32 %v1872, 6.0
    %v1883 = vmul.f32 %v1683, %v1873
    %v1884 = vmul.f32 %v1685, %v1874
    %v1885 = vmul.f32 %v1724, %v1875
    %v1886 = vmul.f32 %v1726, %v1876
    %v1887 = vmul.f32 %v1765, %v1877
    %v1888 = vmul.f32 %v1767, %v1878
    %v1889 = vmul.f32 %v1806, %v1879
    %v1890 = vmul.f32 %v1808, %v1880
    %v1891 = vmul.f32 %v1847, %v1881
    %v1892 = vmul.f32 %v1849, %v1882
    %v1893 = vmul.f32 %v1883, 0.16666667
    %v1894 = vmul.f32 %v1884, 0.16666667
    %v1895 = vmul.f32 %v1885, 0.16666667
    %v1896 = vmul.f32 %v1886, 0.16666667
    %v1897 = vmul.f32 %v1887, 0.16666667
    %v1898 = vmul.f32 %v1888, 0.16666667
    %v1899 = vmul.f32 %v1889, 0.16666667
    %v1900 = vmul.f32 %v1890, 0.16666667
    %v1901 = vmul.f32 %v1891, 0.16666667
    %v1902 = vmul.f32 %v1892, 0.16666667
    %v1903 = vpack.c.bf16 %v1893, %v1893
    %v1904 = vpack.c.bf16 %v1894, %v1894
    %v1905 = vpack.c.bf16 %v1895, %v1895
    %v1906 = vpack.c.bf16 %v1896, %v1896
    %v1907 = vpack.c.bf16 %v1897, %v1897
    %v1908 = vpack.c.bf16 %v1898, %v1898
    %v1909 = vpack.c.bf16 %v1899, %v1899
    %v1910 = vpack.c.bf16 %v1900, %v1900
    %v1911 = vpack.c.bf16 %v1901, %v1901
    %v1912 = vpack.c.bf16 %v1902, %v1902
    %1913 = vmatprep.subr.bf16.mxu0 0
    %1914 = vmatpush1.bf16.msra.mxu0 %v1281
    %1915 = vmatprep.subr.bf16.mxu0 0
    %1916 = vmatpush1.bf16.msra.mxu0 %v1282
    %1917 = vmatprep.subr.bf16.mxu0 0
    %1918 = vmatpush1.bf16.msra.mxu0 %v1283
    %1919 = vmatprep.subr.bf16.mxu0 0
    %1920 = vmatpush1.bf16.msra.mxu0 %v1284
    %1921 = vmatprep.subr.bf16.mxu0 0
    %1922 = vmatpush1.bf16.msra.mxu0 %v1285
    %1923 = vmatprep.subr.bf16.mxu0 0
    %1924 = vmatpush1.bf16.msra.mxu0 %v1286
    %1925 = vmatprep.subr.bf16.mxu0 0
    %1926 = vmatpush1.bf16.msra.mxu0 %v1287
    %1927 = vmatprep.subr.bf16.mxu0 0
    %1928 = vmatpush1.bf16.msra.mxu0 %v1288
    %1929 = vmatprep.subr.bf16.mxu0 0
    %1930 = vmatpush1.bf16.msra.mxu0 %v1289
    %1931 = vmatprep.subr.bf16.mxu0 0
    %1932 = vmatpush1.bf16.msra.mxu0 %v1290
    %1933 = vmatprep.subr.bf16.mxu0 0
    %1934 = vmatpush1.bf16.msra.mxu0 %v1291
    %1935 = vmatprep.subr.bf16.mxu0 0
    %1936 = vmatpush1.bf16.msra.mxu0 %v1292
    %1937 = vmatprep.subr.bf16.mxu0 0
    %1938 = vmatpush1.bf16.msra.mxu0 %v1293
    %1939 = vmatprep.subr.bf16.mxu0 0
    %1940 = vmatpush1.bf16.msra.mxu0 %v1294
    %1941 = vmatprep.subr.bf16.mxu0 0
    %1942 = vmatpush1.bf16.msra.mxu0 %v1295
    %1943 = vmatprep.subr.bf16.mxu0 0
    %1944 = vmatpush1.bf16.msra.mxu0 %v1296
    %1945 = vmatprep.mubr.bf16.mxu0 %v1904
    %1946 = vmatmul.mubr.bf16.gmra.mrb[0].mxu0 %v1903
    %v1947 = vpop.f32.mrb[0].mxu0
    %v1948 = vadd.f32 %v332, %v1947
    %v1949 = vpop.f32.mrb[0].mxu0
    %v1950 = vpop.f32.mrb[0].mxu0
    %v1951 = vpop.f32.mrb[0].mxu0
    %1952 = vdwg.mxu0
    %1953 = vmatprep.subr.bf16.mxu0 0
    %1954 = vmatpush1.bf16.msra.mxu0 %v1297
    %1955 = vmatprep.subr.bf16.mxu0 0
    %1956 = vmatpush1.bf16.msra.mxu0 %v1298
    %1957 = vmatprep.subr.bf16.mxu0 0
    %1958 = vmatpush1.bf16.msra.mxu0 %v1299
    %1959 = vmatprep.subr.bf16.mxu0 0
    %1960 = vmatpush1.bf16.msra.mxu0 %v1300
    %1961 = vmatprep.subr.bf16.mxu0 0
    %1962 = vmatpush1.bf16.msra.mxu0 %v1301
    %1963 = vmatprep.subr.bf16.mxu0 0
    %1964 = vmatpush1.bf16.msra.mxu0 %v1302
    %1965 = vmatprep.subr.bf16.mxu0 0
    %1966 = vmatpush1.bf16.msra.mxu0 %v1303
    %1967 = vmatprep.subr.bf16.mxu0 0
    %1968 = vmatpush1.bf16.msra.mxu0 %v1304
    %1969 = vmatprep.subr.bf16.mxu0 0
    %1970 = vmatpush1.bf16.msra.mxu0 %v1305
    %1971 = vmatprep.subr.bf16.mxu0 0
    %1972 = vmatpush1.bf16.msra.mxu0 %v1306
    %1973 = vmatprep.subr.bf16.mxu0 0
    %1974 = vmatpush1.bf16.msra.mxu0 %v1307
    %1975 = vmatprep.subr.bf16.mxu0 0
    %1976 = vmatpush1.bf16.msra.mxu0 %v1308
    %1977 = vmatprep.subr.bf16.mxu0 0
    %1978 = vmatpush1.bf16.msra.mxu0 %v1309
    %1979 = vmatprep.subr.bf16.mxu0 0
    %1980 = vmatpush1.bf16.msra.mxu0 %v1310
    %1981 = vmatprep.subr.bf16.mxu0 0
    %1982 = vmatpush1.bf16.msra.mxu0 %v1311
    %1983 = vmatprep.subr.bf16.mxu0 0
    %1984 = vmatpush1.bf16.msra.mxu0 %v1312
    %1985 = vmatprep.mubr.bf16.mxu0 %v1906
    %1986 = vmatmul.mubr.bf16.gmra.mrb[0].mxu0 %v1905
    %v1987 = vpop.f32.mrb[0].mxu0
    %v1988 = vadd.f32 %v1948, %v1987
    %v1989 = vpop.f32.mrb[0].mxu0
    %v1990 = vpop.f32.mrb[0].mxu0
    %v1991 = vpop.f32.mrb[0].mxu0
    %1992 = vdwg.mxu0
    %1993 = vmatprep.subr.bf16.mxu0 0
    %1994 = vmatpush1.bf16.msra.mxu0 %v1313
    %1995 = vmatprep.subr.bf16.mxu0 0
    %1996 = vmatpush1.bf16.msra.mxu0 %v1314
    %1997 = vmatprep.subr.bf16.mxu0 0
    %1998 = vmatpush1.bf16.msra.mxu0 %v1315
    %1999 = vmatprep.subr.bf16.mxu0 0
    %2000 = vmatpush1.bf16.msra.mxu0 %v1316
    %2001 = vmatprep.subr.bf16.mxu0 0
    %2002 = vmatpush1.bf16.msra.mxu0 %v1317
    %2003 = vmatprep.subr.bf16.mxu0 0
    %2004 = vmatpush1.bf16.msra.mxu0 %v1318
    %2005 = vmatprep.subr.bf16.mxu0 0
    %2006 = vmatpush1.bf16.msra.mxu0 %v1319
    %2007 = vmatprep.subr.bf16.mxu0 0
    %2008 = vmatpush1.bf16.msra.mxu0 %v1320
    %2009 = vmatprep.subr.bf16.mxu0 0
    %2010 = vmatpush1.bf16.msra.mxu0 %v1321
    %2011 = vmatprep.subr.bf16.mxu0 0
    %2012 = vmatpush1.bf16.msra.mxu0 %v1322
    %2013 = vmatprep.subr.bf16.mxu0 0
    %2014 = vmatpush1.bf16.msra.mxu0 %v1323
    %2015 = vmatprep.subr.bf16.mxu0 0
    %2016 = vmatpush1.bf16.msra.mxu0 %v1324
    %2017 = vmatprep.subr.bf16.mxu0 0
    %2018 = vmatpush1.bf16.msra.mxu0 %v1325
    %2019 = vmatprep.subr.bf16.mxu0 0
    %2020 = vmatpush1.bf16.msra.mxu0 %v1326
    %2021 = vmatprep.subr.bf16.mxu0 0
    %2022 = vmatpush1.bf16.msra.mxu0 %v1327
    %2023 = vmatprep.subr.bf16.mxu0 0
    %2024 = vmatpush1.bf16.msra.mxu0 %v1328
    %2025 = vmatprep.mubr.bf16.mxu0 %v1908
    %2026 = vmatmul.mubr.bf16.gmra.mrb[0].mxu0 %v1907
    %v2027 = vpop.f32.mrb[0].mxu0
    %v2028 = vadd.f32 %v1988, %v2027
    %v2029 = vpop.f32.mrb[0].mxu0
    %v2030 = vpop.f32.mrb[0].mxu0
    %v2031 = vpop.f32.mrb[0].mxu0
    %2032 = vdwg.mxu0
    %2033 = vmatprep.subr.bf16.mxu0 0
    %2034 = vmatpush1.bf16.msra.mxu0 %v1329
    %2035 = vmatprep.subr.bf16.mxu0 0
    %2036 = vmatpush1.bf16.msra.mxu0 %v1330
    %2037 = vmatprep.subr.bf16.mxu0 0
    %2038 = vmatpush1.bf16.msra.mxu0 %v1331
    %2039 = vmatprep.subr.bf16.mxu0 0
    %2040 = vmatpush1.bf16.msra.mxu0 %v1332
    %2041 = vmatprep.subr.bf16.mxu0 0
    %2042 = vmatpush1.bf16.msra.mxu0 %v1333
    %2043 = vmatprep.subr.bf16.mxu0 0
    %2044 = vmatpush1.bf16.msra.mxu0 %v1334
    %2045 = vmatprep.subr.bf16.mxu0 0
    %2046 = vmatpush1.bf16.msra.mxu0 %v1335
    %2047 = vmatprep.subr.bf16.mxu0 0
    %2048 = vmatpush1.bf16.msra.mxu0 %v1336
    %2049 = vmatprep.subr.bf16.mxu0 0
    %2050 = vmatpush1.bf16.msra.mxu0 %v1337
    %2051 = vmatprep.subr.bf16.mxu0 0
    %2052 = vmatpush1.bf16.msra.mxu0 %v1338
    %2053 = vmatprep.subr.bf16.mxu0 0
    %2054 = vmatpush1.bf16.msra.mxu0 %v1339
    %2055 = vmatprep.subr.bf16.mxu0 0
    %2056 = vmatpush1.bf16.msra.mxu0 %v1340
    %2057 = vmatprep.subr.bf16.mxu0 0
    %2058 = vmatpush1.bf16.msra.mxu0 %v1341
    %2059 = vmatprep.subr.bf16.mxu0 0
    %2060 = vmatpush1.bf16.msra.mxu0 %v1342
    %2061 = vmatprep.subr.bf16.mxu0 0
    %2062 = vmatpush1.bf16.msra.mxu0 %v1343
    %2063 = vmatprep.subr.bf16.mxu0 0
    %2064 = vmatpush1.bf16.msra.mxu0 %v1344
    %2065 = vmatprep.mubr.bf16.mxu0 %v1910
    %2066 = vmatmul.mubr.bf16.gmra.mrb[0].mxu0 %v1909
    %v2067 = vpop.f32.mrb[0].mxu0
    %v2068 = vadd.f32 %v2028, %v2067
    %v2069 = vpop.f32.mrb[0].mxu0
    %v2070 = vpop.f32.mrb[0].mxu0
    %v2071 = vpop.f32.mrb[0].mxu0
    %2072 = vdwg.mxu0
    %2073 = vmatprep.subr.bf16.mxu0 0
    %2074 = vmatpush1.bf16.msra.mxu0 %v1345
    %2075 = vmatprep.subr.bf16.mxu0 0
    %2076 = vmatpush1.bf16.msra.mxu0 %v1346
    %2077 = vmatprep.subr.bf16.mxu0 0
    %2078 = vmatpush1.bf16.msra.mxu0 %v1347
    %2079 = vmatprep.subr.bf16.mxu0 0
    %2080 = vmatpush1.bf16.msra.mxu0 %v1348
    %2081 = vmatprep.subr.bf16.mxu0 0
    %2082 = vmatpush1.bf16.msra.mxu0 %v1349
    %2083 = vmatprep.subr.bf16.mxu0 0
    %2084 = vmatpush1.bf16.msra.mxu0 %v1350
    %2085 = vmatprep.subr.bf16.mxu0 0
    %2086 = vmatpush1.bf16.msra.mxu0 %v1351
    %2087 = vmatprep.subr.bf16.mxu0 0
    %2088 = vmatpush1.bf16.msra.mxu0 %v1352
    %2089 = vmatprep.subr.bf16.mxu0 0
    %2090 = vmatpush1.bf16.msra.mxu0 %v1353
    %2091 = vmatprep.subr.bf16.mxu0 0
    %2092 = vmatpush1.bf16.msra.mxu0 %v1354
    %2093 = vmatprep.subr.bf16.mxu0 0
    %2094 = vmatpush1.bf16.msra.mxu0 %v1355
    %2095 = vmatprep.subr.bf16.mxu0 0
    %2096 = vmatpush1.bf16.msra.mxu0 %v1356
    %2097 = vmatprep.subr.bf16.mxu0 0
    %2098 = vmatpush1.bf16.msra.mxu0 %v1357
    %2099 = vmatprep.subr.bf16.mxu0 0
    %2100 = vmatpush1.bf16.msra.mxu0 %v1358
    %2101 = vmatprep.subr.bf16.mxu0 0
    %2102 = vmatpush1.bf16.msra.mxu0 %v1359
    %2103 = vmatprep.subr.bf16.mxu0 0
    %2104 = vmatpush1.bf16.msra.mxu0 %v1360
    %2105 = vmatprep.mubr.bf16.mxu0 %v1912
    %2106 = vmatmul.mubr.bf16.gmra.mrb[0].mxu0 %v1911
    %v2107 = vpop.f32.mrb[0].mxu0
    %v2108 = vadd.f32 %v2068, %v2107
    %v2109 = vpop.f32.mrb[0].mxu0
    %v2110 = vpop.f32.mrb[0].mxu0
    %v2111 = vpop.f32.mrb[0].mxu0
    %2112 = vdwg.mxu0
    %2113 = vst.msk [vmem:[#allocation2 + $0x1] sm:$0x1] %vm1641, %v2108
    // Predicated region
    $region30: #{_lambda_.13} parent=1 // pred_check
      _
    $region31: #{_lambda_.13} parent=1 // pred_check_branch
      %2115 = sbr.rel (0) target = $region33
    $region32: #{_lambda_.13} parent=1 // pred_region
      %s2117 = ssub.s32 32, 32
      %2118 = vsyncadd [#allocation3], %s2117
      %s2120 = sshll.u32 [#allocation2], 4
      %s2121 = int_to_ptr.vmem [resolvable:$true] %s2120
      %2123 = dma.vmem_to_hbm [thread:$0]  %s2121, 32, %s7, [#allocation3]
    $region33: #{_lambda_.13} parent=1 // pred_fallthru
      _
    // Predicated region
    $region34: #{_lambda_.13} parent=1 // pred_check
      _
    $region35: #{_lambda_.13} parent=1 // pred_check_branch
      %2125 = sbr.rel (0) target = $region37
    $region36: #{_lambda_.13} parent=1 // pred_region
      %2126 = dma.done [#allocation3], 32
    $region37: #{_lambda_.13} parent=1 // pred_fallthru
      _
    %2127 = vsyncpa [#allocation3], 1

</llo_original>
